<compile_context>
chip_gen: v7x
topology: tpu7x:2x2x1
jax: 0.10.0
libtpu: 0.0.40
codegen_flags: <defaults>
</compile_context>

<pallas_src>
import math
import jax
import jax.numpy as jnp
from jax import lax
from jax.experimental import pallas as pl
from jax.experimental.pallas import tpu as pltpu

# ---- model dims (small, synthetic RoBERTa-like encoder) ----
B, S, H = 16, 16, 32         # batch, sequence, hidden
NH, DH = 2, 16               # heads, head dim (NH * DH == H)
F = 64                       # FFN intermediate
L = 2                        # encoder layers
VOCAB = 50
MAX_POS = 64
LN_EPS = 1e-12

# grid layout: NG groups of G sequences; each grid step handles GS = G*S rows
G = 8
NG = B // G
GS = G * S
NEG = -1e9                   # additive attention bias for masked / cross-sequence keys

assert B % G == 0 and NH * DH == H


def _layernorm(x, g, b):
    mu = jnp.mean(x, axis=-1, keepdims=True)
    var = jnp.mean((x - mu) ** 2, axis=-1, keepdims=True)
    return (x - mu) * lax.rsqrt(var + LN_EPS) * g + b


def _erf(x):
    # Abramowitz & Stegun 7.1.26 polynomial (|abs err| < 1.5e-7); only uses
    # abs / select / exp / mul / add / div, all of which lower in Mosaic.
    p = 0.3275911
    a1, a2, a3, a4, a5 = 0.254829592, -0.284496736, 1.421413741, -1.453152027, 1.061405429
    sgn = jnp.where(x >= 0.0, 1.0, -1.0)
    ax = jnp.abs(x)
    t = 1.0 / (1.0 + p * ax)
    poly = ((((a5 * t + a4) * t + a3) * t + a2) * t + a1) * t
    return sgn * (1.0 - poly * jnp.exp(-ax * ax))


def _gelu_exact(x):
    # erf-based ("exact") GELU as used by HF RoBERTa (approximate=False).
    return 0.5 * x * (1.0 + _erf(x * (1.0 / math.sqrt(2.0))))


# ---------------------------------------------------------------------------
# Fused per-group kernel: node-averaged embeddings + full L-layer encoder.
# One grid step = one group of G sequences folded into GS = G*S sublane rows.
# ---------------------------------------------------------------------------
def _encoder_group_kernel(pos_col_ref, pos_row_ref, attn_ref,
                          wemb_ref, pemb_ref, temb_ref,
                          embg_ref, embb_ref,
                          wqkv_ref, bqkv_ref, wo_ref, bo_ref,
                          ln1g_ref, ln1b_ref,
                          w1_ref, b1_ref, w2_ref, b2_ref,
                          ln2g_ref, ln2b_ref,
                          out_ref):
    # --- masks & additive attention bias (built in-kernel, cheap VPU work) ----
    nodes = (pos_col_ref[...] == 0).astype(jnp.float32)      # [GS, 1]
    tokens = (pos_row_ref[0] >= 2).astype(jnp.float32)       # [1, GS]
    attn = attn_ref[0]                                       # [GS, GS] block-diag 0/1
    bias = (1.0 - attn) * NEG                                # masked keys -> -1e9

    # --- GraphCodeBERT node-averaged embedding blend ---------------------------
    wemb = wemb_ref[...]                                     # [GS, H]
    n2t = nodes * tokens * attn                              # 0 across sequences
    denom = jnp.sum(n2t, axis=-1, keepdims=True) + 1e-10
    n2t = n2t / denom                                        # exact divide
    avg = jnp.dot(n2t, wemb, preferred_element_type=jnp.float32)
    emb = wemb * (1.0 - nodes) + avg * nodes

    # --- RoBERTa embeddings: + position + token-type, then LayerNorm -----------
    x = _layernorm(emb + pemb_ref[...] + temb_ref[...], embg_ref[...], embb_ref[...])

    for li in range(L):                                      # static layer loop (L=2)
        # fused Q/K/V projection: one [GS, H] @ [H, 3H]; 1/sqrt(DH) folded into Wq
        qkv = jnp.dot(x, wqkv_ref[li], preferred_element_type=jnp.float32) + bqkv_ref[li]
        q = qkv[:, 0 * H:1 * H]
        k = qkv[:, 1 * H:2 * H]
        v = qkv[:, 2 * H:3 * H]

        ctx = []
        for h in range(NH):                                  # static head loop (NH=2)
            sl = slice(h * DH, (h + 1) * DH)
            qh, kh, vh = q[:, sl], k[:, sl], v[:, sl]
            # contract K's last dim directly (no materialized K transpose)
            scores = lax.dot_general(qh, kh, (((1,), (1,)), ((), ())),
                                     preferred_element_type=jnp.float32) + bias
            m = jnp.max(scores, axis=-1, keepdims=True)
            p = jnp.exp(scores - m)
            p = p / jnp.sum(p, axis=-1, keepdims=True)       # exact divide
            ctx.append(jnp.dot(p, vh, preferred_element_type=jnp.float32))  # [GS, DH]
        ctx = jnp.concatenate(ctx, axis=-1)                  # [GS, H]
        attn_out = jnp.dot(ctx, wo_ref[li], preferred_element_type=jnp.float32) + bo_ref[li]

        h1 = _layernorm(x + attn_out, ln1g_ref[li], ln1b_ref[li])
        ff = _gelu_exact(jnp.dot(h1, w1_ref[li], preferred_element_type=jnp.float32)
                         + b1_ref[li])
        ff = jnp.dot(ff, w2_ref[li], preferred_element_type=jnp.float32) + b2_ref[li]
        x = _layernorm(h1 + ff, ln2g_ref[li], ln2b_ref[li])

    # --- dense [GS, H] store; CLS rows are sliced in the JAX wrapper ------------
    out_ref[...] = x


def fused_forward(params, code_inputs, attn_mask, position_idx):
    # position_idx in both orientations so the kernel builds masks without transposes
    pos_col = position_idx.reshape(B * S, 1).astype(jnp.int32)       # [B*S, 1]
    pos_row = position_idx.reshape(NG, 1, GS).astype(jnp.int32)      # [NG, 1, GS]

    # block-diagonal [NG, GS, GS] attention mask: folding G sequences per group into
    # the sublane axis is exact because cross-sequence entries stay fully masked.
    attn_f = attn_mask.astype(jnp.float32).reshape(NG, G, S, S)
    eye = jnp.eye(G, dtype=jnp.float32)
    attn_bd = jnp.einsum('ngij,gh->ngihj', attn_f, eye).reshape(NG, GS, GS)

    # embedding gathers stay in plain JAX (glue)
    wemb = jnp.take(params["word_emb"], code_inputs.reshape(-1), axis=0)        # [B*S, H]
    pemb = jnp.take(params["pos_emb"], position_idx.reshape(-1), axis=0)        # [B*S, H]
    token_type_ids = (position_idx.reshape(-1) == -1).astype(jnp.int32)         # all zeros
    temb = jnp.take(params["type_emb"], token_type_ids, axis=0)                 # [B*S, H]

    args = (pos_col, pos_row, attn_bd, wemb, pemb, temb,
            params["emb_ln_g"], params["emb_ln_b"],
            params["wqkv"], params["bqkv"], params["wo"], params["bo"],
            params["ln1_g"], params["ln1_b"],
            params["w1"], params["b1"], params["w2"], params["b2"],
            params["ln2_g"], params["ln2_b"])

    const3 = lambda g: (0, 0, 0)
    in_specs = [
        pl.BlockSpec((GS, 1), lambda g: (g, 0)),                # pos_col
        pl.BlockSpec((1, 1, GS), lambda g: (g, 0, 0)),          # pos_row
        pl.BlockSpec((1, GS, GS), lambda g: (g, 0, 0)),         # attn_bd
        pl.BlockSpec((GS, H), lambda g: (g, 0)),                # wemb
        pl.BlockSpec((GS, H), lambda g: (g, 0)),                # pemb
        pl.BlockSpec((GS, H), lambda g: (g, 0)),                # temb
        pl.BlockSpec((1, H), lambda g: (0, 0)),                 # emb_ln_g
        pl.BlockSpec((1, H), lambda g: (0, 0)),                 # emb_ln_b
        pl.BlockSpec((L, H, 3 * H), const3),                    # wqkv (resident)
        pl.BlockSpec((L, 1, 3 * H), const3),                    # bqkv
        pl.BlockSpec((L, H, H), const3),                        # wo
        pl.BlockSpec((L, 1, H), const3),                        # bo
        pl.BlockSpec((L, 1, H), const3),                        # ln1_g
        pl.BlockSpec((L, 1, H), const3),                        # ln1_b
        pl.BlockSpec((L, H, F), const3),                        # w1
        pl.BlockSpec((L, 1, F), const3),                        # b1
        pl.BlockSpec((L, F, H), const3),                        # w2
        pl.BlockSpec((L, 1, H), const3),                        # b2
        pl.BlockSpec((L, 1, H), const3),                        # ln2_g
        pl.BlockSpec((L, 1, H), const3),                        # ln2_b
    ]
    out_specs = pl.BlockSpec((GS, H), lambda g: (g, 0))

    # advisory cost estimate so XLA schedules the kernel against the JAX-side gathers
    flops = (L * B * S * (2 * H * 3 * H + 2 * H * H + 4 * H * F)   # QKV + out-proj + FFN
             + L * NG * NH * 4 * GS * GS * DH                      # attention scores + ctx
             + NG * 2 * GS * GS * H)                               # node averaging
    transcendentals = L * NG * NH * GS * GS + L * B * S * F        # softmax exp + GELU exp
    bytes_accessed = (sum(int(a.size) * a.dtype.itemsize for a in args)
                      + B * S * H * 4)

    out_full = pl.pallas_call(
        _encoder_group_kernel,
        out_shape=jax.ShapeDtypeStruct((B * S, H), jnp.float32),
        grid_spec=pltpu.PrefetchScalarGridSpec(
            num_scalar_prefetch=0,
            grid=(NG,),
            in_specs=in_specs,
            out_specs=out_specs),
        compiler_params=pltpu.CompilerParams(
            dimension_semantics=("parallel",)),
        cost_estimate=pl.CostEstimate(flops=flops,
                                      transcendentals=transcendentals,
                                      bytes_accessed=bytes_accessed),
    )(*args)

    # CLS rows (sequence position 0 of every batch element) sliced outside the kernel
    return out_full.reshape(B, S, H)[:, 0, :]


# ---------------------------------------------------------------------------
# Parameter init (deterministic, layer weights stacked along a leading L axis)
# ---------------------------------------------------------------------------
def init_params(key):
    def nrm(k, shape):
        return 0.02 * jax.random.normal(k, shape, dtype=jnp.float32)

    keys = jax.random.split(key, 3 + L)
    params = {
        "word_emb": nrm(keys[0], (VOCAB, H)),
        "pos_emb": nrm(keys[1], (MAX_POS, H)),
        "type_emb": nrm(keys[2], (2, H)),
        "emb_ln_g": jnp.ones((1, H), jnp.float32),
        "emb_ln_b": jnp.zeros((1, H), jnp.float32),
    }
    scale = 1.0 / math.sqrt(DH)          # softmax scale folded into the Q projection
    wqkv, wo, w1, w2 = [], [], [], []
    for li in range(L):
        ks = jax.random.split(keys[3 + li], 6)
        wq, wk, wv = nrm(ks[0], (H, H)), nrm(ks[1], (H, H)), nrm(ks[2], (H, H))
        wqkv.append(jnp.concatenate([wq * scale, wk, wv], axis=1))    # fused [H, 3H]
        wo.append(nrm(ks[3], (H, H)))
        w1.append(nrm(ks[4], (H, F)))
        w2.append(nrm(ks[5], (F, H)))
    params.update({
        "wqkv": jnp.stack(wqkv), "bqkv": jnp.zeros((L, 1, 3 * H), jnp.float32),
        "wo": jnp.stack(wo),     "bo": jnp.zeros((L, 1, H), jnp.float32),
        "ln1_g": jnp.ones((L, 1, H), jnp.float32),
        "ln1_b": jnp.zeros((L, 1, H), jnp.float32),
        "w1": jnp.stack(w1),     "b1": jnp.zeros((L, 1, F), jnp.float32),
        "w2": jnp.stack(w2),     "b2": jnp.zeros((L, 1, H), jnp.float32),
        "ln2_g": jnp.ones((L, 1, H), jnp.float32),
        "ln2_b": jnp.zeros((L, 1, H), jnp.float32),
    })
    return params


if __name__ == "__main__":
    key = jax.random.PRNGKey(0)
    pkey, ckey = jax.random.split(key)
    params = init_params(pkey)

    # position_idx convention (GraphCodeBERT): tokens >= 2, AST nodes == 0, padding == 1
    pos_pattern = jnp.array([2, 3, 4, 5, 6, 7, 8, 9, 10, 11, 0, 0, 0, 1, 1, 1],
                            dtype=jnp.int32)
    position_idx = jnp.tile(pos_pattern[None, :], (B, 1))                 # [B, S]
    code_inputs = jax.random.randint(ckey, (B, S), 0, VOCAB, dtype=jnp.int32)

    valid = (position_idx != 1)                                           # non-padding
    attn_mask = (valid[:, :, None] & valid[:, None, :])                   # [B, S, S] bool

    code_vec = fused_forward(params, code_inputs, attn_mask, position_idx)
    jax.block_until_ready(code_vec)
    assert code_vec.shape == (B, H) and code_vec.dtype == jnp.float32
    # TODO(synk): the encoder here is a small synthetic RoBERTa stack; the real
    # GraphCodeBERT graph-guided attention mask must be supplied via attn_mask.
    print("KERNEL_OK")
</pallas_src>

<mosaic_0001>
module attributes {stable_mosaic.version = 11 : i64} {
  func.func @_encoder_group_kernel(%arg0: i32, %arg1: memref<128x1xi32, #tpu.memory_space<vmem>>, %arg2: memref<1x1x128xi32, #tpu.memory_space<vmem>>, %arg3: memref<1x128x128xf32, #tpu.memory_space<vmem>>, %arg4: memref<128x32xf32, #tpu.memory_space<vmem>>, %arg5: memref<128x32xf32, #tpu.memory_space<vmem>>, %arg6: memref<128x32xf32, #tpu.memory_space<vmem>>, %arg7: memref<1x32xf32, #tpu.memory_space<vmem>>, %arg8: memref<1x32xf32, #tpu.memory_space<vmem>>, %arg9: memref<2x32x96xf32, #tpu.memory_space<vmem>>, %arg10: memref<2x1x96xf32, #tpu.memory_space<vmem>>, %arg11: memref<2x32x32xf32, #tpu.memory_space<vmem>>, %arg12: memref<2x1x32xf32, #tpu.memory_space<vmem>>, %arg13: memref<2x1x32xf32, #tpu.memory_space<vmem>>, %arg14: memref<2x1x32xf32, #tpu.memory_space<vmem>>, %arg15: memref<2x32x64xf32, #tpu.memory_space<vmem>>, %arg16: memref<2x1x64xf32, #tpu.memory_space<vmem>>, %arg17: memref<2x64x32xf32, #tpu.memory_space<vmem>>, %arg18: memref<2x1x32xf32, #tpu.memory_space<vmem>>, %arg19: memref<2x1x32xf32, #tpu.memory_space<vmem>>, %arg20: memref<2x1x32xf32, #tpu.memory_space<vmem>>, %arg21: memref<128x32xf32, #tpu.memory_space<vmem>>) attributes {dimension_semantics = [#tpu.dimension_semantics<parallel>], iteration_bounds = array<i64: 2>, scalar_prefetch = 0 : i64, scratch_operands = 0 : i64, tpu.core_type = #tpu.core_type<tc>, window_params = [{transform_indices = @transform_0, window_bounds = array<i64: 128, 1>}, {transform_indices = @transform_1, window_bounds = array<i64: 1, 1, 128>}, {transform_indices = @transform_2, window_bounds = array<i64: 1, 128, 128>}, {transform_indices = @transform_3, window_bounds = array<i64: 128, 32>}, {transform_indices = @transform_4, window_bounds = array<i64: 128, 32>}, {transform_indices = @transform_5, window_bounds = array<i64: 128, 32>}, {pipeline_mode = #tpu.pipeline_mode<synchronous>, transform_indices = @transform_6, window_bounds = array<i64: 1, 32>}, {pipeline_mode = #tpu.pipeline_mode<synchronous>, transform_indices = @transform_7, window_bounds = array<i64: 1, 32>}, {pipeline_mode = #tpu.pipeline_mode<synchronous>, transform_indices = @transform_8, window_bounds = array<i64: 2, 32, 96>}, {pipeline_mode = #tpu.pipeline_mode<synchronous>, transform_indices = @transform_9, window_bounds = array<i64: 2, 1, 96>}, {pipeline_mode = #tpu.pipeline_mode<synchronous>, transform_indices = @transform_10, window_bounds = array<i64: 2, 32, 32>}, {pipeline_mode = #tpu.pipeline_mode<synchronous>, transform_indices = @transform_11, window_bounds = array<i64: 2, 1, 32>}, {pipeline_mode = #tpu.pipeline_mode<synchronous>, transform_indices = @transform_12, window_bounds = array<i64: 2, 1, 32>}, {pipeline_mode = #tpu.pipeline_mode<synchronous>, transform_indices = @transform_13, window_bounds = array<i64: 2, 1, 32>}, {pipeline_mode = #tpu.pipeline_mode<synchronous>, transform_indices = @transform_14, window_bounds = array<i64: 2, 32, 64>}, {pipeline_mode = #tpu.pipeline_mode<synchronous>, transform_indices = @transform_15, window_bounds = array<i64: 2, 1, 64>}, {pipeline_mode = #tpu.pipeline_mode<synchronous>, transform_indices = @transform_16, window_bounds = array<i64: 2, 64, 32>}, {pipeline_mode = #tpu.pipeline_mode<synchronous>, transform_indices = @transform_17, window_bounds = array<i64: 2, 1, 32>}, {pipeline_mode = #tpu.pipeline_mode<synchronous>, transform_indices = @transform_18, window_bounds = array<i64: 2, 1, 32>}, {pipeline_mode = #tpu.pipeline_mode<synchronous>, transform_indices = @transform_19, window_bounds = array<i64: 2, 1, 32>}, {transform_indices = @transform_20, window_bounds = array<i64: 128, 32>}]} {
    %c0 = arith.constant 0 : index
    %c0_0 = arith.constant 0 : index
    %0 = vector.load %arg1[%c0, %c0_0] : memref<128x1xi32, #tpu.memory_space<vmem>>, vector<128x1xi32>
    %c0_i32 = arith.constant 0 : i32
    %1 = vector.broadcast %c0_i32 : i32 to vector<128x1xi32>
    %2 = arith.cmpi eq, %0, %1 : vector<128x1xi32>
    %3 = arith.extui %2 : vector<128x1xi1> to vector<128x1xi32>
    %4 = arith.sitofp %3 : vector<128x1xi32> to vector<128x1xf32>
    %c0_1 = arith.constant 0 : index
    %c0_2 = arith.constant 0 : index
    %c0_3 = arith.constant 0 : index
    %5 = vector.load %arg2[%c0_1, %c0_2, %c0_3] : memref<1x1x128xi32, #tpu.memory_space<vmem>>, vector<1x1x128xi32>
    %6 = vector.shape_cast %5 : vector<1x1x128xi32> to vector<1x128xi32>
    %c2_i32 = arith.constant 2 : i32
    %7 = vector.broadcast %c2_i32 : i32 to vector<1x128xi32>
    %8 = arith.cmpi sge, %6, %7 : vector<1x128xi32>
    %9 = arith.extui %8 : vector<1x128xi1> to vector<1x128xi32>
    %10 = arith.sitofp %9 : vector<1x128xi32> to vector<1x128xf32>
    %c0_4 = arith.constant 0 : index
    %c0_5 = arith.constant 0 : index
    %c0_6 = arith.constant 0 : index
    %11 = vector.load %arg3[%c0_4, %c0_5, %c0_6] : memref<1x128x128xf32, #tpu.memory_space<vmem>>, vector<1x128x128xf32>
    %12 = vector.shape_cast %11 : vector<1x128x128xf32> to vector<128x128xf32>
    %cst = arith.constant 1.000000e+00 : f32
    %13 = vector.broadcast %cst : f32 to vector<128x128xf32>
    %14 = arith.subf %13, %12 : vector<128x128xf32>
    %cst_7 = arith.constant -1.000000e+09 : f32
    %15 = vector.broadcast %cst_7 : f32 to vector<128x128xf32>
    %16 = arith.mulf %14, %15 : vector<128x128xf32>
    %c0_8 = arith.constant 0 : index
    %c0_9 = arith.constant 0 : index
    %17 = vector.load %arg4[%c0_8, %c0_9] : memref<128x32xf32, #tpu.memory_space<vmem>>, vector<128x32xf32>
    %18 = vector.broadcast %4 : vector<128x1xf32> to vector<128x128xf32>
    %19 = vector.broadcast %10 : vector<1x128xf32> to vector<128x128xf32>
    %20 = arith.mulf %18, %19 : vector<128x128xf32>
    %21 = arith.mulf %20, %12 : vector<128x128xf32>
    %cst_10 = arith.constant dense<0.000000e+00> : vector<128xf32>
    %22 = vector.multi_reduction <add>, %21, %cst_10 [1] : vector<128x128xf32> to vector<128xf32>
    %23 = vector.shape_cast %22 : vector<128xf32> to vector<128x1xf32>
    %cst_11 = arith.constant 1.000000e-10 : f32
    %24 = vector.broadcast %cst_11 : f32 to vector<128x1xf32>
    %25 = arith.addf %23, %24 : vector<128x1xf32>
    %26 = vector.broadcast %25 : vector<128x1xf32> to vector<128x128xf32>
    %27 = arith.divf %21, %26 : vector<128x128xf32>
    %cst_12 = arith.constant dense<0.000000e+00> : vector<128x32xf32>
    %28 = tpu.matmul %27, %17, %cst_12 {dimension_numbers = #tpu.dot_dimension_numbers<[1], [0], [0], [1], [0, 0, 1, 1], [], []>} : vector<128x128xf32>, vector<128x32xf32>, vector<128x32xf32> -> vector<128x32xf32>
    %cst_13 = arith.constant 1.000000e+00 : f32
    %29 = vector.broadcast %cst_13 : f32 to vector<128x1xf32>
    %30 = arith.subf %29, %4 : vector<128x1xf32>
    %31 = vector.broadcast %30 : vector<128x1xf32> to vector<128x32xf32>
    %32 = arith.mulf %17, %31 : vector<128x32xf32>
    %33 = vector.broadcast %4 : vector<128x1xf32> to vector<128x32xf32>
    %34 = arith.mulf %28, %33 : vector<128x32xf32>
    %35 = arith.addf %32, %34 : vector<128x32xf32>
    %c0_14 = arith.constant 0 : index
    %c0_15 = arith.constant 0 : index
    %36 = vector.load %arg5[%c0_14, %c0_15] : memref<128x32xf32, #tpu.memory_space<vmem>>, vector<128x32xf32>
    %37 = arith.addf %35, %36 : vector<128x32xf32>
    %c0_16 = arith.constant 0 : index
    %c0_17 = arith.constant 0 : index
    %38 = vector.load %arg6[%c0_16, %c0_17] : memref<128x32xf32, #tpu.memory_space<vmem>>, vector<128x32xf32>
    %39 = arith.addf %37, %38 : vector<128x32xf32>
    %c0_18 = arith.constant 0 : index
    %c0_19 = arith.constant 0 : index
    %40 = vector.load %arg7[%c0_18, %c0_19] : memref<1x32xf32, #tpu.memory_space<vmem>>, vector<1x32xf32>
    %c0_20 = arith.constant 0 : index
    %c0_21 = arith.constant 0 : index
    %41 = vector.load %arg8[%c0_20, %c0_21] : memref<1x32xf32, #tpu.memory_space<vmem>>, vector<1x32xf32>
    %cst_22 = arith.constant dense<0.000000e+00> : vector<128xf32>
    %42 = vector.multi_reduction <add>, %39, %cst_22 [1] : vector<128x32xf32> to vector<128xf32>
    %43 = vector.shape_cast %42 : vector<128xf32> to vector<128x1xf32>
    %cst_23 = arith.constant 3.200000e+01 : f32
    %44 = vector.broadcast %cst_23 : f32 to vector<128x1xf32>
    %45 = arith.divf %43, %44 : vector<128x1xf32>
    %46 = vector.broadcast %45 : vector<128x1xf32> to vector<128x32xf32>
    %47 = arith.subf %39, %46 : vector<128x32xf32>
    %48 = arith.mulf %47, %47 : vector<128x32xf32>
    %cst_24 = arith.constant dense<0.000000e+00> : vector<128xf32>
    %49 = vector.multi_reduction <add>, %48, %cst_24 [1] : vector<128x32xf32> to vector<128xf32>
    %50 = vector.shape_cast %49 : vector<128xf32> to vector<128x1xf32>
    %cst_25 = arith.constant 3.200000e+01 : f32
    %51 = vector.broadcast %cst_25 : f32 to vector<128x1xf32>
    %52 = arith.divf %50, %51 : vector<128x1xf32>
    %53 = vector.broadcast %45 : vector<128x1xf32> to vector<128x32xf32>
    %54 = arith.subf %39, %53 : vector<128x32xf32>
    %cst_26 = arith.constant 9.99999996E-13 : f32
    %55 = vector.broadcast %cst_26 : f32 to vector<128x1xf32>
    %56 = arith.addf %52, %55 : vector<128x1xf32>
    %57 = math.rsqrt %56 : vector<128x1xf32>
    %58 = vector.broadcast %57 : vector<128x1xf32> to vector<128x32xf32>
    %59 = arith.mulf %54, %58 : vector<128x32xf32>
    %60 = vector.broadcast %40 : vector<1x32xf32> to vector<128x32xf32>
    %61 = arith.mulf %59, %60 : vector<128x32xf32>
    %62 = vector.broadcast %41 : vector<1x32xf32> to vector<128x32xf32>
    %63 = arith.addf %61, %62 : vector<128x32xf32>
    %c0_27 = arith.constant 0 : index
    %c0_28 = arith.constant 0 : index
    %c0_29 = arith.constant 0 : index
    %64 = vector.load %arg9[%c0_27, %c0_28, %c0_29] : memref<2x32x96xf32, #tpu.memory_space<vmem>>, vector<1x32x96xf32>
    %65 = vector.shape_cast %64 : vector<1x32x96xf32> to vector<32x96xf32>
    %cst_30 = arith.constant dense<0.000000e+00> : vector<128x96xf32>
    %66 = tpu.matmul %63, %65, %cst_30 {dimension_numbers = #tpu.dot_dimension_numbers<[1], [0], [0], [1], [0, 0, 1, 1], [], []>} : vector<128x32xf32>, vector<32x96xf32>, vector<128x96xf32> -> vector<128x96xf32>
    %c0_31 = arith.constant 0 : index
    %c0_32 = arith.constant 0 : index
    %c0_33 = arith.constant 0 : index
    %67 = vector.load %arg10[%c0_31, %c0_32, %c0_33] : memref<2x1x96xf32, #tpu.memory_space<vmem>>, vector<1x1x96xf32>
    %68 = vector.shape_cast %67 : vector<1x1x96xf32> to vector<1x96xf32>
    %69 = vector.broadcast %68 : vector<1x96xf32> to vector<128x96xf32>
    %70 = arith.addf %66, %69 : vector<128x96xf32>
    %71 = vector.extract_strided_slice %70 {offsets = [0, 0], sizes = [128, 32], strides = [1, 1]} : vector<128x96xf32> to vector<128x32xf32>
    %72 = vector.extract_strided_slice %70 {offsets = [0, 32], sizes = [128, 32], strides = [1, 1]} : vector<128x96xf32> to vector<128x32xf32>
    %73 = vector.extract_strided_slice %70 {offsets = [0, 64], sizes = [128, 32], strides = [1, 1]} : vector<128x96xf32> to vector<128x32xf32>
    %74 = vector.extract_strided_slice %71 {offsets = [0, 0], sizes = [128, 16], strides = [1, 1]} : vector<128x32xf32> to vector<128x16xf32>
    %75 = vector.extract_strided_slice %72 {offsets = [0, 0], sizes = [128, 16], strides = [1, 1]} : vector<128x32xf32> to vector<128x16xf32>
    %76 = vector.extract_strided_slice %73 {offsets = [0, 0], sizes = [128, 16], strides = [1, 1]} : vector<128x32xf32> to vector<128x16xf32>
    %cst_34 = arith.constant dense<0.000000e+00> : vector<128x128xf32>
    %77 = tpu.matmul %74, %75, %cst_34 {dimension_numbers = #tpu.dot_dimension_numbers<[1], [1], [0], [0], [0, 0, 1, 0], [], []>} : vector<128x16xf32>, vector<128x16xf32>, vector<128x128xf32> -> vector<128x128xf32>
    %78 = arith.addf %77, %16 : vector<128x128xf32>
    %cst_35 = arith.constant dense<0xFF800000> : vector<128xf32>
    %79 = vector.multi_reduction <maximumf>, %78, %cst_35 [1] : vector<128x128xf32> to vector<128xf32>
    %80 = vector.shape_cast %79 : vector<128xf32> to vector<128x1xf32>
    %81 = vector.broadcast %80 : vector<128x1xf32> to vector<128x128xf32>
    %82 = arith.subf %78, %81 : vector<128x128xf32>
    %83 = math.exp %82 : vector<128x128xf32>
    %cst_36 = arith.constant dense<0.000000e+00> : vector<128xf32>
    %84 = vector.multi_reduction <add>, %83, %cst_36 [1] : vector<128x128xf32> to vector<128xf32>
    %85 = vector.shape_cast %84 : vector<128xf32> to vector<128x1xf32>
    %86 = vector.broadcast %85 : vector<128x1xf32> to vector<128x128xf32>
    %87 = arith.divf %83, %86 : vector<128x128xf32>
    %cst_37 = arith.constant dense<0.000000e+00> : vector<128x16xf32>
    %88 = tpu.matmul %87, %76, %cst_37 {dimension_numbers = #tpu.dot_dimension_numbers<[1], [0], [0], [1], [0, 0, 1, 1], [], []>} : vector<128x128xf32>, vector<128x16xf32>, vector<128x16xf32> -> vector<128x16xf32>
    %89 = vector.extract_strided_slice %71 {offsets = [0, 16], sizes = [128, 16], strides = [1, 1]} : vector<128x32xf32> to vector<128x16xf32>
    %90 = vector.extract_strided_slice %72 {offsets = [0, 16], sizes = [128, 16], strides = [1, 1]} : vector<128x32xf32> to vector<128x16xf32>
    %91 = vector.extract_strided_slice %73 {offsets = [0, 16], sizes = [128, 16], strides = [1, 1]} : vector<128x32xf32> to vector<128x16xf32>
    %cst_38 = arith.constant dense<0.000000e+00> : vector<128x128xf32>
    %92 = tpu.matmul %89, %90, %cst_38 {dimension_numbers = #tpu.dot_dimension_numbers<[1], [1], [0], [0], [0, 0, 1, 0], [], []>} : vector<128x16xf32>, vector<128x16xf32>, vector<128x128xf32> -> vector<128x128xf32>
    %93 = arith.addf %92, %16 : vector<128x128xf32>
    %cst_39 = arith.constant dense<0xFF800000> : vector<128xf32>
    %94 = vector.multi_reduction <maximumf>, %93, %cst_39 [1] : vector<128x128xf32> to vector<128xf32>
    %95 = vector.shape_cast %94 : vector<128xf32> to vector<128x1xf32>
    %96 = vector.broadcast %95 : vector<128x1xf32> to vector<128x128xf32>
    %97 = arith.subf %93, %96 : vector<128x128xf32>
    %98 = math.exp %97 : vector<128x128xf32>
    %cst_40 = arith.constant dense<0.000000e+00> : vector<128xf32>
    %99 = vector.multi_reduction <add>, %98, %cst_40 [1] : vector<128x128xf32> to vector<128xf32>
    %100 = vector.shape_cast %99 : vector<128xf32> to vector<128x1xf32>
    %101 = vector.broadcast %100 : vector<128x1xf32> to vector<128x128xf32>
    %102 = arith.divf %98, %101 : vector<128x128xf32>
    %cst_41 = arith.constant dense<0.000000e+00> : vector<128x16xf32>
    %103 = tpu.matmul %102, %91, %cst_41 {dimension_numbers = #tpu.dot_dimension_numbers<[1], [0], [0], [1], [0, 0, 1, 1], [], []>} : vector<128x128xf32>, vector<128x16xf32>, vector<128x16xf32> -> vector<128x16xf32>
    %104 = tpu.concatenate %88, %103 in 1 : vector<128x16xf32>, vector<128x16xf32> -> vector<128x32xf32>
    %c0_42 = arith.constant 0 : index
    %c0_43 = arith.constant 0 : index
    %c0_44 = arith.constant 0 : index
    %105 = vector.load %arg11[%c0_42, %c0_43, %c0_44] : memref<2x32x32xf32, #tpu.memory_space<vmem>>, vector<1x32x32xf32>
    %106 = vector.shape_cast %105 : vector<1x32x32xf32> to vector<32x32xf32>
    %cst_45 = arith.constant dense<0.000000e+00> : vector<128x32xf32>
    %107 = tpu.matmul %104, %106, %cst_45 {dimension_numbers = #tpu.dot_dimension_numbers<[1], [0], [0], [1], [0, 0, 1, 1], [], []>} : vector<128x32xf32>, vector<32x32xf32>, vector<128x32xf32> -> vector<128x32xf32>
    %c0_46 = arith.constant 0 : index
    %c0_47 = arith.constant 0 : index
    %c0_48 = arith.constant 0 : index
    %108 = vector.load %arg12[%c0_46, %c0_47, %c0_48] : memref<2x1x32xf32, #tpu.memory_space<vmem>>, vector<1x1x32xf32>
    %109 = vector.shape_cast %108 : vector<1x1x32xf32> to vector<1x32xf32>
    %110 = vector.broadcast %109 : vector<1x32xf32> to vector<128x32xf32>
    %111 = arith.addf %107, %110 : vector<128x32xf32>
    %112 = arith.addf %63, %111 : vector<128x32xf32>
    %c0_49 = arith.constant 0 : index
    %c0_50 = arith.constant 0 : index
    %c0_51 = arith.constant 0 : index
    %113 = vector.load %arg13[%c0_49, %c0_50, %c0_51] : memref<2x1x32xf32, #tpu.memory_space<vmem>>, vector<1x1x32xf32>
    %114 = vector.shape_cast %113 : vector<1x1x32xf32> to vector<1x32xf32>
    %c0_52 = arith.constant 0 : index
    %c0_53 = arith.constant 0 : index
    %c0_54 = arith.constant 0 : index
    %115 = vector.load %arg14[%c0_52, %c0_53, %c0_54] : memref<2x1x32xf32, #tpu.memory_space<vmem>>, vector<1x1x32xf32>
    %116 = vector.shape_cast %115 : vector<1x1x32xf32> to vector<1x32xf32>
    %cst_55 = arith.constant dense<0.000000e+00> : vector<128xf32>
    %117 = vector.multi_reduction <add>, %112, %cst_55 [1] : vector<128x32xf32> to vector<128xf32>
    %118 = vector.shape_cast %117 : vector<128xf32> to vector<128x1xf32>
    %cst_56 = arith.constant 3.200000e+01 : f32
    %119 = vector.broadcast %cst_56 : f32 to vector<128x1xf32>
    %120 = arith.divf %118, %119 : vector<128x1xf32>
    %121 = vector.broadcast %120 : vector<128x1xf32> to vector<128x32xf32>
    %122 = arith.subf %112, %121 : vector<128x32xf32>
    %123 = arith.mulf %122, %122 : vector<128x32xf32>
    %cst_57 = arith.constant dense<0.000000e+00> : vector<128xf32>
    %124 = vector.multi_reduction <add>, %123, %cst_57 [1] : vector<128x32xf32> to vector<128xf32>
    %125 = vector.shape_cast %124 : vector<128xf32> to vector<128x1xf32>
    %cst_58 = arith.constant 3.200000e+01 : f32
    %126 = vector.broadcast %cst_58 : f32 to vector<128x1xf32>
    %127 = arith.divf %125, %126 : vector<128x1xf32>
    %128 = vector.broadcast %120 : vector<128x1xf32> to vector<128x32xf32>
    %129 = arith.subf %112, %128 : vector<128x32xf32>
    %cst_59 = arith.constant 9.99999996E-13 : f32
    %130 = vector.broadcast %cst_59 : f32 to vector<128x1xf32>
    %131 = arith.addf %127, %130 : vector<128x1xf32>
    %132 = math.rsqrt %131 : vector<128x1xf32>
    %133 = vector.broadcast %132 : vector<128x1xf32> to vector<128x32xf32>
    %134 = arith.mulf %129, %133 : vector<128x32xf32>
    %135 = vector.broadcast %114 : vector<1x32xf32> to vector<128x32xf32>
    %136 = arith.mulf %134, %135 : vector<128x32xf32>
    %137 = vector.broadcast %116 : vector<1x32xf32> to vector<128x32xf32>
    %138 = arith.addf %136, %137 : vector<128x32xf32>
    %c0_60 = arith.constant 0 : index
    %c0_61 = arith.constant 0 : index
    %c0_62 = arith.constant 0 : index
    %139 = vector.load %arg15[%c0_60, %c0_61, %c0_62] : memref<2x32x64xf32, #tpu.memory_space<vmem>>, vector<1x32x64xf32>
    %140 = vector.shape_cast %139 : vector<1x32x64xf32> to vector<32x64xf32>
    %cst_63 = arith.constant dense<0.000000e+00> : vector<128x64xf32>
    %141 = tpu.matmul %138, %140, %cst_63 {dimension_numbers = #tpu.dot_dimension_numbers<[1], [0], [0], [1], [0, 0, 1, 1], [], []>} : vector<128x32xf32>, vector<32x64xf32>, vector<128x64xf32> -> vector<128x64xf32>
    %c0_64 = arith.constant 0 : index
    %c0_65 = arith.constant 0 : index
    %c0_66 = arith.constant 0 : index
    %142 = vector.load %arg16[%c0_64, %c0_65, %c0_66] : memref<2x1x64xf32, #tpu.memory_space<vmem>>, vector<1x1x64xf32>
    %143 = vector.shape_cast %142 : vector<1x1x64xf32> to vector<1x64xf32>
    %144 = vector.broadcast %143 : vector<1x64xf32> to vector<128x64xf32>
    %145 = arith.addf %141, %144 : vector<128x64xf32>
    %cst_67 = arith.constant 5.000000e-01 : f32
    %146 = vector.broadcast %cst_67 : f32 to vector<128x64xf32>
    %147 = arith.mulf %146, %145 : vector<128x64xf32>
    %cst_68 = arith.constant 0.707106769 : f32
    %148 = vector.broadcast %cst_68 : f32 to vector<128x64xf32>
    %149 = arith.mulf %145, %148 : vector<128x64xf32>
    %cst_69 = arith.constant 0.000000e+00 : f32
    %150 = vector.broadcast %cst_69 : f32 to vector<128x64xf32>
    %151 = arith.cmpf oge, %149, %150 : vector<128x64xf32>
    %cst_70 = arith.constant 1.000000e+00 : f32
    %cst_71 = arith.constant -1.000000e+00 : f32
    %152 = vector.broadcast %cst_70 : f32 to vector<128x64xf32>
    %153 = vector.broadcast %cst_71 : f32 to vector<128x64xf32>
    %154 = arith.select %151, %152, %153 : vector<128x64xi1>, vector<128x64xf32>
    %155 = math.absf %149 : vector<128x64xf32>
    %cst_72 = arith.constant 0.327591091 : f32
    %156 = vector.broadcast %cst_72 : f32 to vector<128x64xf32>
    %157 = arith.mulf %156, %155 : vector<128x64xf32>
    %cst_73 = arith.constant 1.000000e+00 : f32
    %158 = vector.broadcast %cst_73 : f32 to vector<128x64xf32>
    %159 = arith.addf %158, %157 : vector<128x64xf32>
    %cst_74 = arith.constant 1.000000e+00 : f32
    %160 = vector.broadcast %cst_74 : f32 to vector<128x64xf32>
    %161 = arith.divf %160, %159 : vector<128x64xf32>
    %cst_75 = arith.constant 1.06140542 : f32
    %162 = vector.broadcast %cst_75 : f32 to vector<128x64xf32>
    %163 = arith.mulf %162, %161 : vector<128x64xf32>
    %cst_76 = arith.constant -1.45315206 : f32
    %164 = vector.broadcast %cst_76 : f32 to vector<128x64xf32>
    %165 = arith.addf %163, %164 : vector<128x64xf32>
    %166 = arith.mulf %165, %161 : vector<128x64xf32>
    %cst_77 = arith.constant 1.42141378 : f32
    %167 = vector.broadcast %cst_77 : f32 to vector<128x64xf32>
    %168 = arith.addf %166, %167 : vector<128x64xf32>
    %169 = arith.mulf %168, %161 : vector<128x64xf32>
    %cst_78 = arith.constant -0.284496725 : f32
    %170 = vector.broadcast %cst_78 : f32 to vector<128x64xf32>
    %171 = arith.addf %169, %170 : vector<128x64xf32>
    %172 = arith.mulf %171, %161 : vector<128x64xf32>
    %cst_79 = arith.constant 0.254829586 : f32
    %173 = vector.broadcast %cst_79 : f32 to vector<128x64xf32>
    %174 = arith.addf %172, %173 : vector<128x64xf32>
    %175 = arith.mulf %174, %161 : vector<128x64xf32>
    %cst_80 = arith.constant 0.000000e+00 : f32
    %176 = vector.broadcast %cst_80 : f32 to vector<128x64xf32>
    %177 = arith.subf %176, %155 : vector<128x64xf32>
    %178 = arith.mulf %177, %155 : vector<128x64xf32>
    %179 = math.exp %178 : vector<128x64xf32>
    %180 = arith.mulf %175, %179 : vector<128x64xf32>
    %cst_81 = arith.constant 1.000000e+00 : f32
    %181 = vector.broadcast %cst_81 : f32 to vector<128x64xf32>
    %182 = arith.subf %181, %180 : vector<128x64xf32>
    %183 = arith.mulf %154, %182 : vector<128x64xf32>
    %cst_82 = arith.constant 1.000000e+00 : f32
    %184 = vector.broadcast %cst_82 : f32 to vector<128x64xf32>
    %185 = arith.addf %184, %183 : vector<128x64xf32>
    %186 = arith.mulf %147, %185 : vector<128x64xf32>
    %c0_83 = arith.constant 0 : index
    %c0_84 = arith.constant 0 : index
    %c0_85 = arith.constant 0 : index
    %187 = vector.load %arg17[%c0_83, %c0_84, %c0_85] : memref<2x64x32xf32, #tpu.memory_space<vmem>>, vector<1x64x32xf32>
    %188 = vector.shape_cast %187 : vector<1x64x32xf32> to vector<64x32xf32>
    %cst_86 = arith.constant dense<0.000000e+00> : vector<128x32xf32>
    %189 = tpu.matmul %186, %188, %cst_86 {dimension_numbers = #tpu.dot_dimension_numbers<[1], [0], [0], [1], [0, 0, 1, 1], [], []>} : vector<128x64xf32>, vector<64x32xf32>, vector<128x32xf32> -> vector<128x32xf32>
    %c0_87 = arith.constant 0 : index
    %c0_88 = arith.constant 0 : index
    %c0_89 = arith.constant 0 : index
    %190 = vector.load %arg18[%c0_87, %c0_88, %c0_89] : memref<2x1x32xf32, #tpu.memory_space<vmem>>, vector<1x1x32xf32>
    %191 = vector.shape_cast %190 : vector<1x1x32xf32> to vector<1x32xf32>
    %192 = vector.broadcast %191 : vector<1x32xf32> to vector<128x32xf32>
    %193 = arith.addf %189, %192 : vector<128x32xf32>
    %194 = arith.addf %138, %193 : vector<128x32xf32>
    %c0_90 = arith.constant 0 : index
    %c0_91 = arith.constant 0 : index
    %c0_92 = arith.constant 0 : index
    %195 = vector.load %arg19[%c0_90, %c0_91, %c0_92] : memref<2x1x32xf32, #tpu.memory_space<vmem>>, vector<1x1x32xf32>
    %196 = vector.shape_cast %195 : vector<1x1x32xf32> to vector<1x32xf32>
    %c0_93 = arith.constant 0 : index
    %c0_94 = arith.constant 0 : index
    %c0_95 = arith.constant 0 : index
    %197 = vector.load %arg20[%c0_93, %c0_94, %c0_95] : memref<2x1x32xf32, #tpu.memory_space<vmem>>, vector<1x1x32xf32>
    %198 = vector.shape_cast %197 : vector<1x1x32xf32> to vector<1x32xf32>
    %cst_96 = arith.constant dense<0.000000e+00> : vector<128xf32>
    %199 = vector.multi_reduction <add>, %194, %cst_96 [1] : vector<128x32xf32> to vector<128xf32>
    %200 = vector.shape_cast %199 : vector<128xf32> to vector<128x1xf32>
    %cst_97 = arith.constant 3.200000e+01 : f32
    %201 = vector.broadcast %cst_97 : f32 to vector<128x1xf32>
    %202 = arith.divf %200, %201 : vector<128x1xf32>
    %203 = vector.broadcast %202 : vector<128x1xf32> to vector<128x32xf32>
    %204 = arith.subf %194, %203 : vector<128x32xf32>
    %205 = arith.mulf %204, %204 : vector<128x32xf32>
    %cst_98 = arith.constant dense<0.000000e+00> : vector<128xf32>
    %206 = vector.multi_reduction <add>, %205, %cst_98 [1] : vector<128x32xf32> to vector<128xf32>
    %207 = vector.shape_cast %206 : vector<128xf32> to vector<128x1xf32>
    %cst_99 = arith.constant 3.200000e+01 : f32
    %208 = vector.broadcast %cst_99 : f32 to vector<128x1xf32>
    %209 = arith.divf %207, %208 : vector<128x1xf32>
    %210 = vector.broadcast %202 : vector<128x1xf32> to vector<128x32xf32>
    %211 = arith.subf %194, %210 : vector<128x32xf32>
    %cst_100 = arith.constant 9.99999996E-13 : f32
    %212 = vector.broadcast %cst_100 : f32 to vector<128x1xf32>
    %213 = arith.addf %209, %212 : vector<128x1xf32>
    %214 = math.rsqrt %213 : vector<128x1xf32>
    %215 = vector.broadcast %214 : vector<128x1xf32> to vector<128x32xf32>
    %216 = arith.mulf %211, %215 : vector<128x32xf32>
    %217 = vector.broadcast %196 : vector<1x32xf32> to vector<128x32xf32>
    %218 = arith.mulf %216, %217 : vector<128x32xf32>
    %219 = vector.broadcast %198 : vector<1x32xf32> to vector<128x32xf32>
    %220 = arith.addf %218, %219 : vector<128x32xf32>
    %c1 = arith.constant 1 : index
    %c0_101 = arith.constant 0 : index
    %c0_102 = arith.constant 0 : index
    %221 = vector.load %arg9[%c1, %c0_101, %c0_102] : memref<2x32x96xf32, #tpu.memory_space<vmem>>, vector<1x32x96xf32>
    %222 = vector.shape_cast %221 : vector<1x32x96xf32> to vector<32x96xf32>
    %cst_103 = arith.constant dense<0.000000e+00> : vector<128x96xf32>
    %223 = tpu.matmul %220, %222, %cst_103 {dimension_numbers = #tpu.dot_dimension_numbers<[1], [0], [0], [1], [0, 0, 1, 1], [], []>} : vector<128x32xf32>, vector<32x96xf32>, vector<128x96xf32> -> vector<128x96xf32>
    %c1_104 = arith.constant 1 : index
    %c0_105 = arith.constant 0 : index
    %c0_106 = arith.constant 0 : index
    %224 = vector.load %arg10[%c1_104, %c0_105, %c0_106] : memref<2x1x96xf32, #tpu.memory_space<vmem>>, vector<1x1x96xf32>
    %225 = vector.shape_cast %224 : vector<1x1x96xf32> to vector<1x96xf32>
    %226 = vector.broadcast %225 : vector<1x96xf32> to vector<128x96xf32>
    %227 = arith.addf %223, %226 : vector<128x96xf32>
    %228 = vector.extract_strided_slice %227 {offsets = [0, 0], sizes = [128, 32], strides = [1, 1]} : vector<128x96xf32> to vector<128x32xf32>
    %229 = vector.extract_strided_slice %227 {offsets = [0, 32], sizes = [128, 32], strides = [1, 1]} : vector<128x96xf32> to vector<128x32xf32>
    %230 = vector.extract_strided_slice %227 {offsets = [0, 64], sizes = [128, 32], strides = [1, 1]} : vector<128x96xf32> to vector<128x32xf32>
    %231 = vector.extract_strided_slice %228 {offsets = [0, 0], sizes = [128, 16], strides = [1, 1]} : vector<128x32xf32> to vector<128x16xf32>
    %232 = vector.extract_strided_slice %229 {offsets = [0, 0], sizes = [128, 16], strides = [1, 1]} : vector<128x32xf32> to vector<128x16xf32>
    %233 = vector.extract_strided_slice %230 {offsets = [0, 0], sizes = [128, 16], strides = [1, 1]} : vector<128x32xf32> to vector<128x16xf32>
    %cst_107 = arith.constant dense<0.000000e+00> : vector<128x128xf32>
    %234 = tpu.matmul %231, %232, %cst_107 {dimension_numbers = #tpu.dot_dimension_numbers<[1], [1], [0], [0], [0, 0, 1, 0], [], []>} : vector<128x16xf32>, vector<128x16xf32>, vector<128x128xf32> -> vector<128x128xf32>
    %235 = arith.addf %234, %16 : vector<128x128xf32>
    %cst_108 = arith.constant dense<0xFF800000> : vector<128xf32>
    %236 = vector.multi_reduction <maximumf>, %235, %cst_108 [1] : vector<128x128xf32> to vector<128xf32>
    %237 = vector.shape_cast %236 : vector<128xf32> to vector<128x1xf32>
    %238 = vector.broadcast %237 : vector<128x1xf32> to vector<128x128xf32>
    %239 = arith.subf %235, %238 : vector<128x128xf32>
    %240 = math.exp %239 : vector<128x128xf32>
    %cst_109 = arith.constant dense<0.000000e+00> : vector<128xf32>
    %241 = vector.multi_reduction <add>, %240, %cst_109 [1] : vector<128x128xf32> to vector<128xf32>
    %242 = vector.shape_cast %241 : vector<128xf32> to vector<128x1xf32>
    %243 = vector.broadcast %242 : vector<128x1xf32> to vector<128x128xf32>
    %244 = arith.divf %240, %243 : vector<128x128xf32>
    %cst_110 = arith.constant dense<0.000000e+00> : vector<128x16xf32>
    %245 = tpu.matmul %244, %233, %cst_110 {dimension_numbers = #tpu.dot_dimension_numbers<[1], [0], [0], [1], [0, 0, 1, 1], [], []>} : vector<128x128xf32>, vector<128x16xf32>, vector<128x16xf32> -> vector<128x16xf32>
    %246 = vector.extract_strided_slice %228 {offsets = [0, 16], sizes = [128, 16], strides = [1, 1]} : vector<128x32xf32> to vector<128x16xf32>
    %247 = vector.extract_strided_slice %229 {offsets = [0, 16], sizes = [128, 16], strides = [1, 1]} : vector<128x32xf32> to vector<128x16xf32>
    %248 = vector.extract_strided_slice %230 {offsets = [0, 16], sizes = [128, 16], strides = [1, 1]} : vector<128x32xf32> to vector<128x16xf32>
    %cst_111 = arith.constant dense<0.000000e+00> : vector<128x128xf32>
    %249 = tpu.matmul %246, %247, %cst_111 {dimension_numbers = #tpu.dot_dimension_numbers<[1], [1], [0], [0], [0, 0, 1, 0], [], []>} : vector<128x16xf32>, vector<128x16xf32>, vector<128x128xf32> -> vector<128x128xf32>
    %250 = arith.addf %249, %16 : vector<128x128xf32>
    %cst_112 = arith.constant dense<0xFF800000> : vector<128xf32>
    %251 = vector.multi_reduction <maximumf>, %250, %cst_112 [1] : vector<128x128xf32> to vector<128xf32>
    %252 = vector.shape_cast %251 : vector<128xf32> to vector<128x1xf32>
    %253 = vector.broadcast %252 : vector<128x1xf32> to vector<128x128xf32>
    %254 = arith.subf %250, %253 : vector<128x128xf32>
    %255 = math.exp %254 : vector<128x128xf32>
    %cst_113 = arith.constant dense<0.000000e+00> : vector<128xf32>
    %256 = vector.multi_reduction <add>, %255, %cst_113 [1] : vector<128x128xf32> to vector<128xf32>
    %257 = vector.shape_cast %256 : vector<128xf32> to vector<128x1xf32>
    %258 = vector.broadcast %257 : vector<128x1xf32> to vector<128x128xf32>
    %259 = arith.divf %255, %258 : vector<128x128xf32>
    %cst_114 = arith.constant dense<0.000000e+00> : vector<128x16xf32>
    %260 = tpu.matmul %259, %248, %cst_114 {dimension_numbers = #tpu.dot_dimension_numbers<[1], [0], [0], [1], [0, 0, 1, 1], [], []>} : vector<128x128xf32>, vector<128x16xf32>, vector<128x16xf32> -> vector<128x16xf32>
    %261 = tpu.concatenate %245, %260 in 1 : vector<128x16xf32>, vector<128x16xf32> -> vector<128x32xf32>
    %c1_115 = arith.constant 1 : index
    %c0_116 = arith.constant 0 : index
    %c0_117 = arith.constant 0 : index
    %262 = vector.load %arg11[%c1_115, %c0_116, %c0_117] : memref<2x32x32xf32, #tpu.memory_space<vmem>>, vector<1x32x32xf32>
    %263 = vector.shape_cast %262 : vector<1x32x32xf32> to vector<32x32xf32>
    %cst_118 = arith.constant dense<0.000000e+00> : vector<128x32xf32>
    %264 = tpu.matmul %261, %263, %cst_118 {dimension_numbers = #tpu.dot_dimension_numbers<[1], [0], [0], [1], [0, 0, 1, 1], [], []>} : vector<128x32xf32>, vector<32x32xf32>, vector<128x32xf32> -> vector<128x32xf32>
    %c1_119 = arith.constant 1 : index
    %c0_120 = arith.constant 0 : index
    %c0_121 = arith.constant 0 : index
    %265 = vector.load %arg12[%c1_119, %c0_120, %c0_121] : memref<2x1x32xf32, #tpu.memory_space<vmem>>, vector<1x1x32xf32>
    %266 = vector.shape_cast %265 : vector<1x1x32xf32> to vector<1x32xf32>
    %267 = vector.broadcast %266 : vector<1x32xf32> to vector<128x32xf32>
    %268 = arith.addf %264, %267 : vector<128x32xf32>
    %269 = arith.addf %220, %268 : vector<128x32xf32>
    %c1_122 = arith.constant 1 : index
    %c0_123 = arith.constant 0 : index
    %c0_124 = arith.constant 0 : index
    %270 = vector.load %arg13[%c1_122, %c0_123, %c0_124] : memref<2x1x32xf32, #tpu.memory_space<vmem>>, vector<1x1x32xf32>
    %271 = vector.shape_cast %270 : vector<1x1x32xf32> to vector<1x32xf32>
    %c1_125 = arith.constant 1 : index
    %c0_126 = arith.constant 0 : index
    %c0_127 = arith.constant 0 : index
    %272 = vector.load %arg14[%c1_125, %c0_126, %c0_127] : memref<2x1x32xf32, #tpu.memory_space<vmem>>, vector<1x1x32xf32>
    %273 = vector.shape_cast %272 : vector<1x1x32xf32> to vector<1x32xf32>
    %cst_128 = arith.constant dense<0.000000e+00> : vector<128xf32>
    %274 = vector.multi_reduction <add>, %269, %cst_128 [1] : vector<128x32xf32> to vector<128xf32>
    %275 = vector.shape_cast %274 : vector<128xf32> to vector<128x1xf32>
    %cst_129 = arith.constant 3.200000e+01 : f32
    %276 = vector.broadcast %cst_129 : f32 to vector<128x1xf32>
    %277 = arith.divf %275, %276 : vector<128x1xf32>
    %278 = vector.broadcast %277 : vector<128x1xf32> to vector<128x32xf32>
    %279 = arith.subf %269, %278 : vector<128x32xf32>
    %280 = arith.mulf %279, %279 : vector<128x32xf32>
    %cst_130 = arith.constant dense<0.000000e+00> : vector<128xf32>
    %281 = vector.multi_reduction <add>, %280, %cst_130 [1] : vector<128x32xf32> to vector<128xf32>
    %282 = vector.shape_cast %281 : vector<128xf32> to vector<128x1xf32>
    %cst_131 = arith.constant 3.200000e+01 : f32
    %283 = vector.broadcast %cst_131 : f32 to vector<128x1xf32>
    %284 = arith.divf %282, %283 : vector<128x1xf32>
    %285 = vector.broadcast %277 : vector<128x1xf32> to vector<128x32xf32>
    %286 = arith.subf %269, %285 : vector<128x32xf32>
    %cst_132 = arith.constant 9.99999996E-13 : f32
    %287 = vector.broadcast %cst_132 : f32 to vector<128x1xf32>
    %288 = arith.addf %284, %287 : vector<128x1xf32>
    %289 = math.rsqrt %288 : vector<128x1xf32>
    %290 = vector.broadcast %289 : vector<128x1xf32> to vector<128x32xf32>
    %291 = arith.mulf %286, %290 : vector<128x32xf32>
    %292 = vector.broadcast %271 : vector<1x32xf32> to vector<128x32xf32>
    %293 = arith.mulf %291, %292 : vector<128x32xf32>
    %294 = vector.broadcast %273 : vector<1x32xf32> to vector<128x32xf32>
    %295 = arith.addf %293, %294 : vector<128x32xf32>
    %c1_133 = arith.constant 1 : index
    %c0_134 = arith.constant 0 : index
    %c0_135 = arith.constant 0 : index
    %296 = vector.load %arg15[%c1_133, %c0_134, %c0_135] : memref<2x32x64xf32, #tpu.memory_space<vmem>>, vector<1x32x64xf32>
    %297 = vector.shape_cast %296 : vector<1x32x64xf32> to vector<32x64xf32>
    %cst_136 = arith.constant dense<0.000000e+00> : vector<128x64xf32>
    %298 = tpu.matmul %295, %297, %cst_136 {dimension_numbers = #tpu.dot_dimension_numbers<[1], [0], [0], [1], [0, 0, 1, 1], [], []>} : vector<128x32xf32>, vector<32x64xf32>, vector<128x64xf32> -> vector<128x64xf32>
    %c1_137 = arith.constant 1 : index
    %c0_138 = arith.constant 0 : index
    %c0_139 = arith.constant 0 : index
    %299 = vector.load %arg16[%c1_137, %c0_138, %c0_139] : memref<2x1x64xf32, #tpu.memory_space<vmem>>, vector<1x1x64xf32>
    %300 = vector.shape_cast %299 : vector<1x1x64xf32> to vector<1x64xf32>
    %301 = vector.broadcast %300 : vector<1x64xf32> to vector<128x64xf32>
    %302 = arith.addf %298, %301 : vector<128x64xf32>
    %cst_140 = arith.constant 5.000000e-01 : f32
    %303 = vector.broadcast %cst_140 : f32 to vector<128x64xf32>
    %304 = arith.mulf %303, %302 : vector<128x64xf32>
    %cst_141 = arith.constant 0.707106769 : f32
    %305 = vector.broadcast %cst_141 : f32 to vector<128x64xf32>
    %306 = arith.mulf %302, %305 : vector<128x64xf32>
    %cst_142 = arith.constant 0.000000e+00 : f32
    %307 = vector.broadcast %cst_142 : f32 to vector<128x64xf32>
    %308 = arith.cmpf oge, %306, %307 : vector<128x64xf32>
    %cst_143 = arith.constant 1.000000e+00 : f32
    %cst_144 = arith.constant -1.000000e+00 : f32
    %309 = vector.broadcast %cst_143 : f32 to vector<128x64xf32>
    %310 = vector.broadcast %cst_144 : f32 to vector<128x64xf32>
    %311 = arith.select %308, %309, %310 : vector<128x64xi1>, vector<128x64xf32>
    %312 = math.absf %306 : vector<128x64xf32>
    %cst_145 = arith.constant 0.327591091 : f32
    %313 = vector.broadcast %cst_145 : f32 to vector<128x64xf32>
    %314 = arith.mulf %313, %312 : vector<128x64xf32>
    %cst_146 = arith.constant 1.000000e+00 : f32
    %315 = vector.broadcast %cst_146 : f32 to vector<128x64xf32>
    %316 = arith.addf %315, %314 : vector<128x64xf32>
    %cst_147 = arith.constant 1.000000e+00 : f32
    %317 = vector.broadcast %cst_147 : f32 to vector<128x64xf32>
    %318 = arith.divf %317, %316 : vector<128x64xf32>
    %cst_148 = arith.constant 1.06140542 : f32
    %319 = vector.broadcast %cst_148 : f32 to vector<128x64xf32>
    %320 = arith.mulf %319, %318 : vector<128x64xf32>
    %cst_149 = arith.constant -1.45315206 : f32
    %321 = vector.broadcast %cst_149 : f32 to vector<128x64xf32>
    %322 = arith.addf %320, %321 : vector<128x64xf32>
    %323 = arith.mulf %322, %318 : vector<128x64xf32>
    %cst_150 = arith.constant 1.42141378 : f32
    %324 = vector.broadcast %cst_150 : f32 to vector<128x64xf32>
    %325 = arith.addf %323, %324 : vector<128x64xf32>
    %326 = arith.mulf %325, %318 : vector<128x64xf32>
    %cst_151 = arith.constant -0.284496725 : f32
    %327 = vector.broadcast %cst_151 : f32 to vector<128x64xf32>
    %328 = arith.addf %326, %327 : vector<128x64xf32>
    %329 = arith.mulf %328, %318 : vector<128x64xf32>
    %cst_152 = arith.constant 0.254829586 : f32
    %330 = vector.broadcast %cst_152 : f32 to vector<128x64xf32>
    %331 = arith.addf %329, %330 : vector<128x64xf32>
    %332 = arith.mulf %331, %318 : vector<128x64xf32>
    %cst_153 = arith.constant 0.000000e+00 : f32
    %333 = vector.broadcast %cst_153 : f32 to vector<128x64xf32>
    %334 = arith.subf %333, %312 : vector<128x64xf32>
    %335 = arith.mulf %334, %312 : vector<128x64xf32>
    %336 = math.exp %335 : vector<128x64xf32>
    %337 = arith.mulf %332, %336 : vector<128x64xf32>
    %cst_154 = arith.constant 1.000000e+00 : f32
    %338 = vector.broadcast %cst_154 : f32 to vector<128x64xf32>
    %339 = arith.subf %338, %337 : vector<128x64xf32>
    %340 = arith.mulf %311, %339 : vector<128x64xf32>
    %cst_155 = arith.constant 1.000000e+00 : f32
    %341 = vector.broadcast %cst_155 : f32 to vector<128x64xf32>
    %342 = arith.addf %341, %340 : vector<128x64xf32>
    %343 = arith.mulf %304, %342 : vector<128x64xf32>
    %c1_156 = arith.constant 1 : index
    %c0_157 = arith.constant 0 : index
    %c0_158 = arith.constant 0 : index
    %344 = vector.load %arg17[%c1_156, %c0_157, %c0_158] : memref<2x64x32xf32, #tpu.memory_space<vmem>>, vector<1x64x32xf32>
    %345 = vector.shape_cast %344 : vector<1x64x32xf32> to vector<64x32xf32>
    %cst_159 = arith.constant dense<0.000000e+00> : vector<128x32xf32>
    %346 = tpu.matmul %343, %345, %cst_159 {dimension_numbers = #tpu.dot_dimension_numbers<[1], [0], [0], [1], [0, 0, 1, 1], [], []>} : vector<128x64xf32>, vector<64x32xf32>, vector<128x32xf32> -> vector<128x32xf32>
    %c1_160 = arith.constant 1 : index
    %c0_161 = arith.constant 0 : index
    %c0_162 = arith.constant 0 : index
    %347 = vector.load %arg18[%c1_160, %c0_161, %c0_162] : memref<2x1x32xf32, #tpu.memory_space<vmem>>, vector<1x1x32xf32>
    %348 = vector.shape_cast %347 : vector<1x1x32xf32> to vector<1x32xf32>
    %349 = vector.broadcast %348 : vector<1x32xf32> to vector<128x32xf32>
    %350 = arith.addf %346, %349 : vector<128x32xf32>
    %351 = arith.addf %295, %350 : vector<128x32xf32>
    %c1_163 = arith.constant 1 : index
    %c0_164 = arith.constant 0 : index
    %c0_165 = arith.constant 0 : index
    %352 = vector.load %arg19[%c1_163, %c0_164, %c0_165] : memref<2x1x32xf32, #tpu.memory_space<vmem>>, vector<1x1x32xf32>
    %353 = vector.shape_cast %352 : vector<1x1x32xf32> to vector<1x32xf32>
    %c1_166 = arith.constant 1 : index
    %c0_167 = arith.constant 0 : index
    %c0_168 = arith.constant 0 : index
    %354 = vector.load %arg20[%c1_166, %c0_167, %c0_168] : memref<2x1x32xf32, #tpu.memory_space<vmem>>, vector<1x1x32xf32>
    %355 = vector.shape_cast %354 : vector<1x1x32xf32> to vector<1x32xf32>
    %cst_169 = arith.constant dense<0.000000e+00> : vector<128xf32>
    %356 = vector.multi_reduction <add>, %351, %cst_169 [1] : vector<128x32xf32> to vector<128xf32>
    %357 = vector.shape_cast %356 : vector<128xf32> to vector<128x1xf32>
    %cst_170 = arith.constant 3.200000e+01 : f32
    %358 = vector.broadcast %cst_170 : f32 to vector<128x1xf32>
    %359 = arith.divf %357, %358 : vector<128x1xf32>
    %360 = vector.broadcast %359 : vector<128x1xf32> to vector<128x32xf32>
    %361 = arith.subf %351, %360 : vector<128x32xf32>
    %362 = arith.mulf %361, %361 : vector<128x32xf32>
    %cst_171 = arith.constant dense<0.000000e+00> : vector<128xf32>
    %363 = vector.multi_reduction <add>, %362, %cst_171 [1] : vector<128x32xf32> to vector<128xf32>
    %364 = vector.shape_cast %363 : vector<128xf32> to vector<128x1xf32>
    %cst_172 = arith.constant 3.200000e+01 : f32
    %365 = vector.broadcast %cst_172 : f32 to vector<128x1xf32>
    %366 = arith.divf %364, %365 : vector<128x1xf32>
    %367 = vector.broadcast %359 : vector<128x1xf32> to vector<128x32xf32>
    %368 = arith.subf %351, %367 : vector<128x32xf32>
    %cst_173 = arith.constant 9.99999996E-13 : f32
    %369 = vector.broadcast %cst_173 : f32 to vector<128x1xf32>
    %370 = arith.addf %366, %369 : vector<128x1xf32>
    %371 = math.rsqrt %370 : vector<128x1xf32>
    %372 = vector.broadcast %371 : vector<128x1xf32> to vector<128x32xf32>
    %373 = arith.mulf %368, %372 : vector<128x32xf32>
    %374 = vector.broadcast %353 : vector<1x32xf32> to vector<128x32xf32>
    %375 = arith.mulf %373, %374 : vector<128x32xf32>
    %376 = vector.broadcast %355 : vector<1x32xf32> to vector<128x32xf32>
    %377 = arith.addf %375, %376 : vector<128x32xf32>
    %c0_174 = arith.constant 0 : index
    %c0_175 = arith.constant 0 : index
    %378 = vector.load %arg21[%c0_174, %c0_175] : memref<128x32xf32, #tpu.memory_space<vmem>>, vector<128x32xf32>
    tpu.vector_store %arg21[%c0_174, %c0_175], %377 {strides = array<i32>} : memref<128x32xf32, #tpu.memory_space<vmem>>, vector<128x32xf32>,
    return
  }
  func.func @transform_0(%arg0: i32) -> (i32, i32) {
    %c0_i32 = arith.constant 0 : i32
    %c0_i32_0 = arith.constant 0 : i32
    return %arg0, %c0_i32 : i32, i32
  }
  func.func @transform_1(%arg0: i32) -> (i32, i32, i32) {
    %c0_i32 = arith.constant 0 : i32
    %c0_i32_0 = arith.constant 0 : i32
    %c0_i32_1 = arith.constant 0 : i32
    return %arg0, %c0_i32, %c0_i32_0 : i32, i32, i32
  }
  func.func @transform_2(%arg0: i32) -> (i32, i32, i32) {
    %c0_i32 = arith.constant 0 : i32
    %c0_i32_0 = arith.constant 0 : i32
    %c0_i32_1 = arith.constant 0 : i32
    return %arg0, %c0_i32, %c0_i32_0 : i32, i32, i32
  }
  func.func @transform_3(%arg0: i32) -> (i32, i32) {
    %c0_i32 = arith.constant 0 : i32
    %c0_i32_0 = arith.constant 0 : i32
    return %arg0, %c0_i32 : i32, i32
  }
  func.func @transform_4(%arg0: i32) -> (i32, i32) {
    %c0_i32 = arith.constant 0 : i32
    %c0_i32_0 = arith.constant 0 : i32
    return %arg0, %c0_i32 : i32, i32
  }
  func.func @transform_5(%arg0: i32) -> (i32, i32) {
    %c0_i32 = arith.constant 0 : i32
    %c0_i32_0 = arith.constant 0 : i32
    return %arg0, %c0_i32 : i32, i32
  }
  func.func @transform_6(%arg0: i32) -> (i32, i32) {
    %c0_i32 = arith.constant 0 : i32
    %c0_i32_0 = arith.constant 0 : i32
    %c0_i32_1 = arith.constant 0 : i32
    return %c0_i32, %c0_i32_0 : i32, i32
  }
  func.func @transform_7(%arg0: i32) -> (i32, i32) {
    %c0_i32 = arith.constant 0 : i32
    %c0_i32_0 = arith.constant 0 : i32
    %c0_i32_1 = arith.constant 0 : i32
    return %c0_i32, %c0_i32_0 : i32, i32
  }
  func.func @transform_8(%arg0: i32) -> (i32, i32, i32) {
    %c0_i32 = arith.constant 0 : i32
    %c0_i32_0 = arith.constant 0 : i32
    %c0_i32_1 = arith.constant 0 : i32
    %c0_i32_2 = arith.constant 0 : i32
    return %c0_i32, %c0_i32_0, %c0_i32_1 : i32, i32, i32
  }
  func.func @transform_9(%arg0: i32) -> (i32, i32, i32) {
    %c0_i32 = arith.constant 0 : i32
    %c0_i32_0 = arith.constant 0 : i32
    %c0_i32_1 = arith.constant 0 : i32
    %c0_i32_2 = arith.constant 0 : i32
    return %c0_i32, %c0_i32_0, %c0_i32_1 : i32, i32, i32
  }
  func.func @transform_10(%arg0: i32) -> (i32, i32, i32) {
    %c0_i32 = arith.constant 0 : i32
    %c0_i32_0 = arith.constant 0 : i32
    %c0_i32_1 = arith.constant 0 : i32
    %c0_i32_2 = arith.constant 0 : i32
    return %c0_i32, %c0_i32_0, %c0_i32_1 : i32, i32, i32
  }
  func.func @transform_11(%arg0: i32) -> (i32, i32, i32) {
    %c0_i32 = arith.constant 0 : i32
    %c0_i32_0 = arith.constant 0 : i32
    %c0_i32_1 = arith.constant 0 : i32
    %c0_i32_2 = arith.constant 0 : i32
    return %c0_i32, %c0_i32_0, %c0_i32_1 : i32, i32, i32
  }
  func.func @transform_12(%arg0: i32) -> (i32, i32, i32) {
    %c0_i32 = arith.constant 0 : i32
    %c0_i32_0 = arith.constant 0 : i32
    %c0_i32_1 = arith.constant 0 : i32
    %c0_i32_2 = arith.constant 0 : i32
    return %c0_i32, %c0_i32_0, %c0_i32_1 : i32, i32, i32
  }
  func.func @transform_13(%arg0: i32) -> (i32, i32, i32) {
    %c0_i32 = arith.constant 0 : i32
    %c0_i32_0 = arith.constant 0 : i32
    %c0_i32_1 = arith.constant 0 : i32
    %c0_i32_2 = arith.constant 0 : i32
    return %c0_i32, %c0_i32_0, %c0_i32_1 : i32, i32, i32
  }
  func.func @transform_14(%arg0: i32) -> (i32, i32, i32) {
    %c0_i32 = arith.constant 0 : i32
    %c0_i32_0 = arith.constant 0 : i32
    %c0_i32_1 = arith.constant 0 : i32
    %c0_i32_2 = arith.constant 0 : i32
    return %c0_i32, %c0_i32_0, %c0_i32_1 : i32, i32, i32
  }
  func.func @transform_15(%arg0: i32) -> (i32, i32, i32) {
    %c0_i32 = arith.constant 0 : i32
    %c0_i32_0 = arith.constant 0 : i32
    %c0_i32_1 = arith.constant 0 : i32
    %c0_i32_2 = arith.constant 0 : i32
    return %c0_i32, %c0_i32_0, %c0_i32_1 : i32, i32, i32
  }
  func.func @transform_16(%arg0: i32) -> (i32, i32, i32) {
    %c0_i32 = arith.constant 0 : i32
    %c0_i32_0 = arith.constant 0 : i32
    %c0_i32_1 = arith.constant 0 : i32
    %c0_i32_2 = arith.constant 0 : i32
    return %c0_i32, %c0_i32_0, %c0_i32_1 : i32, i32, i32
  }
  func.func @transform_17(%arg0: i32) -> (i32, i32, i32) {
    %c0_i32 = arith.constant 0 : i32
    %c0_i32_0 = arith.constant 0 : i32
    %c0_i32_1 = arith.constant 0 : i32
    %c0_i32_2 = arith.constant 0 : i32
    return %c0_i32, %c0_i32_0, %c0_i32_1 : i32, i32, i32
  }
  func.func @transform_18(%arg0: i32) -> (i32, i32, i32) {
    %c0_i32 = arith.constant 0 : i32
    %c0_i32_0 = arith.constant 0 : i32
    %c0_i32_1 = arith.constant 0 : i32
    %c0_i32_2 = arith.constant 0 : i32
    return %c0_i32, %c0_i32_0, %c0_i32_1 : i32, i32, i32
  }
  func.func @transform_19(%arg0: i32) -> (i32, i32, i32) {
    %c0_i32 = arith.constant 0 : i32
    %c0_i32_0 = arith.constant 0 : i32
    %c0_i32_1 = arith.constant 0 : i32
    %c0_i32_2 = arith.constant 0 : i32
    return %c0_i32, %c0_i32_0, %c0_i32_1 : i32, i32, i32
  }
  func.func @transform_20(%arg0: i32) -> (i32, i32) {
    %c0_i32 = arith.constant 0 : i32
    %c0_i32_0 = arith.constant 0 : i32
    return %arg0, %c0_i32 : i32, i32
  }
}

</mosaic_0001>

<llo_original>
// kernel: tpu_custom_call.1
$region0: #{tpu_custom_call.1}
  #allocation0 [shape = 'u32[]', space=smem, size = 0x4, offset = 0x4, fixed_abs, tag = 'smem constant byte address 0x4 - core index']
  #allocation1 [shape = 'u32[144,128]{1,0:T(1,128)}', space=vmem, size = 0x12000, scoped, tag = 'internal scratch']
  %s0 = inlined_call_operand.vmem [shape: s32[256,1], index: 0, kind: input, shape index: {}]
  %s1 = inlined_call_operand.vmem [shape: s32[2,1,128], index: 1, kind: input, shape index: {}]
  %s2 = inlined_call_operand.vmem [shape: f32[2,128,128], index: 2, kind: input, shape index: {}]
  %s3 = inlined_call_operand.vmem [shape: f32[256,32], index: 3, kind: input, shape index: {}]
  %s4 = inlined_call_operand.vmem [shape: f32[256,32], index: 4, kind: input, shape index: {}]
  %s5 = inlined_call_operand.vmem [shape: f32[256,32], index: 5, kind: input, shape index: {}]
  %s6 = inlined_call_operand.vmem [shape: f32[1,32], index: 6, kind: input, shape index: {}]
  %s7 = inlined_call_operand.vmem [shape: f32[1,32], index: 7, kind: input, shape index: {}]
  %s8 = inlined_call_operand.vmem [shape: f32[2,32,96], index: 8, kind: input, shape index: {}]
  %s9 = inlined_call_operand.vmem [shape: f32[2,1,96], index: 9, kind: input, shape index: {}]
  %s10 = inlined_call_operand.vmem [shape: f32[2,32,32], index: 10, kind: input, shape index: {}]
  %s11 = inlined_call_operand.vmem [shape: f32[2,1,32], index: 11, kind: input, shape index: {}]
  %s12 = inlined_call_operand.vmem [shape: f32[2,1,32], index: 12, kind: input, shape index: {}]
  %s13 = inlined_call_operand.vmem [shape: f32[2,1,32], index: 13, kind: input, shape index: {}]
  %s14 = inlined_call_operand.vmem [shape: f32[2,32,64], index: 14, kind: input, shape index: {}]
  %s15 = inlined_call_operand.vmem [shape: f32[2,1,64], index: 15, kind: input, shape index: {}]
  %s16 = inlined_call_operand.vmem [shape: f32[2,64,32], index: 16, kind: input, shape index: {}]
  %s17 = inlined_call_operand.vmem [shape: f32[2,1,32], index: 17, kind: input, shape index: {}]
  %s18 = inlined_call_operand.vmem [shape: f32[2,1,32], index: 18, kind: input, shape index: {}]
  %s19 = inlined_call_operand.vmem [shape: f32[2,1,32], index: 19, kind: input, shape index: {}]
  %s20 = inlined_call_operand.vmem [shape: f32[256,32], index: 20, kind: output, shape index: {}]
  %s21 = sld [smem:[#allocation0]]
  $region113: #{tpu_custom_call.1} parent=0
    _
  %s23 = ssub.s32 1, %s21
  %s24 = scalar_select 0, %s23, %s21
  loop: start=0, step=1, limit=4
  $region2: #{tpu_custom_call.1} parent=0 // loop_pre_header
    _
  $region3: #{tpu_custom_call.1} parent=0 // loop_header
    %s26 = sphi 0, %s30
    %p27 = scmp.ge.s32.totalorder %s26, 4
    %s36 = sphi 0, %s38
    %s39 = sphi 0, %s36
    %s40 = sphi 0, %s39
    %s56 = sphi 0, %s40
    %s62 = sphi 0, %s64
    %s65 = sphi 0, %s62
    %s66 = sphi 0, %s65
    %s82 = sphi 0, %s66
    %s88 = sphi 0, %s90
    %s91 = sphi 0, %s88
    %s92 = sphi 0, %s91
    %s108 = sphi 0, %s92
    %s114 = sphi 0, %s116
    %s117 = sphi 0, %s114
    %s118 = sphi 0, %s117
    %s134 = sphi 0, %s118
    %s140 = sphi 0, %s142
    %s143 = sphi 0, %s140
    %s144 = sphi 0, %s143
    %s160 = sphi 0, %s144
    %s166 = sphi 0, %s168
    %s169 = sphi 0, %s166
    %s170 = sphi 0, %s169
    %s186 = sphi 0, %s170
    %s190 = sphi 0, %s190
    %s192 = sphi 0, %s190
    %s193 = sphi 0, %s192
    %s207 = sphi 0, %s193
    %s211 = sphi 0, %s211
    %s213 = sphi 0, %s211
    %s214 = sphi 0, %s213
    %s228 = sphi 0, %s214
    %s232 = sphi 0, %s232
    %s234 = sphi 0, %s232
    %s235 = sphi 0, %s234
    %s249 = sphi 0, %s235
    %s253 = sphi 0, %s253
    %s255 = sphi 0, %s253
    %s256 = sphi 0, %s255
    %s270 = sphi 0, %s256
    %s274 = sphi 0, %s274
    %s276 = sphi 0, %s274
    %s277 = sphi 0, %s276
    %s291 = sphi 0, %s277
    %s295 = sphi 0, %s295
    %s297 = sphi 0, %s295
    %s298 = sphi 0, %s297
    %s312 = sphi 0, %s298
    %s316 = sphi 0, %s316
    %s318 = sphi 0, %s316
    %s319 = sphi 0, %s318
    %s333 = sphi 0, %s319
    %s337 = sphi 0, %s337
    %s339 = sphi 0, %s337
    %s340 = sphi 0, %s339
    %s354 = sphi 0, %s340
    %s358 = sphi 0, %s358
    %s360 = sphi 0, %s358
    %s361 = sphi 0, %s360
    %s375 = sphi 0, %s361
    %s379 = sphi 0, %s379
    %s381 = sphi 0, %s379
    %s382 = sphi 0, %s381
    %s396 = sphi 0, %s382
    %s400 = sphi 0, %s400
    %s402 = sphi 0, %s400
    %s403 = sphi 0, %s402
    %s417 = sphi 0, %s403
    %s421 = sphi 0, %s421
    %s423 = sphi 0, %s421
    %s424 = sphi 0, %s423
    %s438 = sphi 0, %s424
    %s442 = sphi 0, %s442
    %s444 = sphi 0, %s442
    %s445 = sphi 0, %s444
    %s459 = sphi 0, %s445
    %s463 = sphi 0, %s463
    %s465 = sphi 0, %s463
    %s466 = sphi 0, %s465
    %s480 = sphi 0, %s466
    %s486 = sphi 0, %s488
    %s489 = sphi 0, %s486
    %s490 = sphi 0, %s489
    %s506 = sphi 0, %s490
  $region4: #{tpu_custom_call.1} parent=0 // loop_header_branch
    %29 = sbr.rel (%p27) target = $region8
  $region5: #{tpu_custom_call.1} parent=0 // loop_body
    %s31 = ssub.s32 %s26, 1
    %s32 = ssub.s32 %s26, 2
    %s33 = sadd.s32 %s26, 1
    %s34 = ssub.s32 %s26, %s33
    %p35 = scmp.eq.s32.totalorder %s34, 0
    %s37 = sadd.s32 %s36, 1
    %s38 = scalar_select %p35, %s36, %s37
    %p41 = pneg %p35
    %p42 = scmp.eq.s32.totalorder %s26, 1
    %p43 = por %p41, %p42
    %p44 = scmp.ne.s32.totalorder %s36, %s39
    %p45 = scmp.eq.s32.totalorder %s26, 0
    %p46 = por %p44, %p45
    %p47 = scmp.ne.s32.totalorder %s36, %s39
    %p48 = scmp.eq.s32.totalorder %s31, 1
    %p49 = por %p47, %p48
    %p50 = scmp.ne.s32.totalorder %s39, %s40
    %p51 = scmp.eq.s32.totalorder %s31, 0
    %p52 = por %p50, %p51
    %p53 = scmp.ne.s32.totalorder %s39, %s40
    %p54 = scmp.eq.s32.totalorder %s32, 1
    %p55 = por %p53, %p54
    %p57 = scmp.ne.s32.totalorder %s40, %s56
    %p58 = scmp.eq.s32.totalorder %s32, 0
    %p59 = por %p57, %p58
    %s60 = ssub.s32 %s26, %s33
    %p61 = scmp.eq.s32.totalorder %s60, 0
    %s63 = sadd.s32 %s62, 1
    %s64 = scalar_select %p61, %s62, %s63
    %p67 = pneg %p61
    %p68 = scmp.eq.s32.totalorder %s26, 1
    %p69 = por %p67, %p68
    %p70 = scmp.ne.s32.totalorder %s62, %s65
    %p71 = scmp.eq.s32.totalorder %s26, 0
    %p72 = por %p70, %p71
    %p73 = scmp.ne.s32.totalorder %s62, %s65
    %p74 = scmp.eq.s32.totalorder %s31, 1
    %p75 = por %p73, %p74
    %p76 = scmp.ne.s32.totalorder %s65, %s66
    %p77 = scmp.eq.s32.totalorder %s31, 0
    %p78 = por %p76, %p77
    %p79 = scmp.ne.s32.totalorder %s65, %s66
    %p80 = scmp.eq.s32.totalorder %s32, 1
    %p81 = por %p79, %p80
    %p83 = scmp.ne.s32.totalorder %s66, %s82
    %p84 = scmp.eq.s32.totalorder %s32, 0
    %p85 = por %p83, %p84
    %s86 = ssub.s32 %s26, %s33
    %p87 = scmp.eq.s32.totalorder %s86, 0
    %s89 = sadd.s32 %s88, 1
    %s90 = scalar_select %p87, %s88, %s89
    %p93 = pneg %p87
    %p94 = scmp.eq.s32.totalorder %s26, 1
    %p95 = por %p93, %p94
    %p96 = scmp.ne.s32.totalorder %s88, %s91
    %p97 = scmp.eq.s32.totalorder %s26, 0
    %p98 = por %p96, %p97
    %p99 = scmp.ne.s32.totalorder %s88, %s91
    %p100 = scmp.eq.s32.totalorder %s31, 1
    %p101 = por %p99, %p100
    %p102 = scmp.ne.s32.totalorder %s91, %s92
    %p103 = scmp.eq.s32.totalorder %s31, 0
    %p104 = por %p102, %p103
    %p105 = scmp.ne.s32.totalorder %s91, %s92
    %p106 = scmp.eq.s32.totalorder %s32, 1
    %p107 = por %p105, %p106
    %p109 = scmp.ne.s32.totalorder %s92, %s108
    %p110 = scmp.eq.s32.totalorder %s32, 0
    %p111 = por %p109, %p110
    %s112 = ssub.s32 %s26, %s33
    %p113 = scmp.eq.s32.totalorder %s112, 0
    %s115 = sadd.s32 %s114, 1
    %s116 = scalar_select %p113, %s114, %s115
    %p119 = pneg %p113
    %p120 = scmp.eq.s32.totalorder %s26, 1
    %p121 = por %p119, %p120
    %p122 = scmp.ne.s32.totalorder %s114, %s117
    %p123 = scmp.eq.s32.totalorder %s26, 0
    %p124 = por %p122, %p123
    %p125 = scmp.ne.s32.totalorder %s114, %s117
    %p126 = scmp.eq.s32.totalorder %s31, 1
    %p127 = por %p125, %p126
    %p128 = scmp.ne.s32.totalorder %s117, %s118
    %p129 = scmp.eq.s32.totalorder %s31, 0
    %p130 = por %p128, %p129
    %p131 = scmp.ne.s32.totalorder %s117, %s118
    %p132 = scmp.eq.s32.totalorder %s32, 1
    %p133 = por %p131, %p132
    %p135 = scmp.ne.s32.totalorder %s118, %s134
    %p136 = scmp.eq.s32.totalorder %s32, 0
    %p137 = por %p135, %p136
    %s138 = ssub.s32 %s26, %s33
    %p139 = scmp.eq.s32.totalorder %s138, 0
    %s141 = sadd.s32 %s140, 1
    %s142 = scalar_select %p139, %s140, %s141
    %p145 = pneg %p139
    %p146 = scmp.eq.s32.totalorder %s26, 1
    %p147 = por %p145, %p146
    %p148 = scmp.ne.s32.totalorder %s140, %s143
    %p149 = scmp.eq.s32.totalorder %s26, 0
    %p150 = por %p148, %p149
    %p151 = scmp.ne.s32.totalorder %s140, %s143
    %p152 = scmp.eq.s32.totalorder %s31, 1
    %p153 = por %p151, %p152
    %p154 = scmp.ne.s32.totalorder %s143, %s144
    %p155 = scmp.eq.s32.totalorder %s31, 0
    %p156 = por %p154, %p155
    %p157 = scmp.ne.s32.totalorder %s143, %s144
    %p158 = scmp.eq.s32.totalorder %s32, 1
    %p159 = por %p157, %p158
    %p161 = scmp.ne.s32.totalorder %s144, %s160
    %p162 = scmp.eq.s32.totalorder %s32, 0
    %p163 = por %p161, %p162
    %s164 = ssub.s32 %s26, %s33
    %p165 = scmp.eq.s32.totalorder %s164, 0
    %s167 = sadd.s32 %s166, 1
    %s168 = scalar_select %p165, %s166, %s167
    %p171 = pneg %p165
    %p172 = scmp.eq.s32.totalorder %s26, 1
    %p173 = por %p171, %p172
    %p174 = scmp.ne.s32.totalorder %s166, %s169
    %p175 = scmp.eq.s32.totalorder %s26, 0
    %p176 = por %p174, %p175
    %p177 = scmp.ne.s32.totalorder %s166, %s169
    %p178 = scmp.eq.s32.totalorder %s31, 1
    %p179 = por %p177, %p178
    %p180 = scmp.ne.s32.totalorder %s169, %s170
    %p181 = scmp.eq.s32.totalorder %s31, 0
    %p182 = por %p180, %p181
    %p183 = scmp.ne.s32.totalorder %s169, %s170
    %p184 = scmp.eq.s32.totalorder %s32, 1
    %p185 = por %p183, %p184
    %p187 = scmp.ne.s32.totalorder %s170, %s186
    %p188 = scmp.eq.s32.totalorder %s32, 0
    %p189 = por %p187, %p188
    %s191 = sadd.s32 %s190, 1
    %p194 = scmp.eq.s32.totalorder %s26, 1
    %p195 = scmp.ne.s32.totalorder %s190, %s192
    %p196 = scmp.eq.s32.totalorder %s26, 0
    %p197 = por %p195, %p196
    %p198 = scmp.ne.s32.totalorder %s190, %s192
    %p199 = scmp.eq.s32.totalorder %s31, 1
    %p200 = por %p198, %p199
    %p201 = scmp.ne.s32.totalorder %s192, %s193
    %p202 = scmp.eq.s32.totalorder %s31, 0
    %p203 = por %p201, %p202
    %p204 = scmp.ne.s32.totalorder %s192, %s193
    %p205 = scmp.eq.s32.totalorder %s32, 1
    %p206 = por %p204, %p205
    %p208 = scmp.ne.s32.totalorder %s193, %s207
    %p209 = scmp.eq.s32.totalorder %s32, 0
    %p210 = por %p208, %p209
    %s212 = sadd.s32 %s211, 1
    %p215 = scmp.eq.s32.totalorder %s26, 1
    %p216 = scmp.ne.s32.totalorder %s211, %s213
    %p217 = scmp.eq.s32.totalorder %s26, 0
    %p218 = por %p216, %p217
    %p219 = scmp.ne.s32.totalorder %s211, %s213
    %p220 = scmp.eq.s32.totalorder %s31, 1
    %p221 = por %p219, %p220
    %p222 = scmp.ne.s32.totalorder %s213, %s214
    %p223 = scmp.eq.s32.totalorder %s31, 0
    %p224 = por %p222, %p223
    %p225 = scmp.ne.s32.totalorder %s213, %s214
    %p226 = scmp.eq.s32.totalorder %s32, 1
    %p227 = por %p225, %p226
    %p229 = scmp.ne.s32.totalorder %s214, %s228
    %p230 = scmp.eq.s32.totalorder %s32, 0
    %p231 = por %p229, %p230
    %s233 = sadd.s32 %s232, 1
    %p236 = scmp.eq.s32.totalorder %s26, 1
    %p237 = scmp.ne.s32.totalorder %s232, %s234
    %p238 = scmp.eq.s32.totalorder %s26, 0
    %p239 = por %p237, %p238
    %p240 = scmp.ne.s32.totalorder %s232, %s234
    %p241 = scmp.eq.s32.totalorder %s31, 1
    %p242 = por %p240, %p241
    %p243 = scmp.ne.s32.totalorder %s234, %s235
    %p244 = scmp.eq.s32.totalorder %s31, 0
    %p245 = por %p243, %p244
    %p246 = scmp.ne.s32.totalorder %s234, %s235
    %p247 = scmp.eq.s32.totalorder %s32, 1
    %p248 = por %p246, %p247
    %p250 = scmp.ne.s32.totalorder %s235, %s249
    %p251 = scmp.eq.s32.totalorder %s32, 0
    %p252 = por %p250, %p251
    %s254 = sadd.s32 %s253, 1
    %p257 = scmp.eq.s32.totalorder %s26, 1
    %p258 = scmp.ne.s32.totalorder %s253, %s255
    %p259 = scmp.eq.s32.totalorder %s26, 0
    %p260 = por %p258, %p259
    %p261 = scmp.ne.s32.totalorder %s253, %s255
    %p262 = scmp.eq.s32.totalorder %s31, 1
    %p263 = por %p261, %p262
    %p264 = scmp.ne.s32.totalorder %s255, %s256
    %p265 = scmp.eq.s32.totalorder %s31, 0
    %p266 = por %p264, %p265
    %p267 = scmp.ne.s32.totalorder %s255, %s256
    %p268 = scmp.eq.s32.totalorder %s32, 1
    %p269 = por %p267, %p268
    %p271 = scmp.ne.s32.totalorder %s256, %s270
    %p272 = scmp.eq.s32.totalorder %s32, 0
    %p273 = por %p271, %p272
    %s275 = sadd.s32 %s274, 1
    %p278 = scmp.eq.s32.totalorder %s26, 1
    %p279 = scmp.ne.s32.totalorder %s274, %s276
    %p280 = scmp.eq.s32.totalorder %s26, 0
    %p281 = por %p279, %p280
    %p282 = scmp.ne.s32.totalorder %s274, %s276
    %p283 = scmp.eq.s32.totalorder %s31, 1
    %p284 = por %p282, %p283
    %p285 = scmp.ne.s32.totalorder %s276, %s277
    %p286 = scmp.eq.s32.totalorder %s31, 0
    %p287 = por %p285, %p286
    %p288 = scmp.ne.s32.totalorder %s276, %s277
    %p289 = scmp.eq.s32.totalorder %s32, 1
    %p290 = por %p288, %p289
    %p292 = scmp.ne.s32.totalorder %s277, %s291
    %p293 = scmp.eq.s32.totalorder %s32, 0
    %p294 = por %p292, %p293
    %s296 = sadd.s32 %s295, 1
    %p299 = scmp.eq.s32.totalorder %s26, 1
    %p300 = scmp.ne.s32.totalorder %s295, %s297
    %p301 = scmp.eq.s32.totalorder %s26, 0
    %p302 = por %p300, %p301
    %p303 = scmp.ne.s32.totalorder %s295, %s297
    %p304 = scmp.eq.s32.totalorder %s31, 1
    %p305 = por %p303, %p304
    %p306 = scmp.ne.s32.totalorder %s297, %s298
    %p307 = scmp.eq.s32.totalorder %s31, 0
    %p308 = por %p306, %p307
    %p309 = scmp.ne.s32.totalorder %s297, %s298
    %p310 = scmp.eq.s32.totalorder %s32, 1
    %p311 = por %p309, %p310
    %p313 = scmp.ne.s32.totalorder %s298, %s312
    %p314 = scmp.eq.s32.totalorder %s32, 0
    %p315 = por %p313, %p314
    %s317 = sadd.s32 %s316, 1
    %p320 = scmp.eq.s32.totalorder %s26, 1
    %p321 = scmp.ne.s32.totalorder %s316, %s318
    %p322 = scmp.eq.s32.totalorder %s26, 0
    %p323 = por %p321, %p322
    %p324 = scmp.ne.s32.totalorder %s316, %s318
    %p325 = scmp.eq.s32.totalorder %s31, 1
    %p326 = por %p324, %p325
    %p327 = scmp.ne.s32.totalorder %s318, %s319
    %p328 = scmp.eq.s32.totalorder %s31, 0
    %p329 = por %p327, %p328
    %p330 = scmp.ne.s32.totalorder %s318, %s319
    %p331 = scmp.eq.s32.totalorder %s32, 1
    %p332 = por %p330, %p331
    %p334 = scmp.ne.s32.totalorder %s319, %s333
    %p335 = scmp.eq.s32.totalorder %s32, 0
    %p336 = por %p334, %p335
    %s338 = sadd.s32 %s337, 1
    %p341 = scmp.eq.s32.totalorder %s26, 1
    %p342 = scmp.ne.s32.totalorder %s337, %s339
    %p343 = scmp.eq.s32.totalorder %s26, 0
    %p344 = por %p342, %p343
    %p345 = scmp.ne.s32.totalorder %s337, %s339
    %p346 = scmp.eq.s32.totalorder %s31, 1
    %p347 = por %p345, %p346
    %p348 = scmp.ne.s32.totalorder %s339, %s340
    %p349 = scmp.eq.s32.totalorder %s31, 0
    %p350 = por %p348, %p349
    %p351 = scmp.ne.s32.totalorder %s339, %s340
    %p352 = scmp.eq.s32.totalorder %s32, 1
    %p353 = por %p351, %p352
    %p355 = scmp.ne.s32.totalorder %s340, %s354
    %p356 = scmp.eq.s32.totalorder %s32, 0
    %p357 = por %p355, %p356
    %s359 = sadd.s32 %s358, 1
    %p362 = scmp.eq.s32.totalorder %s26, 1
    %p363 = scmp.ne.s32.totalorder %s358, %s360
    %p364 = scmp.eq.s32.totalorder %s26, 0
    %p365 = por %p363, %p364
    %p366 = scmp.ne.s32.totalorder %s358, %s360
    %p367 = scmp.eq.s32.totalorder %s31, 1
    %p368 = por %p366, %p367
    %p369 = scmp.ne.s32.totalorder %s360, %s361
    %p370 = scmp.eq.s32.totalorder %s31, 0
    %p371 = por %p369, %p370
    %p372 = scmp.ne.s32.totalorder %s360, %s361
    %p373 = scmp.eq.s32.totalorder %s32, 1
    %p374 = por %p372, %p373
    %p376 = scmp.ne.s32.totalorder %s361, %s375
    %p377 = scmp.eq.s32.totalorder %s32, 0
    %p378 = por %p376, %p377
    %s380 = sadd.s32 %s379, 1
    %p383 = scmp.eq.s32.totalorder %s26, 1
    %p384 = scmp.ne.s32.totalorder %s379, %s381
    %p385 = scmp.eq.s32.totalorder %s26, 0
    %p386 = por %p384, %p385
    %p387 = scmp.ne.s32.totalorder %s379, %s381
    %p388 = scmp.eq.s32.totalorder %s31, 1
    %p389 = por %p387, %p388
    %p390 = scmp.ne.s32.totalorder %s381, %s382
    %p391 = scmp.eq.s32.totalorder %s31, 0
    %p392 = por %p390, %p391
    %p393 = scmp.ne.s32.totalorder %s381, %s382
    %p394 = scmp.eq.s32.totalorder %s32, 1
    %p395 = por %p393, %p394
    %p397 = scmp.ne.s32.totalorder %s382, %s396
    %p398 = scmp.eq.s32.totalorder %s32, 0
    %p399 = por %p397, %p398
    %s401 = sadd.s32 %s400, 1
    %p404 = scmp.eq.s32.totalorder %s26, 1
    %p405 = scmp.ne.s32.totalorder %s400, %s402
    %p406 = scmp.eq.s32.totalorder %s26, 0
    %p407 = por %p405, %p406
    %p408 = scmp.ne.s32.totalorder %s400, %s402
    %p409 = scmp.eq.s32.totalorder %s31, 1
    %p410 = por %p408, %p409
    %p411 = scmp.ne.s32.totalorder %s402, %s403
    %p412 = scmp.eq.s32.totalorder %s31, 0
    %p413 = por %p411, %p412
    %p414 = scmp.ne.s32.totalorder %s402, %s403
    %p415 = scmp.eq.s32.totalorder %s32, 1
    %p416 = por %p414, %p415
    %p418 = scmp.ne.s32.totalorder %s403, %s417
    %p419 = scmp.eq.s32.totalorder %s32, 0
    %p420 = por %p418, %p419
    %s422 = sadd.s32 %s421, 1
    %p425 = scmp.eq.s32.totalorder %s26, 1
    %p426 = scmp.ne.s32.totalorder %s421, %s423
    %p427 = scmp.eq.s32.totalorder %s26, 0
    %p428 = por %p426, %p427
    %p429 = scmp.ne.s32.totalorder %s421, %s423
    %p430 = scmp.eq.s32.totalorder %s31, 1
    %p431 = por %p429, %p430
    %p432 = scmp.ne.s32.totalorder %s423, %s424
    %p433 = scmp.eq.s32.totalorder %s31, 0
    %p434 = por %p432, %p433
    %p435 = scmp.ne.s32.totalorder %s423, %s424
    %p436 = scmp.eq.s32.totalorder %s32, 1
    %p437 = por %p435, %p436
    %p439 = scmp.ne.s32.totalorder %s424, %s438
    %p440 = scmp.eq.s32.totalorder %s32, 0
    %p441 = por %p439, %p440
    %s443 = sadd.s32 %s442, 1
    %p446 = scmp.eq.s32.totalorder %s26, 1
    %p447 = scmp.ne.s32.totalorder %s442, %s444
    %p448 = scmp.eq.s32.totalorder %s26, 0
    %p449 = por %p447, %p448
    %p450 = scmp.ne.s32.totalorder %s442, %s444
    %p451 = scmp.eq.s32.totalorder %s31, 1
    %p452 = por %p450, %p451
    %p453 = scmp.ne.s32.totalorder %s444, %s445
    %p454 = scmp.eq.s32.totalorder %s31, 0
    %p455 = por %p453, %p454
    %p456 = scmp.ne.s32.totalorder %s444, %s445
    %p457 = scmp.eq.s32.totalorder %s32, 1
    %p458 = por %p456, %p457
    %p460 = scmp.ne.s32.totalorder %s445, %s459
    %p461 = scmp.eq.s32.totalorder %s32, 0
    %p462 = por %p460, %p461
    %s464 = sadd.s32 %s463, 1
    %p467 = scmp.eq.s32.totalorder %s26, 1
    %p468 = scmp.ne.s32.totalorder %s463, %s465
    %p469 = scmp.eq.s32.totalorder %s26, 0
    %p470 = por %p468, %p469
    %p471 = scmp.ne.s32.totalorder %s463, %s465
    %p472 = scmp.eq.s32.totalorder %s31, 1
    %p473 = por %p471, %p472
    %p474 = scmp.ne.s32.totalorder %s465, %s466
    %p475 = scmp.eq.s32.totalorder %s31, 0
    %p476 = por %p474, %p475
    %p477 = scmp.ne.s32.totalorder %s465, %s466
    %p478 = scmp.eq.s32.totalorder %s32, 1
    %p479 = por %p477, %p478
    %p481 = scmp.ne.s32.totalorder %s466, %s480
    %p482 = scmp.eq.s32.totalorder %s32, 0
    %p483 = por %p481, %p482
    %s484 = ssub.s32 %s26, %s33
    %p485 = scmp.eq.s32.totalorder %s484, 0
    %s487 = sadd.s32 %s486, 1
    %s488 = scalar_select %p485, %s486, %s487
    %p491 = pneg %p485
    %p492 = scmp.eq.s32.totalorder %s26, 1
    %p493 = por %p491, %p492
    %p494 = scmp.ne.s32.totalorder %s486, %s489
    %p495 = scmp.eq.s32.totalorder %s26, 0
    %p496 = por %p494, %p495
    %p497 = scmp.ne.s32.totalorder %s486, %s489
    %p498 = scmp.eq.s32.totalorder %s31, 1
    %p499 = por %p497, %p498
    %p500 = scmp.ne.s32.totalorder %s489, %s490
    %p501 = scmp.eq.s32.totalorder %s31, 0
    %p502 = por %p500, %p501
    %p503 = scmp.ne.s32.totalorder %s489, %s490
    %p504 = scmp.eq.s32.totalorder %s32, 1
    %p505 = por %p503, %p504
    %p507 = scmp.ne.s32.totalorder %s490, %s506
    %p508 = scmp.eq.s32.totalorder %s32, 0
    %p509 = por %p507, %p508
    %p510 = scmp.le.s32.totalorder 1, %s26
    %p511 = scmp.lt.s32.totalorder %s26, 3
    %p512 = pnand %p510, %p511
    %p513 = pneg %p512
    // Predicated region
    $region9: #{tpu_custom_call.1} parent=5 // pred_check
      _
    $region10: #{tpu_custom_call.1} parent=5 // pred_check_branch
      %515 = sbr.rel (%p512) target = $region12
    $region11: #{tpu_custom_call.1} parent=5 // pred_region
      %s516 = ssub.s32 %s26, 1
      // Predicated region
      $region13: #{tpu_custom_call.1} parent=11 // pred_check
        %p517 = pneg %p203
      $region14: #{tpu_custom_call.1} parent=11 // pred_check_branch
        %519 = sbr.rel (%p517) target = $region16
      $region15: #{tpu_custom_call.1} parent=11 // pred_region
        _
      $region16: #{tpu_custom_call.1} parent=11 // pred_fallthru
        _
      // Predicated region
      $region17: #{tpu_custom_call.1} parent=11 // pred_check
        %p520 = pneg %p224
      $region18: #{tpu_custom_call.1} parent=11 // pred_check_branch
        %522 = sbr.rel (%p520) target = $region20
      $region19: #{tpu_custom_call.1} parent=11 // pred_region
        _
      $region20: #{tpu_custom_call.1} parent=11 // pred_fallthru
        _
      // Predicated region
      $region21: #{tpu_custom_call.1} parent=11 // pred_check
        %p523 = pneg %p245
      $region22: #{tpu_custom_call.1} parent=11 // pred_check_branch
        %525 = sbr.rel (%p523) target = $region24
      $region23: #{tpu_custom_call.1} parent=11 // pred_region
        _
      $region24: #{tpu_custom_call.1} parent=11 // pred_fallthru
        _
      // Predicated region
      $region25: #{tpu_custom_call.1} parent=11 // pred_check
        %p526 = pneg %p266
      $region26: #{tpu_custom_call.1} parent=11 // pred_check_branch
        %528 = sbr.rel (%p526) target = $region28
      $region27: #{tpu_custom_call.1} parent=11 // pred_region
        _
      $region28: #{tpu_custom_call.1} parent=11 // pred_fallthru
        _
      // Predicated region
      $region29: #{tpu_custom_call.1} parent=11 // pred_check
        %p529 = pneg %p287
      $region30: #{tpu_custom_call.1} parent=11 // pred_check_branch
        %531 = sbr.rel (%p529) target = $region32
      $region31: #{tpu_custom_call.1} parent=11 // pred_region
        _
      $region32: #{tpu_custom_call.1} parent=11 // pred_fallthru
        _
      // Predicated region
      $region33: #{tpu_custom_call.1} parent=11 // pred_check
        %p532 = pneg %p308
      $region34: #{tpu_custom_call.1} parent=11 // pred_check_branch
        %534 = sbr.rel (%p532) target = $region36
      $region35: #{tpu_custom_call.1} parent=11 // pred_region
        _
      $region36: #{tpu_custom_call.1} parent=11 // pred_fallthru
        _
      // Predicated region
      $region37: #{tpu_custom_call.1} parent=11 // pred_check
        %p535 = pneg %p329
      $region38: #{tpu_custom_call.1} parent=11 // pred_check_branch
        %537 = sbr.rel (%p535) target = $region40
      $region39: #{tpu_custom_call.1} parent=11 // pred_region
        _
      $region40: #{tpu_custom_call.1} parent=11 // pred_fallthru
        _
      // Predicated region
      $region41: #{tpu_custom_call.1} parent=11 // pred_check
        %p538 = pneg %p350
      $region42: #{tpu_custom_call.1} parent=11 // pred_check_branch
        %540 = sbr.rel (%p538) target = $region44
      $region43: #{tpu_custom_call.1} parent=11 // pred_region
        _
      $region44: #{tpu_custom_call.1} parent=11 // pred_fallthru
        _
      // Predicated region
      $region45: #{tpu_custom_call.1} parent=11 // pred_check
        %p541 = pneg %p371
      $region46: #{tpu_custom_call.1} parent=11 // pred_check_branch
        %543 = sbr.rel (%p541) target = $region48
      $region47: #{tpu_custom_call.1} parent=11 // pred_region
        _
      $region48: #{tpu_custom_call.1} parent=11 // pred_fallthru
        _
      // Predicated region
      $region49: #{tpu_custom_call.1} parent=11 // pred_check
        %p544 = pneg %p392
      $region50: #{tpu_custom_call.1} parent=11 // pred_check_branch
        %546 = sbr.rel (%p544) target = $region52
      $region51: #{tpu_custom_call.1} parent=11 // pred_region
        _
      $region52: #{tpu_custom_call.1} parent=11 // pred_fallthru
        _
      // Predicated region
      $region53: #{tpu_custom_call.1} parent=11 // pred_check
        %p547 = pneg %p413
      $region54: #{tpu_custom_call.1} parent=11 // pred_check_branch
        %549 = sbr.rel (%p547) target = $region56
      $region55: #{tpu_custom_call.1} parent=11 // pred_region
        _
      $region56: #{tpu_custom_call.1} parent=11 // pred_fallthru
        _
      // Predicated region
      $region57: #{tpu_custom_call.1} parent=11 // pred_check
        %p550 = pneg %p434
      $region58: #{tpu_custom_call.1} parent=11 // pred_check_branch
        %552 = sbr.rel (%p550) target = $region60
      $region59: #{tpu_custom_call.1} parent=11 // pred_region
        _
      $region60: #{tpu_custom_call.1} parent=11 // pred_fallthru
        _
      // Predicated region
      $region61: #{tpu_custom_call.1} parent=11 // pred_check
        %p553 = pneg %p455
      $region62: #{tpu_custom_call.1} parent=11 // pred_check_branch
        %555 = sbr.rel (%p553) target = $region64
      $region63: #{tpu_custom_call.1} parent=11 // pred_region
        _
      $region64: #{tpu_custom_call.1} parent=11 // pred_fallthru
        _
      // Predicated region
      $region65: #{tpu_custom_call.1} parent=11 // pred_check
        %p556 = pneg %p476
      $region66: #{tpu_custom_call.1} parent=11 // pred_check_branch
        %558 = sbr.rel (%p556) target = $region68
      $region67: #{tpu_custom_call.1} parent=11 // pred_region
        _
      $region68: #{tpu_custom_call.1} parent=11 // pred_fallthru
        _
    $region12: #{tpu_custom_call.1} parent=5 // pred_fallthru
      _
    %p559 = scmp.lt.s32.totalorder %s26, 2
    // Predicated region
    $region69: #{tpu_custom_call.1} parent=5 // pred_check
      %p560 = pneg %p559
    $region70: #{tpu_custom_call.1} parent=5 // pred_check_branch
      %562 = sbr.rel (%p560) target = $region72
    $region71: #{tpu_custom_call.1} parent=5 // pred_region
      // Predicated region
      $region73: #{tpu_custom_call.1} parent=71 // pred_check
        %p563 = pneg %p46
      $region74: #{tpu_custom_call.1} parent=71 // pred_check_branch
        %565 = sbr.rel (%p563) target = $region76
      $region75: #{tpu_custom_call.1} parent=71 // pred_region
        %s566 = smul.u32 16, %s26
        %p567 = scmp.lt.s32.totalorder %s566, 31
        %s568 = scalar_select %p567, %s566, 31
        %s569 = smul.addr %s568, 8
        %s570 = scalar_lea.vmem %s0, %s569
        %s571 = smul.u32 16, %s26
      $region76: #{tpu_custom_call.1} parent=71 // pred_fallthru
        _
      // Predicated region
      $region77: #{tpu_custom_call.1} parent=71 // pred_check
        %p572 = pneg %p72
      $region78: #{tpu_custom_call.1} parent=71 // pred_check_branch
        %574 = sbr.rel (%p572) target = $region80
      $region79: #{tpu_custom_call.1} parent=71 // pred_region
        %p575 = scmp.lt.s32.totalorder %s26, 1
        %s576 = scalar_select %p575, %s26, 1
        %s577 = scalar_lea.vmem %s1, %s576
      $region80: #{tpu_custom_call.1} parent=71 // pred_fallthru
        _
      // Predicated region
      $region81: #{tpu_custom_call.1} parent=71 // pred_check
        %p578 = pneg %p98
      $region82: #{tpu_custom_call.1} parent=71 // pred_check_branch
        %580 = sbr.rel (%p578) target = $region84
      $region83: #{tpu_custom_call.1} parent=71 // pred_region
        %p581 = scmp.lt.s32.totalorder %s26, 1
        %s582 = scalar_select %p581, %s26, 1
        %s583 = smul.addr %s582, 16
        %s584 = smul.addr %s583, 8
        %s585 = scalar_lea.vmem %s2, %s584
      $region84: #{tpu_custom_call.1} parent=71 // pred_fallthru
        _
      // Predicated region
      $region85: #{tpu_custom_call.1} parent=71 // pred_check
        %p586 = pneg %p124
      $region86: #{tpu_custom_call.1} parent=71 // pred_check_branch
        %588 = sbr.rel (%p586) target = $region88
      $region87: #{tpu_custom_call.1} parent=71 // pred_region
        %s589 = smul.u32 16, %s26
        %p590 = scmp.lt.s32.totalorder %s589, 31
        %s591 = scalar_select %p590, %s589, 31
        %s592 = smul.addr %s591, 8
        %s593 = scalar_lea.vmem %s3, %s592
        %s594 = smul.u32 16, %s26
      $region88: #{tpu_custom_call.1} parent=71 // pred_fallthru
        _
      // Predicated region
      $region89: #{tpu_custom_call.1} parent=71 // pred_check
        %p595 = pneg %p150
      $region90: #{tpu_custom_call.1} parent=71 // pred_check_branch
        %597 = sbr.rel (%p595) target = $region92
      $region91: #{tpu_custom_call.1} parent=71 // pred_region
        %s598 = smul.u32 16, %s26
        %p599 = scmp.lt.s32.totalorder %s598, 31
        %s600 = scalar_select %p599, %s598, 31
        %s601 = smul.addr %s600, 8
        %s602 = scalar_lea.vmem %s4, %s601
        %s603 = smul.u32 16, %s26
      $region92: #{tpu_custom_call.1} parent=71 // pred_fallthru
        _
      // Predicated region
      $region93: #{tpu_custom_call.1} parent=71 // pred_check
        %p604 = pneg %p176
      $region94: #{tpu_custom_call.1} parent=71 // pred_check_branch
        %606 = sbr.rel (%p604) target = $region96
      $region95: #{tpu_custom_call.1} parent=71 // pred_region
        %s607 = smul.u32 16, %s26
        %p608 = scmp.lt.s32.totalorder %s607, 31
        %s609 = scalar_select %p608, %s607, 31
        %s610 = smul.addr %s609, 8
        %s611 = scalar_lea.vmem %s5, %s610
        %s612 = smul.u32 16, %s26
      $region96: #{tpu_custom_call.1} parent=71 // pred_fallthru
        _
    $region72: #{tpu_custom_call.1} parent=5 // pred_fallthru
      _
    %p613 = scmp.le.s32.totalorder 1, %s26
    %p614 = scmp.lt.s32.totalorder %s26, 3
    %p615 = pnand %p613, %p614
    %p616 = pneg %p615
    // Predicated region
    $region97: #{tpu_custom_call.1} parent=5 // pred_check
      _
    $region98: #{tpu_custom_call.1} parent=5 // pred_check_branch
      %618 = sbr.rel (%p615) target = $region100
    $region99: #{tpu_custom_call.1} parent=5 // pred_region
      %s619 = ssub.s32 %s26, 1
      %s620 = smul.u32 16, %s31
      %p621 = scmp.lt.s32.totalorder %s620, 31
      %s622 = scalar_select %p621, %s620, 31
      %s623 = smul.addr %s622, 8
      %s624 = scalar_lea.vmem %s0, %s623
      %p625 = pneg %p52
      %p626 = pneg %p49
      %p627 = scmp.lt.s32.totalorder %s31, 1
      %s628 = scalar_select %p627, %s31, 1
      %s629 = scalar_lea.vmem %s1, %s628
      %p630 = pneg %p78
      %p631 = pneg %p75
      %p632 = scmp.lt.s32.totalorder %s31, 1
      %s633 = scalar_select %p632, %s31, 1
      %s634 = smul.addr %s633, 16
      %s635 = smul.addr %s634, 8
      %s636 = scalar_lea.vmem %s2, %s635
      %p637 = pneg %p104
      %p638 = pneg %p101
      %s639 = smul.u32 16, %s31
      %p640 = scmp.lt.s32.totalorder %s639, 31
      %s641 = scalar_select %p640, %s639, 31
      %s642 = smul.addr %s641, 8
      %s643 = scalar_lea.vmem %s3, %s642
      %p644 = pneg %p130
      %p645 = pneg %p127
      %s646 = smul.u32 16, %s31
      %p647 = scmp.lt.s32.totalorder %s646, 31
      %s648 = scalar_select %p647, %s646, 31
      %s649 = smul.addr %s648, 8
      %s650 = scalar_lea.vmem %s4, %s649
      %p651 = pneg %p156
      %p652 = pneg %p153
      %s653 = smul.u32 16, %s31
      %p654 = scmp.lt.s32.totalorder %s653, 31
      %s655 = scalar_select %p654, %s653, 31
      %s656 = smul.addr %s655, 8
      %s657 = scalar_lea.vmem %s5, %s656
      %p658 = pneg %p182
      %p659 = pneg %p179
      %p660 = pneg %p203
      %p661 = pneg %p200
      %p662 = pneg %p224
      %p663 = pneg %p221
      %p664 = pneg %p245
      %p665 = pneg %p242
      %p666 = pneg %p266
      %p667 = pneg %p263
      %p668 = pneg %p287
      %p669 = pneg %p284
      %p670 = pneg %p308
      %p671 = pneg %p305
      %p672 = pneg %p329
      %p673 = pneg %p326
      %p674 = pneg %p350
      %p675 = pneg %p347
      %p676 = pneg %p371
      %p677 = pneg %p368
      %p678 = pneg %p392
      %p679 = pneg %p389
      %p680 = pneg %p413
      %p681 = pneg %p410
      %p682 = pneg %p434
      %p683 = pneg %p431
      %p684 = pneg %p455
      %p685 = pneg %p452
      %p686 = pneg %p476
      %p687 = pneg %p473
      %p688 = pneg %p502
      %p689 = pneg %p499
      %s690 = smul.u32 16, %s31
      %p691 = scmp.lt.s32.totalorder %s690, 31
      %s692 = scalar_select %p691, %s690, 31
      %s693 = smul.addr %s692, 8
      %s694 = scalar_lea.vmem %s20, %s693
      %s695 = smul.u32 16, %s31
      %p696 = scmp.lt.s32.totalorder %s695, 31
      %s697 = scalar_select %p696, %s695, 31
      %s698 = smul.addr %s697, 8
      %s699 = scalar_lea.vmem %s0, %s698
      %s700 = smul.u32 16, %s31
      %p701 = scmp.lt.s32.totalorder %s31, 1
      %s702 = scalar_select %p701, %s31, 1
      %s703 = scalar_lea.vmem %s1, %s702
      %p704 = scmp.lt.s32.totalorder %s31, 1
      %s705 = scalar_select %p704, %s31, 1
      %s706 = smul.addr %s705, 16
      %s707 = smul.addr %s706, 8
      %s708 = scalar_lea.vmem %s2, %s707
      %s709 = smul.u32 16, %s31
      %p710 = scmp.lt.s32.totalorder %s709, 31
      %s711 = scalar_select %p710, %s709, 31
      %s712 = smul.addr %s711, 8
      %s713 = scalar_lea.vmem %s3, %s712
      %s714 = smul.u32 16, %s31
      %s715 = smul.u32 16, %s31
      %p716 = scmp.lt.s32.totalorder %s715, 31
      %s717 = scalar_select %p716, %s715, 31
      %s718 = smul.addr %s717, 8
      %s719 = scalar_lea.vmem %s4, %s718
      %s720 = smul.u32 16, %s31
      %s721 = smul.u32 16, %s31
      %p722 = scmp.lt.s32.totalorder %s721, 31
      %s723 = scalar_select %p722, %s721, 31
      %s724 = smul.addr %s723, 8
      %s725 = scalar_lea.vmem %s5, %s724
      %s726 = smul.u32 16, %s31
      %s727 = smul.u32 16, %s31
      %p728 = scmp.lt.s32.totalorder %s727, 31
      %s729 = scalar_select %p728, %s727, 31
      %s730 = smul.addr %s729, 8
      %s731 = scalar_lea.vmem %s20, %s730
      %s732 = smul.u32 16, %s31
      %v733 = vld [vmem:[%s699] sm:$0xff]
      %v734 = vld [vmem:[%s699 + $0x8] sm:$0xff]
      %v735 = vld [vmem:[%s699 + $0x10] sm:$0xff]
      %v736 = vld [vmem:[%s699 + $0x18] sm:$0xff]
      %v737 = vld [vmem:[%s699 + $0x20] sm:$0xff]
      %v738 = vld [vmem:[%s699 + $0x28] sm:$0xff]
      %v739 = vld [vmem:[%s699 + $0x30] sm:$0xff]
      %v740 = vld [vmem:[%s699 + $0x38] sm:$0xff]
      %v741 = vld [vmem:[%s699 + $0x40] sm:$0xff]
      %v742 = vld [vmem:[%s699 + $0x48] sm:$0xff]
      %v743 = vld [vmem:[%s699 + $0x50] sm:$0xff]
      %v744 = vld [vmem:[%s699 + $0x58] sm:$0xff]
      %v745 = vld [vmem:[%s699 + $0x60] sm:$0xff]
      %v746 = vld [vmem:[%s699 + $0x68] sm:$0xff]
      %v747 = vld [vmem:[%s699 + $0x70] sm:$0xff]
      %v748 = vld [vmem:[%s699 + $0x78] sm:$0xff]
      %vm749 = vcmp.eq.s32.totalorder %v733, 0
      %vm750 = vcmp.eq.s32.totalorder %v734, 0
      %vm751 = vcmp.eq.s32.totalorder %v735, 0
      %vm752 = vcmp.eq.s32.totalorder %v736, 0
      %vm753 = vcmp.eq.s32.totalorder %v737, 0
      %vm754 = vcmp.eq.s32.totalorder %v738, 0
      %vm755 = vcmp.eq.s32.totalorder %v739, 0
      %vm756 = vcmp.eq.s32.totalorder %v740, 0
      %vm757 = vcmp.eq.s32.totalorder %v741, 0
      %vm758 = vcmp.eq.s32.totalorder %v742, 0
      %vm759 = vcmp.eq.s32.totalorder %v743, 0
      %vm760 = vcmp.eq.s32.totalorder %v744, 0
      %vm761 = vcmp.eq.s32.totalorder %v745, 0
      %vm762 = vcmp.eq.s32.totalorder %v746, 0
      %vm763 = vcmp.eq.s32.totalorder %v747, 0
      %vm764 = vcmp.eq.s32.totalorder %v748, 0
      %v765 = vsel %vm749, 1, 0
      %v766 = vsel %vm750, 1, 0
      %v767 = vsel %vm751, 1, 0
      %v768 = vsel %vm752, 1, 0
      %v769 = vsel %vm753, 1, 0
      %v770 = vsel %vm754, 1, 0
      %v771 = vsel %vm755, 1, 0
      %v772 = vsel %vm756, 1, 0
      %v773 = vsel %vm757, 1, 0
      %v774 = vsel %vm758, 1, 0
      %v775 = vsel %vm759, 1, 0
      %v776 = vsel %vm760, 1, 0
      %v777 = vsel %vm761, 1, 0
      %v778 = vsel %vm762, 1, 0
      %v779 = vsel %vm763, 1, 0
      %v780 = vsel %vm764, 1, 0
      %v781 = vcvt.s32.f32 %v765
      %v782 = vcvt.s32.f32 %v766
      %v783 = vcvt.s32.f32 %v767
      %v784 = vcvt.s32.f32 %v768
      %v785 = vcvt.s32.f32 %v769
      %v786 = vcvt.s32.f32 %v770
      %v787 = vcvt.s32.f32 %v771
      %v788 = vcvt.s32.f32 %v772
      %v789 = vcvt.s32.f32 %v773
      %v790 = vcvt.s32.f32 %v774
      %v791 = vcvt.s32.f32 %v775
      %v792 = vcvt.s32.f32 %v776
      %v793 = vcvt.s32.f32 %v777
      %v794 = vcvt.s32.f32 %v778
      %v795 = vcvt.s32.f32 %v779
      %v796 = vcvt.s32.f32 %v780
      %v797 = vld [vmem:[%s703] sm:$0x1]
      %vm798 = vcmp.ge.s32.totalorder %v797, 2
      %v799 = vsel %vm798, 1, 0
      %v800 = vcvt.s32.f32 %v799
      %v801 = vld [vmem:[%s708] sm:$0xff]
      %v802 = vld [vmem:[%s708 + $0x8] sm:$0xff]
      %v803 = vld [vmem:[%s708 + $0x10] sm:$0xff]
      %v804 = vld [vmem:[%s708 + $0x18] sm:$0xff]
      %v805 = vld [vmem:[%s708 + $0x20] sm:$0xff]
      %v806 = vld [vmem:[%s708 + $0x28] sm:$0xff]
      %v807 = vld [vmem:[%s708 + $0x30] sm:$0xff]
      %v808 = vld [vmem:[%s708 + $0x38] sm:$0xff]
      %v809 = vld [vmem:[%s708 + $0x40] sm:$0xff]
      %v810 = vld [vmem:[%s708 + $0x48] sm:$0xff]
      %v811 = vld [vmem:[%s708 + $0x50] sm:$0xff]
      %v812 = vld [vmem:[%s708 + $0x58] sm:$0xff]
      %v813 = vld [vmem:[%s708 + $0x60] sm:$0xff]
      %v814 = vld [vmem:[%s708 + $0x68] sm:$0xff]
      %v815 = vld [vmem:[%s708 + $0x70] sm:$0xff]
      %v816 = vld [vmem:[%s708 + $0x78] sm:$0xff]
      %v817 = vsub.f32 1.0, %v801
      %v818 = vsub.f32 1.0, %v802
      %v819 = vsub.f32 1.0, %v803
      %v820 = vsub.f32 1.0, %v804
      %v821 = vsub.f32 1.0, %v805
      %v822 = vsub.f32 1.0, %v806
      %v823 = vsub.f32 1.0, %v807
      %v824 = vsub.f32 1.0, %v808
      %v825 = vsub.f32 1.0, %v809
      %v826 = vsub.f32 1.0, %v810
      %v827 = vsub.f32 1.0, %v811
      %v828 = vsub.f32 1.0, %v812
      %v829 = vsub.f32 1.0, %v813
      %v830 = vsub.f32 1.0, %v814
      %v831 = vsub.f32 1.0, %v815
      %v832 = vsub.f32 1.0, %v816
      %v833 = vmul.f32 %v817, -1e+09
      %v834 = vmul.f32 %v818, -1e+09
      %v835 = vmul.f32 %v819, -1e+09
      %v836 = vmul.f32 %v820, -1e+09
      %v837 = vmul.f32 %v821, -1e+09
      %v838 = vmul.f32 %v822, -1e+09
      %v839 = vmul.f32 %v823, -1e+09
      %v840 = vmul.f32 %v824, -1e+09
      %v841 = vmul.f32 %v825, -1e+09
      %v842 = vmul.f32 %v826, -1e+09
      %v843 = vmul.f32 %v827, -1e+09
      %v844 = vmul.f32 %v828, -1e+09
      %v845 = vmul.f32 %v829, -1e+09
      %v846 = vmul.f32 %v830, -1e+09
      %v847 = vmul.f32 %v831, -1e+09
      %v848 = vmul.f32 %v832, -1e+09
      %v849 = vld [vmem:[%s713] sm:$0xff]
      %v850 = vld [vmem:[%s713 + $0x8] sm:$0xff]
      %v851 = vld [vmem:[%s713 + $0x10] sm:$0xff]
      %v852 = vld [vmem:[%s713 + $0x18] sm:$0xff]
      %v853 = vld [vmem:[%s713 + $0x20] sm:$0xff]
      %v854 = vld [vmem:[%s713 + $0x28] sm:$0xff]
      %v855 = vld [vmem:[%s713 + $0x30] sm:$0xff]
      %v856 = vld [vmem:[%s713 + $0x38] sm:$0xff]
      %v857 = vld [vmem:[%s713 + $0x40] sm:$0xff]
      %v858 = vld [vmem:[%s713 + $0x48] sm:$0xff]
      %v859 = vld [vmem:[%s713 + $0x50] sm:$0xff]
      %v860 = vld [vmem:[%s713 + $0x58] sm:$0xff]
      %v861 = vld [vmem:[%s713 + $0x60] sm:$0xff]
      %v862 = vld [vmem:[%s713 + $0x68] sm:$0xff]
      %v863 = vld [vmem:[%s713 + $0x70] sm:$0xff]
      %v864 = vld [vmem:[%s713 + $0x78] sm:$0xff]
      %866 = vset.pattern.permute.xlu0 0
      %867 = vperm.xlu0 %866, %v781
      %v868 = vpop.permute.xlu0 %867
      %871 = vset.pattern.permute.xlu0 0
      %872 = vperm.xlu0 %871, %v782
      %v873 = vpop.permute.xlu0 %872
      %876 = vset.pattern.permute.xlu0 0
      %877 = vperm.xlu0 %876, %v783
      %v878 = vpop.permute.xlu0 %877
      %881 = vset.pattern.permute.xlu0 0
      %882 = vperm.xlu0 %881, %v784
      %v883 = vpop.permute.xlu0 %882
      %886 = vset.pattern.permute.xlu0 0
      %887 = vperm.xlu0 %886, %v785
      %v888 = vpop.permute.xlu0 %887
      %891 = vset.pattern.permute.xlu0 0
      %892 = vperm.xlu0 %891, %v786
      %v893 = vpop.permute.xlu0 %892
      %896 = vset.pattern.permute.xlu0 0
      %897 = vperm.xlu0 %896, %v787
      %v898 = vpop.permute.xlu0 %897
      %901 = vset.pattern.permute.xlu0 0
      %902 = vperm.xlu0 %901, %v788
      %v903 = vpop.permute.xlu0 %902
      %906 = vset.pattern.permute.xlu0 0
      %907 = vperm.xlu0 %906, %v789
      %v908 = vpop.permute.xlu0 %907
      %911 = vset.pattern.permute.xlu0 0
      %912 = vperm.xlu0 %911, %v790
      %v913 = vpop.permute.xlu0 %912
      %916 = vset.pattern.permute.xlu0 0
      %917 = vperm.xlu0 %916, %v791
      %v918 = vpop.permute.xlu0 %917
      %921 = vset.pattern.permute.xlu0 0
      %922 = vperm.xlu0 %921, %v792
      %v923 = vpop.permute.xlu0 %922
      %926 = vset.pattern.permute.xlu0 0
      %927 = vperm.xlu0 %926, %v793
      %v928 = vpop.permute.xlu0 %927
      %931 = vset.pattern.permute.xlu0 0
      %932 = vperm.xlu0 %931, %v794
      %v933 = vpop.permute.xlu0 %932
      %936 = vset.pattern.permute.xlu0 0
      %937 = vperm.xlu0 %936, %v795
      %v938 = vpop.permute.xlu0 %937
      %941 = vset.pattern.permute.xlu0 0
      %942 = vperm.xlu0 %941, %v796
      %v943 = vpop.permute.xlu0 %942
      %v946 = vlaneseq
      %v947 = vshrl.u32 %v946, 7
      %v948 = vsub.s32 0, %v947
      %v949 = vrot.slane %v800, %v948
      %v951 = vmul.f32 %v868, %v949
      %v952 = vmul.f32 %v873, %v949
      %v953 = vmul.f32 %v878, %v949
      %v954 = vmul.f32 %v883, %v949
      %v955 = vmul.f32 %v888, %v949
      %v956 = vmul.f32 %v893, %v949
      %v957 = vmul.f32 %v898, %v949
      %v958 = vmul.f32 %v903, %v949
      %v959 = vmul.f32 %v908, %v949
      %v960 = vmul.f32 %v913, %v949
      %v961 = vmul.f32 %v918, %v949
      %v962 = vmul.f32 %v923, %v949
      %v963 = vmul.f32 %v928, %v949
      %v964 = vmul.f32 %v933, %v949
      %v965 = vmul.f32 %v938, %v949
      %v966 = vmul.f32 %v943, %v949
      %v967 = vmul.f32 %v951, %v801
      %v968 = vmul.f32 %v952, %v802
      %v969 = vmul.f32 %v953, %v803
      %v970 = vmul.f32 %v954, %v804
      %v971 = vmul.f32 %v955, %v805
      %v972 = vmul.f32 %v956, %v806
      %v973 = vmul.f32 %v957, %v807
      %v974 = vmul.f32 %v958, %v808
      %v975 = vmul.f32 %v959, %v809
      %v976 = vmul.f32 %v960, %v810
      %v977 = vmul.f32 %v961, %v811
      %v978 = vmul.f32 %v962, %v812
      %v979 = vmul.f32 %v963, %v813
      %v980 = vmul.f32 %v964, %v814
      %v981 = vmul.f32 %v965, %v815
      %v982 = vmul.f32 %v966, %v816
      %983 = vadd.xlane.f32.xlu0 %v967
      %v984 = vpop.xlane.xlu0 %983
      %985 = vadd.xlane.f32.xlu0 %v968
      %v986 = vpop.xlane.xlu0 %985
      %987 = vadd.xlane.f32.xlu0 %v969
      %v988 = vpop.xlane.xlu0 %987
      %989 = vadd.xlane.f32.xlu0 %v970
      %v990 = vpop.xlane.xlu0 %989
      %991 = vadd.xlane.f32.xlu0 %v971
      %v992 = vpop.xlane.xlu0 %991
      %993 = vadd.xlane.f32.xlu0 %v972
      %v994 = vpop.xlane.xlu0 %993
      %995 = vadd.xlane.f32.xlu0 %v973
      %v996 = vpop.xlane.xlu0 %995
      %997 = vadd.xlane.f32.xlu0 %v974
      %v998 = vpop.xlane.xlu0 %997
      %999 = vadd.xlane.f32.xlu0 %v975
      %v1000 = vpop.xlane.xlu0 %999
      %1001 = vadd.xlane.f32.xlu0 %v976
      %v1002 = vpop.xlane.xlu0 %1001
      %1003 = vadd.xlane.f32.xlu0 %v977
      %v1004 = vpop.xlane.xlu0 %1003
      %1005 = vadd.xlane.f32.xlu0 %v978
      %v1006 = vpop.xlane.xlu0 %1005
      %1007 = vadd.xlane.f32.xlu0 %v979
      %v1008 = vpop.xlane.xlu0 %1007
      %1009 = vadd.xlane.f32.xlu0 %v980
      %v1010 = vpop.xlane.xlu0 %1009
      %1011 = vadd.xlane.f32.xlu0 %v981
      %v1012 = vpop.xlane.xlu0 %1011
      %1013 = vadd.xlane.f32.xlu0 %v982
      %v1014 = vpop.xlane.xlu0 %1013
      %v1015 = vadd.f32 %v984, 1e-10
      %v1016 = vadd.f32 %v986, 1e-10
      %v1017 = vadd.f32 %v988, 1e-10
      %v1018 = vadd.f32 %v990, 1e-10
      %v1019 = vadd.f32 %v992, 1e-10
      %v1020 = vadd.f32 %v994, 1e-10
      %v1021 = vadd.f32 %v996, 1e-10
      %v1022 = vadd.f32 %v998, 1e-10
      %v1023 = vadd.f32 %v1000, 1e-10
      %v1024 = vadd.f32 %v1002, 1e-10
      %v1025 = vadd.f32 %v1004, 1e-10
      %v1026 = vadd.f32 %v1006, 1e-10
      %v1027 = vadd.f32 %v1008, 1e-10
      %v1028 = vadd.f32 %v1010, 1e-10
      %v1029 = vadd.f32 %v1012, 1e-10
      %v1030 = vadd.f32 %v1014, 1e-10
      %v1031 = vrcp.pop %v1015
      %v1032 = vmul.f32 %v967, %v1031
      %v1033 = vrcp.pop %v1016
      %v1034 = vmul.f32 %v968, %v1033
      %v1035 = vrcp.pop %v1017
      %v1036 = vmul.f32 %v969, %v1035
      %v1037 = vrcp.pop %v1018
      %v1038 = vmul.f32 %v970, %v1037
      %v1039 = vrcp.pop %v1019
      %v1040 = vmul.f32 %v971, %v1039
      %v1041 = vrcp.pop %v1020
      %v1042 = vmul.f32 %v972, %v1041
      %v1043 = vrcp.pop %v1021
      %v1044 = vmul.f32 %v973, %v1043
      %v1045 = vrcp.pop %v1022
      %v1046 = vmul.f32 %v974, %v1045
      %v1047 = vrcp.pop %v1023
      %v1048 = vmul.f32 %v975, %v1047
      %v1049 = vrcp.pop %v1024
      %v1050 = vmul.f32 %v976, %v1049
      %v1051 = vrcp.pop %v1025
      %v1052 = vmul.f32 %v977, %v1051
      %v1053 = vrcp.pop %v1026
      %v1054 = vmul.f32 %v978, %v1053
      %v1055 = vrcp.pop %v1027
      %v1056 = vmul.f32 %v979, %v1055
      %v1057 = vrcp.pop %v1028
      %v1058 = vmul.f32 %v980, %v1057
      %v1059 = vrcp.pop %v1029
      %v1060 = vmul.f32 %v981, %v1059
      %v1061 = vrcp.pop %v1030
      %v1062 = vmul.f32 %v982, %v1061
      %1063 = vmatprep.subr.mxu0 0.0
      %1064 = vmatpush1.msra.mxu0 %v849
      %1065 = vmatprep.subr.mxu0 0.0
      %1066 = vmatpush1.msra.mxu0 %v850
      %1067 = vmatprep.subr.mxu0 0.0
      %1068 = vmatpush1.msra.mxu0 %v851
      %1069 = vmatprep.subr.mxu0 0.0
      %1070 = vmatpush1.msra.mxu0 %v852
      %1071 = vmatprep.subr.mxu0 0.0
      %1072 = vmatpush1.msra.mxu0 %v853
      %1073 = vmatprep.subr.mxu0 0.0
      %1074 = vmatpush1.msra.mxu0 %v854
      %1075 = vmatprep.subr.mxu0 0.0
      %1076 = vmatpush1.msra.mxu0 %v855
      %1077 = vmatprep.subr.mxu0 0.0
      %1078 = vmatpush1.msra.mxu0 %v856
      %1079 = vmatprep.subr.mxu0 0.0
      %1080 = vmatpush1.msra.mxu0 %v857
      %1081 = vmatprep.subr.mxu0 0.0
      %1082 = vmatpush1.msra.mxu0 %v858
      %1083 = vmatprep.subr.mxu0 0.0
      %1084 = vmatpush1.msra.mxu0 %v859
      %1085 = vmatprep.subr.mxu0 0.0
      %1086 = vmatpush1.msra.mxu0 %v860
      %1087 = vmatprep.subr.mxu0 0.0
      %1088 = vmatpush1.msra.mxu0 %v861
      %1089 = vmatprep.subr.mxu0 0.0
      %1090 = vmatpush1.msra.mxu0 %v862
      %1091 = vmatprep.subr.mxu0 0.0
      %1092 = vmatpush1.msra.mxu0 %v863
      %1093 = vmatprep.subr.mxu0 0.0
      %1094 = vmatpush1.msra.mxu0 %v864
      %1095 = vmatprep.subr.mxu0 0.0
      %1096 = vmatpush1.msra.mxu0 0.0
      %1097 = vmatprep.subr.mxu0 0.0
      %1098 = vmatpush1.msra.mxu0 0.0
      %1099 = vmatprep.subr.mxu0 0.0
      %1100 = vmatpush1.msra.mxu0 0.0
      %1101 = vmatprep.subr.mxu0 0.0
      %1102 = vmatpush1.msra.mxu0 0.0
      %1103 = vmatprep.subr.mxu0 0.0
      %1104 = vmatpush1.msra.mxu0 0.0
      %1105 = vmatprep.subr.mxu0 0.0
      %1106 = vmatpush1.msra.mxu0 0.0
      %1107 = vmatprep.subr.mxu0 0.0
      %1108 = vmatpush1.msra.mxu0 0.0
      %1109 = vmatprep.subr.mxu0 0.0
      %1110 = vmatpush1.msra.mxu0 0.0
      %1111 = vmatprep.subr.mxu0 0.0
      %1112 = vmatpush1.msra.mxu0 0.0
      %1113 = vmatprep.subr.mxu0 0.0
      %1114 = vmatpush1.msra.mxu0 0.0
      %1115 = vmatprep.subr.mxu0 0.0
      %1116 = vmatpush1.msra.mxu0 0.0
      %1117 = vmatprep.subr.mxu0 0.0
      %1118 = vmatpush1.msra.mxu0 0.0
      %1119 = vmatprep.subr.mxu0 0.0
      %1120 = vmatpush1.msra.mxu0 0.0
      %1121 = vmatprep.subr.mxu0 0.0
      %1122 = vmatpush1.msra.mxu0 0.0
      %1123 = vmatprep.subr.mxu0 0.0
      %1124 = vmatpush1.msra.mxu0 0.0
      %1125 = vmatprep.subr.mxu0 0.0
      %1126 = vmatpush1.msra.mxu0 0.0
      %1127 = vmatprep.mubr.f32.mxu0 0.0
      %1128 = vmatmul.mubr.f32.gmra.mrb[0].mxu0 %v1032
      %v1129 = vpop.f32.mrb[0].mxu0
      %v1130 = vadd.f32 0.0, %v1129
      %v1131 = vpop.f32.mrb[0].mxu0
      %1132 = vmatprep.mubr.f32.mxu0 0.0
      %1133 = vmatmul.mubr.f32.gmra.mrb[0].mxu0 %v1034
      %v1134 = vpop.f32.mrb[0].mxu0
      %v1135 = vadd.f32 0.0, %v1134
      %v1136 = vpop.f32.mrb[0].mxu0
      %1137 = vmatprep.mubr.f32.mxu0 0.0
      %1138 = vmatmul.mubr.f32.gmra.mrb[0].mxu0 %v1036
      %v1139 = vpop.f32.mrb[0].mxu0
      %v1140 = vadd.f32 0.0, %v1139
      %v1141 = vpop.f32.mrb[0].mxu0
      %1142 = vmatprep.mubr.f32.mxu0 0.0
      %1143 = vmatmul.mubr.f32.gmra.mrb[0].mxu0 %v1038
      %v1144 = vpop.f32.mrb[0].mxu0
      %v1145 = vadd.f32 0.0, %v1144
      %v1146 = vpop.f32.mrb[0].mxu0
      %1147 = vmatprep.mubr.f32.mxu0 0.0
      %1148 = vmatmul.mubr.f32.gmra.mrb[0].mxu0 %v1040
      %v1149 = vpop.f32.mrb[0].mxu0
      %v1150 = vadd.f32 0.0, %v1149
      %v1151 = vpop.f32.mrb[0].mxu0
      %1152 = vmatprep.mubr.f32.mxu0 0.0
      %1153 = vmatmul.mubr.f32.gmra.mrb[0].mxu0 %v1042
      %v1154 = vpop.f32.mrb[0].mxu0
      %v1155 = vadd.f32 0.0, %v1154
      %v1156 = vpop.f32.mrb[0].mxu0
      %1157 = vmatprep.mubr.f32.mxu0 0.0
      %1158 = vmatmul.mubr.f32.gmra.mrb[0].mxu0 %v1044
      %v1159 = vpop.f32.mrb[0].mxu0
      %v1160 = vadd.f32 0.0, %v1159
      %v1161 = vpop.f32.mrb[0].mxu0
      %1162 = vmatprep.mubr.f32.mxu0 0.0
      %1163 = vmatmul.mubr.f32.gmra.mrb[0].mxu0 %v1046
      %v1164 = vpop.f32.mrb[0].mxu0
      %v1165 = vadd.f32 0.0, %v1164
      %v1166 = vpop.f32.mrb[0].mxu0
      %1167 = vmatprep.mubr.f32.mxu0 0.0
      %1168 = vmatmul.mubr.f32.gmra.mrb[0].mxu0 %v1048
      %v1169 = vpop.f32.mrb[0].mxu0
      %v1170 = vadd.f32 0.0, %v1169
      %v1171 = vpop.f32.mrb[0].mxu0
      %1172 = vmatprep.mubr.f32.mxu0 0.0
      %1173 = vmatmul.mubr.f32.gmra.mrb[0].mxu0 %v1050
      %v1174 = vpop.f32.mrb[0].mxu0
      %v1175 = vadd.f32 0.0, %v1174
      %v1176 = vpop.f32.mrb[0].mxu0
      %1177 = vmatprep.mubr.f32.mxu0 0.0
      %1178 = vmatmul.mubr.f32.gmra.mrb[0].mxu0 %v1052
      %v1179 = vpop.f32.mrb[0].mxu0
      %v1180 = vadd.f32 0.0, %v1179
      %v1181 = vpop.f32.mrb[0].mxu0
      %1182 = vmatprep.mubr.f32.mxu0 0.0
      %1183 = vmatmul.mubr.f32.gmra.mrb[0].mxu0 %v1054
      %v1184 = vpop.f32.mrb[0].mxu0
      %v1185 = vadd.f32 0.0, %v1184
      %v1186 = vpop.f32.mrb[0].mxu0
      %1187 = vmatprep.mubr.f32.mxu0 0.0
      %1188 = vmatmul.mubr.f32.gmra.mrb[0].mxu0 %v1056
      %v1189 = vpop.f32.mrb[0].mxu0
      %v1190 = vadd.f32 0.0, %v1189
      %v1191 = vpop.f32.mrb[0].mxu0
      %1192 = vmatprep.mubr.f32.mxu0 0.0
      %1193 = vmatmul.mubr.f32.gmra.mrb[0].mxu0 %v1058
      %v1194 = vpop.f32.mrb[0].mxu0
      %v1195 = vadd.f32 0.0, %v1194
      %v1196 = vpop.f32.mrb[0].mxu0
      %1197 = vmatprep.mubr.f32.mxu0 0.0
      %1198 = vmatmul.mubr.f32.gmra.mrb[0].mxu0 %v1060
      %v1199 = vpop.f32.mrb[0].mxu0
      %v1200 = vadd.f32 0.0, %v1199
      %v1201 = vpop.f32.mrb[0].mxu0
      %1202 = vmatprep.mubr.f32.mxu0 0.0
      %1203 = vmatmul.mubr.f32.gmra.mrb[0].mxu0 %v1062
      %v1204 = vpop.f32.mrb[0].mxu0
      %v1205 = vadd.f32 0.0, %v1204
      %v1206 = vpop.f32.mrb[0].mxu0
      %1207 = vdwg.mxu0
      %v1208 = vsub.f32 1.0, %v781
      %v1209 = vsub.f32 1.0, %v782
      %v1210 = vsub.f32 1.0, %v783
      %v1211 = vsub.f32 1.0, %v784
      %v1212 = vsub.f32 1.0, %v785
      %v1213 = vsub.f32 1.0, %v786
      %v1214 = vsub.f32 1.0, %v787
      %v1215 = vsub.f32 1.0, %v788
      %v1216 = vsub.f32 1.0, %v789
      %v1217 = vsub.f32 1.0, %v790
      %v1218 = vsub.f32 1.0, %v791
      %v1219 = vsub.f32 1.0, %v792
      %v1220 = vsub.f32 1.0, %v793
      %v1221 = vsub.f32 1.0, %v794
      %v1222 = vsub.f32 1.0, %v795
      %v1223 = vsub.f32 1.0, %v796
      %1225 = vset.pattern.permute.xlu0 0
      %1226 = vperm.xlu0 %1225, %v1208
      %v1227 = vpop.permute.xlu0 %1226
      %1230 = vset.pattern.permute.xlu0 0
      %1231 = vperm.xlu0 %1230, %v1209
      %v1232 = vpop.permute.xlu0 %1231
      %1235 = vset.pattern.permute.xlu0 0
      %1236 = vperm.xlu0 %1235, %v1210
      %v1237 = vpop.permute.xlu0 %1236
      %1240 = vset.pattern.permute.xlu0 0
      %1241 = vperm.xlu0 %1240, %v1211
      %v1242 = vpop.permute.xlu0 %1241
      %1245 = vset.pattern.permute.xlu0 0
      %1246 = vperm.xlu0 %1245, %v1212
      %v1247 = vpop.permute.xlu0 %1246
      %1250 = vset.pattern.permute.xlu0 0
      %1251 = vperm.xlu0 %1250, %v1213
      %v1252 = vpop.permute.xlu0 %1251
      %1255 = vset.pattern.permute.xlu0 0
      %1256 = vperm.xlu0 %1255, %v1214
      %v1257 = vpop.permute.xlu0 %1256
      %1260 = vset.pattern.permute.xlu0 0
      %1261 = vperm.xlu0 %1260, %v1215
      %v1262 = vpop.permute.xlu0 %1261
      %1265 = vset.pattern.permute.xlu0 0
      %1266 = vperm.xlu0 %1265, %v1216
      %v1267 = vpop.permute.xlu0 %1266
      %1270 = vset.pattern.permute.xlu0 0
      %1271 = vperm.xlu0 %1270, %v1217
      %v1272 = vpop.permute.xlu0 %1271
      %1275 = vset.pattern.permute.xlu0 0
      %1276 = vperm.xlu0 %1275, %v1218
      %v1277 = vpop.permute.xlu0 %1276
      %1280 = vset.pattern.permute.xlu0 0
      %1281 = vperm.xlu0 %1280, %v1219
      %v1282 = vpop.permute.xlu0 %1281
      %1285 = vset.pattern.permute.xlu0 0
      %1286 = vperm.xlu0 %1285, %v1220
      %v1287 = vpop.permute.xlu0 %1286
      %1290 = vset.pattern.permute.xlu0 0
      %1291 = vperm.xlu0 %1290, %v1221
      %v1292 = vpop.permute.xlu0 %1291
      %1295 = vset.pattern.permute.xlu0 0
      %1296 = vperm.xlu0 %1295, %v1222
      %v1297 = vpop.permute.xlu0 %1296
      %1300 = vset.pattern.permute.xlu0 0
      %1301 = vperm.xlu0 %1300, %v1223
      %v1302 = vpop.permute.xlu0 %1301
      %v1304 = vmul.f32 %v849, %v1227
      %v1305 = vmul.f32 %v850, %v1232
      %v1306 = vmul.f32 %v851, %v1237
      %v1307 = vmul.f32 %v852, %v1242
      %v1308 = vmul.f32 %v853, %v1247
      %v1309 = vmul.f32 %v854, %v1252
      %v1310 = vmul.f32 %v855, %v1257
      %v1311 = vmul.f32 %v856, %v1262
      %v1312 = vmul.f32 %v857, %v1267
      %v1313 = vmul.f32 %v858, %v1272
      %v1314 = vmul.f32 %v859, %v1277
      %v1315 = vmul.f32 %v860, %v1282
      %v1316 = vmul.f32 %v861, %v1287
      %v1317 = vmul.f32 %v862, %v1292
      %v1318 = vmul.f32 %v863, %v1297
      %v1319 = vmul.f32 %v864, %v1302
      %v1320 = vmul.f32 %v1130, %v868
      %v1321 = vmul.f32 %v1135, %v873
      %v1322 = vmul.f32 %v1140, %v878
      %v1323 = vmul.f32 %v1145, %v883
      %v1324 = vmul.f32 %v1150, %v888
      %v1325 = vmul.f32 %v1155, %v893
      %v1326 = vmul.f32 %v1160, %v898
      %v1327 = vmul.f32 %v1165, %v903
      %v1328 = vmul.f32 %v1170, %v908
      %v1329 = vmul.f32 %v1175, %v913
      %v1330 = vmul.f32 %v1180, %v918
      %v1331 = vmul.f32 %v1185, %v923
      %v1332 = vmul.f32 %v1190, %v928
      %v1333 = vmul.f32 %v1195, %v933
      %v1334 = vmul.f32 %v1200, %v938
      %v1335 = vmul.f32 %v1205, %v943
      %v1336 = vadd.f32 %v1304, %v1320
      %v1337 = vadd.f32 %v1305, %v1321
      %v1338 = vadd.f32 %v1306, %v1322
      %v1339 = vadd.f32 %v1307, %v1323
      %v1340 = vadd.f32 %v1308, %v1324
      %v1341 = vadd.f32 %v1309, %v1325
      %v1342 = vadd.f32 %v1310, %v1326
      %v1343 = vadd.f32 %v1311, %v1327
      %v1344 = vadd.f32 %v1312, %v1328
      %v1345 = vadd.f32 %v1313, %v1329
      %v1346 = vadd.f32 %v1314, %v1330
      %v1347 = vadd.f32 %v1315, %v1331
      %v1348 = vadd.f32 %v1316, %v1332
      %v1349 = vadd.f32 %v1317, %v1333
      %v1350 = vadd.f32 %v1318, %v1334
      %v1351 = vadd.f32 %v1319, %v1335
      %v1352 = vld [vmem:[%s719] sm:$0xff]
      %v1353 = vld [vmem:[%s719 + $0x8] sm:$0xff]
      %v1354 = vld [vmem:[%s719 + $0x10] sm:$0xff]
      %v1355 = vld [vmem:[%s719 + $0x18] sm:$0xff]
      %v1356 = vld [vmem:[%s719 + $0x20] sm:$0xff]
      %v1357 = vld [vmem:[%s719 + $0x28] sm:$0xff]
      %v1358 = vld [vmem:[%s719 + $0x30] sm:$0xff]
      %v1359 = vld [vmem:[%s719 + $0x38] sm:$0xff]
      %v1360 = vld [vmem:[%s719 + $0x40] sm:$0xff]
      %v1361 = vld [vmem:[%s719 + $0x48] sm:$0xff]
      %v1362 = vld [vmem:[%s719 + $0x50] sm:$0xff]
      %v1363 = vld [vmem:[%s719 + $0x58] sm:$0xff]
      %v1364 = vld [vmem:[%s719 + $0x60] sm:$0xff]
      %v1365 = vld [vmem:[%s719 + $0x68] sm:$0xff]
      %v1366 = vld [vmem:[%s719 + $0x70] sm:$0xff]
      %v1367 = vld [vmem:[%s719 + $0x78] sm:$0xff]
      %v1368 = vadd.f32 %v1336, %v1352
      %v1369 = vadd.f32 %v1337, %v1353
      %v1370 = vadd.f32 %v1338, %v1354
      %v1371 = vadd.f32 %v1339, %v1355
      %v1372 = vadd.f32 %v1340, %v1356
      %v1373 = vadd.f32 %v1341, %v1357
      %v1374 = vadd.f32 %v1342, %v1358
      %v1375 = vadd.f32 %v1343, %v1359
      %v1376 = vadd.f32 %v1344, %v1360
      %v1377 = vadd.f32 %v1345, %v1361
      %v1378 = vadd.f32 %v1346, %v1362
      %v1379 = vadd.f32 %v1347, %v1363
      %v1380 = vadd.f32 %v1348, %v1364
      %v1381 = vadd.f32 %v1349, %v1365
      %v1382 = vadd.f32 %v1350, %v1366
      %v1383 = vadd.f32 %v1351, %v1367
      %v1384 = vld [vmem:[%s725] sm:$0xff]
      %v1385 = vld [vmem:[%s725 + $0x8] sm:$0xff]
      %v1386 = vld [vmem:[%s725 + $0x10] sm:$0xff]
      %v1387 = vld [vmem:[%s725 + $0x18] sm:$0xff]
      %v1388 = vld [vmem:[%s725 + $0x20] sm:$0xff]
      %v1389 = vld [vmem:[%s725 + $0x28] sm:$0xff]
      %v1390 = vld [vmem:[%s725 + $0x30] sm:$0xff]
      %v1391 = vld [vmem:[%s725 + $0x38] sm:$0xff]
      %v1392 = vld [vmem:[%s725 + $0x40] sm:$0xff]
      %v1393 = vld [vmem:[%s725 + $0x48] sm:$0xff]
      %v1394 = vld [vmem:[%s725 + $0x50] sm:$0xff]
      %v1395 = vld [vmem:[%s725 + $0x58] sm:$0xff]
      %v1396 = vld [vmem:[%s725 + $0x60] sm:$0xff]
      %v1397 = vld [vmem:[%s725 + $0x68] sm:$0xff]
      %v1398 = vld [vmem:[%s725 + $0x70] sm:$0xff]
      %v1399 = vld [vmem:[%s725 + $0x78] sm:$0xff]
      %v1400 = vadd.f32 %v1368, %v1384
      %v1401 = vadd.f32 %v1369, %v1385
      %v1402 = vadd.f32 %v1370, %v1386
      %v1403 = vadd.f32 %v1371, %v1387
      %v1404 = vadd.f32 %v1372, %v1388
      %v1405 = vadd.f32 %v1373, %v1389
      %v1406 = vadd.f32 %v1374, %v1390
      %v1407 = vadd.f32 %v1375, %v1391
      %v1408 = vadd.f32 %v1376, %v1392
      %v1409 = vadd.f32 %v1377, %v1393
      %v1410 = vadd.f32 %v1378, %v1394
      %v1411 = vadd.f32 %v1379, %v1395
      %v1412 = vadd.f32 %v1380, %v1396
      %v1413 = vadd.f32 %v1381, %v1397
      %v1414 = vadd.f32 %v1382, %v1398
      %v1415 = vadd.f32 %v1383, %v1399
      %v1416 = vld [vmem:[%s6] sm:$0x1]
      %v1417 = vld [vmem:[%s7] sm:$0x1]
      %vm1418 = vcmask 261120
      %v1419 = vsel %vm1418, %v1400, 0.0
      %1420 = vadd.xlane.f32.xlu0 %v1419
      %v1421 = vpop.xlane.xlu0 %1420
      %v1422 = vsel %vm1418, %v1401, 0.0
      %1423 = vadd.xlane.f32.xlu0 %v1422
      %v1424 = vpop.xlane.xlu0 %1423
      %v1425 = vsel %vm1418, %v1402, 0.0
      %1426 = vadd.xlane.f32.xlu0 %v1425
      %v1427 = vpop.xlane.xlu0 %1426
      %v1428 = vsel %vm1418, %v1403, 0.0
      %1429 = vadd.xlane.f32.xlu0 %v1428
      %v1430 = vpop.xlane.xlu0 %1429
      %v1431 = vsel %vm1418, %v1404, 0.0
      %1432 = vadd.xlane.f32.xlu0 %v1431
      %v1433 = vpop.xlane.xlu0 %1432
      %v1434 = vsel %vm1418, %v1405, 0.0
      %1435 = vadd.xlane.f32.xlu0 %v1434
      %v1436 = vpop.xlane.xlu0 %1435
      %v1437 = vsel %vm1418, %v1406, 0.0
      %1438 = vadd.xlane.f32.xlu0 %v1437
      %v1439 = vpop.xlane.xlu0 %1438
      %v1440 = vsel %vm1418, %v1407, 0.0
      %1441 = vadd.xlane.f32.xlu0 %v1440
      %v1442 = vpop.xlane.xlu0 %1441
      %v1443 = vsel %vm1418, %v1408, 0.0
      %1444 = vadd.xlane.f32.xlu0 %v1443
      %v1445 = vpop.xlane.xlu0 %1444
      %v1446 = vsel %vm1418, %v1409, 0.0
      %1447 = vadd.xlane.f32.xlu0 %v1446
      %v1448 = vpop.xlane.xlu0 %1447
      %v1449 = vsel %vm1418, %v1410, 0.0
      %1450 = vadd.xlane.f32.xlu0 %v1449
      %v1451 = vpop.xlane.xlu0 %1450
      %v1452 = vsel %vm1418, %v1411, 0.0
      %1453 = vadd.xlane.f32.xlu0 %v1452
      %v1454 = vpop.xlane.xlu0 %1453
      %v1455 = vsel %vm1418, %v1412, 0.0
      %1456 = vadd.xlane.f32.xlu0 %v1455
      %v1457 = vpop.xlane.xlu0 %1456
      %v1458 = vsel %vm1418, %v1413, 0.0
      %1459 = vadd.xlane.f32.xlu0 %v1458
      %v1460 = vpop.xlane.xlu0 %1459
      %v1461 = vsel %vm1418, %v1414, 0.0
      %1462 = vadd.xlane.f32.xlu0 %v1461
      %v1463 = vpop.xlane.xlu0 %1462
      %v1464 = vsel %vm1418, %v1415, 0.0
      %1465 = vadd.xlane.f32.xlu0 %v1464
      %v1466 = vpop.xlane.xlu0 %1465
      %v1467 = vrcp.pop 32.0
      %v1468 = vmul.f32 %v1421, %v1467
      %v1469 = vmul.f32 %v1424, %v1467
      %v1470 = vmul.f32 %v1427, %v1467
      %v1471 = vmul.f32 %v1430, %v1467
      %v1472 = vmul.f32 %v1433, %v1467
      %v1473 = vmul.f32 %v1436, %v1467
      %v1474 = vmul.f32 %v1439, %v1467
      %v1475 = vmul.f32 %v1442, %v1467
      %v1476 = vmul.f32 %v1445, %v1467
      %v1477 = vmul.f32 %v1448, %v1467
      %v1478 = vmul.f32 %v1451, %v1467
      %v1479 = vmul.f32 %v1454, %v1467
      %v1480 = vmul.f32 %v1457, %v1467
      %v1481 = vmul.f32 %v1460, %v1467
      %v1482 = vmul.f32 %v1463, %v1467
      %v1483 = vmul.f32 %v1466, %v1467
      %v1484 = vsub.f32 %v1400, %v1468
      %v1485 = vsub.f32 %v1401, %v1469
      %v1486 = vsub.f32 %v1402, %v1470
      %v1487 = vsub.f32 %v1403, %v1471
      %v1488 = vsub.f32 %v1404, %v1472
      %v1489 = vsub.f32 %v1405, %v1473
      %v1490 = vsub.f32 %v1406, %v1474
      %v1491 = vsub.f32 %v1407, %v1475
      %v1492 = vsub.f32 %v1408, %v1476
      %v1493 = vsub.f32 %v1409, %v1477
      %v1494 = vsub.f32 %v1410, %v1478
      %v1495 = vsub.f32 %v1411, %v1479
      %v1496 = vsub.f32 %v1412, %v1480
      %v1497 = vsub.f32 %v1413, %v1481
      %v1498 = vsub.f32 %v1414, %v1482
      %v1499 = vsub.f32 %v1415, %v1483
      %v1500 = vmul.f32 %v1484, %v1484
      %v1501 = vmul.f32 %v1485, %v1485
      %v1502 = vmul.f32 %v1486, %v1486
      %v1503 = vmul.f32 %v1487, %v1487
      %v1504 = vmul.f32 %v1488, %v1488
      %v1505 = vmul.f32 %v1489, %v1489
      %v1506 = vmul.f32 %v1490, %v1490
      %v1507 = vmul.f32 %v1491, %v1491
      %v1508 = vmul.f32 %v1492, %v1492
      %v1509 = vmul.f32 %v1493, %v1493
      %v1510 = vmul.f32 %v1494, %v1494
      %v1511 = vmul.f32 %v1495, %v1495
      %v1512 = vmul.f32 %v1496, %v1496
      %v1513 = vmul.f32 %v1497, %v1497
      %v1514 = vmul.f32 %v1498, %v1498
      %v1515 = vmul.f32 %v1499, %v1499
      %v1516 = vsel %vm1418, %v1500, 0.0
      %1517 = vadd.xlane.f32.xlu0 %v1516
      %v1518 = vpop.xlane.xlu0 %1517
      %v1519 = vsel %vm1418, %v1501, 0.0
      %1520 = vadd.xlane.f32.xlu0 %v1519
      %v1521 = vpop.xlane.xlu0 %1520
      %v1522 = vsel %vm1418, %v1502, 0.0
      %1523 = vadd.xlane.f32.xlu0 %v1522
      %v1524 = vpop.xlane.xlu0 %1523
      %v1525 = vsel %vm1418, %v1503, 0.0
      %1526 = vadd.xlane.f32.xlu0 %v1525
      %v1527 = vpop.xlane.xlu0 %1526
      %v1528 = vsel %vm1418, %v1504, 0.0
      %1529 = vadd.xlane.f32.xlu0 %v1528
      %v1530 = vpop.xlane.xlu0 %1529
      %v1531 = vsel %vm1418, %v1505, 0.0
      %1532 = vadd.xlane.f32.xlu0 %v1531
      %v1533 = vpop.xlane.xlu0 %1532
      %v1534 = vsel %vm1418, %v1506, 0.0
      %1535 = vadd.xlane.f32.xlu0 %v1534
      %v1536 = vpop.xlane.xlu0 %1535
      %v1537 = vsel %vm1418, %v1507, 0.0
      %1538 = vadd.xlane.f32.xlu0 %v1537
      %v1539 = vpop.xlane.xlu0 %1538
      %v1540 = vsel %vm1418, %v1508, 0.0
      %1541 = vadd.xlane.f32.xlu0 %v1540
      %v1542 = vpop.xlane.xlu0 %1541
      %v1543 = vsel %vm1418, %v1509, 0.0
      %1544 = vadd.xlane.f32.xlu0 %v1543
      %v1545 = vpop.xlane.xlu0 %1544
      %v1546 = vsel %vm1418, %v1510, 0.0
      %1547 = vadd.xlane.f32.xlu0 %v1546
      %v1548 = vpop.xlane.xlu0 %1547
      %v1549 = vsel %vm1418, %v1511, 0.0
      %1550 = vadd.xlane.f32.xlu0 %v1549
      %v1551 = vpop.xlane.xlu0 %1550
      %v1552 = vsel %vm1418, %v1512, 0.0
      %1553 = vadd.xlane.f32.xlu0 %v1552
      %v1554 = vpop.xlane.xlu0 %1553
      %v1555 = vsel %vm1418, %v1513, 0.0
      %1556 = vadd.xlane.f32.xlu0 %v1555
      %v1557 = vpop.xlane.xlu0 %1556
      %v1558 = vsel %vm1418, %v1514, 0.0
      %1559 = vadd.xlane.f32.xlu0 %v1558
      %v1560 = vpop.xlane.xlu0 %1559
      %v1561 = vsel %vm1418, %v1515, 0.0
      %1562 = vadd.xlane.f32.xlu0 %v1561
      %v1563 = vpop.xlane.xlu0 %1562
      %v1564 = vmul.f32 %v1518, %v1467
      %v1565 = vmul.f32 %v1521, %v1467
      %v1566 = vmul.f32 %v1524, %v1467
      %v1567 = vmul.f32 %v1527, %v1467
      %v1568 = vmul.f32 %v1530, %v1467
      %v1569 = vmul.f32 %v1533, %v1467
      %v1570 = vmul.f32 %v1536, %v1467
      %v1571 = vmul.f32 %v1539, %v1467
      %v1572 = vmul.f32 %v1542, %v1467
      %v1573 = vmul.f32 %v1545, %v1467
      %v1574 = vmul.f32 %v1548, %v1467
      %v1575 = vmul.f32 %v1551, %v1467
      %v1576 = vmul.f32 %v1554, %v1467
      %v1577 = vmul.f32 %v1557, %v1467
      %v1578 = vmul.f32 %v1560, %v1467
      %v1579 = vmul.f32 %v1563, %v1467
      %v1580 = vadd.f32 %v1564, 1e-12
      %v1581 = vadd.f32 %v1565, 1e-12
      %v1582 = vadd.f32 %v1566, 1e-12
      %v1583 = vadd.f32 %v1567, 1e-12
      %v1584 = vadd.f32 %v1568, 1e-12
      %v1585 = vadd.f32 %v1569, 1e-12
      %v1586 = vadd.f32 %v1570, 1e-12
      %v1587 = vadd.f32 %v1571, 1e-12
      %v1588 = vadd.f32 %v1572, 1e-12
      %v1589 = vadd.f32 %v1573, 1e-12
      %v1590 = vadd.f32 %v1574, 1e-12
      %v1591 = vadd.f32 %v1575, 1e-12
      %v1592 = vadd.f32 %v1576, 1e-12
      %v1593 = vadd.f32 %v1577, 1e-12
      %v1594 = vadd.f32 %v1578, 1e-12
      %v1595 = vadd.f32 %v1579, 1e-12
      %v1596 = vrsqrt.pop %v1580
      %v1597 = vrsqrt.pop %v1581
      %v1598 = vrsqrt.pop %v1582
      %v1599 = vrsqrt.pop %v1583
      %v1600 = vrsqrt.pop %v1584
      %v1601 = vrsqrt.pop %v1585
      %v1602 = vrsqrt.pop %v1586
      %v1603 = vrsqrt.pop %v1587
      %v1604 = vrsqrt.pop %v1588
      %v1605 = vrsqrt.pop %v1589
      %v1606 = vrsqrt.pop %v1590
      %v1607 = vrsqrt.pop %v1591
      %v1608 = vrsqrt.pop %v1592
      %v1609 = vrsqrt.pop %v1593
      %v1610 = vrsqrt.pop %v1594
      %v1611 = vrsqrt.pop %v1595
      %v1612 = vmul.f32 %v1484, %v1596
      %v1613 = vmul.f32 %v1485, %v1597
      %v1614 = vmul.f32 %v1486, %v1598
      %v1615 = vmul.f32 %v1487, %v1599
      %v1616 = vmul.f32 %v1488, %v1600
      %v1617 = vmul.f32 %v1489, %v1601
      %v1618 = vmul.f32 %v1490, %v1602
      %v1619 = vmul.f32 %v1491, %v1603
      %v1620 = vmul.f32 %v1492, %v1604
      %v1621 = vmul.f32 %v1493, %v1605
      %v1622 = vmul.f32 %v1494, %v1606
      %v1623 = vmul.f32 %v1495, %v1607
      %v1624 = vmul.f32 %v1496, %v1608
      %v1625 = vmul.f32 %v1497, %v1609
      %v1626 = vmul.f32 %v1498, %v1610
      %v1627 = vmul.f32 %v1499, %v1611
      %v1629 = vlaneseq
      %v1630 = vshrl.u32 %v1629, 7
      %v1631 = vsub.s32 0, %v1630
      %v1632 = vrot.slane %v1416, %v1631
      %v1634 = vmul.f32 %v1612, %v1632
      %v1635 = vmul.f32 %v1613, %v1632
      %v1636 = vmul.f32 %v1614, %v1632
      %v1637 = vmul.f32 %v1615, %v1632
      %v1638 = vmul.f32 %v1616, %v1632
      %v1639 = vmul.f32 %v1617, %v1632
      %v1640 = vmul.f32 %v1618, %v1632
      %v1641 = vmul.f32 %v1619, %v1632
      %v1642 = vmul.f32 %v1620, %v1632
      %v1643 = vmul.f32 %v1621, %v1632
      %v1644 = vmul.f32 %v1622, %v1632
      %v1645 = vmul.f32 %v1623, %v1632
      %v1646 = vmul.f32 %v1624, %v1632
      %v1647 = vmul.f32 %v1625, %v1632
      %v1648 = vmul.f32 %v1626, %v1632
      %v1649 = vmul.f32 %v1627, %v1632
      %v1651 = vlaneseq
      %v1652 = vshrl.u32 %v1651, 7
      %v1653 = vsub.s32 0, %v1652
      %v1654 = vrot.slane %v1417, %v1653
      %v1656 = vadd.f32 %v1634, %v1654
      %v1657 = vadd.f32 %v1635, %v1654
      %v1658 = vadd.f32 %v1636, %v1654
      %v1659 = vadd.f32 %v1637, %v1654
      %v1660 = vadd.f32 %v1638, %v1654
      %v1661 = vadd.f32 %v1639, %v1654
      %v1662 = vadd.f32 %v1640, %v1654
      %v1663 = vadd.f32 %v1641, %v1654
      %v1664 = vadd.f32 %v1642, %v1654
      %v1665 = vadd.f32 %v1643, %v1654
      %v1666 = vadd.f32 %v1644, %v1654
      %v1667 = vadd.f32 %v1645, %v1654
      %v1668 = vadd.f32 %v1646, %v1654
      %v1669 = vadd.f32 %v1647, %v1654
      %v1670 = vadd.f32 %v1648, %v1654
      %v1671 = vadd.f32 %v1649, %v1654
      %v1672 = vld [vmem:[%s8] sm:$0xff]
      %v1673 = vld [vmem:[%s8 + $0x8] sm:$0xff]
      %v1674 = vld [vmem:[%s8 + $0x10] sm:$0xff]
      %v1675 = vld [vmem:[%s8 + $0x18] sm:$0xff]
      %v1676 = vld [vmem:[%s9] sm:$0x1]
      %v1678 = vlaneseq
      %v1679 = vshrl.u32 %v1678, 7
      %v1680 = vsub.s32 0, %v1679
      %v1681 = vrot.slane %v1676, %v1680
      %v1684 = vsel %vm1418, %v1656, 0
      %v1687 = vsel %vm1418, %v1657, 0
      %v1690 = vsel %vm1418, %v1658, 0
      %v1693 = vsel %vm1418, %v1659, 0
      %v1696 = vsel %vm1418, %v1660, 0
      %v1699 = vsel %vm1418, %v1661, 0
      %v1702 = vsel %vm1418, %v1662, 0
      %v1705 = vsel %vm1418, %v1663, 0
      %v1708 = vsel %vm1418, %v1664, 0
      %v1711 = vsel %vm1418, %v1665, 0
      %v1714 = vsel %vm1418, %v1666, 0
      %v1717 = vsel %vm1418, %v1667, 0
      %v1720 = vsel %vm1418, %v1668, 0
      %v1723 = vsel %vm1418, %v1669, 0
      %v1726 = vsel %vm1418, %v1670, 0
      %v1729 = vsel %vm1418, %v1671, 0
      %1731 = vmatprep.subr.mxu0 0.0
      %1732 = vmatpush1.msra.mxu0 %v1672
      %1733 = vmatprep.subr.mxu0 0.0
      %1734 = vmatpush1.msra.mxu0 %v1673
      %1735 = vmatprep.subr.mxu0 0.0
      %1736 = vmatpush1.msra.mxu0 %v1674
      %1737 = vmatprep.subr.mxu0 0.0
      %1738 = vmatpush1.msra.mxu0 %v1675
      %1739 = vmatprep.subr.mxu0 0.0
      %1740 = vmatpush1.msra.mxu0 0.0
      %1741 = vmatprep.subr.mxu0 0.0
      %1742 = vmatpush1.msra.mxu0 0.0
      %1743 = vmatprep.subr.mxu0 0.0
      %1744 = vmatpush1.msra.mxu0 0.0
      %1745 = vmatprep.subr.mxu0 0.0
      %1746 = vmatpush1.msra.mxu0 0.0
      %1747 = vmatprep.subr.mxu0 0.0
      %1748 = vmatpush1.msra.mxu0 0.0
      %1749 = vmatprep.subr.mxu0 0.0
      %1750 = vmatpush1.msra.mxu0 0.0
      %1751 = vmatprep.subr.mxu0 0.0
      %1752 = vmatpush1.msra.mxu0 0.0
      %1753 = vmatprep.subr.mxu0 0.0
      %1754 = vmatpush1.msra.mxu0 0.0
      %1755 = vmatprep.subr.mxu0 0.0
      %1756 = vmatpush1.msra.mxu0 0.0
      %1757 = vmatprep.subr.mxu0 0.0
      %1758 = vmatpush1.msra.mxu0 0.0
      %1759 = vmatprep.subr.mxu0 0.0
      %1760 = vmatpush1.msra.mxu0 0.0
      %1761 = vmatprep.subr.mxu0 0.0
      %1762 = vmatpush1.msra.mxu0 0.0
      %1763 = vmatprep.subr.mxu0 0.0
      %1764 = vmatpush1.msra.mxu0 0.0
      %1765 = vmatprep.subr.mxu0 0.0
      %1766 = vmatpush1.msra.mxu0 0.0
      %1767 = vmatprep.subr.mxu0 0.0
      %1768 = vmatpush1.msra.mxu0 0.0
      %1769 = vmatprep.subr.mxu0 0.0
      %1770 = vmatpush1.msra.mxu0 0.0
      %1771 = vmatprep.subr.mxu0 0.0
      %1772 = vmatpush1.msra.mxu0 0.0
      %1773 = vmatprep.subr.mxu0 0.0
      %1774 = vmatpush1.msra.mxu0 0.0
      %1775 = vmatprep.subr.mxu0 0.0
      %1776 = vmatpush1.msra.mxu0 0.0
      %1777 = vmatprep.subr.mxu0 0.0
      %1778 = vmatpush1.msra.mxu0 0.0
      %1779 = vmatprep.subr.mxu0 0.0
      %1780 = vmatpush1.msra.mxu0 0.0
      %1781 = vmatprep.subr.mxu0 0.0
      %1782 = vmatpush1.msra.mxu0 0.0
      %1783 = vmatprep.subr.mxu0 0.0
      %1784 = vmatpush1.msra.mxu0 0.0
      %1785 = vmatprep.subr.mxu0 0.0
      %1786 = vmatpush1.msra.mxu0 0.0
      %1787 = vmatprep.subr.mxu0 0.0
      %1788 = vmatpush1.msra.mxu0 0.0
      %1789 = vmatprep.subr.mxu0 0.0
      %1790 = vmatpush1.msra.mxu0 0.0
      %1791 = vmatprep.subr.mxu0 0.0
      %1792 = vmatpush1.msra.mxu0 0.0
      %1793 = vmatprep.subr.mxu0 0.0
      %1794 = vmatpush1.msra.mxu0 0.0
      %1795 = vmatprep.mubr.f32.mxu0 0.0
      %1796 = vmatmul.mubr.f32.gmra.mrb[0].mxu0 %v1684
      %v1797 = vpop.f32.mrb[0].mxu0
      %v1798 = vadd.f32 %v1681, %v1797
      %v1799 = vpop.f32.mrb[0].mxu0
      %1800 = vmatprep.mubr.f32.mxu0 0.0
      %1801 = vmatmul.mubr.f32.gmra.mrb[0].mxu0 %v1687
      %v1802 = vpop.f32.mrb[0].mxu0
      %v1803 = vadd.f32 %v1681, %v1802
      %v1804 = vpop.f32.mrb[0].mxu0
      %1805 = vmatprep.mubr.f32.mxu0 0.0
      %1806 = vmatmul.mubr.f32.gmra.mrb[0].mxu0 %v1690
      %v1807 = vpop.f32.mrb[0].mxu0
      %v1808 = vadd.f32 %v1681, %v1807
      %v1809 = vpop.f32.mrb[0].mxu0
      %1810 = vmatprep.mubr.f32.mxu0 0.0
      %1811 = vmatmul.mubr.f32.gmra.mrb[0].mxu0 %v1693
      %v1812 = vpop.f32.mrb[0].mxu0
      %v1813 = vadd.f32 %v1681, %v1812
      %v1814 = vpop.f32.mrb[0].mxu0
      %1815 = vmatprep.mubr.f32.mxu0 0.0
      %1816 = vmatmul.mubr.f32.gmra.mrb[0].mxu0 %v1696
      %v1817 = vpop.f32.mrb[0].mxu0
      %v1818 = vadd.f32 %v1681, %v1817
      %v1819 = vpop.f32.mrb[0].mxu0
      %1820 = vmatprep.mubr.f32.mxu0 0.0
      %1821 = vmatmul.mubr.f32.gmra.mrb[0].mxu0 %v1699
      %v1822 = vpop.f32.mrb[0].mxu0
      %v1823 = vadd.f32 %v1681, %v1822
      %v1824 = vpop.f32.mrb[0].mxu0
      %1825 = vmatprep.mubr.f32.mxu0 0.0
      %1826 = vmatmul.mubr.f32.gmra.mrb[0].mxu0 %v1702
      %v1827 = vpop.f32.mrb[0].mxu0
      %v1828 = vadd.f32 %v1681, %v1827
      %v1829 = vpop.f32.mrb[0].mxu0
      %1830 = vmatprep.mubr.f32.mxu0 0.0
      %1831 = vmatmul.mubr.f32.gmra.mrb[0].mxu0 %v1705
      %v1832 = vpop.f32.mrb[0].mxu0
      %v1833 = vadd.f32 %v1681, %v1832
      %v1834 = vpop.f32.mrb[0].mxu0
      %1835 = vmatprep.mubr.f32.mxu0 0.0
      %1836 = vmatmul.mubr.f32.gmra.mrb[0].mxu0 %v1708
      %v1837 = vpop.f32.mrb[0].mxu0
      %v1838 = vadd.f32 %v1681, %v1837
      %v1839 = vpop.f32.mrb[0].mxu0
      %1840 = vmatprep.mubr.f32.mxu0 0.0
      %1841 = vmatmul.mubr.f32.gmra.mrb[0].mxu0 %v1711
      %v1842 = vpop.f32.mrb[0].mxu0
      %v1843 = vadd.f32 %v1681, %v1842
      %v1844 = vpop.f32.mrb[0].mxu0
      %1845 = vmatprep.mubr.f32.mxu0 0.0
      %1846 = vmatmul.mubr.f32.gmra.mrb[0].mxu0 %v1714
      %v1847 = vpop.f32.mrb[0].mxu0
      %v1848 = vadd.f32 %v1681, %v1847
      %v1849 = vpop.f32.mrb[0].mxu0
      %1850 = vmatprep.mubr.f32.mxu0 0.0
      %1851 = vmatmul.mubr.f32.gmra.mrb[0].mxu0 %v1717
      %v1852 = vpop.f32.mrb[0].mxu0
      %v1853 = vadd.f32 %v1681, %v1852
      %v1854 = vpop.f32.mrb[0].mxu0
      %1855 = vmatprep.mubr.f32.mxu0 0.0
      %1856 = vmatmul.mubr.f32.gmra.mrb[0].mxu0 %v1720
      %v1857 = vpop.f32.mrb[0].mxu0
      %v1858 = vadd.f32 %v1681, %v1857
      %v1859 = vpop.f32.mrb[0].mxu0
      %1860 = vmatprep.mubr.f32.mxu0 0.0
      %1861 = vmatmul.mubr.f32.gmra.mrb[0].mxu0 %v1723
      %v1862 = vpop.f32.mrb[0].mxu0
      %v1863 = vadd.f32 %v1681, %v1862
      %v1864 = vpop.f32.mrb[0].mxu0
      %1865 = vmatprep.mubr.f32.mxu0 0.0
      %1866 = vmatmul.mubr.f32.gmra.mrb[0].mxu0 %v1726
      %v1867 = vpop.f32.mrb[0].mxu0
      %v1868 = vadd.f32 %v1681, %v1867
      %v1869 = vpop.f32.mrb[0].mxu0
      %1870 = vmatprep.mubr.f32.mxu0 0.0
      %1871 = vmatmul.mubr.f32.gmra.mrb[0].mxu0 %v1729
      %v1872 = vpop.f32.mrb[0].mxu0
      %v1873 = vadd.f32 %v1681, %v1872
      %v1874 = vpop.f32.mrb[0].mxu0
      %1875 = vdwg.mxu0
      %1892 = vrot.lane.b32.xlu0 %v1798, 96
      %v1893 = vpop.permute.xlu0 %1892
      %1894 = vrot.lane.b32.xlu0 %v1803, 96
      %v1895 = vpop.permute.xlu0 %1894
      %1896 = vrot.lane.b32.xlu0 %v1808, 96
      %v1897 = vpop.permute.xlu0 %1896
      %1898 = vrot.lane.b32.xlu0 %v1813, 96
      %v1899 = vpop.permute.xlu0 %1898
      %1900 = vrot.lane.b32.xlu0 %v1818, 96
      %v1901 = vpop.permute.xlu0 %1900
      %1902 = vrot.lane.b32.xlu0 %v1823, 96
      %v1903 = vpop.permute.xlu0 %1902
      %1904 = vrot.lane.b32.xlu0 %v1828, 96
      %v1905 = vpop.permute.xlu0 %1904
      %1906 = vrot.lane.b32.xlu0 %v1833, 96
      %v1907 = vpop.permute.xlu0 %1906
      %1908 = vrot.lane.b32.xlu0 %v1838, 96
      %v1909 = vpop.permute.xlu0 %1908
      %1910 = vrot.lane.b32.xlu0 %v1843, 96
      %v1911 = vpop.permute.xlu0 %1910
      %1912 = vrot.lane.b32.xlu0 %v1848, 96
      %v1913 = vpop.permute.xlu0 %1912
      %1914 = vrot.lane.b32.xlu0 %v1853, 96
      %v1915 = vpop.permute.xlu0 %1914
      %1916 = vrot.lane.b32.xlu0 %v1858, 96
      %v1917 = vpop.permute.xlu0 %1916
      %1918 = vrot.lane.b32.xlu0 %v1863, 96
      %v1919 = vpop.permute.xlu0 %1918
      %1920 = vrot.lane.b32.xlu0 %v1868, 96
      %v1921 = vpop.permute.xlu0 %1920
      %1922 = vrot.lane.b32.xlu0 %v1873, 96
      %v1923 = vpop.permute.xlu0 %1922
      %vm1924 = vcmask 130048
      %v1925 = vsel %vm1924, %v1798, 0
      %v1927 = vsel %vm1924, %v1803, 0
      %v1929 = vsel %vm1924, %v1808, 0
      %v1931 = vsel %vm1924, %v1813, 0
      %v1933 = vsel %vm1924, %v1818, 0
      %v1935 = vsel %vm1924, %v1823, 0
      %v1937 = vsel %vm1924, %v1828, 0
      %v1939 = vsel %vm1924, %v1833, 0
      %v1941 = vsel %vm1924, %v1838, 0
      %v1943 = vsel %vm1924, %v1843, 0
      %v1945 = vsel %vm1924, %v1848, 0
      %v1947 = vsel %vm1924, %v1853, 0
      %v1949 = vsel %vm1924, %v1858, 0
      %v1951 = vsel %vm1924, %v1863, 0
      %v1953 = vsel %vm1924, %v1868, 0
      %v1955 = vsel %vm1924, %v1873, 0
      %v1957 = vsel %vm1924, %v1893, 0
      %v1959 = vsel %vm1924, %v1895, 0
      %v1961 = vsel %vm1924, %v1897, 0
      %v1963 = vsel %vm1924, %v1899, 0
      %v1965 = vsel %vm1924, %v1901, 0
      %v1967 = vsel %vm1924, %v1903, 0
      %v1969 = vsel %vm1924, %v1905, 0
      %v1971 = vsel %vm1924, %v1907, 0
      %v1973 = vsel %vm1924, %v1909, 0
      %v1975 = vsel %vm1924, %v1911, 0
      %v1977 = vsel %vm1924, %v1913, 0
      %v1979 = vsel %vm1924, %v1915, 0
      %v1981 = vsel %vm1924, %v1917, 0
      %v1983 = vsel %vm1924, %v1919, 0
      %v1985 = vsel %vm1924, %v1921, 0
      %v1987 = vsel %vm1924, %v1923, 0
      %1989 = vmatprep.subr.mxu0 0.0
      %1990 = vmatpush1.xpose.msra.mxu0 %v1957
      %1991 = vmatprep.subr.mxu0 0.0
      %1992 = vmatpush1.xpose.msra.mxu0 %v1959
      %1993 = vmatprep.subr.mxu0 0.0
      %1994 = vmatpush1.xpose.msra.mxu0 %v1961
      %1995 = vmatprep.subr.mxu0 0.0
      %1996 = vmatpush1.xpose.msra.mxu0 %v1963
      %1997 = vmatprep.subr.mxu0 0.0
      %1998 = vmatpush1.xpose.msra.mxu0 %v1965
      %1999 = vmatprep.subr.mxu0 0.0
      %2000 = vmatpush1.xpose.msra.mxu0 %v1967
      %2001 = vmatprep.subr.mxu0 0.0
      %2002 = vmatpush1.xpose.msra.mxu0 %v1969
      %2003 = vmatprep.subr.mxu0 0.0
      %2004 = vmatpush1.xpose.msra.mxu0 %v1971
      %2005 = vmatprep.subr.mxu0 0.0
      %2006 = vmatpush1.xpose.msra.mxu0 %v1973
      %2007 = vmatprep.subr.mxu0 0.0
      %2008 = vmatpush1.xpose.msra.mxu0 %v1975
      %2009 = vmatprep.subr.mxu0 0.0
      %2010 = vmatpush1.xpose.msra.mxu0 %v1977
      %2011 = vmatprep.subr.mxu0 0.0
      %2012 = vmatpush1.xpose.msra.mxu0 %v1979
      %2013 = vmatprep.subr.mxu0 0.0
      %2014 = vmatpush1.xpose.msra.mxu0 %v1981
      %2015 = vmatprep.subr.mxu0 0.0
      %2016 = vmatpush1.xpose.msra.mxu0 %v1983
      %2017 = vmatprep.subr.mxu0 0.0
      %2018 = vmatpush1.xpose.msra.mxu0 %v1985
      %2019 = vmatprep.subr.mxu0 0.0
      %2020 = vmatpush1.xpose.msra.mxu0 %v1987
      %2021 = vmatprep.subr.mxu0 0.0
      %2022 = vmatpush1.xpose.msra.mxu0 0.0
      %2023 = vmatprep.subr.mxu0 0.0
      %2024 = vmatpush1.xpose.msra.mxu0 0.0
      %2025 = vmatprep.subr.mxu0 0.0
      %2026 = vmatpush1.xpose.msra.mxu0 0.0
      %2027 = vmatprep.subr.mxu0 0.0
      %2028 = vmatpush1.xpose.msra.mxu0 0.0
      %2029 = vmatprep.subr.mxu0 0.0
      %2030 = vmatpush1.xpose.msra.mxu0 0.0
      %2031 = vmatprep.subr.mxu0 0.0
      %2032 = vmatpush1.xpose.msra.mxu0 0.0
      %2033 = vmatprep.subr.mxu0 0.0
      %2034 = vmatpush1.xpose.msra.mxu0 0.0
      %2035 = vmatprep.subr.mxu0 0.0
      %2036 = vmatpush1.xpose.msra.mxu0 0.0
      %2037 = vmatprep.subr.mxu0 0.0
      %2038 = vmatpush1.xpose.msra.mxu0 0.0
      %2039 = vmatprep.subr.mxu0 0.0
      %2040 = vmatpush1.xpose.msra.mxu0 0.0
      %2041 = vmatprep.subr.mxu0 0.0
      %2042 = vmatpush1.xpose.msra.mxu0 0.0
      %2043 = vmatprep.subr.mxu0 0.0
      %2044 = vmatpush1.xpose.msra.mxu0 0.0
      %2045 = vmatprep.subr.mxu0 0.0
      %2046 = vmatpush1.xpose.msra.mxu0 0.0
      %2047 = vmatprep.subr.mxu0 0.0
      %2048 = vmatpush1.xpose.msra.mxu0 0.0
      %2049 = vmatprep.subr.mxu0 0.0
      %2050 = vmatpush1.xpose.msra.mxu0 0.0
      %2051 = vmatprep.subr.mxu0 0.0
      %2052 = vmatpush1.xpose.msra.mxu0 0.0
      %2053 = vmatprep.mubr.f32.mxu0 0.0
      %2054 = vmatmul.mubr.f32.gmra.mrb[0].mxu0 %v1925
      %v2055 = vpop.f32.mrb[0].mxu0
      %v2056 = vadd.f32 %v833, %v2055
      %v2057 = vpop.f32.mrb[0].mxu0
      %2058 = vmatprep.mubr.f32.mxu0 0.0
      %2059 = vmatmul.mubr.f32.gmra.mrb[0].mxu0 %v1927
      %v2060 = vpop.f32.mrb[0].mxu0
      %v2061 = vadd.f32 %v834, %v2060
      %v2062 = vpop.f32.mrb[0].mxu0
      %2063 = vmatprep.mubr.f32.mxu0 0.0
      %2064 = vmatmul.mubr.f32.gmra.mrb[0].mxu0 %v1929
      %v2065 = vpop.f32.mrb[0].mxu0
      %v2066 = vadd.f32 %v835, %v2065
      %v2067 = vpop.f32.mrb[0].mxu0
      %2068 = vmatprep.mubr.f32.mxu0 0.0
      %2069 = vmatmul.mubr.f32.gmra.mrb[0].mxu0 %v1931
      %v2070 = vpop.f32.mrb[0].mxu0
      %v2071 = vadd.f32 %v836, %v2070
      %v2072 = vpop.f32.mrb[0].mxu0
      %2073 = vmatprep.mubr.f32.mxu0 0.0
      %2074 = vmatmul.mubr.f32.gmra.mrb[0].mxu0 %v1933
      %v2075 = vpop.f32.mrb[0].mxu0
      %v2076 = vadd.f32 %v837, %v2075
      %v2077 = vpop.f32.mrb[0].mxu0
      %2078 = vmatprep.mubr.f32.mxu0 0.0
      %2079 = vmatmul.mubr.f32.gmra.mrb[0].mxu0 %v1935
      %v2080 = vpop.f32.mrb[0].mxu0
      %v2081 = vadd.f32 %v838, %v2080
      %v2082 = vpop.f32.mrb[0].mxu0
      %2083 = vmatprep.mubr.f32.mxu0 0.0
      %2084 = vmatmul.mubr.f32.gmra.mrb[0].mxu0 %v1937
      %v2085 = vpop.f32.mrb[0].mxu0
      %v2086 = vadd.f32 %v839, %v2085
      %v2087 = vpop.f32.mrb[0].mxu0
      %2088 = vmatprep.mubr.f32.mxu0 0.0
      %2089 = vmatmul.mubr.f32.gmra.mrb[0].mxu0 %v1939
      %v2090 = vpop.f32.mrb[0].mxu0
      %v2091 = vadd.f32 %v840, %v2090
      %v2092 = vpop.f32.mrb[0].mxu0
      %2093 = vmatprep.mubr.f32.mxu0 0.0
      %2094 = vmatmul.mubr.f32.gmra.mrb[0].mxu0 %v1941
      %v2095 = vpop.f32.mrb[0].mxu0
      %v2096 = vadd.f32 %v841, %v2095
      %v2097 = vpop.f32.mrb[0].mxu0
      %2098 = vmatprep.mubr.f32.mxu0 0.0
      %2099 = vmatmul.mubr.f32.gmra.mrb[0].mxu0 %v1943
      %v2100 = vpop.f32.mrb[0].mxu0
      %v2101 = vadd.f32 %v842, %v2100
      %v2102 = vpop.f32.mrb[0].mxu0
      %2103 = vmatprep.mubr.f32.mxu0 0.0
      %2104 = vmatmul.mubr.f32.gmra.mrb[0].mxu0 %v1945
      %v2105 = vpop.f32.mrb[0].mxu0
      %v2106 = vadd.f32 %v843, %v2105
      %v2107 = vpop.f32.mrb[0].mxu0
      %2108 = vmatprep.mubr.f32.mxu0 0.0
      %2109 = vmatmul.mubr.f32.gmra.mrb[0].mxu0 %v1947
      %v2110 = vpop.f32.mrb[0].mxu0
      %v2111 = vadd.f32 %v844, %v2110
      %v2112 = vpop.f32.mrb[0].mxu0
      %2113 = vmatprep.mubr.f32.mxu0 0.0
      %2114 = vmatmul.mubr.f32.gmra.mrb[0].mxu0 %v1949
      %v2115 = vpop.f32.mrb[0].mxu0
      %v2116 = vadd.f32 %v845, %v2115
      %v2117 = vpop.f32.mrb[0].mxu0
      %2118 = vmatprep.mubr.f32.mxu0 0.0
      %2119 = vmatmul.mubr.f32.gmra.mrb[0].mxu0 %v1951
      %v2120 = vpop.f32.mrb[0].mxu0
      %v2121 = vadd.f32 %v846, %v2120
      %v2122 = vpop.f32.mrb[0].mxu0
      %2123 = vmatprep.mubr.f32.mxu0 0.0
      %2124 = vmatmul.mubr.f32.gmra.mrb[0].mxu0 %v1953
      %v2125 = vpop.f32.mrb[0].mxu0
      %v2126 = vadd.f32 %v847, %v2125
      %v2127 = vpop.f32.mrb[0].mxu0
      %2128 = vmatprep.mubr.f32.mxu0 0.0
      %2129 = vmatmul.mubr.f32.gmra.mrb[0].mxu0 %v1955
      %v2130 = vpop.f32.mrb[0].mxu0
      %v2131 = vadd.f32 %v848, %v2130
      %v2132 = vpop.f32.mrb[0].mxu0
      %2133 = vdwg.mxu0
      %2134 = vmax.xlane.f32.xlu0 %v2056
      %v2135 = vpop.xlane.xlu0 %2134
      %2136 = vmax.xlane.f32.xlu0 %v2061
      %v2137 = vpop.xlane.xlu0 %2136
      %2138 = vmax.xlane.f32.xlu0 %v2066
      %v2139 = vpop.xlane.xlu0 %2138
      %2140 = vmax.xlane.f32.xlu0 %v2071
      %v2141 = vpop.xlane.xlu0 %2140
      %2142 = vmax.xlane.f32.xlu0 %v2076
      %v2143 = vpop.xlane.xlu0 %2142
      %2144 = vmax.xlane.f32.xlu0 %v2081
      %v2145 = vpop.xlane.xlu0 %2144
      %2146 = vmax.xlane.f32.xlu0 %v2086
      %v2147 = vpop.xlane.xlu0 %2146
      %2148 = vmax.xlane.f32.xlu0 %v2091
      %v2149 = vpop.xlane.xlu0 %2148
      %2150 = vmax.xlane.f32.xlu0 %v2096
      %v2151 = vpop.xlane.xlu0 %2150
      %2152 = vmax.xlane.f32.xlu0 %v2101
      %v2153 = vpop.xlane.xlu0 %2152
      %2154 = vmax.xlane.f32.xlu0 %v2106
      %v2155 = vpop.xlane.xlu0 %2154
      %2156 = vmax.xlane.f32.xlu0 %v2111
      %v2157 = vpop.xlane.xlu0 %2156
      %2158 = vmax.xlane.f32.xlu0 %v2116
      %v2159 = vpop.xlane.xlu0 %2158
      %2160 = vmax.xlane.f32.xlu0 %v2121
      %v2161 = vpop.xlane.xlu0 %2160
      %2162 = vmax.xlane.f32.xlu0 %v2126
      %v2163 = vpop.xlane.xlu0 %2162
      %2164 = vmax.xlane.f32.xlu0 %v2131
      %v2165 = vpop.xlane.xlu0 %2164
      %v2166 = vsub.f32 %v2056, %v2135
      %v2167 = vsub.f32 %v2061, %v2137
      %v2168 = vsub.f32 %v2066, %v2139
      %v2169 = vsub.f32 %v2071, %v2141
      %v2170 = vsub.f32 %v2076, %v2143
      %v2171 = vsub.f32 %v2081, %v2145
      %v2172 = vsub.f32 %v2086, %v2147
      %v2173 = vsub.f32 %v2091, %v2149
      %v2174 = vsub.f32 %v2096, %v2151
      %v2175 = vsub.f32 %v2101, %v2153
      %v2176 = vsub.f32 %v2106, %v2155
      %v2177 = vsub.f32 %v2111, %v2157
      %v2178 = vsub.f32 %v2116, %v2159
      %v2179 = vsub.f32 %v2121, %v2161
      %v2180 = vsub.f32 %v2126, %v2163
      %v2181 = vsub.f32 %v2131, %v2165
      %v2182 = vmul.f32 %v2166, 1.442695
      %v2183 = vpow.pop %v2182
      %v2184 = vmul.f32 %v2167, 1.442695
      %v2185 = vpow.pop %v2184
      %v2186 = vmul.f32 %v2168, 1.442695
      %v2187 = vpow.pop %v2186
      %v2188 = vmul.f32 %v2169, 1.442695
      %v2189 = vpow.pop %v2188
      %v2190 = vmul.f32 %v2170, 1.442695
      %v2191 = vpow.pop %v2190
      %v2192 = vmul.f32 %v2171, 1.442695
      %v2193 = vpow.pop %v2192
      %v2194 = vmul.f32 %v2172, 1.442695
      %v2195 = vpow.pop %v2194
      %v2196 = vmul.f32 %v2173, 1.442695
      %v2197 = vpow.pop %v2196
      %v2198 = vmul.f32 %v2174, 1.442695
      %v2199 = vpow.pop %v2198
      %v2200 = vmul.f32 %v2175, 1.442695
      %v2201 = vpow.pop %v2200
      %v2202 = vmul.f32 %v2176, 1.442695
      %v2203 = vpow.pop %v2202
      %v2204 = vmul.f32 %v2177, 1.442695
      %v2205 = vpow.pop %v2204
      %v2206 = vmul.f32 %v2178, 1.442695
      %v2207 = vpow.pop %v2206
      %v2208 = vmul.f32 %v2179, 1.442695
      %v2209 = vpow.pop %v2208
      %v2210 = vmul.f32 %v2180, 1.442695
      %v2211 = vpow.pop %v2210
      %v2212 = vmul.f32 %v2181, 1.442695
      %v2213 = vpow.pop %v2212
      %2214 = vadd.xlane.f32.xlu0 %v2183
      %v2215 = vpop.xlane.xlu0 %2214
      %2216 = vadd.xlane.f32.xlu0 %v2185
      %v2217 = vpop.xlane.xlu0 %2216
      %2218 = vadd.xlane.f32.xlu0 %v2187
      %v2219 = vpop.xlane.xlu0 %2218
      %2220 = vadd.xlane.f32.xlu0 %v2189
      %v2221 = vpop.xlane.xlu0 %2220
      %2222 = vadd.xlane.f32.xlu0 %v2191
      %v2223 = vpop.xlane.xlu0 %2222
      %2224 = vadd.xlane.f32.xlu0 %v2193
      %v2225 = vpop.xlane.xlu0 %2224
      %2226 = vadd.xlane.f32.xlu0 %v2195
      %v2227 = vpop.xlane.xlu0 %2226
      %2228 = vadd.xlane.f32.xlu0 %v2197
      %v2229 = vpop.xlane.xlu0 %2228
      %2230 = vadd.xlane.f32.xlu0 %v2199
      %v2231 = vpop.xlane.xlu0 %2230
      %2232 = vadd.xlane.f32.xlu0 %v2201
      %v2233 = vpop.xlane.xlu0 %2232
      %2234 = vadd.xlane.f32.xlu0 %v2203
      %v2235 = vpop.xlane.xlu0 %2234
      %2236 = vadd.xlane.f32.xlu0 %v2205
      %v2237 = vpop.xlane.xlu0 %2236
      %2238 = vadd.xlane.f32.xlu0 %v2207
      %v2239 = vpop.xlane.xlu0 %2238
      %2240 = vadd.xlane.f32.xlu0 %v2209
      %v2241 = vpop.xlane.xlu0 %2240
      %2242 = vadd.xlane.f32.xlu0 %v2211
      %v2243 = vpop.xlane.xlu0 %2242
      %2244 = vadd.xlane.f32.xlu0 %v2213
      %v2245 = vpop.xlane.xlu0 %2244
      %v2246 = vrcp.pop %v2215
      %v2247 = vmul.f32 %v2183, %v2246
      %v2248 = vrcp.pop %v2217
      %v2249 = vmul.f32 %v2185, %v2248
      %v2250 = vrcp.pop %v2219
      %v2251 = vmul.f32 %v2187, %v2250
      %v2252 = vrcp.pop %v2221
      %v2253 = vmul.f32 %v2189, %v2252
      %v2254 = vrcp.pop %v2223
      %v2255 = vmul.f32 %v2191, %v2254
      %v2256 = vrcp.pop %v2225
      %v2257 = vmul.f32 %v2193, %v2256
      %v2258 = vrcp.pop %v2227
      %v2259 = vmul.f32 %v2195, %v2258
      %v2260 = vrcp.pop %v2229
      %v2261 = vmul.f32 %v2197, %v2260
      %v2262 = vrcp.pop %v2231
      %v2263 = vmul.f32 %v2199, %v2262
      %v2264 = vrcp.pop %v2233
      %v2265 = vmul.f32 %v2201, %v2264
      %v2266 = vrcp.pop %v2235
      %v2267 = vmul.f32 %v2203, %v2266
      %v2268 = vrcp.pop %v2237
      %v2269 = vmul.f32 %v2205, %v2268
      %v2270 = vrcp.pop %v2239
      %v2271 = vmul.f32 %v2207, %v2270
      %v2272 = vrcp.pop %v2241
      %v2273 = vmul.f32 %v2209, %v2272
      %v2274 = vrcp.pop %v2243
      %v2275 = vmul.f32 %v2211, %v2274
      %v2276 = vrcp.pop %v2245
      %v2277 = vmul.f32 %v2213, %v2276
      %2278 = vrot.lane.b32.xlu0 %v1798, 64
      %v2279 = vpop.permute.xlu0 %2278
      %2280 = vrot.lane.b32.xlu0 %v1803, 64
      %v2281 = vpop.permute.xlu0 %2280
      %2282 = vrot.lane.b32.xlu0 %v1808, 64
      %v2283 = vpop.permute.xlu0 %2282
      %2284 = vrot.lane.b32.xlu0 %v1813, 64
      %v2285 = vpop.permute.xlu0 %2284
      %2286 = vrot.lane.b32.xlu0 %v1818, 64
      %v2287 = vpop.permute.xlu0 %2286
      %2288 = vrot.lane.b32.xlu0 %v1823, 64
      %v2289 = vpop.permute.xlu0 %2288
      %2290 = vrot.lane.b32.xlu0 %v1828, 64
      %v2291 = vpop.permute.xlu0 %2290
      %2292 = vrot.lane.b32.xlu0 %v1833, 64
      %v2293 = vpop.permute.xlu0 %2292
      %2294 = vrot.lane.b32.xlu0 %v1838, 64
      %v2295 = vpop.permute.xlu0 %2294
      %2296 = vrot.lane.b32.xlu0 %v1843, 64
      %v2297 = vpop.permute.xlu0 %2296
      %2298 = vrot.lane.b32.xlu0 %v1848, 64
      %v2299 = vpop.permute.xlu0 %2298
      %2300 = vrot.lane.b32.xlu0 %v1853, 64
      %v2301 = vpop.permute.xlu0 %2300
      %2302 = vrot.lane.b32.xlu0 %v1858, 64
      %v2303 = vpop.permute.xlu0 %2302
      %2304 = vrot.lane.b32.xlu0 %v1863, 64
      %v2305 = vpop.permute.xlu0 %2304
      %2306 = vrot.lane.b32.xlu0 %v1868, 64
      %v2307 = vpop.permute.xlu0 %2306
      %2308 = vrot.lane.b32.xlu0 %v1873, 64
      %v2309 = vpop.permute.xlu0 %2308
      %2326 = vmatprep.subr.mxu0 0.0
      %2327 = vmatpush1.msra.mxu0 %v2279
      %2328 = vmatprep.subr.mxu0 0.0
      %2329 = vmatpush1.msra.mxu0 %v2281
      %2330 = vmatprep.subr.mxu0 0.0
      %2331 = vmatpush1.msra.mxu0 %v2283
      %2332 = vmatprep.subr.mxu0 0.0
      %2333 = vmatpush1.msra.mxu0 %v2285
      %2334 = vmatprep.subr.mxu0 0.0
      %2335 = vmatpush1.msra.mxu0 %v2287
      %2336 = vmatprep.subr.mxu0 0.0
      %2337 = vmatpush1.msra.mxu0 %v2289
      %2338 = vmatprep.subr.mxu0 0.0
      %2339 = vmatpush1.msra.mxu0 %v2291
      %2340 = vmatprep.subr.mxu0 0.0
      %2341 = vmatpush1.msra.mxu0 %v2293
      %2342 = vmatprep.subr.mxu0 0.0
      %2343 = vmatpush1.msra.mxu0 %v2295
      %2344 = vmatprep.subr.mxu0 0.0
      %2345 = vmatpush1.msra.mxu0 %v2297
      %2346 = vmatprep.subr.mxu0 0.0
      %2347 = vmatpush1.msra.mxu0 %v2299
      %2348 = vmatprep.subr.mxu0 0.0
      %2349 = vmatpush1.msra.mxu0 %v2301
      %2350 = vmatprep.subr.mxu0 0.0
      %2351 = vmatpush1.msra.mxu0 %v2303
      %2352 = vmatprep.subr.mxu0 0.0
      %2353 = vmatpush1.msra.mxu0 %v2305
      %2354 = vmatprep.subr.mxu0 0.0
      %2355 = vmatpush1.msra.mxu0 %v2307
      %2356 = vmatprep.subr.mxu0 0.0
      %2357 = vmatpush1.msra.mxu0 %v2309
      %2358 = vmatprep.subr.mxu0 0.0
      %2359 = vmatpush1.msra.mxu0 0.0
      %2360 = vmatprep.subr.mxu0 0.0
      %2361 = vmatpush1.msra.mxu0 0.0
      %2362 = vmatprep.subr.mxu0 0.0
      %2363 = vmatpush1.msra.mxu0 0.0
      %2364 = vmatprep.subr.mxu0 0.0
      %2365 = vmatpush1.msra.mxu0 0.0
      %2366 = vmatprep.subr.mxu0 0.0
      %2367 = vmatpush1.msra.mxu0 0.0
      %2368 = vmatprep.subr.mxu0 0.0
      %2369 = vmatpush1.msra.mxu0 0.0
      %2370 = vmatprep.subr.mxu0 0.0
      %2371 = vmatpush1.msra.mxu0 0.0
      %2372 = vmatprep.subr.mxu0 0.0
      %2373 = vmatpush1.msra.mxu0 0.0
      %2374 = vmatprep.subr.mxu0 0.0
      %2375 = vmatpush1.msra.mxu0 0.0
      %2376 = vmatprep.subr.mxu0 0.0
      %2377 = vmatpush1.msra.mxu0 0.0
      %2378 = vmatprep.subr.mxu0 0.0
      %2379 = vmatpush1.msra.mxu0 0.0
      %2380 = vmatprep.subr.mxu0 0.0
      %2381 = vmatpush1.msra.mxu0 0.0
      %2382 = vmatprep.subr.mxu0 0.0
      %2383 = vmatpush1.msra.mxu0 0.0
      %2384 = vmatprep.subr.mxu0 0.0
      %2385 = vmatpush1.msra.mxu0 0.0
      %2386 = vmatprep.subr.mxu0 0.0
      %2387 = vmatpush1.msra.mxu0 0.0
      %2388 = vmatprep.subr.mxu0 0.0
      %2389 = vmatpush1.msra.mxu0 0.0
      %2390 = vmatprep.mubr.f32.mxu0 0.0
      %2391 = vmatmul.mubr.f32.gmra.mrb[0].mxu0 %v2247
      %v2392 = vpop.f32.mrb[0].mxu0
      %v2393 = vadd.f32 0.0, %v2392
      %v2394 = vpop.f32.mrb[0].mxu0
      %2395 = vmatprep.mubr.f32.mxu0 0.0
      %2396 = vmatmul.mubr.f32.gmra.mrb[0].mxu0 %v2249
      %v2397 = vpop.f32.mrb[0].mxu0
      %v2398 = vadd.f32 0.0, %v2397
      %v2399 = vpop.f32.mrb[0].mxu0
      %2400 = vmatprep.mubr.f32.mxu0 0.0
      %2401 = vmatmul.mubr.f32.gmra.mrb[0].mxu0 %v2251
      %v2402 = vpop.f32.mrb[0].mxu0
      %v2403 = vadd.f32 0.0, %v2402
      %v2404 = vpop.f32.mrb[0].mxu0
      %2405 = vmatprep.mubr.f32.mxu0 0.0
      %2406 = vmatmul.mubr.f32.gmra.mrb[0].mxu0 %v2253
      %v2407 = vpop.f32.mrb[0].mxu0
      %v2408 = vadd.f32 0.0, %v2407
      %v2409 = vpop.f32.mrb[0].mxu0
      %2410 = vmatprep.mubr.f32.mxu0 0.0
      %2411 = vmatmul.mubr.f32.gmra.mrb[0].mxu0 %v2255
      %v2412 = vpop.f32.mrb[0].mxu0
      %v2413 = vadd.f32 0.0, %v2412
      %v2414 = vpop.f32.mrb[0].mxu0
      %2415 = vmatprep.mubr.f32.mxu0 0.0
      %2416 = vmatmul.mubr.f32.gmra.mrb[0].mxu0 %v2257
      %v2417 = vpop.f32.mrb[0].mxu0
      %v2418 = vadd.f32 0.0, %v2417
      %v2419 = vpop.f32.mrb[0].mxu0
      %2420 = vmatprep.mubr.f32.mxu0 0.0
      %2421 = vmatmul.mubr.f32.gmra.mrb[0].mxu0 %v2259
      %v2422 = vpop.f32.mrb[0].mxu0
      %v2423 = vadd.f32 0.0, %v2422
      %v2424 = vpop.f32.mrb[0].mxu0
      %2425 = vmatprep.mubr.f32.mxu0 0.0
      %2426 = vmatmul.mubr.f32.gmra.mrb[0].mxu0 %v2261
      %v2427 = vpop.f32.mrb[0].mxu0
      %v2428 = vadd.f32 0.0, %v2427
      %v2429 = vpop.f32.mrb[0].mxu0
      %2430 = vmatprep.mubr.f32.mxu0 0.0
      %2431 = vmatmul.mubr.f32.gmra.mrb[0].mxu0 %v2263
      %v2432 = vpop.f32.mrb[0].mxu0
      %v2433 = vadd.f32 0.0, %v2432
      %v2434 = vpop.f32.mrb[0].mxu0
      %2435 = vmatprep.mubr.f32.mxu0 0.0
      %2436 = vmatmul.mubr.f32.gmra.mrb[0].mxu0 %v2265
      %v2437 = vpop.f32.mrb[0].mxu0
      %v2438 = vadd.f32 0.0, %v2437
      %v2439 = vpop.f32.mrb[0].mxu0
      %2440 = vmatprep.mubr.f32.mxu0 0.0
      %2441 = vmatmul.mubr.f32.gmra.mrb[0].mxu0 %v2267
      %v2442 = vpop.f32.mrb[0].mxu0
      %v2443 = vadd.f32 0.0, %v2442
      %v2444 = vpop.f32.mrb[0].mxu0
      %2445 = vmatprep.mubr.f32.mxu0 0.0
      %2446 = vmatmul.mubr.f32.gmra.mrb[0].mxu0 %v2269
      %v2447 = vpop.f32.mrb[0].mxu0
      %v2448 = vadd.f32 0.0, %v2447
      %v2449 = vpop.f32.mrb[0].mxu0
      %2450 = vmatprep.mubr.f32.mxu0 0.0
      %2451 = vmatmul.mubr.f32.gmra.mrb[0].mxu0 %v2271
      %v2452 = vpop.f32.mrb[0].mxu0
      %v2453 = vadd.f32 0.0, %v2452
      %v2454 = vpop.f32.mrb[0].mxu0
      %2455 = vmatprep.mubr.f32.mxu0 0.0
      %2456 = vmatmul.mubr.f32.gmra.mrb[0].mxu0 %v2273
      %v2457 = vpop.f32.mrb[0].mxu0
      %v2458 = vadd.f32 0.0, %v2457
      %v2459 = vpop.f32.mrb[0].mxu0
      %2460 = vmatprep.mubr.f32.mxu0 0.0
      %2461 = vmatmul.mubr.f32.gmra.mrb[0].mxu0 %v2275
      %v2462 = vpop.f32.mrb[0].mxu0
      %v2463 = vadd.f32 0.0, %v2462
      %v2464 = vpop.f32.mrb[0].mxu0
      %2465 = vmatprep.mubr.f32.mxu0 0.0
      %2466 = vmatmul.mubr.f32.gmra.mrb[0].mxu0 %v2277
      %v2467 = vpop.f32.mrb[0].mxu0
      %v2468 = vadd.f32 0.0, %v2467
      %v2469 = vpop.f32.mrb[0].mxu0
      %2470 = vdwg.mxu0
      %2471 = vrot.lane.b32.xlu0 %v1798, 112
      %v2472 = vpop.permute.xlu0 %2471
      %2473 = vrot.lane.b32.xlu0 %v1803, 112
      %v2474 = vpop.permute.xlu0 %2473
      %2475 = vrot.lane.b32.xlu0 %v1808, 112
      %v2476 = vpop.permute.xlu0 %2475
      %2477 = vrot.lane.b32.xlu0 %v1813, 112
      %v2478 = vpop.permute.xlu0 %2477
      %2479 = vrot.lane.b32.xlu0 %v1818, 112
      %v2480 = vpop.permute.xlu0 %2479
      %2481 = vrot.lane.b32.xlu0 %v1823, 112
      %v2482 = vpop.permute.xlu0 %2481
      %2483 = vrot.lane.b32.xlu0 %v1828, 112
      %v2484 = vpop.permute.xlu0 %2483
      %2485 = vrot.lane.b32.xlu0 %v1833, 112
      %v2486 = vpop.permute.xlu0 %2485
      %2487 = vrot.lane.b32.xlu0 %v1838, 112
      %v2488 = vpop.permute.xlu0 %2487
      %2489 = vrot.lane.b32.xlu0 %v1843, 112
      %v2490 = vpop.permute.xlu0 %2489
      %2491 = vrot.lane.b32.xlu0 %v1848, 112
      %v2492 = vpop.permute.xlu0 %2491
      %2493 = vrot.lane.b32.xlu0 %v1853, 112
      %v2494 = vpop.permute.xlu0 %2493
      %2495 = vrot.lane.b32.xlu0 %v1858, 112
      %v2496 = vpop.permute.xlu0 %2495
      %2497 = vrot.lane.b32.xlu0 %v1863, 112
      %v2498 = vpop.permute.xlu0 %2497
      %2499 = vrot.lane.b32.xlu0 %v1868, 112
      %v2500 = vpop.permute.xlu0 %2499
      %2501 = vrot.lane.b32.xlu0 %v1873, 112
      %v2502 = vpop.permute.xlu0 %2501
      %2503 = vrot.lane.b32.xlu0 %v1798, 80
      %v2504 = vpop.permute.xlu0 %2503
      %2505 = vrot.lane.b32.xlu0 %v1803, 80
      %v2506 = vpop.permute.xlu0 %2505
      %2507 = vrot.lane.b32.xlu0 %v1808, 80
      %v2508 = vpop.permute.xlu0 %2507
      %2509 = vrot.lane.b32.xlu0 %v1813, 80
      %v2510 = vpop.permute.xlu0 %2509
      %2511 = vrot.lane.b32.xlu0 %v1818, 80
      %v2512 = vpop.permute.xlu0 %2511
      %2513 = vrot.lane.b32.xlu0 %v1823, 80
      %v2514 = vpop.permute.xlu0 %2513
      %2515 = vrot.lane.b32.xlu0 %v1828, 80
      %v2516 = vpop.permute.xlu0 %2515
      %2517 = vrot.lane.b32.xlu0 %v1833, 80
      %v2518 = vpop.permute.xlu0 %2517
      %2519 = vrot.lane.b32.xlu0 %v1838, 80
      %v2520 = vpop.permute.xlu0 %2519
      %2521 = vrot.lane.b32.xlu0 %v1843, 80
      %v2522 = vpop.permute.xlu0 %2521
      %2523 = vrot.lane.b32.xlu0 %v1848, 80
      %v2524 = vpop.permute.xlu0 %2523
      %2525 = vrot.lane.b32.xlu0 %v1853, 80
      %v2526 = vpop.permute.xlu0 %2525
      %2527 = vrot.lane.b32.xlu0 %v1858, 80
      %v2528 = vpop.permute.xlu0 %2527
      %2529 = vrot.lane.b32.xlu0 %v1863, 80
      %v2530 = vpop.permute.xlu0 %2529
      %2531 = vrot.lane.b32.xlu0 %v1868, 80
      %v2532 = vpop.permute.xlu0 %2531
      %2533 = vrot.lane.b32.xlu0 %v1873, 80
      %v2534 = vpop.permute.xlu0 %2533
      %v2535 = vsel %vm1924, %v2472, 0
      %v2537 = vsel %vm1924, %v2474, 0
      %v2539 = vsel %vm1924, %v2476, 0
      %v2541 = vsel %vm1924, %v2478, 0
      %v2543 = vsel %vm1924, %v2480, 0
      %v2545 = vsel %vm1924, %v2482, 0
      %v2547 = vsel %vm1924, %v2484, 0
      %v2549 = vsel %vm1924, %v2486, 0
      %v2551 = vsel %vm1924, %v2488, 0
      %v2553 = vsel %vm1924, %v2490, 0
      %v2555 = vsel %vm1924, %v2492, 0
      %v2557 = vsel %vm1924, %v2494, 0
      %v2559 = vsel %vm1924, %v2496, 0
      %v2561 = vsel %vm1924, %v2498, 0
      %v2563 = vsel %vm1924, %v2500, 0
      %v2565 = vsel %vm1924, %v2502, 0
      %v2567 = vsel %vm1924, %v2504, 0
      %v2569 = vsel %vm1924, %v2506, 0
      %v2571 = vsel %vm1924, %v2508, 0
      %v2573 = vsel %vm1924, %v2510, 0
      %v2575 = vsel %vm1924, %v2512, 0
      %v2577 = vsel %vm1924, %v2514, 0
      %v2579 = vsel %vm1924, %v2516, 0
      %v2581 = vsel %vm1924, %v2518, 0
      %v2583 = vsel %vm1924, %v2520, 0
      %v2585 = vsel %vm1924, %v2522, 0
      %v2587 = vsel %vm1924, %v2524, 0
      %v2589 = vsel %vm1924, %v2526, 0
      %v2591 = vsel %vm1924, %v2528, 0
      %v2593 = vsel %vm1924, %v2530, 0
      %v2595 = vsel %vm1924, %v2532, 0
      %v2597 = vsel %vm1924, %v2534, 0
      %2599 = vmatprep.subr.mxu0 0.0
      %2600 = vmatpush1.xpose.msra.mxu0 %v2567
      %2601 = vmatprep.subr.mxu0 0.0
      %2602 = vmatpush1.xpose.msra.mxu0 %v2569
      %2603 = vmatprep.subr.mxu0 0.0
      %2604 = vmatpush1.xpose.msra.mxu0 %v2571
      %2605 = vmatprep.subr.mxu0 0.0
      %2606 = vmatpush1.xpose.msra.mxu0 %v2573
      %2607 = vmatprep.subr.mxu0 0.0
      %2608 = vmatpush1.xpose.msra.mxu0 %v2575
      %2609 = vmatprep.subr.mxu0 0.0
      %2610 = vmatpush1.xpose.msra.mxu0 %v2577
      %2611 = vmatprep.subr.mxu0 0.0
      %2612 = vmatpush1.xpose.msra.mxu0 %v2579
      %2613 = vmatprep.subr.mxu0 0.0
      %2614 = vmatpush1.xpose.msra.mxu0 %v2581
      %2615 = vmatprep.subr.mxu0 0.0
      %2616 = vmatpush1.xpose.msra.mxu0 %v2583
      %2617 = vmatprep.subr.mxu0 0.0
      %2618 = vmatpush1.xpose.msra.mxu0 %v2585
      %2619 = vmatprep.subr.mxu0 0.0
      %2620 = vmatpush1.xpose.msra.mxu0 %v2587
      %2621 = vmatprep.subr.mxu0 0.0
      %2622 = vmatpush1.xpose.msra.mxu0 %v2589
      %2623 = vmatprep.subr.mxu0 0.0
      %2624 = vmatpush1.xpose.msra.mxu0 %v2591
      %2625 = vmatprep.subr.mxu0 0.0
      %2626 = vmatpush1.xpose.msra.mxu0 %v2593
      %2627 = vmatprep.subr.mxu0 0.0
      %2628 = vmatpush1.xpose.msra.mxu0 %v2595
      %2629 = vmatprep.subr.mxu0 0.0
      %2630 = vmatpush1.xpose.msra.mxu0 %v2597
      %2631 = vmatprep.subr.mxu0 0.0
      %2632 = vmatpush1.xpose.msra.mxu0 0.0
      %2633 = vmatprep.subr.mxu0 0.0
      %2634 = vmatpush1.xpose.msra.mxu0 0.0
      %2635 = vmatprep.subr.mxu0 0.0
      %2636 = vmatpush1.xpose.msra.mxu0 0.0
      %2637 = vmatprep.subr.mxu0 0.0
      %2638 = vmatpush1.xpose.msra.mxu0 0.0
      %2639 = vmatprep.subr.mxu0 0.0
      %2640 = vmatpush1.xpose.msra.mxu0 0.0
      %2641 = vmatprep.subr.mxu0 0.0
      %2642 = vmatpush1.xpose.msra.mxu0 0.0
      %2643 = vmatprep.subr.mxu0 0.0
      %2644 = vmatpush1.xpose.msra.mxu0 0.0
      %2645 = vmatprep.subr.mxu0 0.0
      %2646 = vmatpush1.xpose.msra.mxu0 0.0
      %2647 = vmatprep.subr.mxu0 0.0
      %2648 = vmatpush1.xpose.msra.mxu0 0.0
      %2649 = vmatprep.subr.mxu0 0.0
      %2650 = vmatpush1.xpose.msra.mxu0 0.0
      %2651 = vmatprep.subr.mxu0 0.0
      %2652 = vmatpush1.xpose.msra.mxu0 0.0
      %2653 = vmatprep.subr.mxu0 0.0
      %2654 = vmatpush1.xpose.msra.mxu0 0.0
      %2655 = vmatprep.subr.mxu0 0.0
      %2656 = vmatpush1.xpose.msra.mxu0 0.0
      %2657 = vmatprep.subr.mxu0 0.0
      %2658 = vmatpush1.xpose.msra.mxu0 0.0
      %2659 = vmatprep.subr.mxu0 0.0
      %2660 = vmatpush1.xpose.msra.mxu0 0.0
      %2661 = vmatprep.subr.mxu0 0.0
      %2662 = vmatpush1.xpose.msra.mxu0 0.0
      %2663 = vmatprep.mubr.f32.mxu0 0.0
      %2664 = vmatmul.mubr.f32.gmra.mrb[0].mxu0 %v2535
      %v2665 = vpop.f32.mrb[0].mxu0
      %v2666 = vadd.f32 %v833, %v2665
      %v2667 = vpop.f32.mrb[0].mxu0
      %2668 = vmatprep.mubr.f32.mxu0 0.0
      %2669 = vmatmul.mubr.f32.gmra.mrb[0].mxu0 %v2537
      %v2670 = vpop.f32.mrb[0].mxu0
      %v2671 = vadd.f32 %v834, %v2670
      %v2672 = vpop.f32.mrb[0].mxu0
      %2673 = vmatprep.mubr.f32.mxu0 0.0
      %2674 = vmatmul.mubr.f32.gmra.mrb[0].mxu0 %v2539
      %v2675 = vpop.f32.mrb[0].mxu0
      %v2676 = vadd.f32 %v835, %v2675
      %v2677 = vpop.f32.mrb[0].mxu0
      %2678 = vmatprep.mubr.f32.mxu0 0.0
      %2679 = vmatmul.mubr.f32.gmra.mrb[0].mxu0 %v2541
      %v2680 = vpop.f32.mrb[0].mxu0
      %v2681 = vadd.f32 %v836, %v2680
      %v2682 = vpop.f32.mrb[0].mxu0
      %2683 = vmatprep.mubr.f32.mxu0 0.0
      %2684 = vmatmul.mubr.f32.gmra.mrb[0].mxu0 %v2543
      %v2685 = vpop.f32.mrb[0].mxu0
      %v2686 = vadd.f32 %v837, %v2685
      %v2687 = vpop.f32.mrb[0].mxu0
      %2688 = vmatprep.mubr.f32.mxu0 0.0
      %2689 = vmatmul.mubr.f32.gmra.mrb[0].mxu0 %v2545
      %v2690 = vpop.f32.mrb[0].mxu0
      %v2691 = vadd.f32 %v838, %v2690
      %v2692 = vpop.f32.mrb[0].mxu0
      %2693 = vmatprep.mubr.f32.mxu0 0.0
      %2694 = vmatmul.mubr.f32.gmra.mrb[0].mxu0 %v2547
      %v2695 = vpop.f32.mrb[0].mxu0
      %v2696 = vadd.f32 %v839, %v2695
      %v2697 = vpop.f32.mrb[0].mxu0
      %2698 = vmatprep.mubr.f32.mxu0 0.0
      %2699 = vmatmul.mubr.f32.gmra.mrb[0].mxu0 %v2549
      %v2700 = vpop.f32.mrb[0].mxu0
      %v2701 = vadd.f32 %v840, %v2700
      %v2702 = vpop.f32.mrb[0].mxu0
      %2703 = vmatprep.mubr.f32.mxu0 0.0
      %2704 = vmatmul.mubr.f32.gmra.mrb[0].mxu0 %v2551
      %v2705 = vpop.f32.mrb[0].mxu0
      %v2706 = vadd.f32 %v841, %v2705
      %v2707 = vpop.f32.mrb[0].mxu0
      %2708 = vmatprep.mubr.f32.mxu0 0.0
      %2709 = vmatmul.mubr.f32.gmra.mrb[0].mxu0 %v2553
      %v2710 = vpop.f32.mrb[0].mxu0
      %v2711 = vadd.f32 %v842, %v2710
      %v2712 = vpop.f32.mrb[0].mxu0
      %2713 = vmatprep.mubr.f32.mxu0 0.0
      %2714 = vmatmul.mubr.f32.gmra.mrb[0].mxu0 %v2555
      %v2715 = vpop.f32.mrb[0].mxu0
      %v2716 = vadd.f32 %v843, %v2715
      %v2717 = vpop.f32.mrb[0].mxu0
      %2718 = vmatprep.mubr.f32.mxu0 0.0
      %2719 = vmatmul.mubr.f32.gmra.mrb[0].mxu0 %v2557
      %v2720 = vpop.f32.mrb[0].mxu0
      %v2721 = vadd.f32 %v844, %v2720
      %v2722 = vpop.f32.mrb[0].mxu0
      %2723 = vmatprep.mubr.f32.mxu0 0.0
      %2724 = vmatmul.mubr.f32.gmra.mrb[0].mxu0 %v2559
      %v2725 = vpop.f32.mrb[0].mxu0
      %v2726 = vadd.f32 %v845, %v2725
      %v2727 = vpop.f32.mrb[0].mxu0
      %2728 = vmatprep.mubr.f32.mxu0 0.0
      %2729 = vmatmul.mubr.f32.gmra.mrb[0].mxu0 %v2561
      %v2730 = vpop.f32.mrb[0].mxu0
      %v2731 = vadd.f32 %v846, %v2730
      %v2732 = vpop.f32.mrb[0].mxu0
      %2733 = vmatprep.mubr.f32.mxu0 0.0
      %2734 = vmatmul.mubr.f32.gmra.mrb[0].mxu0 %v2563
      %v2735 = vpop.f32.mrb[0].mxu0
      %v2736 = vadd.f32 %v847, %v2735
      %v2737 = vpop.f32.mrb[0].mxu0
      %2738 = vmatprep.mubr.f32.mxu0 0.0
      %2739 = vmatmul.mubr.f32.gmra.mrb[0].mxu0 %v2565
      %v2740 = vpop.f32.mrb[0].mxu0
      %v2741 = vadd.f32 %v848, %v2740
      %v2742 = vpop.f32.mrb[0].mxu0
      %2743 = vdwg.mxu0
      %2744 = vmax.xlane.f32.xlu0 %v2666
      %v2745 = vpop.xlane.xlu0 %2744
      %2746 = vmax.xlane.f32.xlu0 %v2671
      %v2747 = vpop.xlane.xlu0 %2746
      %2748 = vmax.xlane.f32.xlu0 %v2676
      %v2749 = vpop.xlane.xlu0 %2748
      %2750 = vmax.xlane.f32.xlu0 %v2681
      %v2751 = vpop.xlane.xlu0 %2750
      %2752 = vmax.xlane.f32.xlu0 %v2686
      %v2753 = vpop.xlane.xlu0 %2752
      %2754 = vmax.xlane.f32.xlu0 %v2691
      %v2755 = vpop.xlane.xlu0 %2754
      %2756 = vmax.xlane.f32.xlu0 %v2696
      %v2757 = vpop.xlane.xlu0 %2756
      %2758 = vmax.xlane.f32.xlu0 %v2701
      %v2759 = vpop.xlane.xlu0 %2758
      %2760 = vmax.xlane.f32.xlu0 %v2706
      %v2761 = vpop.xlane.xlu0 %2760
      %2762 = vmax.xlane.f32.xlu0 %v2711
      %v2763 = vpop.xlane.xlu0 %2762
      %2764 = vmax.xlane.f32.xlu0 %v2716
      %v2765 = vpop.xlane.xlu0 %2764
      %2766 = vmax.xlane.f32.xlu0 %v2721
      %v2767 = vpop.xlane.xlu0 %2766
      %2768 = vmax.xlane.f32.xlu0 %v2726
      %v2769 = vpop.xlane.xlu0 %2768
      %2770 = vmax.xlane.f32.xlu0 %v2731
      %v2771 = vpop.xlane.xlu0 %2770
      %2772 = vmax.xlane.f32.xlu0 %v2736
      %v2773 = vpop.xlane.xlu0 %2772
      %2774 = vmax.xlane.f32.xlu0 %v2741
      %v2775 = vpop.xlane.xlu0 %2774
      %v2776 = vsub.f32 %v2666, %v2745
      %v2777 = vsub.f32 %v2671, %v2747
      %v2778 = vsub.f32 %v2676, %v2749
      %v2779 = vsub.f32 %v2681, %v2751
      %v2780 = vsub.f32 %v2686, %v2753
      %v2781 = vsub.f32 %v2691, %v2755
      %v2782 = vsub.f32 %v2696, %v2757
      %v2783 = vsub.f32 %v2701, %v2759
      %v2784 = vsub.f32 %v2706, %v2761
      %v2785 = vsub.f32 %v2711, %v2763
      %v2786 = vsub.f32 %v2716, %v2765
      %v2787 = vsub.f32 %v2721, %v2767
      %v2788 = vsub.f32 %v2726, %v2769
      %v2789 = vsub.f32 %v2731, %v2771
      %v2790 = vsub.f32 %v2736, %v2773
      %v2791 = vsub.f32 %v2741, %v2775
      %v2792 = vmul.f32 %v2776, 1.442695
      %v2793 = vpow.pop %v2792
      %v2794 = vmul.f32 %v2777, 1.442695
      %v2795 = vpow.pop %v2794
      %v2796 = vmul.f32 %v2778, 1.442695
      %v2797 = vpow.pop %v2796
      %v2798 = vmul.f32 %v2779, 1.442695
      %v2799 = vpow.pop %v2798
      %v2800 = vmul.f32 %v2780, 1.442695
      %v2801 = vpow.pop %v2800
      %v2802 = vmul.f32 %v2781, 1.442695
      %v2803 = vpow.pop %v2802
      %v2804 = vmul.f32 %v2782, 1.442695
      %v2805 = vpow.pop %v2804
      %v2806 = vmul.f32 %v2783, 1.442695
      %v2807 = vpow.pop %v2806
      %v2808 = vmul.f32 %v2784, 1.442695
      %v2809 = vpow.pop %v2808
      %v2810 = vmul.f32 %v2785, 1.442695
      %v2811 = vpow.pop %v2810
      %v2812 = vmul.f32 %v2786, 1.442695
      %v2813 = vpow.pop %v2812
      %v2814 = vmul.f32 %v2787, 1.442695
      %v2815 = vpow.pop %v2814
      %v2816 = vmul.f32 %v2788, 1.442695
      %v2817 = vpow.pop %v2816
      %v2818 = vmul.f32 %v2789, 1.442695
      %v2819 = vpow.pop %v2818
      %v2820 = vmul.f32 %v2790, 1.442695
      %v2821 = vpow.pop %v2820
      %v2822 = vmul.f32 %v2791, 1.442695
      %v2823 = vpow.pop %v2822
      %2824 = vadd.xlane.f32.xlu0 %v2793
      %v2825 = vpop.xlane.xlu0 %2824
      %2826 = vadd.xlane.f32.xlu0 %v2795
      %v2827 = vpop.xlane.xlu0 %2826
      %2828 = vadd.xlane.f32.xlu0 %v2797
      %v2829 = vpop.xlane.xlu0 %2828
      %2830 = vadd.xlane.f32.xlu0 %v2799
      %v2831 = vpop.xlane.xlu0 %2830
      %2832 = vadd.xlane.f32.xlu0 %v2801
      %v2833 = vpop.xlane.xlu0 %2832
      %2834 = vadd.xlane.f32.xlu0 %v2803
      %v2835 = vpop.xlane.xlu0 %2834
      %2836 = vadd.xlane.f32.xlu0 %v2805
      %v2837 = vpop.xlane.xlu0 %2836
      %2838 = vadd.xlane.f32.xlu0 %v2807
      %v2839 = vpop.xlane.xlu0 %2838
      %2840 = vadd.xlane.f32.xlu0 %v2809
      %v2841 = vpop.xlane.xlu0 %2840
      %2842 = vadd.xlane.f32.xlu0 %v2811
      %v2843 = vpop.xlane.xlu0 %2842
      %2844 = vadd.xlane.f32.xlu0 %v2813
      %v2845 = vpop.xlane.xlu0 %2844
      %2846 = vadd.xlane.f32.xlu0 %v2815
      %v2847 = vpop.xlane.xlu0 %2846
      %2848 = vadd.xlane.f32.xlu0 %v2817
      %v2849 = vpop.xlane.xlu0 %2848
      %2850 = vadd.xlane.f32.xlu0 %v2819
      %v2851 = vpop.xlane.xlu0 %2850
      %2852 = vadd.xlane.f32.xlu0 %v2821
      %v2853 = vpop.xlane.xlu0 %2852
      %2854 = vadd.xlane.f32.xlu0 %v2823
      %v2855 = vpop.xlane.xlu0 %2854
      %v2856 = vrcp.pop %v2825
      %v2857 = vmul.f32 %v2793, %v2856
      %v2858 = vrcp.pop %v2827
      %v2859 = vmul.f32 %v2795, %v2858
      %v2860 = vrcp.pop %v2829
      %v2861 = vmul.f32 %v2797, %v2860
      %v2862 = vrcp.pop %v2831
      %v2863 = vmul.f32 %v2799, %v2862
      %v2864 = vrcp.pop %v2833
      %v2865 = vmul.f32 %v2801, %v2864
      %v2866 = vrcp.pop %v2835
      %v2867 = vmul.f32 %v2803, %v2866
      %v2868 = vrcp.pop %v2837
      %v2869 = vmul.f32 %v2805, %v2868
      %v2870 = vrcp.pop %v2839
      %v2871 = vmul.f32 %v2807, %v2870
      %v2872 = vrcp.pop %v2841
      %v2873 = vmul.f32 %v2809, %v2872
      %v2874 = vrcp.pop %v2843
      %v2875 = vmul.f32 %v2811, %v2874
      %v2876 = vrcp.pop %v2845
      %v2877 = vmul.f32 %v2813, %v2876
      %v2878 = vrcp.pop %v2847
      %v2879 = vmul.f32 %v2815, %v2878
      %v2880 = vrcp.pop %v2849
      %v2881 = vmul.f32 %v2817, %v2880
      %v2882 = vrcp.pop %v2851
      %v2883 = vmul.f32 %v2819, %v2882
      %v2884 = vrcp.pop %v2853
      %v2885 = vmul.f32 %v2821, %v2884
      %v2886 = vrcp.pop %v2855
      %v2887 = vmul.f32 %v2823, %v2886
      %2888 = vrot.lane.b32.xlu0 %v1798, 48
      %v2889 = vpop.permute.xlu0 %2888
      %2890 = vrot.lane.b32.xlu0 %v1803, 48
      %v2891 = vpop.permute.xlu0 %2890
      %2892 = vrot.lane.b32.xlu0 %v1808, 48
      %v2893 = vpop.permute.xlu0 %2892
      %2894 = vrot.lane.b32.xlu0 %v1813, 48
      %v2895 = vpop.permute.xlu0 %2894
      %2896 = vrot.lane.b32.xlu0 %v1818, 48
      %v2897 = vpop.permute.xlu0 %2896
      %2898 = vrot.lane.b32.xlu0 %v1823, 48
      %v2899 = vpop.permute.xlu0 %2898
      %2900 = vrot.lane.b32.xlu0 %v1828, 48
      %v2901 = vpop.permute.xlu0 %2900
      %2902 = vrot.lane.b32.xlu0 %v1833, 48
      %v2903 = vpop.permute.xlu0 %2902
      %2904 = vrot.lane.b32.xlu0 %v1838, 48
      %v2905 = vpop.permute.xlu0 %2904
      %2906 = vrot.lane.b32.xlu0 %v1843, 48
      %v2907 = vpop.permute.xlu0 %2906
      %2908 = vrot.lane.b32.xlu0 %v1848, 48
      %v2909 = vpop.permute.xlu0 %2908
      %2910 = vrot.lane.b32.xlu0 %v1853, 48
      %v2911 = vpop.permute.xlu0 %2910
      %2912 = vrot.lane.b32.xlu0 %v1858, 48
      %v2913 = vpop.permute.xlu0 %2912
      %2914 = vrot.lane.b32.xlu0 %v1863, 48
      %v2915 = vpop.permute.xlu0 %2914
      %2916 = vrot.lane.b32.xlu0 %v1868, 48
      %v2917 = vpop.permute.xlu0 %2916
      %2918 = vrot.lane.b32.xlu0 %v1873, 48
      %v2919 = vpop.permute.xlu0 %2918
      %2936 = vmatprep.subr.mxu0 0.0
      %2937 = vmatpush1.msra.mxu0 %v2889
      %2938 = vmatprep.subr.mxu0 0.0
      %2939 = vmatpush1.msra.mxu0 %v2891
      %2940 = vmatprep.subr.mxu0 0.0
      %2941 = vmatpush1.msra.mxu0 %v2893
      %2942 = vmatprep.subr.mxu0 0.0
      %2943 = vmatpush1.msra.mxu0 %v2895
      %2944 = vmatprep.subr.mxu0 0.0
      %2945 = vmatpush1.msra.mxu0 %v2897
      %2946 = vmatprep.subr.mxu0 0.0
      %2947 = vmatpush1.msra.mxu0 %v2899
      %2948 = vmatprep.subr.mxu0 0.0
      %2949 = vmatpush1.msra.mxu0 %v2901
      %2950 = vmatprep.subr.mxu0 0.0
      %2951 = vmatpush1.msra.mxu0 %v2903
      %2952 = vmatprep.subr.mxu0 0.0
      %2953 = vmatpush1.msra.mxu0 %v2905
      %2954 = vmatprep.subr.mxu0 0.0
      %2955 = vmatpush1.msra.mxu0 %v2907
      %2956 = vmatprep.subr.mxu0 0.0
      %2957 = vmatpush1.msra.mxu0 %v2909
      %2958 = vmatprep.subr.mxu0 0.0
      %2959 = vmatpush1.msra.mxu0 %v2911
      %2960 = vmatprep.subr.mxu0 0.0
      %2961 = vmatpush1.msra.mxu0 %v2913
      %2962 = vmatprep.subr.mxu0 0.0
      %2963 = vmatpush1.msra.mxu0 %v2915
      %2964 = vmatprep.subr.mxu0 0.0
      %2965 = vmatpush1.msra.mxu0 %v2917
      %2966 = vmatprep.subr.mxu0 0.0
      %2967 = vmatpush1.msra.mxu0 %v2919
      %2968 = vmatprep.subr.mxu0 0.0
      %2969 = vmatpush1.msra.mxu0 0.0
      %2970 = vmatprep.subr.mxu0 0.0
      %2971 = vmatpush1.msra.mxu0 0.0
      %2972 = vmatprep.subr.mxu0 0.0
      %2973 = vmatpush1.msra.mxu0 0.0
      %2974 = vmatprep.subr.mxu0 0.0
      %2975 = vmatpush1.msra.mxu0 0.0
      %2976 = vmatprep.subr.mxu0 0.0
      %2977 = vmatpush1.msra.mxu0 0.0
      %2978 = vmatprep.subr.mxu0 0.0
      %2979 = vmatpush1.msra.mxu0 0.0
      %2980 = vmatprep.subr.mxu0 0.0
      %2981 = vmatpush1.msra.mxu0 0.0
      %2982 = vmatprep.subr.mxu0 0.0
      %2983 = vmatpush1.msra.mxu0 0.0
      %2984 = vmatprep.subr.mxu0 0.0
      %2985 = vmatpush1.msra.mxu0 0.0
      %2986 = vmatprep.subr.mxu0 0.0
      %2987 = vmatpush1.msra.mxu0 0.0
      %2988 = vmatprep.subr.mxu0 0.0
      %2989 = vmatpush1.msra.mxu0 0.0
      %2990 = vmatprep.subr.mxu0 0.0
      %2991 = vmatpush1.msra.mxu0 0.0
      %2992 = vmatprep.subr.mxu0 0.0
      %2993 = vmatpush1.msra.mxu0 0.0
      %2994 = vmatprep.subr.mxu0 0.0
      %2995 = vmatpush1.msra.mxu0 0.0
      %2996 = vmatprep.subr.mxu0 0.0
      %2997 = vmatpush1.msra.mxu0 0.0
      %2998 = vmatprep.subr.mxu0 0.0
      %2999 = vmatpush1.msra.mxu0 0.0
      %3000 = vmatprep.mubr.f32.mxu0 0.0
      %3001 = vmatmul.mubr.f32.gmra.mrb[0].mxu0 %v2857
      %v3002 = vpop.f32.mrb[0].mxu0
      %v3003 = vadd.f32 0.0, %v3002
      %v3004 = vpop.f32.mrb[0].mxu0
      %3005 = vmatprep.mubr.f32.mxu0 0.0
      %3006 = vmatmul.mubr.f32.gmra.mrb[0].mxu0 %v2859
      %v3007 = vpop.f32.mrb[0].mxu0
      %v3008 = vadd.f32 0.0, %v3007
      %v3009 = vpop.f32.mrb[0].mxu0
      %3010 = vmatprep.mubr.f32.mxu0 0.0
      %3011 = vmatmul.mubr.f32.gmra.mrb[0].mxu0 %v2861
      %v3012 = vpop.f32.mrb[0].mxu0
      %v3013 = vadd.f32 0.0, %v3012
      %v3014 = vpop.f32.mrb[0].mxu0
      %3015 = vmatprep.mubr.f32.mxu0 0.0
      %3016 = vmatmul.mubr.f32.gmra.mrb[0].mxu0 %v2863
      %v3017 = vpop.f32.mrb[0].mxu0
      %v3018 = vadd.f32 0.0, %v3017
      %v3019 = vpop.f32.mrb[0].mxu0
      %3020 = vmatprep.mubr.f32.mxu0 0.0
      %3021 = vmatmul.mubr.f32.gmra.mrb[0].mxu0 %v2865
      %v3022 = vpop.f32.mrb[0].mxu0
      %v3023 = vadd.f32 0.0, %v3022
      %v3024 = vpop.f32.mrb[0].mxu0
      %3025 = vmatprep.mubr.f32.mxu0 0.0
      %3026 = vmatmul.mubr.f32.gmra.mrb[0].mxu0 %v2867
      %v3027 = vpop.f32.mrb[0].mxu0
      %v3028 = vadd.f32 0.0, %v3027
      %v3029 = vpop.f32.mrb[0].mxu0
      %3030 = vmatprep.mubr.f32.mxu0 0.0
      %3031 = vmatmul.mubr.f32.gmra.mrb[0].mxu0 %v2869
      %v3032 = vpop.f32.mrb[0].mxu0
      %v3033 = vadd.f32 0.0, %v3032
      %v3034 = vpop.f32.mrb[0].mxu0
      %3035 = vmatprep.mubr.f32.mxu0 0.0
      %3036 = vmatmul.mubr.f32.gmra.mrb[0].mxu0 %v2871
      %v3037 = vpop.f32.mrb[0].mxu0
      %v3038 = vadd.f32 0.0, %v3037
      %v3039 = vpop.f32.mrb[0].mxu0
      %3040 = vmatprep.mubr.f32.mxu0 0.0
      %3041 = vmatmul.mubr.f32.gmra.mrb[0].mxu0 %v2873
      %v3042 = vpop.f32.mrb[0].mxu0
      %v3043 = vadd.f32 0.0, %v3042
      %v3044 = vpop.f32.mrb[0].mxu0
      %3045 = vmatprep.mubr.f32.mxu0 0.0
      %3046 = vmatmul.mubr.f32.gmra.mrb[0].mxu0 %v2875
      %v3047 = vpop.f32.mrb[0].mxu0
      %v3048 = vadd.f32 0.0, %v3047
      %v3049 = vpop.f32.mrb[0].mxu0
      %3050 = vmatprep.mubr.f32.mxu0 0.0
      %3051 = vmatmul.mubr.f32.gmra.mrb[0].mxu0 %v2877
      %v3052 = vpop.f32.mrb[0].mxu0
      %v3053 = vadd.f32 0.0, %v3052
      %v3054 = vpop.f32.mrb[0].mxu0
      %3055 = vmatprep.mubr.f32.mxu0 0.0
      %3056 = vmatmul.mubr.f32.gmra.mrb[0].mxu0 %v2879
      %v3057 = vpop.f32.mrb[0].mxu0
      %v3058 = vadd.f32 0.0, %v3057
      %v3059 = vpop.f32.mrb[0].mxu0
      %3060 = vmatprep.mubr.f32.mxu0 0.0
      %3061 = vmatmul.mubr.f32.gmra.mrb[0].mxu0 %v2881
      %v3062 = vpop.f32.mrb[0].mxu0
      %v3063 = vadd.f32 0.0, %v3062
      %v3064 = vpop.f32.mrb[0].mxu0
      %3065 = vmatprep.mubr.f32.mxu0 0.0
      %3066 = vmatmul.mubr.f32.gmra.mrb[0].mxu0 %v2883
      %v3067 = vpop.f32.mrb[0].mxu0
      %v3068 = vadd.f32 0.0, %v3067
      %v3069 = vpop.f32.mrb[0].mxu0
      %3070 = vmatprep.mubr.f32.mxu0 0.0
      %3071 = vmatmul.mubr.f32.gmra.mrb[0].mxu0 %v2885
      %v3072 = vpop.f32.mrb[0].mxu0
      %v3073 = vadd.f32 0.0, %v3072
      %v3074 = vpop.f32.mrb[0].mxu0
      %3075 = vmatprep.mubr.f32.mxu0 0.0
      %3076 = vmatmul.mubr.f32.gmra.mrb[0].mxu0 %v2887
      %v3077 = vpop.f32.mrb[0].mxu0
      %v3078 = vadd.f32 0.0, %v3077
      %v3079 = vpop.f32.mrb[0].mxu0
      %3080 = vdwg.mxu0
      %3097 = vrot.lane.b32.xlu0 %v3003, 16
      %v3098 = vpop.permute.xlu0 %3097
      %3099 = vrot.lane.b32.xlu0 %v3008, 16
      %v3100 = vpop.permute.xlu0 %3099
      %3101 = vrot.lane.b32.xlu0 %v3013, 16
      %v3102 = vpop.permute.xlu0 %3101
      %3103 = vrot.lane.b32.xlu0 %v3018, 16
      %v3104 = vpop.permute.xlu0 %3103
      %3105 = vrot.lane.b32.xlu0 %v3023, 16
      %v3106 = vpop.permute.xlu0 %3105
      %3107 = vrot.lane.b32.xlu0 %v3028, 16
      %v3108 = vpop.permute.xlu0 %3107
      %3109 = vrot.lane.b32.xlu0 %v3033, 16
      %v3110 = vpop.permute.xlu0 %3109
      %3111 = vrot.lane.b32.xlu0 %v3038, 16
      %v3112 = vpop.permute.xlu0 %3111
      %3113 = vrot.lane.b32.xlu0 %v3043, 16
      %v3114 = vpop.permute.xlu0 %3113
      %3115 = vrot.lane.b32.xlu0 %v3048, 16
      %v3116 = vpop.permute.xlu0 %3115
      %3117 = vrot.lane.b32.xlu0 %v3053, 16
      %v3118 = vpop.permute.xlu0 %3117
      %3119 = vrot.lane.b32.xlu0 %v3058, 16
      %v3120 = vpop.permute.xlu0 %3119
      %3121 = vrot.lane.b32.xlu0 %v3063, 16
      %v3122 = vpop.permute.xlu0 %3121
      %3123 = vrot.lane.b32.xlu0 %v3068, 16
      %v3124 = vpop.permute.xlu0 %3123
      %3125 = vrot.lane.b32.xlu0 %v3073, 16
      %v3126 = vpop.permute.xlu0 %3125
      %3127 = vrot.lane.b32.xlu0 %v3078, 16
      %v3128 = vpop.permute.xlu0 %3127
      %v3145 = vsel %vm1924, %v2393, %v3098
      %v3146 = vsel %vm1924, %v2398, %v3100
      %v3147 = vsel %vm1924, %v2403, %v3102
      %v3148 = vsel %vm1924, %v2408, %v3104
      %v3149 = vsel %vm1924, %v2413, %v3106
      %v3150 = vsel %vm1924, %v2418, %v3108
      %v3151 = vsel %vm1924, %v2423, %v3110
      %v3152 = vsel %vm1924, %v2428, %v3112
      %v3153 = vsel %vm1924, %v2433, %v3114
      %v3154 = vsel %vm1924, %v2438, %v3116
      %v3155 = vsel %vm1924, %v2443, %v3118
      %v3156 = vsel %vm1924, %v2448, %v3120
      %v3157 = vsel %vm1924, %v2453, %v3122
      %v3158 = vsel %vm1924, %v2458, %v3124
      %v3159 = vsel %vm1924, %v2463, %v3126
      %v3160 = vsel %vm1924, %v2468, %v3128
      %v3161 = vld [vmem:[%s10] sm:$0xff]
      %v3162 = vld [vmem:[%s10 + $0x8] sm:$0xff]
      %v3163 = vld [vmem:[%s10 + $0x10] sm:$0xff]
      %v3164 = vld [vmem:[%s10 + $0x18] sm:$0xff]
      %v3165 = vld [vmem:[%s11] sm:$0x1]
      %v3167 = vlaneseq
      %v3168 = vshrl.u32 %v3167, 7
      %v3169 = vsub.s32 0, %v3168
      %v3170 = vrot.slane %v3165, %v3169
      %v3173 = vsel %vm1418, %v3145, 0
      %v3176 = vsel %vm1418, %v3146, 0
      %v3179 = vsel %vm1418, %v3147, 0
      %v3182 = vsel %vm1418, %v3148, 0
      %v3185 = vsel %vm1418, %v3149, 0
      %v3188 = vsel %vm1418, %v3150, 0
      %v3191 = vsel %vm1418, %v3151, 0
      %v3194 = vsel %vm1418, %v3152, 0
      %v3197 = vsel %vm1418, %v3153, 0
      %v3200 = vsel %vm1418, %v3154, 0
      %v3203 = vsel %vm1418, %v3155, 0
      %v3206 = vsel %vm1418, %v3156, 0
      %v3209 = vsel %vm1418, %v3157, 0
      %v3212 = vsel %vm1418, %v3158, 0
      %v3215 = vsel %vm1418, %v3159, 0
      %v3218 = vsel %vm1418, %v3160, 0
      %3220 = vmatprep.subr.mxu0 0.0
      %3221 = vmatpush1.msra.mxu0 %v3161
      %3222 = vmatprep.subr.mxu0 0.0
      %3223 = vmatpush1.msra.mxu0 %v3162
      %3224 = vmatprep.subr.mxu0 0.0
      %3225 = vmatpush1.msra.mxu0 %v3163
      %3226 = vmatprep.subr.mxu0 0.0
      %3227 = vmatpush1.msra.mxu0 %v3164
      %3228 = vmatprep.subr.mxu0 0.0
      %3229 = vmatpush1.msra.mxu0 0.0
      %3230 = vmatprep.subr.mxu0 0.0
      %3231 = vmatpush1.msra.mxu0 0.0
      %3232 = vmatprep.subr.mxu0 0.0
      %3233 = vmatpush1.msra.mxu0 0.0
      %3234 = vmatprep.subr.mxu0 0.0
      %3235 = vmatpush1.msra.mxu0 0.0
      %3236 = vmatprep.subr.mxu0 0.0
      %3237 = vmatpush1.msra.mxu0 0.0
      %3238 = vmatprep.subr.mxu0 0.0
      %3239 = vmatpush1.msra.mxu0 0.0
      %3240 = vmatprep.subr.mxu0 0.0
      %3241 = vmatpush1.msra.mxu0 0.0
      %3242 = vmatprep.subr.mxu0 0.0
      %3243 = vmatpush1.msra.mxu0 0.0
      %3244 = vmatprep.subr.mxu0 0.0
      %3245 = vmatpush1.msra.mxu0 0.0
      %3246 = vmatprep.subr.mxu0 0.0
      %3247 = vmatpush1.msra.mxu0 0.0
      %3248 = vmatprep.subr.mxu0 0.0
      %3249 = vmatpush1.msra.mxu0 0.0
      %3250 = vmatprep.subr.mxu0 0.0
      %3251 = vmatpush1.msra.mxu0 0.0
      %3252 = vmatprep.subr.mxu0 0.0
      %3253 = vmatpush1.msra.mxu0 0.0
      %3254 = vmatprep.subr.mxu0 0.0
      %3255 = vmatpush1.msra.mxu0 0.0
      %3256 = vmatprep.subr.mxu0 0.0
      %3257 = vmatpush1.msra.mxu0 0.0
      %3258 = vmatprep.subr.mxu0 0.0
      %3259 = vmatpush1.msra.mxu0 0.0
      %3260 = vmatprep.subr.mxu0 0.0
      %3261 = vmatpush1.msra.mxu0 0.0
      %3262 = vmatprep.subr.mxu0 0.0
      %3263 = vmatpush1.msra.mxu0 0.0
      %3264 = vmatprep.subr.mxu0 0.0
      %3265 = vmatpush1.msra.mxu0 0.0
      %3266 = vmatprep.subr.mxu0 0.0
      %3267 = vmatpush1.msra.mxu0 0.0
      %3268 = vmatprep.subr.mxu0 0.0
      %3269 = vmatpush1.msra.mxu0 0.0
      %3270 = vmatprep.subr.mxu0 0.0
      %3271 = vmatpush1.msra.mxu0 0.0
      %3272 = vmatprep.subr.mxu0 0.0
      %3273 = vmatpush1.msra.mxu0 0.0
      %3274 = vmatprep.subr.mxu0 0.0
      %3275 = vmatpush1.msra.mxu0 0.0
      %3276 = vmatprep.subr.mxu0 0.0
      %3277 = vmatpush1.msra.mxu0 0.0
      %3278 = vmatprep.subr.mxu0 0.0
      %3279 = vmatpush1.msra.mxu0 0.0
      %3280 = vmatprep.subr.mxu0 0.0
      %3281 = vmatpush1.msra.mxu0 0.0
      %3282 = vmatprep.subr.mxu0 0.0
      %3283 = vmatpush1.msra.mxu0 0.0
      %3284 = vmatprep.mubr.f32.mxu0 0.0
      %3285 = vmatmul.mubr.f32.gmra.mrb[0].mxu0 %v3173
      %v3286 = vpop.f32.mrb[0].mxu0
      %v3287 = vadd.f32 %v3170, %v3286
      %v3288 = vpop.f32.mrb[0].mxu0
      %3289 = vmatprep.mubr.f32.mxu0 0.0
      %3290 = vmatmul.mubr.f32.gmra.mrb[0].mxu0 %v3176
      %v3291 = vpop.f32.mrb[0].mxu0
      %v3292 = vadd.f32 %v3170, %v3291
      %v3293 = vpop.f32.mrb[0].mxu0
      %3294 = vmatprep.mubr.f32.mxu0 0.0
      %3295 = vmatmul.mubr.f32.gmra.mrb[0].mxu0 %v3179
      %v3296 = vpop.f32.mrb[0].mxu0
      %v3297 = vadd.f32 %v3170, %v3296
      %v3298 = vpop.f32.mrb[0].mxu0
      %3299 = vmatprep.mubr.f32.mxu0 0.0
      %3300 = vmatmul.mubr.f32.gmra.mrb[0].mxu0 %v3182
      %v3301 = vpop.f32.mrb[0].mxu0
      %v3302 = vadd.f32 %v3170, %v3301
      %v3303 = vpop.f32.mrb[0].mxu0
      %3304 = vmatprep.mubr.f32.mxu0 0.0
      %3305 = vmatmul.mubr.f32.gmra.mrb[0].mxu0 %v3185
      %v3306 = vpop.f32.mrb[0].mxu0
      %v3307 = vadd.f32 %v3170, %v3306
      %v3308 = vpop.f32.mrb[0].mxu0
      %3309 = vmatprep.mubr.f32.mxu0 0.0
      %3310 = vmatmul.mubr.f32.gmra.mrb[0].mxu0 %v3188
      %v3311 = vpop.f32.mrb[0].mxu0
      %v3312 = vadd.f32 %v3170, %v3311
      %v3313 = vpop.f32.mrb[0].mxu0
      %3314 = vmatprep.mubr.f32.mxu0 0.0
      %3315 = vmatmul.mubr.f32.gmra.mrb[0].mxu0 %v3191
      %v3316 = vpop.f32.mrb[0].mxu0
      %v3317 = vadd.f32 %v3170, %v3316
      %v3318 = vpop.f32.mrb[0].mxu0
      %3319 = vmatprep.mubr.f32.mxu0 0.0
      %3320 = vmatmul.mubr.f32.gmra.mrb[0].mxu0 %v3194
      %v3321 = vpop.f32.mrb[0].mxu0
      %v3322 = vadd.f32 %v3170, %v3321
      %v3323 = vpop.f32.mrb[0].mxu0
      %3324 = vmatprep.mubr.f32.mxu0 0.0
      %3325 = vmatmul.mubr.f32.gmra.mrb[0].mxu0 %v3197
      %v3326 = vpop.f32.mrb[0].mxu0
      %v3327 = vadd.f32 %v3170, %v3326
      %v3328 = vpop.f32.mrb[0].mxu0
      %3329 = vmatprep.mubr.f32.mxu0 0.0
      %3330 = vmatmul.mubr.f32.gmra.mrb[0].mxu0 %v3200
      %v3331 = vpop.f32.mrb[0].mxu0
      %v3332 = vadd.f32 %v3170, %v3331
      %v3333 = vpop.f32.mrb[0].mxu0
      %3334 = vmatprep.mubr.f32.mxu0 0.0
      %3335 = vmatmul.mubr.f32.gmra.mrb[0].mxu0 %v3203
      %v3336 = vpop.f32.mrb[0].mxu0
      %v3337 = vadd.f32 %v3170, %v3336
      %v3338 = vpop.f32.mrb[0].mxu0
      %3339 = vmatprep.mubr.f32.mxu0 0.0
      %3340 = vmatmul.mubr.f32.gmra.mrb[0].mxu0 %v3206
      %v3341 = vpop.f32.mrb[0].mxu0
      %v3342 = vadd.f32 %v3170, %v3341
      %v3343 = vpop.f32.mrb[0].mxu0
      %3344 = vmatprep.mubr.f32.mxu0 0.0
      %3345 = vmatmul.mubr.f32.gmra.mrb[0].mxu0 %v3209
      %v3346 = vpop.f32.mrb[0].mxu0
      %v3347 = vadd.f32 %v3170, %v3346
      %v3348 = vpop.f32.mrb[0].mxu0
      %3349 = vmatprep.mubr.f32.mxu0 0.0
      %3350 = vmatmul.mubr.f32.gmra.mrb[0].mxu0 %v3212
      %v3351 = vpop.f32.mrb[0].mxu0
      %v3352 = vadd.f32 %v3170, %v3351
      %v3353 = vpop.f32.mrb[0].mxu0
      %3354 = vmatprep.mubr.f32.mxu0 0.0
      %3355 = vmatmul.mubr.f32.gmra.mrb[0].mxu0 %v3215
      %v3356 = vpop.f32.mrb[0].mxu0
      %v3357 = vadd.f32 %v3170, %v3356
      %v3358 = vpop.f32.mrb[0].mxu0
      %3359 = vmatprep.mubr.f32.mxu0 0.0
      %3360 = vmatmul.mubr.f32.gmra.mrb[0].mxu0 %v3218
      %v3361 = vpop.f32.mrb[0].mxu0
      %v3362 = vadd.f32 %v3170, %v3361
      %v3363 = vpop.f32.mrb[0].mxu0
      %3364 = vdwg.mxu0
      %v3365 = vadd.f32 %v1656, %v3287
      %v3366 = vadd.f32 %v1657, %v3292
      %v3367 = vadd.f32 %v1658, %v3297
      %v3368 = vadd.f32 %v1659, %v3302
      %v3369 = vadd.f32 %v1660, %v3307
      %v3370 = vadd.f32 %v1661, %v3312
      %v3371 = vadd.f32 %v1662, %v3317
      %v3372 = vadd.f32 %v1663, %v3322
      %v3373 = vadd.f32 %v1664, %v3327
      %v3374 = vadd.f32 %v1665, %v3332
      %v3375 = vadd.f32 %v1666, %v3337
      %v3376 = vadd.f32 %v1667, %v3342
      %v3377 = vadd.f32 %v1668, %v3347
      %v3378 = vadd.f32 %v1669, %v3352
      %v3379 = vadd.f32 %v1670, %v3357
      %v3380 = vadd.f32 %v1671, %v3362
      %v3381 = vld [vmem:[%s12] sm:$0x1]
      %v3382 = vld [vmem:[%s13] sm:$0x1]
      %v3383 = vsel %vm1418, %v3365, 0.0
      %3384 = vadd.xlane.f32.xlu0 %v3383
      %v3385 = vpop.xlane.xlu0 %3384
      %v3386 = vsel %vm1418, %v3366, 0.0
      %3387 = vadd.xlane.f32.xlu0 %v3386
      %v3388 = vpop.xlane.xlu0 %3387
      %v3389 = vsel %vm1418, %v3367, 0.0
      %3390 = vadd.xlane.f32.xlu0 %v3389
      %v3391 = vpop.xlane.xlu0 %3390
      %v3392 = vsel %vm1418, %v3368, 0.0
      %3393 = vadd.xlane.f32.xlu0 %v3392
      %v3394 = vpop.xlane.xlu0 %3393
      %v3395 = vsel %vm1418, %v3369, 0.0
      %3396 = vadd.xlane.f32.xlu0 %v3395
      %v3397 = vpop.xlane.xlu0 %3396
      %v3398 = vsel %vm1418, %v3370, 0.0
      %3399 = vadd.xlane.f32.xlu0 %v3398
      %v3400 = vpop.xlane.xlu0 %3399
      %v3401 = vsel %vm1418, %v3371, 0.0
      %3402 = vadd.xlane.f32.xlu0 %v3401
      %v3403 = vpop.xlane.xlu0 %3402
      %v3404 = vsel %vm1418, %v3372, 0.0
      %3405 = vadd.xlane.f32.xlu0 %v3404
      %v3406 = vpop.xlane.xlu0 %3405
      %v3407 = vsel %vm1418, %v3373, 0.0
      %3408 = vadd.xlane.f32.xlu0 %v3407
      %v3409 = vpop.xlane.xlu0 %3408
      %v3410 = vsel %vm1418, %v3374, 0.0
      %3411 = vadd.xlane.f32.xlu0 %v3410
      %v3412 = vpop.xlane.xlu0 %3411
      %v3413 = vsel %vm1418, %v3375, 0.0
      %3414 = vadd.xlane.f32.xlu0 %v3413
      %v3415 = vpop.xlane.xlu0 %3414
      %v3416 = vsel %vm1418, %v3376, 0.0
      %3417 = vadd.xlane.f32.xlu0 %v3416
      %v3418 = vpop.xlane.xlu0 %3417
      %v3419 = vsel %vm1418, %v3377, 0.0
      %3420 = vadd.xlane.f32.xlu0 %v3419
      %v3421 = vpop.xlane.xlu0 %3420
      %v3422 = vsel %vm1418, %v3378, 0.0
      %3423 = vadd.xlane.f32.xlu0 %v3422
      %v3424 = vpop.xlane.xlu0 %3423
      %v3425 = vsel %vm1418, %v3379, 0.0
      %3426 = vadd.xlane.f32.xlu0 %v3425
      %v3427 = vpop.xlane.xlu0 %3426
      %v3428 = vsel %vm1418, %v3380, 0.0
      %3429 = vadd.xlane.f32.xlu0 %v3428
      %v3430 = vpop.xlane.xlu0 %3429
      %v3431 = vmul.f32 %v3385, %v1467
      %v3432 = vmul.f32 %v3388, %v1467
      %v3433 = vmul.f32 %v3391, %v1467
      %v3434 = vmul.f32 %v3394, %v1467
      %v3435 = vmul.f32 %v3397, %v1467
      %v3436 = vmul.f32 %v3400, %v1467
      %v3437 = vmul.f32 %v3403, %v1467
      %v3438 = vmul.f32 %v3406, %v1467
      %v3439 = vmul.f32 %v3409, %v1467
      %v3440 = vmul.f32 %v3412, %v1467
      %v3441 = vmul.f32 %v3415, %v1467
      %v3442 = vmul.f32 %v3418, %v1467
      %v3443 = vmul.f32 %v3421, %v1467
      %v3444 = vmul.f32 %v3424, %v1467
      %v3445 = vmul.f32 %v3427, %v1467
      %v3446 = vmul.f32 %v3430, %v1467
      %v3447 = vsub.f32 %v3365, %v3431
      %v3448 = vsub.f32 %v3366, %v3432
      %v3449 = vsub.f32 %v3367, %v3433
      %v3450 = vsub.f32 %v3368, %v3434
      %v3451 = vsub.f32 %v3369, %v3435
      %v3452 = vsub.f32 %v3370, %v3436
      %v3453 = vsub.f32 %v3371, %v3437
      %v3454 = vsub.f32 %v3372, %v3438
      %v3455 = vsub.f32 %v3373, %v3439
      %v3456 = vsub.f32 %v3374, %v3440
      %v3457 = vsub.f32 %v3375, %v3441
      %v3458 = vsub.f32 %v3376, %v3442
      %v3459 = vsub.f32 %v3377, %v3443
      %v3460 = vsub.f32 %v3378, %v3444
      %v3461 = vsub.f32 %v3379, %v3445
      %v3462 = vsub.f32 %v3380, %v3446
      %v3463 = vmul.f32 %v3447, %v3447
      %v3464 = vmul.f32 %v3448, %v3448
      %v3465 = vmul.f32 %v3449, %v3449
      %v3466 = vmul.f32 %v3450, %v3450
      %v3467 = vmul.f32 %v3451, %v3451
      %v3468 = vmul.f32 %v3452, %v3452
      %v3469 = vmul.f32 %v3453, %v3453
      %v3470 = vmul.f32 %v3454, %v3454
      %v3471 = vmul.f32 %v3455, %v3455
      %v3472 = vmul.f32 %v3456, %v3456
      %v3473 = vmul.f32 %v3457, %v3457
      %v3474 = vmul.f32 %v3458, %v3458
      %v3475 = vmul.f32 %v3459, %v3459
      %v3476 = vmul.f32 %v3460, %v3460
      %v3477 = vmul.f32 %v3461, %v3461
      %v3478 = vmul.f32 %v3462, %v3462
      %v3479 = vsel %vm1418, %v3463, 0.0
      %3480 = vadd.xlane.f32.xlu0 %v3479
      %v3481 = vpop.xlane.xlu0 %3480
      %v3482 = vsel %vm1418, %v3464, 0.0
      %3483 = vadd.xlane.f32.xlu0 %v3482
      %v3484 = vpop.xlane.xlu0 %3483
      %v3485 = vsel %vm1418, %v3465, 0.0
      %3486 = vadd.xlane.f32.xlu0 %v3485
      %v3487 = vpop.xlane.xlu0 %3486
      %v3488 = vsel %vm1418, %v3466, 0.0
      %3489 = vadd.xlane.f32.xlu0 %v3488
      %v3490 = vpop.xlane.xlu0 %3489
      %v3491 = vsel %vm1418, %v3467, 0.0
      %3492 = vadd.xlane.f32.xlu0 %v3491
      %v3493 = vpop.xlane.xlu0 %3492
      %v3494 = vsel %vm1418, %v3468, 0.0
      %3495 = vadd.xlane.f32.xlu0 %v3494
      %v3496 = vpop.xlane.xlu0 %3495
      %v3497 = vsel %vm1418, %v3469, 0.0
      %3498 = vadd.xlane.f32.xlu0 %v3497
      %v3499 = vpop.xlane.xlu0 %3498
      %v3500 = vsel %vm1418, %v3470, 0.0
      %3501 = vadd.xlane.f32.xlu0 %v3500
      %v3502 = vpop.xlane.xlu0 %3501
      %v3503 = vsel %vm1418, %v3471, 0.0
      %3504 = vadd.xlane.f32.xlu0 %v3503
      %v3505 = vpop.xlane.xlu0 %3504
      %v3506 = vsel %vm1418, %v3472, 0.0
      %3507 = vadd.xlane.f32.xlu0 %v3506
      %v3508 = vpop.xlane.xlu0 %3507
      %v3509 = vsel %vm1418, %v3473, 0.0
      %3510 = vadd.xlane.f32.xlu0 %v3509
      %v3511 = vpop.xlane.xlu0 %3510
      %v3512 = vsel %vm1418, %v3474, 0.0
      %3513 = vadd.xlane.f32.xlu0 %v3512
      %v3514 = vpop.xlane.xlu0 %3513
      %v3515 = vsel %vm1418, %v3475, 0.0
      %3516 = vadd.xlane.f32.xlu0 %v3515
      %v3517 = vpop.xlane.xlu0 %3516
      %v3518 = vsel %vm1418, %v3476, 0.0
      %3519 = vadd.xlane.f32.xlu0 %v3518
      %v3520 = vpop.xlane.xlu0 %3519
      %v3521 = vsel %vm1418, %v3477, 0.0
      %3522 = vadd.xlane.f32.xlu0 %v3521
      %v3523 = vpop.xlane.xlu0 %3522
      %v3524 = vsel %vm1418, %v3478, 0.0
      %3525 = vadd.xlane.f32.xlu0 %v3524
      %v3526 = vpop.xlane.xlu0 %3525
      %v3527 = vmul.f32 %v3481, %v1467
      %v3528 = vmul.f32 %v3484, %v1467
      %v3529 = vmul.f32 %v3487, %v1467
      %v3530 = vmul.f32 %v3490, %v1467
      %v3531 = vmul.f32 %v3493, %v1467
      %v3532 = vmul.f32 %v3496, %v1467
      %v3533 = vmul.f32 %v3499, %v1467
      %v3534 = vmul.f32 %v3502, %v1467
      %v3535 = vmul.f32 %v3505, %v1467
      %v3536 = vmul.f32 %v3508, %v1467
      %v3537 = vmul.f32 %v3511, %v1467
      %v3538 = vmul.f32 %v3514, %v1467
      %v3539 = vmul.f32 %v3517, %v1467
      %v3540 = vmul.f32 %v3520, %v1467
      %v3541 = vmul.f32 %v3523, %v1467
      %v3542 = vmul.f32 %v3526, %v1467
      %v3543 = vadd.f32 %v3527, 1e-12
      %v3544 = vadd.f32 %v3528, 1e-12
      %v3545 = vadd.f32 %v3529, 1e-12
      %v3546 = vadd.f32 %v3530, 1e-12
      %v3547 = vadd.f32 %v3531, 1e-12
      %v3548 = vadd.f32 %v3532, 1e-12
      %v3549 = vadd.f32 %v3533, 1e-12
      %v3550 = vadd.f32 %v3534, 1e-12
      %v3551 = vadd.f32 %v3535, 1e-12
      %v3552 = vadd.f32 %v3536, 1e-12
      %v3553 = vadd.f32 %v3537, 1e-12
      %v3554 = vadd.f32 %v3538, 1e-12
      %v3555 = vadd.f32 %v3539, 1e-12
      %v3556 = vadd.f32 %v3540, 1e-12
      %v3557 = vadd.f32 %v3541, 1e-12
      %v3558 = vadd.f32 %v3542, 1e-12
      %v3559 = vrsqrt.pop %v3543
      %v3560 = vrsqrt.pop %v3544
      %v3561 = vrsqrt.pop %v3545
      %v3562 = vrsqrt.pop %v3546
      %v3563 = vrsqrt.pop %v3547
      %v3564 = vrsqrt.pop %v3548
      %v3565 = vrsqrt.pop %v3549
      %v3566 = vrsqrt.pop %v3550
      %v3567 = vrsqrt.pop %v3551
      %v3568 = vrsqrt.pop %v3552
      %v3569 = vrsqrt.pop %v3553
      %v3570 = vrsqrt.pop %v3554
      %v3571 = vrsqrt.pop %v3555
      %v3572 = vrsqrt.pop %v3556
      %v3573 = vrsqrt.pop %v3557
      %v3574 = vrsqrt.pop %v3558
      %v3575 = vmul.f32 %v3447, %v3559
      %v3576 = vmul.f32 %v3448, %v3560
      %v3577 = vmul.f32 %v3449, %v3561
      %v3578 = vmul.f32 %v3450, %v3562
      %v3579 = vmul.f32 %v3451, %v3563
      %v3580 = vmul.f32 %v3452, %v3564
      %v3581 = vmul.f32 %v3453, %v3565
      %v3582 = vmul.f32 %v3454, %v3566
      %v3583 = vmul.f32 %v3455, %v3567
      %v3584 = vmul.f32 %v3456, %v3568
      %v3585 = vmul.f32 %v3457, %v3569
      %v3586 = vmul.f32 %v3458, %v3570
      %v3587 = vmul.f32 %v3459, %v3571
      %v3588 = vmul.f32 %v3460, %v3572
      %v3589 = vmul.f32 %v3461, %v3573
      %v3590 = vmul.f32 %v3462, %v3574
      %v3592 = vlaneseq
      %v3593 = vshrl.u32 %v3592, 7
      %v3594 = vsub.s32 0, %v3593
      %v3595 = vrot.slane %v3381, %v3594
      %v3597 = vmul.f32 %v3575, %v3595
      %v3598 = vmul.f32 %v3576, %v3595
      %v3599 = vmul.f32 %v3577, %v3595
      %v3600 = vmul.f32 %v3578, %v3595
      %v3601 = vmul.f32 %v3579, %v3595
      %v3602 = vmul.f32 %v3580, %v3595
      %v3603 = vmul.f32 %v3581, %v3595
      %v3604 = vmul.f32 %v3582, %v3595
      %v3605 = vmul.f32 %v3583, %v3595
      %v3606 = vmul.f32 %v3584, %v3595
      %v3607 = vmul.f32 %v3585, %v3595
      %v3608 = vmul.f32 %v3586, %v3595
      %v3609 = vmul.f32 %v3587, %v3595
      %v3610 = vmul.f32 %v3588, %v3595
      %v3611 = vmul.f32 %v3589, %v3595
      %v3612 = vmul.f32 %v3590, %v3595
      %v3614 = vlaneseq
      %v3615 = vshrl.u32 %v3614, 7
      %v3616 = vsub.s32 0, %v3615
      %v3617 = vrot.slane %v3382, %v3616
      %v3619 = vadd.f32 %v3597, %v3617
      %v3620 = vadd.f32 %v3598, %v3617
      %v3621 = vadd.f32 %v3599, %v3617
      %v3622 = vadd.f32 %v3600, %v3617
      %v3623 = vadd.f32 %v3601, %v3617
      %v3624 = vadd.f32 %v3602, %v3617
      %v3625 = vadd.f32 %v3603, %v3617
      %v3626 = vadd.f32 %v3604, %v3617
      %v3627 = vadd.f32 %v3605, %v3617
      %v3628 = vadd.f32 %v3606, %v3617
      %v3629 = vadd.f32 %v3607, %v3617
      %v3630 = vadd.f32 %v3608, %v3617
      %v3631 = vadd.f32 %v3609, %v3617
      %v3632 = vadd.f32 %v3610, %v3617
      %v3633 = vadd.f32 %v3611, %v3617
      %v3634 = vadd.f32 %v3612, %v3617
      %v3635 = vld [vmem:[%s14] sm:$0xff]
      %v3636 = vld [vmem:[%s14 + $0x8] sm:$0xff]
      %v3637 = vld [vmem:[%s14 + $0x10] sm:$0xff]
      %v3638 = vld [vmem:[%s14 + $0x18] sm:$0xff]
      %v3639 = vld [vmem:[%s15] sm:$0x1]
      %v3641 = vlaneseq
      %v3642 = vshrl.u32 %v3641, 7
      %v3643 = vsub.s32 0, %v3642
      %v3644 = vrot.slane %v3639, %v3643
      %v3647 = vsel %vm1418, %v3619, 0
      %v3650 = vsel %vm1418, %v3620, 0
      %v3653 = vsel %vm1418, %v3621, 0
      %v3656 = vsel %vm1418, %v3622, 0
      %v3659 = vsel %vm1418, %v3623, 0
      %v3662 = vsel %vm1418, %v3624, 0
      %v3665 = vsel %vm1418, %v3625, 0
      %v3668 = vsel %vm1418, %v3626, 0
      %v3671 = vsel %vm1418, %v3627, 0
      %v3674 = vsel %vm1418, %v3628, 0
      %v3677 = vsel %vm1418, %v3629, 0
      %v3680 = vsel %vm1418, %v3630, 0
      %v3683 = vsel %vm1418, %v3631, 0
      %v3686 = vsel %vm1418, %v3632, 0
      %v3689 = vsel %vm1418, %v3633, 0
      %v3692 = vsel %vm1418, %v3634, 0
      %3694 = vmatprep.subr.mxu0 0.0
      %3695 = vmatpush1.msra.mxu0 %v3635
      %3696 = vmatprep.subr.mxu0 0.0
      %3697 = vmatpush1.msra.mxu0 %v3636
      %3698 = vmatprep.subr.mxu0 0.0
      %3699 = vmatpush1.msra.mxu0 %v3637
      %3700 = vmatprep.subr.mxu0 0.0
      %3701 = vmatpush1.msra.mxu0 %v3638
      %3702 = vmatprep.subr.mxu0 0.0
      %3703 = vmatpush1.msra.mxu0 0.0
      %3704 = vmatprep.subr.mxu0 0.0
      %3705 = vmatpush1.msra.mxu0 0.0
      %3706 = vmatprep.subr.mxu0 0.0
      %3707 = vmatpush1.msra.mxu0 0.0
      %3708 = vmatprep.subr.mxu0 0.0
      %3709 = vmatpush1.msra.mxu0 0.0
      %3710 = vmatprep.subr.mxu0 0.0
      %3711 = vmatpush1.msra.mxu0 0.0
      %3712 = vmatprep.subr.mxu0 0.0
      %3713 = vmatpush1.msra.mxu0 0.0
      %3714 = vmatprep.subr.mxu0 0.0
      %3715 = vmatpush1.msra.mxu0 0.0
      %3716 = vmatprep.subr.mxu0 0.0
      %3717 = vmatpush1.msra.mxu0 0.0
      %3718 = vmatprep.subr.mxu0 0.0
      %3719 = vmatpush1.msra.mxu0 0.0
      %3720 = vmatprep.subr.mxu0 0.0
      %3721 = vmatpush1.msra.mxu0 0.0
      %3722 = vmatprep.subr.mxu0 0.0
      %3723 = vmatpush1.msra.mxu0 0.0
      %3724 = vmatprep.subr.mxu0 0.0
      %3725 = vmatpush1.msra.mxu0 0.0
      %3726 = vmatprep.subr.mxu0 0.0
      %3727 = vmatpush1.msra.mxu0 0.0
      %3728 = vmatprep.subr.mxu0 0.0
      %3729 = vmatpush1.msra.mxu0 0.0
      %3730 = vmatprep.subr.mxu0 0.0
      %3731 = vmatpush1.msra.mxu0 0.0
      %3732 = vmatprep.subr.mxu0 0.0
      %3733 = vmatpush1.msra.mxu0 0.0
      %3734 = vmatprep.subr.mxu0 0.0
      %3735 = vmatpush1.msra.mxu0 0.0
      %3736 = vmatprep.subr.mxu0 0.0
      %3737 = vmatpush1.msra.mxu0 0.0
      %3738 = vmatprep.subr.mxu0 0.0
      %3739 = vmatpush1.msra.mxu0 0.0
      %3740 = vmatprep.subr.mxu0 0.0
      %3741 = vmatpush1.msra.mxu0 0.0
      %3742 = vmatprep.subr.mxu0 0.0
      %3743 = vmatpush1.msra.mxu0 0.0
      %3744 = vmatprep.subr.mxu0 0.0
      %3745 = vmatpush1.msra.mxu0 0.0
      %3746 = vmatprep.subr.mxu0 0.0
      %3747 = vmatpush1.msra.mxu0 0.0
      %3748 = vmatprep.subr.mxu0 0.0
      %3749 = vmatpush1.msra.mxu0 0.0
      %3750 = vmatprep.subr.mxu0 0.0
      %3751 = vmatpush1.msra.mxu0 0.0
      %3752 = vmatprep.subr.mxu0 0.0
      %3753 = vmatpush1.msra.mxu0 0.0
      %3754 = vmatprep.subr.mxu0 0.0
      %3755 = vmatpush1.msra.mxu0 0.0
      %3756 = vmatprep.subr.mxu0 0.0
      %3757 = vmatpush1.msra.mxu0 0.0
      %3758 = vmatprep.mubr.f32.mxu0 0.0
      %3759 = vmatmul.mubr.f32.gmra.mrb[0].mxu0 %v3647
      %v3760 = vpop.f32.mrb[0].mxu0
      %v3761 = vadd.f32 %v3644, %v3760
      %v3762 = vpop.f32.mrb[0].mxu0
      %3763 = vmatprep.mubr.f32.mxu0 0.0
      %3764 = vmatmul.mubr.f32.gmra.mrb[0].mxu0 %v3650
      %v3765 = vpop.f32.mrb[0].mxu0
      %v3766 = vadd.f32 %v3644, %v3765
      %v3767 = vpop.f32.mrb[0].mxu0
      %3768 = vmatprep.mubr.f32.mxu0 0.0
      %3769 = vmatmul.mubr.f32.gmra.mrb[0].mxu0 %v3653
      %v3770 = vpop.f32.mrb[0].mxu0
      %v3771 = vadd.f32 %v3644, %v3770
      %v3772 = vpop.f32.mrb[0].mxu0
      %3773 = vmatprep.mubr.f32.mxu0 0.0
      %3774 = vmatmul.mubr.f32.gmra.mrb[0].mxu0 %v3656
      %v3775 = vpop.f32.mrb[0].mxu0
      %v3776 = vadd.f32 %v3644, %v3775
      %v3777 = vpop.f32.mrb[0].mxu0
      %3778 = vmatprep.mubr.f32.mxu0 0.0
      %3779 = vmatmul.mubr.f32.gmra.mrb[0].mxu0 %v3659
      %v3780 = vpop.f32.mrb[0].mxu0
      %v3781 = vadd.f32 %v3644, %v3780
      %v3782 = vpop.f32.mrb[0].mxu0
      %3783 = vmatprep.mubr.f32.mxu0 0.0
      %3784 = vmatmul.mubr.f32.gmra.mrb[0].mxu0 %v3662
      %v3785 = vpop.f32.mrb[0].mxu0
      %v3786 = vadd.f32 %v3644, %v3785
      %v3787 = vpop.f32.mrb[0].mxu0
      %3788 = vmatprep.mubr.f32.mxu0 0.0
      %3789 = vmatmul.mubr.f32.gmra.mrb[0].mxu0 %v3665
      %v3790 = vpop.f32.mrb[0].mxu0
      %v3791 = vadd.f32 %v3644, %v3790
      %v3792 = vpop.f32.mrb[0].mxu0
      %3793 = vmatprep.mubr.f32.mxu0 0.0
      %3794 = vmatmul.mubr.f32.gmra.mrb[0].mxu0 %v3668
      %v3795 = vpop.f32.mrb[0].mxu0
      %v3796 = vadd.f32 %v3644, %v3795
      %v3797 = vpop.f32.mrb[0].mxu0
      %3798 = vmatprep.mubr.f32.mxu0 0.0
      %3799 = vmatmul.mubr.f32.gmra.mrb[0].mxu0 %v3671
      %v3800 = vpop.f32.mrb[0].mxu0
      %v3801 = vadd.f32 %v3644, %v3800
      %v3802 = vpop.f32.mrb[0].mxu0
      %3803 = vmatprep.mubr.f32.mxu0 0.0
      %3804 = vmatmul.mubr.f32.gmra.mrb[0].mxu0 %v3674
      %v3805 = vpop.f32.mrb[0].mxu0
      %v3806 = vadd.f32 %v3644, %v3805
      %v3807 = vpop.f32.mrb[0].mxu0
      %3808 = vmatprep.mubr.f32.mxu0 0.0
      %3809 = vmatmul.mubr.f32.gmra.mrb[0].mxu0 %v3677
      %v3810 = vpop.f32.mrb[0].mxu0
      %v3811 = vadd.f32 %v3644, %v3810
      %v3812 = vpop.f32.mrb[0].mxu0
      %3813 = vmatprep.mubr.f32.mxu0 0.0
      %3814 = vmatmul.mubr.f32.gmra.mrb[0].mxu0 %v3680
      %v3815 = vpop.f32.mrb[0].mxu0
      %v3816 = vadd.f32 %v3644, %v3815
      %v3817 = vpop.f32.mrb[0].mxu0
      %3818 = vmatprep.mubr.f32.mxu0 0.0
      %3819 = vmatmul.mubr.f32.gmra.mrb[0].mxu0 %v3683
      %v3820 = vpop.f32.mrb[0].mxu0
      %v3821 = vadd.f32 %v3644, %v3820
      %v3822 = vpop.f32.mrb[0].mxu0
      %3823 = vmatprep.mubr.f32.mxu0 0.0
      %3824 = vmatmul.mubr.f32.gmra.mrb[0].mxu0 %v3686
      %v3825 = vpop.f32.mrb[0].mxu0
      %v3826 = vadd.f32 %v3644, %v3825
      %v3827 = vpop.f32.mrb[0].mxu0
      %3828 = vmatprep.mubr.f32.mxu0 0.0
      %3829 = vmatmul.mubr.f32.gmra.mrb[0].mxu0 %v3689
      %v3830 = vpop.f32.mrb[0].mxu0
      %v3831 = vadd.f32 %v3644, %v3830
      %v3832 = vpop.f32.mrb[0].mxu0
      %3833 = vmatprep.mubr.f32.mxu0 0.0
      %3834 = vmatmul.mubr.f32.gmra.mrb[0].mxu0 %v3692
      %v3835 = vpop.f32.mrb[0].mxu0
      %v3836 = vadd.f32 %v3644, %v3835
      %v3837 = vpop.f32.mrb[0].mxu0
      %3838 = vdwg.mxu0
      %v3839 = vmul.f32 %v3761, 0.5
      %v3840 = vmul.f32 %v3766, 0.5
      %v3841 = vmul.f32 %v3771, 0.5
      %v3842 = vmul.f32 %v3776, 0.5
      %v3843 = vmul.f32 %v3781, 0.5
      %v3844 = vmul.f32 %v3786, 0.5
      %v3845 = vmul.f32 %v3791, 0.5
      %v3846 = vmul.f32 %v3796, 0.5
      %v3847 = vmul.f32 %v3801, 0.5
      %v3848 = vmul.f32 %v3806, 0.5
      %v3849 = vmul.f32 %v3811, 0.5
      %v3850 = vmul.f32 %v3816, 0.5
      %v3851 = vmul.f32 %v3821, 0.5
      %v3852 = vmul.f32 %v3826, 0.5
      %v3853 = vmul.f32 %v3831, 0.5
      %v3854 = vmul.f32 %v3836, 0.5
      %v3855 = vmul.f32 %v3761, 0.70710677
      %v3856 = vmul.f32 %v3766, 0.70710677
      %v3857 = vmul.f32 %v3771, 0.70710677
      %v3858 = vmul.f32 %v3776, 0.70710677
      %v3859 = vmul.f32 %v3781, 0.70710677
      %v3860 = vmul.f32 %v3786, 0.70710677
      %v3861 = vmul.f32 %v3791, 0.70710677
      %v3862 = vmul.f32 %v3796, 0.70710677
      %v3863 = vmul.f32 %v3801, 0.70710677
      %v3864 = vmul.f32 %v3806, 0.70710677
      %v3865 = vmul.f32 %v3811, 0.70710677
      %v3866 = vmul.f32 %v3816, 0.70710677
      %v3867 = vmul.f32 %v3821, 0.70710677
      %v3868 = vmul.f32 %v3826, 0.70710677
      %v3869 = vmul.f32 %v3831, 0.70710677
      %v3870 = vmul.f32 %v3836, 0.70710677
      %vm3871 = vcmp.ge.f32.partialorder %v3855, 0.0
      %vm3872 = vcmp.ge.f32.partialorder %v3856, 0.0
      %vm3873 = vcmp.ge.f32.partialorder %v3857, 0.0
      %vm3874 = vcmp.ge.f32.partialorder %v3858, 0.0
      %vm3875 = vcmp.ge.f32.partialorder %v3859, 0.0
      %vm3876 = vcmp.ge.f32.partialorder %v3860, 0.0
      %vm3877 = vcmp.ge.f32.partialorder %v3861, 0.0
      %vm3878 = vcmp.ge.f32.partialorder %v3862, 0.0
      %vm3879 = vcmp.ge.f32.partialorder %v3863, 0.0
      %vm3880 = vcmp.ge.f32.partialorder %v3864, 0.0
      %vm3881 = vcmp.ge.f32.partialorder %v3865, 0.0
      %vm3882 = vcmp.ge.f32.partialorder %v3866, 0.0
      %vm3883 = vcmp.ge.f32.partialorder %v3867, 0.0
      %vm3884 = vcmp.ge.f32.partialorder %v3868, 0.0
      %vm3885 = vcmp.ge.f32.partialorder %v3869, 0.0
      %vm3886 = vcmp.ge.f32.partialorder %v3870, 0.0
      %v3887 = vsel %vm3871, 1.0, -1.0
      %v3888 = vsel %vm3872, 1.0, -1.0
      %v3889 = vsel %vm3873, 1.0, -1.0
      %v3890 = vsel %vm3874, 1.0, -1.0
      %v3891 = vsel %vm3875, 1.0, -1.0
      %v3892 = vsel %vm3876, 1.0, -1.0
      %v3893 = vsel %vm3877, 1.0, -1.0
      %v3894 = vsel %vm3878, 1.0, -1.0
      %v3895 = vsel %vm3879, 1.0, -1.0
      %v3896 = vsel %vm3880, 1.0, -1.0
      %v3897 = vsel %vm3881, 1.0, -1.0
      %v3898 = vsel %vm3882, 1.0, -1.0
      %v3899 = vsel %vm3883, 1.0, -1.0
      %v3900 = vsel %vm3884, 1.0, -1.0
      %v3901 = vsel %vm3885, 1.0, -1.0
      %v3902 = vsel %vm3886, 1.0, -1.0
      %v3903 = vand.u32 2147483647, %v3855
      %v3904 = vand.u32 2147483647, %v3856
      %v3905 = vand.u32 2147483647, %v3857
      %v3906 = vand.u32 2147483647, %v3858
      %v3907 = vand.u32 2147483647, %v3859
      %v3908 = vand.u32 2147483647, %v3860
      %v3909 = vand.u32 2147483647, %v3861
      %v3910 = vand.u32 2147483647, %v3862
      %v3911 = vand.u32 2147483647, %v3863
      %v3912 = vand.u32 2147483647, %v3864
      %v3913 = vand.u32 2147483647, %v3865
      %v3914 = vand.u32 2147483647, %v3866
      %v3915 = vand.u32 2147483647, %v3867
      %v3916 = vand.u32 2147483647, %v3868
      %v3917 = vand.u32 2147483647, %v3869
      %v3918 = vand.u32 2147483647, %v3870
      %v3919 = vmul.f32 %v3903, 0.3275911
      %v3920 = vmul.f32 %v3904, 0.3275911
      %v3921 = vmul.f32 %v3905, 0.3275911
      %v3922 = vmul.f32 %v3906, 0.3275911
      %v3923 = vmul.f32 %v3907, 0.3275911
      %v3924 = vmul.f32 %v3908, 0.3275911
      %v3925 = vmul.f32 %v3909, 0.3275911
      %v3926 = vmul.f32 %v3910, 0.3275911
      %v3927 = vmul.f32 %v3911, 0.3275911
      %v3928 = vmul.f32 %v3912, 0.3275911
      %v3929 = vmul.f32 %v3913, 0.3275911
      %v3930 = vmul.f32 %v3914, 0.3275911
      %v3931 = vmul.f32 %v3915, 0.3275911
      %v3932 = vmul.f32 %v3916, 0.3275911
      %v3933 = vmul.f32 %v3917, 0.3275911
      %v3934 = vmul.f32 %v3918, 0.3275911
      %v3935 = vadd.f32 %v3919, 1.0
      %v3936 = vadd.f32 %v3920, 1.0
      %v3937 = vadd.f32 %v3921, 1.0
      %v3938 = vadd.f32 %v3922, 1.0
      %v3939 = vadd.f32 %v3923, 1.0
      %v3940 = vadd.f32 %v3924, 1.0
      %v3941 = vadd.f32 %v3925, 1.0
      %v3942 = vadd.f32 %v3926, 1.0
      %v3943 = vadd.f32 %v3927, 1.0
      %v3944 = vadd.f32 %v3928, 1.0
      %v3945 = vadd.f32 %v3929, 1.0
      %v3946 = vadd.f32 %v3930, 1.0
      %v3947 = vadd.f32 %v3931, 1.0
      %v3948 = vadd.f32 %v3932, 1.0
      %v3949 = vadd.f32 %v3933, 1.0
      %v3950 = vadd.f32 %v3934, 1.0
      %v3951 = vrcp.pop %v3935
      %v3952 = vmul.f32 1.0, %v3951
      %v3953 = vrcp.pop %v3936
      %v3954 = vmul.f32 1.0, %v3953
      %v3955 = vrcp.pop %v3937
      %v3956 = vmul.f32 1.0, %v3955
      %v3957 = vrcp.pop %v3938
      %v3958 = vmul.f32 1.0, %v3957
      %v3959 = vrcp.pop %v3939
      %v3960 = vmul.f32 1.0, %v3959
      %v3961 = vrcp.pop %v3940
      %v3962 = vmul.f32 1.0, %v3961
      %v3963 = vrcp.pop %v3941
      %v3964 = vmul.f32 1.0, %v3963
      %v3965 = vrcp.pop %v3942
      %v3966 = vmul.f32 1.0, %v3965
      %v3967 = vrcp.pop %v3943
      %v3968 = vmul.f32 1.0, %v3967
      %v3969 = vrcp.pop %v3944
      %v3970 = vmul.f32 1.0, %v3969
      %v3971 = vrcp.pop %v3945
      %v3972 = vmul.f32 1.0, %v3971
      %v3973 = vrcp.pop %v3946
      %v3974 = vmul.f32 1.0, %v3973
      %v3975 = vrcp.pop %v3947
      %v3976 = vmul.f32 1.0, %v3975
      %v3977 = vrcp.pop %v3948
      %v3978 = vmul.f32 1.0, %v3977
      %v3979 = vrcp.pop %v3949
      %v3980 = vmul.f32 1.0, %v3979
      %v3981 = vrcp.pop %v3950
      %v3982 = vmul.f32 1.0, %v3981
      %v3983 = vmul.f32 %v3952, 1.0614054
      %v3984 = vmul.f32 %v3954, 1.0614054
      %v3985 = vmul.f32 %v3956, 1.0614054
      %v3986 = vmul.f32 %v3958, 1.0614054
      %v3987 = vmul.f32 %v3960, 1.0614054
      %v3988 = vmul.f32 %v3962, 1.0614054
      %v3989 = vmul.f32 %v3964, 1.0614054
      %v3990 = vmul.f32 %v3966, 1.0614054
      %v3991 = vmul.f32 %v3968, 1.0614054
      %v3992 = vmul.f32 %v3970, 1.0614054
      %v3993 = vmul.f32 %v3972, 1.0614054
      %v3994 = vmul.f32 %v3974, 1.0614054
      %v3995 = vmul.f32 %v3976, 1.0614054
      %v3996 = vmul.f32 %v3978, 1.0614054
      %v3997 = vmul.f32 %v3980, 1.0614054
      %v3998 = vmul.f32 %v3982, 1.0614054
      %v3999 = vadd.f32 %v3983, -1.4531521
      %v4000 = vadd.f32 %v3984, -1.4531521
      %v4001 = vadd.f32 %v3985, -1.4531521
      %v4002 = vadd.f32 %v3986, -1.4531521
      %v4003 = vadd.f32 %v3987, -1.4531521
      %v4004 = vadd.f32 %v3988, -1.4531521
      %v4005 = vadd.f32 %v3989, -1.4531521
      %v4006 = vadd.f32 %v3990, -1.4531521
      %v4007 = vadd.f32 %v3991, -1.4531521
      %v4008 = vadd.f32 %v3992, -1.4531521
      %v4009 = vadd.f32 %v3993, -1.4531521
      %v4010 = vadd.f32 %v3994, -1.4531521
      %v4011 = vadd.f32 %v3995, -1.4531521
      %v4012 = vadd.f32 %v3996, -1.4531521
      %v4013 = vadd.f32 %v3997, -1.4531521
      %v4014 = vadd.f32 %v3998, -1.4531521
      %v4015 = vmul.f32 %v3999, %v3952
      %v4016 = vmul.f32 %v4000, %v3954
      %v4017 = vmul.f32 %v4001, %v3956
      %v4018 = vmul.f32 %v4002, %v3958
      %v4019 = vmul.f32 %v4003, %v3960
      %v4020 = vmul.f32 %v4004, %v3962
      %v4021 = vmul.f32 %v4005, %v3964
      %v4022 = vmul.f32 %v4006, %v3966
      %v4023 = vmul.f32 %v4007, %v3968
      %v4024 = vmul.f32 %v4008, %v3970
      %v4025 = vmul.f32 %v4009, %v3972
      %v4026 = vmul.f32 %v4010, %v3974
      %v4027 = vmul.f32 %v4011, %v3976
      %v4028 = vmul.f32 %v4012, %v3978
      %v4029 = vmul.f32 %v4013, %v3980
      %v4030 = vmul.f32 %v4014, %v3982
      %v4031 = vadd.f32 %v4015, 1.4214138
      %v4032 = vadd.f32 %v4016, 1.4214138
      %v4033 = vadd.f32 %v4017, 1.4214138
      %v4034 = vadd.f32 %v4018, 1.4214138
      %v4035 = vadd.f32 %v4019, 1.4214138
      %v4036 = vadd.f32 %v4020, 1.4214138
      %v4037 = vadd.f32 %v4021, 1.4214138
      %v4038 = vadd.f32 %v4022, 1.4214138
      %v4039 = vadd.f32 %v4023, 1.4214138
      %v4040 = vadd.f32 %v4024, 1.4214138
      %v4041 = vadd.f32 %v4025, 1.4214138
      %v4042 = vadd.f32 %v4026, 1.4214138
      %v4043 = vadd.f32 %v4027, 1.4214138
      %v4044 = vadd.f32 %v4028, 1.4214138
      %v4045 = vadd.f32 %v4029, 1.4214138
      %v4046 = vadd.f32 %v4030, 1.4214138
      %v4047 = vmul.f32 %v4031, %v3952
      %v4048 = vmul.f32 %v4032, %v3954
      %v4049 = vmul.f32 %v4033, %v3956
      %v4050 = vmul.f32 %v4034, %v3958
      %v4051 = vmul.f32 %v4035, %v3960
      %v4052 = vmul.f32 %v4036, %v3962
      %v4053 = vmul.f32 %v4037, %v3964
      %v4054 = vmul.f32 %v4038, %v3966
      %v4055 = vmul.f32 %v4039, %v3968
      %v4056 = vmul.f32 %v4040, %v3970
      %v4057 = vmul.f32 %v4041, %v3972
      %v4058 = vmul.f32 %v4042, %v3974
      %v4059 = vmul.f32 %v4043, %v3976
      %v4060 = vmul.f32 %v4044, %v3978
      %v4061 = vmul.f32 %v4045, %v3980
      %v4062 = vmul.f32 %v4046, %v3982
      %v4063 = vadd.f32 %v4047, -0.28449672
      %v4064 = vadd.f32 %v4048, -0.28449672
      %v4065 = vadd.f32 %v4049, -0.28449672
      %v4066 = vadd.f32 %v4050, -0.28449672
      %v4067 = vadd.f32 %v4051, -0.28449672
      %v4068 = vadd.f32 %v4052, -0.28449672
      %v4069 = vadd.f32 %v4053, -0.28449672
      %v4070 = vadd.f32 %v4054, -0.28449672
      %v4071 = vadd.f32 %v4055, -0.28449672
      %v4072 = vadd.f32 %v4056, -0.28449672
      %v4073 = vadd.f32 %v4057, -0.28449672
      %v4074 = vadd.f32 %v4058, -0.28449672
      %v4075 = vadd.f32 %v4059, -0.28449672
      %v4076 = vadd.f32 %v4060, -0.28449672
      %v4077 = vadd.f32 %v4061, -0.28449672
      %v4078 = vadd.f32 %v4062, -0.28449672
      %v4079 = vmul.f32 %v4063, %v3952
      %v4080 = vmul.f32 %v4064, %v3954
      %v4081 = vmul.f32 %v4065, %v3956
      %v4082 = vmul.f32 %v4066, %v3958
      %v4083 = vmul.f32 %v4067, %v3960
      %v4084 = vmul.f32 %v4068, %v3962
      %v4085 = vmul.f32 %v4069, %v3964
      %v4086 = vmul.f32 %v4070, %v3966
      %v4087 = vmul.f32 %v4071, %v3968
      %v4088 = vmul.f32 %v4072, %v3970
      %v4089 = vmul.f32 %v4073, %v3972
      %v4090 = vmul.f32 %v4074, %v3974
      %v4091 = vmul.f32 %v4075, %v3976
      %v4092 = vmul.f32 %v4076, %v3978
      %v4093 = vmul.f32 %v4077, %v3980
      %v4094 = vmul.f32 %v4078, %v3982
      %v4095 = vadd.f32 %v4079, 0.2548296
      %v4096 = vadd.f32 %v4080, 0.2548296
      %v4097 = vadd.f32 %v4081, 0.2548296
      %v4098 = vadd.f32 %v4082, 0.2548296
      %v4099 = vadd.f32 %v4083, 0.2548296
      %v4100 = vadd.f32 %v4084, 0.2548296
      %v4101 = vadd.f32 %v4085, 0.2548296
      %v4102 = vadd.f32 %v4086, 0.2548296
      %v4103 = vadd.f32 %v4087, 0.2548296
      %v4104 = vadd.f32 %v4088, 0.2548296
      %v4105 = vadd.f32 %v4089, 0.2548296
      %v4106 = vadd.f32 %v4090, 0.2548296
      %v4107 = vadd.f32 %v4091, 0.2548296
      %v4108 = vadd.f32 %v4092, 0.2548296
      %v4109 = vadd.f32 %v4093, 0.2548296
      %v4110 = vadd.f32 %v4094, 0.2548296
      %v4111 = vmul.f32 %v4095, %v3952
      %v4112 = vmul.f32 %v4096, %v3954
      %v4113 = vmul.f32 %v4097, %v3956
      %v4114 = vmul.f32 %v4098, %v3958
      %v4115 = vmul.f32 %v4099, %v3960
      %v4116 = vmul.f32 %v4100, %v3962
      %v4117 = vmul.f32 %v4101, %v3964
      %v4118 = vmul.f32 %v4102, %v3966
      %v4119 = vmul.f32 %v4103, %v3968
      %v4120 = vmul.f32 %v4104, %v3970
      %v4121 = vmul.f32 %v4105, %v3972
      %v4122 = vmul.f32 %v4106, %v3974
      %v4123 = vmul.f32 %v4107, %v3976
      %v4124 = vmul.f32 %v4108, %v3978
      %v4125 = vmul.f32 %v4109, %v3980
      %v4126 = vmul.f32 %v4110, %v3982
      %v4127 = vsub.f32 0.0, %v3903
      %v4128 = vsub.f32 0.0, %v3904
      %v4129 = vsub.f32 0.0, %v3905
      %v4130 = vsub.f32 0.0, %v3906
      %v4131 = vsub.f32 0.0, %v3907
      %v4132 = vsub.f32 0.0, %v3908
      %v4133 = vsub.f32 0.0, %v3909
      %v4134 = vsub.f32 0.0, %v3910
      %v4135 = vsub.f32 0.0, %v3911
      %v4136 = vsub.f32 0.0, %v3912
      %v4137 = vsub.f32 0.0, %v3913
      %v4138 = vsub.f32 0.0, %v3914
      %v4139 = vsub.f32 0.0, %v3915
      %v4140 = vsub.f32 0.0, %v3916
      %v4141 = vsub.f32 0.0, %v3917
      %v4142 = vsub.f32 0.0, %v3918
      %v4143 = vmul.f32 %v4127, %v3903
      %v4144 = vmul.f32 %v4128, %v3904
      %v4145 = vmul.f32 %v4129, %v3905
      %v4146 = vmul.f32 %v4130, %v3906
      %v4147 = vmul.f32 %v4131, %v3907
      %v4148 = vmul.f32 %v4132, %v3908
      %v4149 = vmul.f32 %v4133, %v3909
      %v4150 = vmul.f32 %v4134, %v3910
      %v4151 = vmul.f32 %v4135, %v3911
      %v4152 = vmul.f32 %v4136, %v3912
      %v4153 = vmul.f32 %v4137, %v3913
      %v4154 = vmul.f32 %v4138, %v3914
      %v4155 = vmul.f32 %v4139, %v3915
      %v4156 = vmul.f32 %v4140, %v3916
      %v4157 = vmul.f32 %v4141, %v3917
      %v4158 = vmul.f32 %v4142, %v3918
      %v4159 = vmul.f32 %v4143, 1.442695
      %v4160 = vpow.pop %v4159
      %v4161 = vmul.f32 %v4144, 1.442695
      %v4162 = vpow.pop %v4161
      %v4163 = vmul.f32 %v4145, 1.442695
      %v4164 = vpow.pop %v4163
      %v4165 = vmul.f32 %v4146, 1.442695
      %v4166 = vpow.pop %v4165
      %v4167 = vmul.f32 %v4147, 1.442695
      %v4168 = vpow.pop %v4167
      %v4169 = vmul.f32 %v4148, 1.442695
      %v4170 = vpow.pop %v4169
      %v4171 = vmul.f32 %v4149, 1.442695
      %v4172 = vpow.pop %v4171
      %v4173 = vmul.f32 %v4150, 1.442695
      %v4174 = vpow.pop %v4173
      %v4175 = vmul.f32 %v4151, 1.442695
      %v4176 = vpow.pop %v4175
      %v4177 = vmul.f32 %v4152, 1.442695
      %v4178 = vpow.pop %v4177
      %v4179 = vmul.f32 %v4153, 1.442695
      %v4180 = vpow.pop %v4179
      %v4181 = vmul.f32 %v4154, 1.442695
      %v4182 = vpow.pop %v4181
      %v4183 = vmul.f32 %v4155, 1.442695
      %v4184 = vpow.pop %v4183
      %v4185 = vmul.f32 %v4156, 1.442695
      %v4186 = vpow.pop %v4185
      %v4187 = vmul.f32 %v4157, 1.442695
      %v4188 = vpow.pop %v4187
      %v4189 = vmul.f32 %v4158, 1.442695
      %v4190 = vpow.pop %v4189
      %v4191 = vmul.f32 %v4111, %v4160
      %v4192 = vmul.f32 %v4112, %v4162
      %v4193 = vmul.f32 %v4113, %v4164
      %v4194 = vmul.f32 %v4114, %v4166
      %v4195 = vmul.f32 %v4115, %v4168
      %v4196 = vmul.f32 %v4116, %v4170
      %v4197 = vmul.f32 %v4117, %v4172
      %v4198 = vmul.f32 %v4118, %v4174
      %v4199 = vmul.f32 %v4119, %v4176
      %v4200 = vmul.f32 %v4120, %v4178
      %v4201 = vmul.f32 %v4121, %v4180
      %v4202 = vmul.f32 %v4122, %v4182
      %v4203 = vmul.f32 %v4123, %v4184
      %v4204 = vmul.f32 %v4124, %v4186
      %v4205 = vmul.f32 %v4125, %v4188
      %v4206 = vmul.f32 %v4126, %v4190
      %v4207 = vsub.f32 1.0, %v4191
      %v4208 = vsub.f32 1.0, %v4192
      %v4209 = vsub.f32 1.0, %v4193
      %v4210 = vsub.f32 1.0, %v4194
      %v4211 = vsub.f32 1.0, %v4195
      %v4212 = vsub.f32 1.0, %v4196
      %v4213 = vsub.f32 1.0, %v4197
      %v4214 = vsub.f32 1.0, %v4198
      %v4215 = vsub.f32 1.0, %v4199
      %v4216 = vsub.f32 1.0, %v4200
      %v4217 = vsub.f32 1.0, %v4201
      %v4218 = vsub.f32 1.0, %v4202
      %v4219 = vsub.f32 1.0, %v4203
      %v4220 = vsub.f32 1.0, %v4204
      %v4221 = vsub.f32 1.0, %v4205
      %v4222 = vsub.f32 1.0, %v4206
      %v4223 = vmul.f32 %v3887, %v4207
      %v4224 = vmul.f32 %v3888, %v4208
      %v4225 = vmul.f32 %v3889, %v4209
      %v4226 = vmul.f32 %v3890, %v4210
      %v4227 = vmul.f32 %v3891, %v4211
      %v4228 = vmul.f32 %v3892, %v4212
      %v4229 = vmul.f32 %v3893, %v4213
      %v4230 = vmul.f32 %v3894, %v4214
      %v4231 = vmul.f32 %v3895, %v4215
      %v4232 = vmul.f32 %v3896, %v4216
      %v4233 = vmul.f32 %v3897, %v4217
      %v4234 = vmul.f32 %v3898, %v4218
      %v4235 = vmul.f32 %v3899, %v4219
      %v4236 = vmul.f32 %v3900, %v4220
      %v4237 = vmul.f32 %v3901, %v4221
      %v4238 = vmul.f32 %v3902, %v4222
      %v4239 = vadd.f32 %v4223, 1.0
      %v4240 = vadd.f32 %v4224, 1.0
      %v4241 = vadd.f32 %v4225, 1.0
      %v4242 = vadd.f32 %v4226, 1.0
      %v4243 = vadd.f32 %v4227, 1.0
      %v4244 = vadd.f32 %v4228, 1.0
      %v4245 = vadd.f32 %v4229, 1.0
      %v4246 = vadd.f32 %v4230, 1.0
      %v4247 = vadd.f32 %v4231, 1.0
      %v4248 = vadd.f32 %v4232, 1.0
      %v4249 = vadd.f32 %v4233, 1.0
      %v4250 = vadd.f32 %v4234, 1.0
      %v4251 = vadd.f32 %v4235, 1.0
      %v4252 = vadd.f32 %v4236, 1.0
      %v4253 = vadd.f32 %v4237, 1.0
      %v4254 = vadd.f32 %v4238, 1.0
      %v4255 = vmul.f32 %v3839, %v4239
      %v4256 = vmul.f32 %v3840, %v4240
      %v4257 = vmul.f32 %v3841, %v4241
      %v4258 = vmul.f32 %v3842, %v4242
      %v4259 = vmul.f32 %v3843, %v4243
      %v4260 = vmul.f32 %v3844, %v4244
      %v4261 = vmul.f32 %v3845, %v4245
      %v4262 = vmul.f32 %v3846, %v4246
      %v4263 = vmul.f32 %v3847, %v4247
      %v4264 = vmul.f32 %v3848, %v4248
      %v4265 = vmul.f32 %v3849, %v4249
      %v4266 = vmul.f32 %v3850, %v4250
      %v4267 = vmul.f32 %v3851, %v4251
      %v4268 = vmul.f32 %v3852, %v4252
      %v4269 = vmul.f32 %v3853, %v4253
      %v4270 = vmul.f32 %v3854, %v4254
      %v4271 = vld [vmem:[%s16] sm:$0xff]
      %v4272 = vld [vmem:[%s16 + $0x8] sm:$0xff]
      %v4273 = vld [vmem:[%s16 + $0x10] sm:$0xff]
      %v4274 = vld [vmem:[%s16 + $0x18] sm:$0xff]
      %v4275 = vld [vmem:[%s16 + $0x20] sm:$0xff]
      %v4276 = vld [vmem:[%s16 + $0x28] sm:$0xff]
      %v4277 = vld [vmem:[%s16 + $0x30] sm:$0xff]
      %v4278 = vld [vmem:[%s16 + $0x38] sm:$0xff]
      %v4279 = vld [vmem:[%s17] sm:$0x1]
      %v4281 = vlaneseq
      %v4282 = vshrl.u32 %v4281, 7
      %v4283 = vsub.s32 0, %v4282
      %v4284 = vrot.slane %v4279, %v4283
      %vm4286 = vcmask 523264
      %v4288 = vsel %vm4286, %v4255, 0
      %v4291 = vsel %vm4286, %v4256, 0
      %v4294 = vsel %vm4286, %v4257, 0
      %v4297 = vsel %vm4286, %v4258, 0
      %v4300 = vsel %vm4286, %v4259, 0
      %v4303 = vsel %vm4286, %v4260, 0
      %v4306 = vsel %vm4286, %v4261, 0
      %v4309 = vsel %vm4286, %v4262, 0
      %v4312 = vsel %vm4286, %v4263, 0
      %v4315 = vsel %vm4286, %v4264, 0
      %v4318 = vsel %vm4286, %v4265, 0
      %v4321 = vsel %vm4286, %v4266, 0
      %v4324 = vsel %vm4286, %v4267, 0
      %v4327 = vsel %vm4286, %v4268, 0
      %v4330 = vsel %vm4286, %v4269, 0
      %v4333 = vsel %vm4286, %v4270, 0
      %4335 = vmatprep.subr.mxu0 0.0
      %4336 = vmatpush1.msra.mxu0 %v4271
      %4337 = vmatprep.subr.mxu0 0.0
      %4338 = vmatpush1.msra.mxu0 %v4272
      %4339 = vmatprep.subr.mxu0 0.0
      %4340 = vmatpush1.msra.mxu0 %v4273
      %4341 = vmatprep.subr.mxu0 0.0
      %4342 = vmatpush1.msra.mxu0 %v4274
      %4343 = vmatprep.subr.mxu0 0.0
      %4344 = vmatpush1.msra.mxu0 %v4275
      %4345 = vmatprep.subr.mxu0 0.0
      %4346 = vmatpush1.msra.mxu0 %v4276
      %4347 = vmatprep.subr.mxu0 0.0
      %4348 = vmatpush1.msra.mxu0 %v4277
      %4349 = vmatprep.subr.mxu0 0.0
      %4350 = vmatpush1.msra.mxu0 %v4278
      %4351 = vmatprep.subr.mxu0 0.0
      %4352 = vmatpush1.msra.mxu0 0.0
      %4353 = vmatprep.subr.mxu0 0.0
      %4354 = vmatpush1.msra.mxu0 0.0
      %4355 = vmatprep.subr.mxu0 0.0
      %4356 = vmatpush1.msra.mxu0 0.0
      %4357 = vmatprep.subr.mxu0 0.0
      %4358 = vmatpush1.msra.mxu0 0.0
      %4359 = vmatprep.subr.mxu0 0.0
      %4360 = vmatpush1.msra.mxu0 0.0
      %4361 = vmatprep.subr.mxu0 0.0
      %4362 = vmatpush1.msra.mxu0 0.0
      %4363 = vmatprep.subr.mxu0 0.0
      %4364 = vmatpush1.msra.mxu0 0.0
      %4365 = vmatprep.subr.mxu0 0.0
      %4366 = vmatpush1.msra.mxu0 0.0
      %4367 = vmatprep.subr.mxu0 0.0
      %4368 = vmatpush1.msra.mxu0 0.0
      %4369 = vmatprep.subr.mxu0 0.0
      %4370 = vmatpush1.msra.mxu0 0.0
      %4371 = vmatprep.subr.mxu0 0.0
      %4372 = vmatpush1.msra.mxu0 0.0
      %4373 = vmatprep.subr.mxu0 0.0
      %4374 = vmatpush1.msra.mxu0 0.0
      %4375 = vmatprep.subr.mxu0 0.0
      %4376 = vmatpush1.msra.mxu0 0.0
      %4377 = vmatprep.subr.mxu0 0.0
      %4378 = vmatpush1.msra.mxu0 0.0
      %4379 = vmatprep.subr.mxu0 0.0
      %4380 = vmatpush1.msra.mxu0 0.0
      %4381 = vmatprep.subr.mxu0 0.0
      %4382 = vmatpush1.msra.mxu0 0.0
      %4383 = vmatprep.subr.mxu0 0.0
      %4384 = vmatpush1.msra.mxu0 0.0
      %4385 = vmatprep.subr.mxu0 0.0
      %4386 = vmatpush1.msra.mxu0 0.0
      %4387 = vmatprep.subr.mxu0 0.0
      %4388 = vmatpush1.msra.mxu0 0.0
      %4389 = vmatprep.subr.mxu0 0.0
      %4390 = vmatpush1.msra.mxu0 0.0
      %4391 = vmatprep.subr.mxu0 0.0
      %4392 = vmatpush1.msra.mxu0 0.0
      %4393 = vmatprep.subr.mxu0 0.0
      %4394 = vmatpush1.msra.mxu0 0.0
      %4395 = vmatprep.subr.mxu0 0.0
      %4396 = vmatpush1.msra.mxu0 0.0
      %4397 = vmatprep.subr.mxu0 0.0
      %4398 = vmatpush1.msra.mxu0 0.0
      %4399 = vmatprep.mubr.f32.mxu0 0.0
      %4400 = vmatmul.mubr.f32.gmra.mrb[0].mxu0 %v4288
      %v4401 = vpop.f32.mrb[0].mxu0
      %v4402 = vadd.f32 %v4284, %v4401
      %v4403 = vpop.f32.mrb[0].mxu0
      %4404 = vmatprep.mubr.f32.mxu0 0.0
      %4405 = vmatmul.mubr.f32.gmra.mrb[0].mxu0 %v4291
      %v4406 = vpop.f32.mrb[0].mxu0
      %v4407 = vadd.f32 %v4284, %v4406
      %v4408 = vpop.f32.mrb[0].mxu0
      %4409 = vmatprep.mubr.f32.mxu0 0.0
      %4410 = vmatmul.mubr.f32.gmra.mrb[0].mxu0 %v4294
      %v4411 = vpop.f32.mrb[0].mxu0
      %v4412 = vadd.f32 %v4284, %v4411
      %v4413 = vpop.f32.mrb[0].mxu0
      %4414 = vmatprep.mubr.f32.mxu0 0.0
      %4415 = vmatmul.mubr.f32.gmra.mrb[0].mxu0 %v4297
      %v4416 = vpop.f32.mrb[0].mxu0
      %v4417 = vadd.f32 %v4284, %v4416
      %v4418 = vpop.f32.mrb[0].mxu0
      %4419 = vmatprep.mubr.f32.mxu0 0.0
      %4420 = vmatmul.mubr.f32.gmra.mrb[0].mxu0 %v4300
      %v4421 = vpop.f32.mrb[0].mxu0
      %v4422 = vadd.f32 %v4284, %v4421
      %v4423 = vpop.f32.mrb[0].mxu0
      %4424 = vmatprep.mubr.f32.mxu0 0.0
      %4425 = vmatmul.mubr.f32.gmra.mrb[0].mxu0 %v4303
      %v4426 = vpop.f32.mrb[0].mxu0
      %v4427 = vadd.f32 %v4284, %v4426
      %v4428 = vpop.f32.mrb[0].mxu0
      %4429 = vmatprep.mubr.f32.mxu0 0.0
      %4430 = vmatmul.mubr.f32.gmra.mrb[0].mxu0 %v4306
      %v4431 = vpop.f32.mrb[0].mxu0
      %v4432 = vadd.f32 %v4284, %v4431
      %v4433 = vpop.f32.mrb[0].mxu0
      %4434 = vmatprep.mubr.f32.mxu0 0.0
      %4435 = vmatmul.mubr.f32.gmra.mrb[0].mxu0 %v4309
      %v4436 = vpop.f32.mrb[0].mxu0
      %v4437 = vadd.f32 %v4284, %v4436
      %v4438 = vpop.f32.mrb[0].mxu0
      %4439 = vmatprep.mubr.f32.mxu0 0.0
      %4440 = vmatmul.mubr.f32.gmra.mrb[0].mxu0 %v4312
      %v4441 = vpop.f32.mrb[0].mxu0
      %v4442 = vadd.f32 %v4284, %v4441
      %v4443 = vpop.f32.mrb[0].mxu0
      %4444 = vmatprep.mubr.f32.mxu0 0.0
      %4445 = vmatmul.mubr.f32.gmra.mrb[0].mxu0 %v4315
      %v4446 = vpop.f32.mrb[0].mxu0
      %v4447 = vadd.f32 %v4284, %v4446
      %v4448 = vpop.f32.mrb[0].mxu0
      %4449 = vmatprep.mubr.f32.mxu0 0.0
      %4450 = vmatmul.mubr.f32.gmra.mrb[0].mxu0 %v4318
      %v4451 = vpop.f32.mrb[0].mxu0
      %v4452 = vadd.f32 %v4284, %v4451
      %v4453 = vpop.f32.mrb[0].mxu0
      %4454 = vmatprep.mubr.f32.mxu0 0.0
      %4455 = vmatmul.mubr.f32.gmra.mrb[0].mxu0 %v4321
      %v4456 = vpop.f32.mrb[0].mxu0
      %v4457 = vadd.f32 %v4284, %v4456
      %v4458 = vpop.f32.mrb[0].mxu0
      %4459 = vmatprep.mubr.f32.mxu0 0.0
      %4460 = vmatmul.mubr.f32.gmra.mrb[0].mxu0 %v4324
      %v4461 = vpop.f32.mrb[0].mxu0
      %v4462 = vadd.f32 %v4284, %v4461
      %v4463 = vpop.f32.mrb[0].mxu0
      %4464 = vmatprep.mubr.f32.mxu0 0.0
      %4465 = vmatmul.mubr.f32.gmra.mrb[0].mxu0 %v4327
      %v4466 = vpop.f32.mrb[0].mxu0
      %v4467 = vadd.f32 %v4284, %v4466
      %v4468 = vpop.f32.mrb[0].mxu0
      %4469 = vmatprep.mubr.f32.mxu0 0.0
      %4470 = vmatmul.mubr.f32.gmra.mrb[0].mxu0 %v4330
      %v4471 = vpop.f32.mrb[0].mxu0
      %v4472 = vadd.f32 %v4284, %v4471
      %v4473 = vpop.f32.mrb[0].mxu0
      %4474 = vmatprep.mubr.f32.mxu0 0.0
      %4475 = vmatmul.mubr.f32.gmra.mrb[0].mxu0 %v4333
      %v4476 = vpop.f32.mrb[0].mxu0
      %v4477 = vadd.f32 %v4284, %v4476
      %v4478 = vpop.f32.mrb[0].mxu0
      %4479 = vdwg.mxu0
      %v4480 = vadd.f32 %v3619, %v4402
      %v4481 = vadd.f32 %v3620, %v4407
      %v4482 = vadd.f32 %v3621, %v4412
      %v4483 = vadd.f32 %v3622, %v4417
      %v4484 = vadd.f32 %v3623, %v4422
      %v4485 = vadd.f32 %v3624, %v4427
      %v4486 = vadd.f32 %v3625, %v4432
      %v4487 = vadd.f32 %v3626, %v4437
      %v4488 = vadd.f32 %v3627, %v4442
      %v4489 = vadd.f32 %v3628, %v4447
      %v4490 = vadd.f32 %v3629, %v4452
      %v4491 = vadd.f32 %v3630, %v4457
      %v4492 = vadd.f32 %v3631, %v4462
      %v4493 = vadd.f32 %v3632, %v4467
      %v4494 = vadd.f32 %v3633, %v4472
      %v4495 = vadd.f32 %v3634, %v4477
      %v4496 = vld [vmem:[%s18] sm:$0x1]
      %v4497 = vld [vmem:[%s19] sm:$0x1]
      %v4498 = vsel %vm1418, %v4480, 0.0
      %4499 = vadd.xlane.f32.xlu0 %v4498
      %v4500 = vpop.xlane.xlu0 %4499
      %v4501 = vsel %vm1418, %v4481, 0.0
      %4502 = vadd.xlane.f32.xlu0 %v4501
      %v4503 = vpop.xlane.xlu0 %4502
      %v4504 = vsel %vm1418, %v4482, 0.0
      %4505 = vadd.xlane.f32.xlu0 %v4504
      %v4506 = vpop.xlane.xlu0 %4505
      %v4507 = vsel %vm1418, %v4483, 0.0
      %4508 = vadd.xlane.f32.xlu0 %v4507
      %v4509 = vpop.xlane.xlu0 %4508
      %v4510 = vsel %vm1418, %v4484, 0.0
      %4511 = vadd.xlane.f32.xlu0 %v4510
      %v4512 = vpop.xlane.xlu0 %4511
      %v4513 = vsel %vm1418, %v4485, 0.0
      %4514 = vadd.xlane.f32.xlu0 %v4513
      %v4515 = vpop.xlane.xlu0 %4514
      %v4516 = vsel %vm1418, %v4486, 0.0
      %4517 = vadd.xlane.f32.xlu0 %v4516
      %v4518 = vpop.xlane.xlu0 %4517
      %v4519 = vsel %vm1418, %v4487, 0.0
      %4520 = vadd.xlane.f32.xlu0 %v4519
      %v4521 = vpop.xlane.xlu0 %4520
      %v4522 = vsel %vm1418, %v4488, 0.0
      %4523 = vadd.xlane.f32.xlu0 %v4522
      %v4524 = vpop.xlane.xlu0 %4523
      %v4525 = vsel %vm1418, %v4489, 0.0
      %4526 = vadd.xlane.f32.xlu0 %v4525
      %v4527 = vpop.xlane.xlu0 %4526
      %v4528 = vsel %vm1418, %v4490, 0.0
      %4529 = vadd.xlane.f32.xlu0 %v4528
      %v4530 = vpop.xlane.xlu0 %4529
      %v4531 = vsel %vm1418, %v4491, 0.0
      %4532 = vadd.xlane.f32.xlu0 %v4531
      %v4533 = vpop.xlane.xlu0 %4532
      %v4534 = vsel %vm1418, %v4492, 0.0
      %4535 = vadd.xlane.f32.xlu0 %v4534
      %v4536 = vpop.xlane.xlu0 %4535
      %v4537 = vsel %vm1418, %v4493, 0.0
      %4538 = vadd.xlane.f32.xlu0 %v4537
      %v4539 = vpop.xlane.xlu0 %4538
      %v4540 = vsel %vm1418, %v4494, 0.0
      %4541 = vadd.xlane.f32.xlu0 %v4540
      %v4542 = vpop.xlane.xlu0 %4541
      %v4543 = vsel %vm1418, %v4495, 0.0
      %4544 = vadd.xlane.f32.xlu0 %v4543
      %v4545 = vpop.xlane.xlu0 %4544
      %v4546 = vmul.f32 %v4500, %v1467
      %v4547 = vmul.f32 %v4503, %v1467
      %v4548 = vmul.f32 %v4506, %v1467
      %v4549 = vmul.f32 %v4509, %v1467
      %v4550 = vmul.f32 %v4512, %v1467
      %v4551 = vmul.f32 %v4515, %v1467
      %v4552 = vmul.f32 %v4518, %v1467
      %v4553 = vmul.f32 %v4521, %v1467
      %v4554 = vmul.f32 %v4524, %v1467
      %v4555 = vmul.f32 %v4527, %v1467
      %v4556 = vmul.f32 %v4530, %v1467
      %v4557 = vmul.f32 %v4533, %v1467
      %v4558 = vmul.f32 %v4536, %v1467
      %v4559 = vmul.f32 %v4539, %v1467
      %v4560 = vmul.f32 %v4542, %v1467
      %v4561 = vmul.f32 %v4545, %v1467
      %v4562 = vsub.f32 %v4480, %v4546
      %v4563 = vsub.f32 %v4481, %v4547
      %v4564 = vsub.f32 %v4482, %v4548
      %v4565 = vsub.f32 %v4483, %v4549
      %v4566 = vsub.f32 %v4484, %v4550
      %v4567 = vsub.f32 %v4485, %v4551
      %v4568 = vsub.f32 %v4486, %v4552
      %v4569 = vsub.f32 %v4487, %v4553
      %v4570 = vsub.f32 %v4488, %v4554
      %v4571 = vsub.f32 %v4489, %v4555
      %v4572 = vsub.f32 %v4490, %v4556
      %v4573 = vsub.f32 %v4491, %v4557
      %v4574 = vsub.f32 %v4492, %v4558
      %v4575 = vsub.f32 %v4493, %v4559
      %v4576 = vsub.f32 %v4494, %v4560
      %v4577 = vsub.f32 %v4495, %v4561
      %v4578 = vmul.f32 %v4562, %v4562
      %v4579 = vmul.f32 %v4563, %v4563
      %v4580 = vmul.f32 %v4564, %v4564
      %v4581 = vmul.f32 %v4565, %v4565
      %v4582 = vmul.f32 %v4566, %v4566
      %v4583 = vmul.f32 %v4567, %v4567
      %v4584 = vmul.f32 %v4568, %v4568
      %v4585 = vmul.f32 %v4569, %v4569
      %v4586 = vmul.f32 %v4570, %v4570
      %v4587 = vmul.f32 %v4571, %v4571
      %v4588 = vmul.f32 %v4572, %v4572
      %v4589 = vmul.f32 %v4573, %v4573
      %v4590 = vmul.f32 %v4574, %v4574
      %v4591 = vmul.f32 %v4575, %v4575
      %v4592 = vmul.f32 %v4576, %v4576
      %v4593 = vmul.f32 %v4577, %v4577
      %v4594 = vsel %vm1418, %v4578, 0.0
      %4595 = vadd.xlane.f32.xlu0 %v4594
      %v4596 = vpop.xlane.xlu0 %4595
      %v4597 = vsel %vm1418, %v4579, 0.0
      %4598 = vadd.xlane.f32.xlu0 %v4597
      %v4599 = vpop.xlane.xlu0 %4598
      %v4600 = vsel %vm1418, %v4580, 0.0
      %4601 = vadd.xlane.f32.xlu0 %v4600
      %v4602 = vpop.xlane.xlu0 %4601
      %v4603 = vsel %vm1418, %v4581, 0.0
      %4604 = vadd.xlane.f32.xlu0 %v4603
      %v4605 = vpop.xlane.xlu0 %4604
      %v4606 = vsel %vm1418, %v4582, 0.0
      %4607 = vadd.xlane.f32.xlu0 %v4606
      %v4608 = vpop.xlane.xlu0 %4607
      %v4609 = vsel %vm1418, %v4583, 0.0
      %4610 = vadd.xlane.f32.xlu0 %v4609
      %v4611 = vpop.xlane.xlu0 %4610
      %v4612 = vsel %vm1418, %v4584, 0.0
      %4613 = vadd.xlane.f32.xlu0 %v4612
      %v4614 = vpop.xlane.xlu0 %4613
      %v4615 = vsel %vm1418, %v4585, 0.0
      %4616 = vadd.xlane.f32.xlu0 %v4615
      %v4617 = vpop.xlane.xlu0 %4616
      %v4618 = vsel %vm1418, %v4586, 0.0
      %4619 = vadd.xlane.f32.xlu0 %v4618
      %v4620 = vpop.xlane.xlu0 %4619
      %v4621 = vsel %vm1418, %v4587, 0.0
      %4622 = vadd.xlane.f32.xlu0 %v4621
      %v4623 = vpop.xlane.xlu0 %4622
      %v4624 = vsel %vm1418, %v4588, 0.0
      %4625 = vadd.xlane.f32.xlu0 %v4624
      %v4626 = vpop.xlane.xlu0 %4625
      %v4627 = vsel %vm1418, %v4589, 0.0
      %4628 = vadd.xlane.f32.xlu0 %v4627
      %v4629 = vpop.xlane.xlu0 %4628
      %v4630 = vsel %vm1418, %v4590, 0.0
      %4631 = vadd.xlane.f32.xlu0 %v4630
      %v4632 = vpop.xlane.xlu0 %4631
      %v4633 = vsel %vm1418, %v4591, 0.0
      %4634 = vadd.xlane.f32.xlu0 %v4633
      %v4635 = vpop.xlane.xlu0 %4634
      %v4636 = vsel %vm1418, %v4592, 0.0
      %4637 = vadd.xlane.f32.xlu0 %v4636
      %v4638 = vpop.xlane.xlu0 %4637
      %v4639 = vsel %vm1418, %v4593, 0.0
      %4640 = vadd.xlane.f32.xlu0 %v4639
      %v4641 = vpop.xlane.xlu0 %4640
      %v4642 = vmul.f32 %v4596, %v1467
      %v4643 = vmul.f32 %v4599, %v1467
      %v4644 = vmul.f32 %v4602, %v1467
      %v4645 = vmul.f32 %v4605, %v1467
      %v4646 = vmul.f32 %v4608, %v1467
      %v4647 = vmul.f32 %v4611, %v1467
      %v4648 = vmul.f32 %v4614, %v1467
      %v4649 = vmul.f32 %v4617, %v1467
      %v4650 = vmul.f32 %v4620, %v1467
      %v4651 = vmul.f32 %v4623, %v1467
      %v4652 = vmul.f32 %v4626, %v1467
      %v4653 = vmul.f32 %v4629, %v1467
      %v4654 = vmul.f32 %v4632, %v1467
      %v4655 = vmul.f32 %v4635, %v1467
      %v4656 = vmul.f32 %v4638, %v1467
      %v4657 = vmul.f32 %v4641, %v1467
      %v4658 = vadd.f32 %v4642, 1e-12
      %v4659 = vadd.f32 %v4643, 1e-12
      %v4660 = vadd.f32 %v4644, 1e-12
      %v4661 = vadd.f32 %v4645, 1e-12
      %v4662 = vadd.f32 %v4646, 1e-12
      %v4663 = vadd.f32 %v4647, 1e-12
      %v4664 = vadd.f32 %v4648, 1e-12
      %v4665 = vadd.f32 %v4649, 1e-12
      %v4666 = vadd.f32 %v4650, 1e-12
      %v4667 = vadd.f32 %v4651, 1e-12
      %v4668 = vadd.f32 %v4652, 1e-12
      %v4669 = vadd.f32 %v4653, 1e-12
      %v4670 = vadd.f32 %v4654, 1e-12
      %v4671 = vadd.f32 %v4655, 1e-12
      %v4672 = vadd.f32 %v4656, 1e-12
      %v4673 = vadd.f32 %v4657, 1e-12
      %v4674 = vrsqrt.pop %v4658
      %v4675 = vrsqrt.pop %v4659
      %v4676 = vrsqrt.pop %v4660
      %v4677 = vrsqrt.pop %v4661
      %v4678 = vrsqrt.pop %v4662
      %v4679 = vrsqrt.pop %v4663
      %v4680 = vrsqrt.pop %v4664
      %v4681 = vrsqrt.pop %v4665
      %v4682 = vrsqrt.pop %v4666
      %v4683 = vrsqrt.pop %v4667
      %v4684 = vrsqrt.pop %v4668
      %v4685 = vrsqrt.pop %v4669
      %v4686 = vrsqrt.pop %v4670
      %v4687 = vrsqrt.pop %v4671
      %v4688 = vrsqrt.pop %v4672
      %v4689 = vrsqrt.pop %v4673
      %v4690 = vmul.f32 %v4562, %v4674
      %v4691 = vmul.f32 %v4563, %v4675
      %v4692 = vmul.f32 %v4564, %v4676
      %v4693 = vmul.f32 %v4565, %v4677
      %v4694 = vmul.f32 %v4566, %v4678
      %v4695 = vmul.f32 %v4567, %v4679
      %v4696 = vmul.f32 %v4568, %v4680
      %v4697 = vmul.f32 %v4569, %v4681
      %v4698 = vmul.f32 %v4570, %v4682
      %v4699 = vmul.f32 %v4571, %v4683
      %v4700 = vmul.f32 %v4572, %v4684
      %v4701 = vmul.f32 %v4573, %v4685
      %v4702 = vmul.f32 %v4574, %v4686
      %v4703 = vmul.f32 %v4575, %v4687
      %v4704 = vmul.f32 %v4576, %v4688
      %v4705 = vmul.f32 %v4577, %v4689
      %v4707 = vlaneseq
      %v4708 = vshrl.u32 %v4707, 7
      %v4709 = vsub.s32 0, %v4708
      %v4710 = vrot.slane %v4496, %v4709
      %v4712 = vmul.f32 %v4690, %v4710
      %v4713 = vmul.f32 %v4691, %v4710
      %v4714 = vmul.f32 %v4692, %v4710
      %v4715 = vmul.f32 %v4693, %v4710
      %v4716 = vmul.f32 %v4694, %v4710
      %v4717 = vmul.f32 %v4695, %v4710
      %v4718 = vmul.f32 %v4696, %v4710
      %v4719 = vmul.f32 %v4697, %v4710
      %v4720 = vmul.f32 %v4698, %v4710
      %v4721 = vmul.f32 %v4699, %v4710
      %v4722 = vmul.f32 %v4700, %v4710
      %v4723 = vmul.f32 %v4701, %v4710
      %v4724 = vmul.f32 %v4702, %v4710
      %v4725 = vmul.f32 %v4703, %v4710
      %v4726 = vmul.f32 %v4704, %v4710
      %v4727 = vmul.f32 %v4705, %v4710
      %v4729 = vlaneseq
      %v4730 = vshrl.u32 %v4729, 7
      %v4731 = vsub.s32 0, %v4730
      %v4732 = vrot.slane %v4497, %v4731
      %v4734 = vadd.f32 %v4712, %v4732
      %v4735 = vadd.f32 %v4713, %v4732
      %v4736 = vadd.f32 %v4714, %v4732
      %v4737 = vadd.f32 %v4715, %v4732
      %v4738 = vadd.f32 %v4716, %v4732
      %v4739 = vadd.f32 %v4717, %v4732
      %v4740 = vadd.f32 %v4718, %v4732
      %v4741 = vadd.f32 %v4719, %v4732
      %v4742 = vadd.f32 %v4720, %v4732
      %v4743 = vadd.f32 %v4721, %v4732
      %v4744 = vadd.f32 %v4722, %v4732
      %v4745 = vadd.f32 %v4723, %v4732
      %v4746 = vadd.f32 %v4724, %v4732
      %v4747 = vadd.f32 %v4725, %v4732
      %v4748 = vadd.f32 %v4726, %v4732
      %v4749 = vadd.f32 %v4727, %v4732
      %s4750 = scalar_lea.vmem %s8, 32
      %v4751 = vld [vmem:[%s4750] sm:$0xff]
      %v4752 = vld [vmem:[%s4750 + $0x8] sm:$0xff]
      %v4753 = vld [vmem:[%s4750 + $0x10] sm:$0xff]
      %v4754 = vld [vmem:[%s4750 + $0x18] sm:$0xff]
      %s4755 = scalar_lea.vmem %s9, 1
      %v4756 = vld [vmem:[%s4755] sm:$0x1]
      %v4758 = vlaneseq
      %v4759 = vshrl.u32 %v4758, 7
      %v4760 = vsub.s32 0, %v4759
      %v4761 = vrot.slane %v4756, %v4760
      %v4764 = vsel %vm1418, %v4734, 0
      %v4767 = vsel %vm1418, %v4735, 0
      %v4770 = vsel %vm1418, %v4736, 0
      %v4773 = vsel %vm1418, %v4737, 0
      %v4776 = vsel %vm1418, %v4738, 0
      %v4779 = vsel %vm1418, %v4739, 0
      %v4782 = vsel %vm1418, %v4740, 0
      %v4785 = vsel %vm1418, %v4741, 0
      %v4788 = vsel %vm1418, %v4742, 0
      %v4791 = vsel %vm1418, %v4743, 0
      %v4794 = vsel %vm1418, %v4744, 0
      %v4797 = vsel %vm1418, %v4745, 0
      %v4800 = vsel %vm1418, %v4746, 0
      %v4803 = vsel %vm1418, %v4747, 0
      %v4806 = vsel %vm1418, %v4748, 0
      %v4809 = vsel %vm1418, %v4749, 0
      %4811 = vmatprep.subr.mxu0 0.0
      %4812 = vmatpush1.msra.mxu0 %v4751
      %4813 = vmatprep.subr.mxu0 0.0
      %4814 = vmatpush1.msra.mxu0 %v4752
      %4815 = vmatprep.subr.mxu0 0.0
      %4816 = vmatpush1.msra.mxu0 %v4753
      %4817 = vmatprep.subr.mxu0 0.0
      %4818 = vmatpush1.msra.mxu0 %v4754
      %4819 = vmatprep.subr.mxu0 0.0
      %4820 = vmatpush1.msra.mxu0 0.0
      %4821 = vmatprep.subr.mxu0 0.0
      %4822 = vmatpush1.msra.mxu0 0.0
      %4823 = vmatprep.subr.mxu0 0.0
      %4824 = vmatpush1.msra.mxu0 0.0
      %4825 = vmatprep.subr.mxu0 0.0
      %4826 = vmatpush1.msra.mxu0 0.0
      %4827 = vmatprep.subr.mxu0 0.0
      %4828 = vmatpush1.msra.mxu0 0.0
      %4829 = vmatprep.subr.mxu0 0.0
      %4830 = vmatpush1.msra.mxu0 0.0
      %4831 = vmatprep.subr.mxu0 0.0
      %4832 = vmatpush1.msra.mxu0 0.0
      %4833 = vmatprep.subr.mxu0 0.0
      %4834 = vmatpush1.msra.mxu0 0.0
      %4835 = vmatprep.subr.mxu0 0.0
      %4836 = vmatpush1.msra.mxu0 0.0
      %4837 = vmatprep.subr.mxu0 0.0
      %4838 = vmatpush1.msra.mxu0 0.0
      %4839 = vmatprep.subr.mxu0 0.0
      %4840 = vmatpush1.msra.mxu0 0.0
      %4841 = vmatprep.subr.mxu0 0.0
      %4842 = vmatpush1.msra.mxu0 0.0
      %4843 = vmatprep.subr.mxu0 0.0
      %4844 = vmatpush1.msra.mxu0 0.0
      %4845 = vmatprep.subr.mxu0 0.0
      %4846 = vmatpush1.msra.mxu0 0.0
      %4847 = vmatprep.subr.mxu0 0.0
      %4848 = vmatpush1.msra.mxu0 0.0
      %4849 = vmatprep.subr.mxu0 0.0
      %4850 = vmatpush1.msra.mxu0 0.0
      %4851 = vmatprep.subr.mxu0 0.0
      %4852 = vmatpush1.msra.mxu0 0.0
      %4853 = vmatprep.subr.mxu0 0.0
      %4854 = vmatpush1.msra.mxu0 0.0
      %4855 = vmatprep.subr.mxu0 0.0
      %4856 = vmatpush1.msra.mxu0 0.0
      %4857 = vmatprep.subr.mxu0 0.0
      %4858 = vmatpush1.msra.mxu0 0.0
      %4859 = vmatprep.subr.mxu0 0.0
      %4860 = vmatpush1.msra.mxu0 0.0
      %4861 = vmatprep.subr.mxu0 0.0
      %4862 = vmatpush1.msra.mxu0 0.0
      %4863 = vmatprep.subr.mxu0 0.0
      %4864 = vmatpush1.msra.mxu0 0.0
      %4865 = vmatprep.subr.mxu0 0.0
      %4866 = vmatpush1.msra.mxu0 0.0
      %4867 = vmatprep.subr.mxu0 0.0
      %4868 = vmatpush1.msra.mxu0 0.0
      %4869 = vmatprep.subr.mxu0 0.0
      %4870 = vmatpush1.msra.mxu0 0.0
      %4871 = vmatprep.subr.mxu0 0.0
      %4872 = vmatpush1.msra.mxu0 0.0
      %4873 = vmatprep.subr.mxu0 0.0
      %4874 = vmatpush1.msra.mxu0 0.0
      %4875 = vmatprep.mubr.f32.mxu0 0.0
      %4876 = vmatmul.mubr.f32.gmra.mrb[0].mxu0 %v4764
      %v4877 = vpop.f32.mrb[0].mxu0
      %v4878 = vadd.f32 %v4761, %v4877
      %v4879 = vpop.f32.mrb[0].mxu0
      %4880 = vmatprep.mubr.f32.mxu0 0.0
      %4881 = vmatmul.mubr.f32.gmra.mrb[0].mxu0 %v4767
      %v4882 = vpop.f32.mrb[0].mxu0
      %v4883 = vadd.f32 %v4761, %v4882
      %v4884 = vpop.f32.mrb[0].mxu0
      %4885 = vmatprep.mubr.f32.mxu0 0.0
      %4886 = vmatmul.mubr.f32.gmra.mrb[0].mxu0 %v4770
      %v4887 = vpop.f32.mrb[0].mxu0
      %v4888 = vadd.f32 %v4761, %v4887
      %v4889 = vpop.f32.mrb[0].mxu0
      %4890 = vmatprep.mubr.f32.mxu0 0.0
      %4891 = vmatmul.mubr.f32.gmra.mrb[0].mxu0 %v4773
      %v4892 = vpop.f32.mrb[0].mxu0
      %v4893 = vadd.f32 %v4761, %v4892
      %v4894 = vpop.f32.mrb[0].mxu0
      %4895 = vmatprep.mubr.f32.mxu0 0.0
      %4896 = vmatmul.mubr.f32.gmra.mrb[0].mxu0 %v4776
      %v4897 = vpop.f32.mrb[0].mxu0
      %v4898 = vadd.f32 %v4761, %v4897
      %v4899 = vpop.f32.mrb[0].mxu0
      %4900 = vmatprep.mubr.f32.mxu0 0.0
      %4901 = vmatmul.mubr.f32.gmra.mrb[0].mxu0 %v4779
      %v4902 = vpop.f32.mrb[0].mxu0
      %v4903 = vadd.f32 %v4761, %v4902
      %v4904 = vpop.f32.mrb[0].mxu0
      %4905 = vmatprep.mubr.f32.mxu0 0.0
      %4906 = vmatmul.mubr.f32.gmra.mrb[0].mxu0 %v4782
      %v4907 = vpop.f32.mrb[0].mxu0
      %v4908 = vadd.f32 %v4761, %v4907
      %v4909 = vpop.f32.mrb[0].mxu0
      %4910 = vmatprep.mubr.f32.mxu0 0.0
      %4911 = vmatmul.mubr.f32.gmra.mrb[0].mxu0 %v4785
      %v4912 = vpop.f32.mrb[0].mxu0
      %v4913 = vadd.f32 %v4761, %v4912
      %v4914 = vpop.f32.mrb[0].mxu0
      %4915 = vmatprep.mubr.f32.mxu0 0.0
      %4916 = vmatmul.mubr.f32.gmra.mrb[0].mxu0 %v4788
      %v4917 = vpop.f32.mrb[0].mxu0
      %v4918 = vadd.f32 %v4761, %v4917
      %v4919 = vpop.f32.mrb[0].mxu0
      %4920 = vmatprep.mubr.f32.mxu0 0.0
      %4921 = vmatmul.mubr.f32.gmra.mrb[0].mxu0 %v4791
      %v4922 = vpop.f32.mrb[0].mxu0
      %v4923 = vadd.f32 %v4761, %v4922
      %v4924 = vpop.f32.mrb[0].mxu0
      %4925 = vmatprep.mubr.f32.mxu0 0.0
      %4926 = vmatmul.mubr.f32.gmra.mrb[0].mxu0 %v4794
      %v4927 = vpop.f32.mrb[0].mxu0
      %v4928 = vadd.f32 %v4761, %v4927
      %v4929 = vpop.f32.mrb[0].mxu0
      %4930 = vmatprep.mubr.f32.mxu0 0.0
      %4931 = vmatmul.mubr.f32.gmra.mrb[0].mxu0 %v4797
      %v4932 = vpop.f32.mrb[0].mxu0
      %v4933 = vadd.f32 %v4761, %v4932
      %v4934 = vpop.f32.mrb[0].mxu0
      %4935 = vmatprep.mubr.f32.mxu0 0.0
      %4936 = vmatmul.mubr.f32.gmra.mrb[0].mxu0 %v4800
      %v4937 = vpop.f32.mrb[0].mxu0
      %v4938 = vadd.f32 %v4761, %v4937
      %v4939 = vpop.f32.mrb[0].mxu0
      %4940 = vmatprep.mubr.f32.mxu0 0.0
      %4941 = vmatmul.mubr.f32.gmra.mrb[0].mxu0 %v4803
      %v4942 = vpop.f32.mrb[0].mxu0
      %v4943 = vadd.f32 %v4761, %v4942
      %v4944 = vpop.f32.mrb[0].mxu0
      %4945 = vmatprep.mubr.f32.mxu0 0.0
      %4946 = vmatmul.mubr.f32.gmra.mrb[0].mxu0 %v4806
      %v4947 = vpop.f32.mrb[0].mxu0
      %v4948 = vadd.f32 %v4761, %v4947
      %v4949 = vpop.f32.mrb[0].mxu0
      %4950 = vmatprep.mubr.f32.mxu0 0.0
      %4951 = vmatmul.mubr.f32.gmra.mrb[0].mxu0 %v4809
      %v4952 = vpop.f32.mrb[0].mxu0
      %v4953 = vadd.f32 %v4761, %v4952
      %v4954 = vpop.f32.mrb[0].mxu0
      %4955 = vdwg.mxu0
      %4972 = vrot.lane.b32.xlu0 %v4878, 96
      %v4973 = vpop.permute.xlu0 %4972
      %4974 = vrot.lane.b32.xlu0 %v4883, 96
      %v4975 = vpop.permute.xlu0 %4974
      %4976 = vrot.lane.b32.xlu0 %v4888, 96
      %v4977 = vpop.permute.xlu0 %4976
      %4978 = vrot.lane.b32.xlu0 %v4893, 96
      %v4979 = vpop.permute.xlu0 %4978
      %4980 = vrot.lane.b32.xlu0 %v4898, 96
      %v4981 = vpop.permute.xlu0 %4980
      %4982 = vrot.lane.b32.xlu0 %v4903, 96
      %v4983 = vpop.permute.xlu0 %4982
      %4984 = vrot.lane.b32.xlu0 %v4908, 96
      %v4985 = vpop.permute.xlu0 %4984
      %4986 = vrot.lane.b32.xlu0 %v4913, 96
      %v4987 = vpop.permute.xlu0 %4986
      %4988 = vrot.lane.b32.xlu0 %v4918, 96
      %v4989 = vpop.permute.xlu0 %4988
      %4990 = vrot.lane.b32.xlu0 %v4923, 96
      %v4991 = vpop.permute.xlu0 %4990
      %4992 = vrot.lane.b32.xlu0 %v4928, 96
      %v4993 = vpop.permute.xlu0 %4992
      %4994 = vrot.lane.b32.xlu0 %v4933, 96
      %v4995 = vpop.permute.xlu0 %4994
      %4996 = vrot.lane.b32.xlu0 %v4938, 96
      %v4997 = vpop.permute.xlu0 %4996
      %4998 = vrot.lane.b32.xlu0 %v4943, 96
      %v4999 = vpop.permute.xlu0 %4998
      %5000 = vrot.lane.b32.xlu0 %v4948, 96
      %v5001 = vpop.permute.xlu0 %5000
      %5002 = vrot.lane.b32.xlu0 %v4953, 96
      %v5003 = vpop.permute.xlu0 %5002
      %v5004 = vsel %vm1924, %v4878, 0
      %v5006 = vsel %vm1924, %v4883, 0
      %v5008 = vsel %vm1924, %v4888, 0
      %v5010 = vsel %vm1924, %v4893, 0
      %v5012 = vsel %vm1924, %v4898, 0
      %v5014 = vsel %vm1924, %v4903, 0
      %v5016 = vsel %vm1924, %v4908, 0
      %v5018 = vsel %vm1924, %v4913, 0
      %v5020 = vsel %vm1924, %v4918, 0
      %v5022 = vsel %vm1924, %v4923, 0
      %v5024 = vsel %vm1924, %v4928, 0
      %v5026 = vsel %vm1924, %v4933, 0
      %v5028 = vsel %vm1924, %v4938, 0
      %v5030 = vsel %vm1924, %v4943, 0
      %v5032 = vsel %vm1924, %v4948, 0
      %v5034 = vsel %vm1924, %v4953, 0
      %v5036 = vsel %vm1924, %v4973, 0
      %v5038 = vsel %vm1924, %v4975, 0
      %v5040 = vsel %vm1924, %v4977, 0
      %v5042 = vsel %vm1924, %v4979, 0
      %v5044 = vsel %vm1924, %v4981, 0
      %v5046 = vsel %vm1924, %v4983, 0
      %v5048 = vsel %vm1924, %v4985, 0
      %v5050 = vsel %vm1924, %v4987, 0
      %v5052 = vsel %vm1924, %v4989, 0
      %v5054 = vsel %vm1924, %v4991, 0
      %v5056 = vsel %vm1924, %v4993, 0
      %v5058 = vsel %vm1924, %v4995, 0
      %v5060 = vsel %vm1924, %v4997, 0
      %v5062 = vsel %vm1924, %v4999, 0
      %v5064 = vsel %vm1924, %v5001, 0
      %v5066 = vsel %vm1924, %v5003, 0
      %5068 = vmatprep.subr.mxu0 0.0
      %5069 = vmatpush1.xpose.msra.mxu0 %v5036
      %5070 = vmatprep.subr.mxu0 0.0
      %5071 = vmatpush1.xpose.msra.mxu0 %v5038
      %5072 = vmatprep.subr.mxu0 0.0
      %5073 = vmatpush1.xpose.msra.mxu0 %v5040
      %5074 = vmatprep.subr.mxu0 0.0
      %5075 = vmatpush1.xpose.msra.mxu0 %v5042
      %5076 = vmatprep.subr.mxu0 0.0
      %5077 = vmatpush1.xpose.msra.mxu0 %v5044
      %5078 = vmatprep.subr.mxu0 0.0
      %5079 = vmatpush1.xpose.msra.mxu0 %v5046
      %5080 = vmatprep.subr.mxu0 0.0
      %5081 = vmatpush1.xpose.msra.mxu0 %v5048
      %5082 = vmatprep.subr.mxu0 0.0
      %5083 = vmatpush1.xpose.msra.mxu0 %v5050
      %5084 = vmatprep.subr.mxu0 0.0
      %5085 = vmatpush1.xpose.msra.mxu0 %v5052
      %5086 = vmatprep.subr.mxu0 0.0
      %5087 = vmatpush1.xpose.msra.mxu0 %v5054
      %5088 = vmatprep.subr.mxu0 0.0
      %5089 = vmatpush1.xpose.msra.mxu0 %v5056
      %5090 = vmatprep.subr.mxu0 0.0
      %5091 = vmatpush1.xpose.msra.mxu0 %v5058
      %5092 = vmatprep.subr.mxu0 0.0
      %5093 = vmatpush1.xpose.msra.mxu0 %v5060
      %5094 = vmatprep.subr.mxu0 0.0
      %5095 = vmatpush1.xpose.msra.mxu0 %v5062
      %5096 = vmatprep.subr.mxu0 0.0
      %5097 = vmatpush1.xpose.msra.mxu0 %v5064
      %5098 = vmatprep.subr.mxu0 0.0
      %5099 = vmatpush1.xpose.msra.mxu0 %v5066
      %5100 = vmatprep.subr.mxu0 0.0
      %5101 = vmatpush1.xpose.msra.mxu0 0.0
      %5102 = vmatprep.subr.mxu0 0.0
      %5103 = vmatpush1.xpose.msra.mxu0 0.0
      %5104 = vmatprep.subr.mxu0 0.0
      %5105 = vmatpush1.xpose.msra.mxu0 0.0
      %5106 = vmatprep.subr.mxu0 0.0
      %5107 = vmatpush1.xpose.msra.mxu0 0.0
      %5108 = vmatprep.subr.mxu0 0.0
      %5109 = vmatpush1.xpose.msra.mxu0 0.0
      %5110 = vmatprep.subr.mxu0 0.0
      %5111 = vmatpush1.xpose.msra.mxu0 0.0
      %5112 = vmatprep.subr.mxu0 0.0
      %5113 = vmatpush1.xpose.msra.mxu0 0.0
      %5114 = vmatprep.subr.mxu0 0.0
      %5115 = vmatpush1.xpose.msra.mxu0 0.0
      %5116 = vmatprep.subr.mxu0 0.0
      %5117 = vmatpush1.xpose.msra.mxu0 0.0
      %5118 = vmatprep.subr.mxu0 0.0
      %5119 = vmatpush1.xpose.msra.mxu0 0.0
      %5120 = vmatprep.subr.mxu0 0.0
      %5121 = vmatpush1.xpose.msra.mxu0 0.0
      %5122 = vmatprep.subr.mxu0 0.0
      %5123 = vmatpush1.xpose.msra.mxu0 0.0
      %5124 = vmatprep.subr.mxu0 0.0
      %5125 = vmatpush1.xpose.msra.mxu0 0.0
      %5126 = vmatprep.subr.mxu0 0.0
      %5127 = vmatpush1.xpose.msra.mxu0 0.0
      %5128 = vmatprep.subr.mxu0 0.0
      %5129 = vmatpush1.xpose.msra.mxu0 0.0
      %5130 = vmatprep.subr.mxu0 0.0
      %5131 = vmatpush1.xpose.msra.mxu0 0.0
      %5132 = vmatprep.mubr.f32.mxu0 0.0
      %5133 = vmatmul.mubr.f32.gmra.mrb[0].mxu0 %v5004
      %v5134 = vpop.f32.mrb[0].mxu0
      %v5135 = vadd.f32 %v833, %v5134
      %v5136 = vpop.f32.mrb[0].mxu0
      %5137 = vmatprep.mubr.f32.mxu0 0.0
      %5138 = vmatmul.mubr.f32.gmra.mrb[0].mxu0 %v5006
      %v5139 = vpop.f32.mrb[0].mxu0
      %v5140 = vadd.f32 %v834, %v5139
      %v5141 = vpop.f32.mrb[0].mxu0
      %5142 = vmatprep.mubr.f32.mxu0 0.0
      %5143 = vmatmul.mubr.f32.gmra.mrb[0].mxu0 %v5008
      %v5144 = vpop.f32.mrb[0].mxu0
      %v5145 = vadd.f32 %v835, %v5144
      %v5146 = vpop.f32.mrb[0].mxu0
      %5147 = vmatprep.mubr.f32.mxu0 0.0
      %5148 = vmatmul.mubr.f32.gmra.mrb[0].mxu0 %v5010
      %v5149 = vpop.f32.mrb[0].mxu0
      %v5150 = vadd.f32 %v836, %v5149
      %v5151 = vpop.f32.mrb[0].mxu0
      %5152 = vmatprep.mubr.f32.mxu0 0.0
      %5153 = vmatmul.mubr.f32.gmra.mrb[0].mxu0 %v5012
      %v5154 = vpop.f32.mrb[0].mxu0
      %v5155 = vadd.f32 %v837, %v5154
      %v5156 = vpop.f32.mrb[0].mxu0
      %5157 = vmatprep.mubr.f32.mxu0 0.0
      %5158 = vmatmul.mubr.f32.gmra.mrb[0].mxu0 %v5014
      %v5159 = vpop.f32.mrb[0].mxu0
      %v5160 = vadd.f32 %v838, %v5159
      %v5161 = vpop.f32.mrb[0].mxu0
      %5162 = vmatprep.mubr.f32.mxu0 0.0
      %5163 = vmatmul.mubr.f32.gmra.mrb[0].mxu0 %v5016
      %v5164 = vpop.f32.mrb[0].mxu0
      %v5165 = vadd.f32 %v839, %v5164
      %v5166 = vpop.f32.mrb[0].mxu0
      %5167 = vmatprep.mubr.f32.mxu0 0.0
      %5168 = vmatmul.mubr.f32.gmra.mrb[0].mxu0 %v5018
      %v5169 = vpop.f32.mrb[0].mxu0
      %v5170 = vadd.f32 %v840, %v5169
      %v5171 = vpop.f32.mrb[0].mxu0
      %5172 = vmatprep.mubr.f32.mxu0 0.0
      %5173 = vmatmul.mubr.f32.gmra.mrb[0].mxu0 %v5020
      %v5174 = vpop.f32.mrb[0].mxu0
      %v5175 = vadd.f32 %v841, %v5174
      %v5176 = vpop.f32.mrb[0].mxu0
      %5177 = vmatprep.mubr.f32.mxu0 0.0
      %5178 = vmatmul.mubr.f32.gmra.mrb[0].mxu0 %v5022
      %v5179 = vpop.f32.mrb[0].mxu0
      %v5180 = vadd.f32 %v842, %v5179
      %v5181 = vpop.f32.mrb[0].mxu0
      %5182 = vmatprep.mubr.f32.mxu0 0.0
      %5183 = vmatmul.mubr.f32.gmra.mrb[0].mxu0 %v5024
      %v5184 = vpop.f32.mrb[0].mxu0
      %v5185 = vadd.f32 %v843, %v5184
      %v5186 = vpop.f32.mrb[0].mxu0
      %5187 = vmatprep.mubr.f32.mxu0 0.0
      %5188 = vmatmul.mubr.f32.gmra.mrb[0].mxu0 %v5026
      %v5189 = vpop.f32.mrb[0].mxu0
      %v5190 = vadd.f32 %v844, %v5189
      %v5191 = vpop.f32.mrb[0].mxu0
      %5192 = vmatprep.mubr.f32.mxu0 0.0
      %5193 = vmatmul.mubr.f32.gmra.mrb[0].mxu0 %v5028
      %v5194 = vpop.f32.mrb[0].mxu0
      %v5195 = vadd.f32 %v845, %v5194
      %v5196 = vpop.f32.mrb[0].mxu0
      %5197 = vmatprep.mubr.f32.mxu0 0.0
      %5198 = vmatmul.mubr.f32.gmra.mrb[0].mxu0 %v5030
      %v5199 = vpop.f32.mrb[0].mxu0
      %v5200 = vadd.f32 %v846, %v5199
      %v5201 = vpop.f32.mrb[0].mxu0
      %5202 = vmatprep.mubr.f32.mxu0 0.0
      %5203 = vmatmul.mubr.f32.gmra.mrb[0].mxu0 %v5032
      %v5204 = vpop.f32.mrb[0].mxu0
      %v5205 = vadd.f32 %v847, %v5204
      %v5206 = vpop.f32.mrb[0].mxu0
      %5207 = vmatprep.mubr.f32.mxu0 0.0
      %5208 = vmatmul.mubr.f32.gmra.mrb[0].mxu0 %v5034
      %v5209 = vpop.f32.mrb[0].mxu0
      %v5210 = vadd.f32 %v848, %v5209
      %v5211 = vpop.f32.mrb[0].mxu0
      %5212 = vdwg.mxu0
      %5213 = vmax.xlane.f32.xlu0 %v5135
      %v5214 = vpop.xlane.xlu0 %5213
      %5215 = vmax.xlane.f32.xlu0 %v5140
      %v5216 = vpop.xlane.xlu0 %5215
      %5217 = vmax.xlane.f32.xlu0 %v5145
      %v5218 = vpop.xlane.xlu0 %5217
      %5219 = vmax.xlane.f32.xlu0 %v5150
      %v5220 = vpop.xlane.xlu0 %5219
      %5221 = vmax.xlane.f32.xlu0 %v5155
      %v5222 = vpop.xlane.xlu0 %5221
      %5223 = vmax.xlane.f32.xlu0 %v5160
      %v5224 = vpop.xlane.xlu0 %5223
      %5225 = vmax.xlane.f32.xlu0 %v5165
      %v5226 = vpop.xlane.xlu0 %5225
      %5227 = vmax.xlane.f32.xlu0 %v5170
      %v5228 = vpop.xlane.xlu0 %5227
      %5229 = vmax.xlane.f32.xlu0 %v5175
      %v5230 = vpop.xlane.xlu0 %5229
      %5231 = vmax.xlane.f32.xlu0 %v5180
      %v5232 = vpop.xlane.xlu0 %5231
      %5233 = vmax.xlane.f32.xlu0 %v5185
      %v5234 = vpop.xlane.xlu0 %5233
      %5235 = vmax.xlane.f32.xlu0 %v5190
      %v5236 = vpop.xlane.xlu0 %5235
      %5237 = vmax.xlane.f32.xlu0 %v5195
      %v5238 = vpop.xlane.xlu0 %5237
      %5239 = vmax.xlane.f32.xlu0 %v5200
      %v5240 = vpop.xlane.xlu0 %5239
      %5241 = vmax.xlane.f32.xlu0 %v5205
      %v5242 = vpop.xlane.xlu0 %5241
      %5243 = vmax.xlane.f32.xlu0 %v5210
      %v5244 = vpop.xlane.xlu0 %5243
      %v5245 = vsub.f32 %v5135, %v5214
      %v5246 = vsub.f32 %v5140, %v5216
      %v5247 = vsub.f32 %v5145, %v5218
      %v5248 = vsub.f32 %v5150, %v5220
      %v5249 = vsub.f32 %v5155, %v5222
      %v5250 = vsub.f32 %v5160, %v5224
      %v5251 = vsub.f32 %v5165, %v5226
      %v5252 = vsub.f32 %v5170, %v5228
      %v5253 = vsub.f32 %v5175, %v5230
      %v5254 = vsub.f32 %v5180, %v5232
      %v5255 = vsub.f32 %v5185, %v5234
      %v5256 = vsub.f32 %v5190, %v5236
      %v5257 = vsub.f32 %v5195, %v5238
      %v5258 = vsub.f32 %v5200, %v5240
      %v5259 = vsub.f32 %v5205, %v5242
      %v5260 = vsub.f32 %v5210, %v5244
      %v5261 = vmul.f32 %v5245, 1.442695
      %v5262 = vpow.pop %v5261
      %v5263 = vmul.f32 %v5246, 1.442695
      %v5264 = vpow.pop %v5263
      %v5265 = vmul.f32 %v5247, 1.442695
      %v5266 = vpow.pop %v5265
      %v5267 = vmul.f32 %v5248, 1.442695
      %v5268 = vpow.pop %v5267
      %v5269 = vmul.f32 %v5249, 1.442695
      %v5270 = vpow.pop %v5269
      %v5271 = vmul.f32 %v5250, 1.442695
      %v5272 = vpow.pop %v5271
      %v5273 = vmul.f32 %v5251, 1.442695
      %v5274 = vpow.pop %v5273
      %v5275 = vmul.f32 %v5252, 1.442695
      %v5276 = vpow.pop %v5275
      %v5277 = vmul.f32 %v5253, 1.442695
      %v5278 = vpow.pop %v5277
      %v5279 = vmul.f32 %v5254, 1.442695
      %v5280 = vpow.pop %v5279
      %v5281 = vmul.f32 %v5255, 1.442695
      %v5282 = vpow.pop %v5281
      %v5283 = vmul.f32 %v5256, 1.442695
      %v5284 = vpow.pop %v5283
      %v5285 = vmul.f32 %v5257, 1.442695
      %v5286 = vpow.pop %v5285
      %v5287 = vmul.f32 %v5258, 1.442695
      %v5288 = vpow.pop %v5287
      %v5289 = vmul.f32 %v5259, 1.442695
      %v5290 = vpow.pop %v5289
      %v5291 = vmul.f32 %v5260, 1.442695
      %v5292 = vpow.pop %v5291
      %5293 = vadd.xlane.f32.xlu0 %v5262
      %v5294 = vpop.xlane.xlu0 %5293
      %5295 = vadd.xlane.f32.xlu0 %v5264
      %v5296 = vpop.xlane.xlu0 %5295
      %5297 = vadd.xlane.f32.xlu0 %v5266
      %v5298 = vpop.xlane.xlu0 %5297
      %5299 = vadd.xlane.f32.xlu0 %v5268
      %v5300 = vpop.xlane.xlu0 %5299
      %5301 = vadd.xlane.f32.xlu0 %v5270
      %v5302 = vpop.xlane.xlu0 %5301
      %5303 = vadd.xlane.f32.xlu0 %v5272
      %v5304 = vpop.xlane.xlu0 %5303
      %5305 = vadd.xlane.f32.xlu0 %v5274
      %v5306 = vpop.xlane.xlu0 %5305
      %5307 = vadd.xlane.f32.xlu0 %v5276
      %v5308 = vpop.xlane.xlu0 %5307
      %5309 = vadd.xlane.f32.xlu0 %v5278
      %v5310 = vpop.xlane.xlu0 %5309
      %5311 = vadd.xlane.f32.xlu0 %v5280
      %v5312 = vpop.xlane.xlu0 %5311
      %5313 = vadd.xlane.f32.xlu0 %v5282
      %v5314 = vpop.xlane.xlu0 %5313
      %5315 = vadd.xlane.f32.xlu0 %v5284
      %v5316 = vpop.xlane.xlu0 %5315
      %5317 = vadd.xlane.f32.xlu0 %v5286
      %v5318 = vpop.xlane.xlu0 %5317
      %5319 = vadd.xlane.f32.xlu0 %v5288
      %v5320 = vpop.xlane.xlu0 %5319
      %5321 = vadd.xlane.f32.xlu0 %v5290
      %v5322 = vpop.xlane.xlu0 %5321
      %5323 = vadd.xlane.f32.xlu0 %v5292
      %v5324 = vpop.xlane.xlu0 %5323
      %v5325 = vrcp.pop %v5294
      %v5326 = vmul.f32 %v5262, %v5325
      %v5327 = vrcp.pop %v5296
      %v5328 = vmul.f32 %v5264, %v5327
      %v5329 = vrcp.pop %v5298
      %v5330 = vmul.f32 %v5266, %v5329
      %v5331 = vrcp.pop %v5300
      %v5332 = vmul.f32 %v5268, %v5331
      %v5333 = vrcp.pop %v5302
      %v5334 = vmul.f32 %v5270, %v5333
      %v5335 = vrcp.pop %v5304
      %v5336 = vmul.f32 %v5272, %v5335
      %v5337 = vrcp.pop %v5306
      %v5338 = vmul.f32 %v5274, %v5337
      %v5339 = vrcp.pop %v5308
      %v5340 = vmul.f32 %v5276, %v5339
      %v5341 = vrcp.pop %v5310
      %v5342 = vmul.f32 %v5278, %v5341
      %v5343 = vrcp.pop %v5312
      %v5344 = vmul.f32 %v5280, %v5343
      %v5345 = vrcp.pop %v5314
      %v5346 = vmul.f32 %v5282, %v5345
      %v5347 = vrcp.pop %v5316
      %v5348 = vmul.f32 %v5284, %v5347
      %v5349 = vrcp.pop %v5318
      %v5350 = vmul.f32 %v5286, %v5349
      %v5351 = vrcp.pop %v5320
      %v5352 = vmul.f32 %v5288, %v5351
      %v5353 = vrcp.pop %v5322
      %v5354 = vmul.f32 %v5290, %v5353
      %v5355 = vrcp.pop %v5324
      %v5356 = vmul.f32 %v5292, %v5355
      %5357 = vrot.lane.b32.xlu0 %v4878, 64
      %v5358 = vpop.permute.xlu0 %5357
      %5359 = vrot.lane.b32.xlu0 %v4883, 64
      %v5360 = vpop.permute.xlu0 %5359
      %5361 = vrot.lane.b32.xlu0 %v4888, 64
      %v5362 = vpop.permute.xlu0 %5361
      %5363 = vrot.lane.b32.xlu0 %v4893, 64
      %v5364 = vpop.permute.xlu0 %5363
      %5365 = vrot.lane.b32.xlu0 %v4898, 64
      %v5366 = vpop.permute.xlu0 %5365
      %5367 = vrot.lane.b32.xlu0 %v4903, 64
      %v5368 = vpop.permute.xlu0 %5367
      %5369 = vrot.lane.b32.xlu0 %v4908, 64
      %v5370 = vpop.permute.xlu0 %5369
      %5371 = vrot.lane.b32.xlu0 %v4913, 64
      %v5372 = vpop.permute.xlu0 %5371
      %5373 = vrot.lane.b32.xlu0 %v4918, 64
      %v5374 = vpop.permute.xlu0 %5373
      %5375 = vrot.lane.b32.xlu0 %v4923, 64
      %v5376 = vpop.permute.xlu0 %5375
      %5377 = vrot.lane.b32.xlu0 %v4928, 64
      %v5378 = vpop.permute.xlu0 %5377
      %5379 = vrot.lane.b32.xlu0 %v4933, 64
      %v5380 = vpop.permute.xlu0 %5379
      %5381 = vrot.lane.b32.xlu0 %v4938, 64
      %v5382 = vpop.permute.xlu0 %5381
      %5383 = vrot.lane.b32.xlu0 %v4943, 64
      %v5384 = vpop.permute.xlu0 %5383
      %5385 = vrot.lane.b32.xlu0 %v4948, 64
      %v5386 = vpop.permute.xlu0 %5385
      %5387 = vrot.lane.b32.xlu0 %v4953, 64
      %v5388 = vpop.permute.xlu0 %5387
      %5405 = vmatprep.subr.mxu0 0.0
      %5406 = vmatpush1.msra.mxu0 %v5358
      %5407 = vmatprep.subr.mxu0 0.0
      %5408 = vmatpush1.msra.mxu0 %v5360
      %5409 = vmatprep.subr.mxu0 0.0
      %5410 = vmatpush1.msra.mxu0 %v5362
      %5411 = vmatprep.subr.mxu0 0.0
      %5412 = vmatpush1.msra.mxu0 %v5364
      %5413 = vmatprep.subr.mxu0 0.0
      %5414 = vmatpush1.msra.mxu0 %v5366
      %5415 = vmatprep.subr.mxu0 0.0
      %5416 = vmatpush1.msra.mxu0 %v5368
      %5417 = vmatprep.subr.mxu0 0.0
      %5418 = vmatpush1.msra.mxu0 %v5370
      %5419 = vmatprep.subr.mxu0 0.0
      %5420 = vmatpush1.msra.mxu0 %v5372
      %5421 = vmatprep.subr.mxu0 0.0
      %5422 = vmatpush1.msra.mxu0 %v5374
      %5423 = vmatprep.subr.mxu0 0.0
      %5424 = vmatpush1.msra.mxu0 %v5376
      %5425 = vmatprep.subr.mxu0 0.0
      %5426 = vmatpush1.msra.mxu0 %v5378
      %5427 = vmatprep.subr.mxu0 0.0
      %5428 = vmatpush1.msra.mxu0 %v5380
      %5429 = vmatprep.subr.mxu0 0.0
      %5430 = vmatpush1.msra.mxu0 %v5382
      %5431 = vmatprep.subr.mxu0 0.0
      %5432 = vmatpush1.msra.mxu0 %v5384
      %5433 = vmatprep.subr.mxu0 0.0
      %5434 = vmatpush1.msra.mxu0 %v5386
      %5435 = vmatprep.subr.mxu0 0.0
      %5436 = vmatpush1.msra.mxu0 %v5388
      %5437 = vmatprep.subr.mxu0 0.0
      %5438 = vmatpush1.msra.mxu0 0.0
      %5439 = vmatprep.subr.mxu0 0.0
      %5440 = vmatpush1.msra.mxu0 0.0
      %5441 = vmatprep.subr.mxu0 0.0
      %5442 = vmatpush1.msra.mxu0 0.0
      %5443 = vmatprep.subr.mxu0 0.0
      %5444 = vmatpush1.msra.mxu0 0.0
      %5445 = vmatprep.subr.mxu0 0.0
      %5446 = vmatpush1.msra.mxu0 0.0
      %5447 = vmatprep.subr.mxu0 0.0
      %5448 = vmatpush1.msra.mxu0 0.0
      %5449 = vmatprep.subr.mxu0 0.0
      %5450 = vmatpush1.msra.mxu0 0.0
      %5451 = vmatprep.subr.mxu0 0.0
      %5452 = vmatpush1.msra.mxu0 0.0
      %5453 = vmatprep.subr.mxu0 0.0
      %5454 = vmatpush1.msra.mxu0 0.0
      %5455 = vmatprep.subr.mxu0 0.0
      %5456 = vmatpush1.msra.mxu0 0.0
      %5457 = vmatprep.subr.mxu0 0.0
      %5458 = vmatpush1.msra.mxu0 0.0
      %5459 = vmatprep.subr.mxu0 0.0
      %5460 = vmatpush1.msra.mxu0 0.0
      %5461 = vmatprep.subr.mxu0 0.0
      %5462 = vmatpush1.msra.mxu0 0.0
      %5463 = vmatprep.subr.mxu0 0.0
      %5464 = vmatpush1.msra.mxu0 0.0
      %5465 = vmatprep.subr.mxu0 0.0
      %5466 = vmatpush1.msra.mxu0 0.0
      %5467 = vmatprep.subr.mxu0 0.0
      %5468 = vmatpush1.msra.mxu0 0.0
      %5469 = vmatprep.mubr.f32.mxu0 0.0
      %5470 = vmatmul.mubr.f32.gmra.mrb[0].mxu0 %v5326
      %v5471 = vpop.f32.mrb[0].mxu0
      %v5472 = vadd.f32 0.0, %v5471
      %v5473 = vpop.f32.mrb[0].mxu0
      %5474 = vmatprep.mubr.f32.mxu0 0.0
      %5475 = vmatmul.mubr.f32.gmra.mrb[0].mxu0 %v5328
      %v5476 = vpop.f32.mrb[0].mxu0
      %v5477 = vadd.f32 0.0, %v5476
      %v5478 = vpop.f32.mrb[0].mxu0
      %5479 = vmatprep.mubr.f32.mxu0 0.0
      %5480 = vmatmul.mubr.f32.gmra.mrb[0].mxu0 %v5330
      %v5481 = vpop.f32.mrb[0].mxu0
      %v5482 = vadd.f32 0.0, %v5481
      %v5483 = vpop.f32.mrb[0].mxu0
      %5484 = vmatprep.mubr.f32.mxu0 0.0
      %5485 = vmatmul.mubr.f32.gmra.mrb[0].mxu0 %v5332
      %v5486 = vpop.f32.mrb[0].mxu0
      %v5487 = vadd.f32 0.0, %v5486
      %v5488 = vpop.f32.mrb[0].mxu0
      %5489 = vmatprep.mubr.f32.mxu0 0.0
      %5490 = vmatmul.mubr.f32.gmra.mrb[0].mxu0 %v5334
      %v5491 = vpop.f32.mrb[0].mxu0
      %v5492 = vadd.f32 0.0, %v5491
      %v5493 = vpop.f32.mrb[0].mxu0
      %5494 = vmatprep.mubr.f32.mxu0 0.0
      %5495 = vmatmul.mubr.f32.gmra.mrb[0].mxu0 %v5336
      %v5496 = vpop.f32.mrb[0].mxu0
      %v5497 = vadd.f32 0.0, %v5496
      %v5498 = vpop.f32.mrb[0].mxu0
      %5499 = vmatprep.mubr.f32.mxu0 0.0
      %5500 = vmatmul.mubr.f32.gmra.mrb[0].mxu0 %v5338
      %v5501 = vpop.f32.mrb[0].mxu0
      %v5502 = vadd.f32 0.0, %v5501
      %v5503 = vpop.f32.mrb[0].mxu0
      %5504 = vmatprep.mubr.f32.mxu0 0.0
      %5505 = vmatmul.mubr.f32.gmra.mrb[0].mxu0 %v5340
      %v5506 = vpop.f32.mrb[0].mxu0
      %v5507 = vadd.f32 0.0, %v5506
      %v5508 = vpop.f32.mrb[0].mxu0
      %5509 = vmatprep.mubr.f32.mxu0 0.0
      %5510 = vmatmul.mubr.f32.gmra.mrb[0].mxu0 %v5342
      %v5511 = vpop.f32.mrb[0].mxu0
      %v5512 = vadd.f32 0.0, %v5511
      %v5513 = vpop.f32.mrb[0].mxu0
      %5514 = vmatprep.mubr.f32.mxu0 0.0
      %5515 = vmatmul.mubr.f32.gmra.mrb[0].mxu0 %v5344
      %v5516 = vpop.f32.mrb[0].mxu0
      %v5517 = vadd.f32 0.0, %v5516
      %v5518 = vpop.f32.mrb[0].mxu0
      %5519 = vmatprep.mubr.f32.mxu0 0.0
      %5520 = vmatmul.mubr.f32.gmra.mrb[0].mxu0 %v5346
      %v5521 = vpop.f32.mrb[0].mxu0
      %v5522 = vadd.f32 0.0, %v5521
      %v5523 = vpop.f32.mrb[0].mxu0
      %5524 = vmatprep.mubr.f32.mxu0 0.0
      %5525 = vmatmul.mubr.f32.gmra.mrb[0].mxu0 %v5348
      %v5526 = vpop.f32.mrb[0].mxu0
      %v5527 = vadd.f32 0.0, %v5526
      %v5528 = vpop.f32.mrb[0].mxu0
      %5529 = vmatprep.mubr.f32.mxu0 0.0
      %5530 = vmatmul.mubr.f32.gmra.mrb[0].mxu0 %v5350
      %v5531 = vpop.f32.mrb[0].mxu0
      %v5532 = vadd.f32 0.0, %v5531
      %v5533 = vpop.f32.mrb[0].mxu0
      %5534 = vmatprep.mubr.f32.mxu0 0.0
      %5535 = vmatmul.mubr.f32.gmra.mrb[0].mxu0 %v5352
      %v5536 = vpop.f32.mrb[0].mxu0
      %v5537 = vadd.f32 0.0, %v5536
      %v5538 = vpop.f32.mrb[0].mxu0
      %5539 = vmatprep.mubr.f32.mxu0 0.0
      %5540 = vmatmul.mubr.f32.gmra.mrb[0].mxu0 %v5354
      %v5541 = vpop.f32.mrb[0].mxu0
      %v5542 = vadd.f32 0.0, %v5541
      %v5543 = vpop.f32.mrb[0].mxu0
      %5544 = vmatprep.mubr.f32.mxu0 0.0
      %5545 = vmatmul.mubr.f32.gmra.mrb[0].mxu0 %v5356
      %v5546 = vpop.f32.mrb[0].mxu0
      %v5547 = vadd.f32 0.0, %v5546
      %v5548 = vpop.f32.mrb[0].mxu0
      %5549 = vdwg.mxu0
      %5550 = vrot.lane.b32.xlu0 %v4878, 112
      %v5551 = vpop.permute.xlu0 %5550
      %5552 = vrot.lane.b32.xlu0 %v4883, 112
      %v5553 = vpop.permute.xlu0 %5552
      %5554 = vrot.lane.b32.xlu0 %v4888, 112
      %v5555 = vpop.permute.xlu0 %5554
      %5556 = vrot.lane.b32.xlu0 %v4893, 112
      %v5557 = vpop.permute.xlu0 %5556
      %5558 = vrot.lane.b32.xlu0 %v4898, 112
      %v5559 = vpop.permute.xlu0 %5558
      %5560 = vrot.lane.b32.xlu0 %v4903, 112
      %v5561 = vpop.permute.xlu0 %5560
      %5562 = vrot.lane.b32.xlu0 %v4908, 112
      %v5563 = vpop.permute.xlu0 %5562
      %5564 = vrot.lane.b32.xlu0 %v4913, 112
      %v5565 = vpop.permute.xlu0 %5564
      %5566 = vrot.lane.b32.xlu0 %v4918, 112
      %v5567 = vpop.permute.xlu0 %5566
      %5568 = vrot.lane.b32.xlu0 %v4923, 112
      %v5569 = vpop.permute.xlu0 %5568
      %5570 = vrot.lane.b32.xlu0 %v4928, 112
      %v5571 = vpop.permute.xlu0 %5570
      %5572 = vrot.lane.b32.xlu0 %v4933, 112
      %v5573 = vpop.permute.xlu0 %5572
      %5574 = vrot.lane.b32.xlu0 %v4938, 112
      %v5575 = vpop.permute.xlu0 %5574
      %5576 = vrot.lane.b32.xlu0 %v4943, 112
      %v5577 = vpop.permute.xlu0 %5576
      %5578 = vrot.lane.b32.xlu0 %v4948, 112
      %v5579 = vpop.permute.xlu0 %5578
      %5580 = vrot.lane.b32.xlu0 %v4953, 112
      %v5581 = vpop.permute.xlu0 %5580
      %5582 = vrot.lane.b32.xlu0 %v4878, 80
      %v5583 = vpop.permute.xlu0 %5582
      %5584 = vrot.lane.b32.xlu0 %v4883, 80
      %v5585 = vpop.permute.xlu0 %5584
      %5586 = vrot.lane.b32.xlu0 %v4888, 80
      %v5587 = vpop.permute.xlu0 %5586
      %5588 = vrot.lane.b32.xlu0 %v4893, 80
      %v5589 = vpop.permute.xlu0 %5588
      %5590 = vrot.lane.b32.xlu0 %v4898, 80
      %v5591 = vpop.permute.xlu0 %5590
      %5592 = vrot.lane.b32.xlu0 %v4903, 80
      %v5593 = vpop.permute.xlu0 %5592
      %5594 = vrot.lane.b32.xlu0 %v4908, 80
      %v5595 = vpop.permute.xlu0 %5594
      %5596 = vrot.lane.b32.xlu0 %v4913, 80
      %v5597 = vpop.permute.xlu0 %5596
      %5598 = vrot.lane.b32.xlu0 %v4918, 80
      %v5599 = vpop.permute.xlu0 %5598
      %5600 = vrot.lane.b32.xlu0 %v4923, 80
      %v5601 = vpop.permute.xlu0 %5600
      %5602 = vrot.lane.b32.xlu0 %v4928, 80
      %v5603 = vpop.permute.xlu0 %5602
      %5604 = vrot.lane.b32.xlu0 %v4933, 80
      %v5605 = vpop.permute.xlu0 %5604
      %5606 = vrot.lane.b32.xlu0 %v4938, 80
      %v5607 = vpop.permute.xlu0 %5606
      %5608 = vrot.lane.b32.xlu0 %v4943, 80
      %v5609 = vpop.permute.xlu0 %5608
      %5610 = vrot.lane.b32.xlu0 %v4948, 80
      %v5611 = vpop.permute.xlu0 %5610
      %5612 = vrot.lane.b32.xlu0 %v4953, 80
      %v5613 = vpop.permute.xlu0 %5612
      %v5614 = vsel %vm1924, %v5551, 0
      %v5616 = vsel %vm1924, %v5553, 0
      %v5618 = vsel %vm1924, %v5555, 0
      %v5620 = vsel %vm1924, %v5557, 0
      %v5622 = vsel %vm1924, %v5559, 0
      %v5624 = vsel %vm1924, %v5561, 0
      %v5626 = vsel %vm1924, %v5563, 0
      %v5628 = vsel %vm1924, %v5565, 0
      %v5630 = vsel %vm1924, %v5567, 0
      %v5632 = vsel %vm1924, %v5569, 0
      %v5634 = vsel %vm1924, %v5571, 0
      %v5636 = vsel %vm1924, %v5573, 0
      %v5638 = vsel %vm1924, %v5575, 0
      %v5640 = vsel %vm1924, %v5577, 0
      %v5642 = vsel %vm1924, %v5579, 0
      %v5644 = vsel %vm1924, %v5581, 0
      %v5646 = vsel %vm1924, %v5583, 0
      %v5648 = vsel %vm1924, %v5585, 0
      %v5650 = vsel %vm1924, %v5587, 0
      %v5652 = vsel %vm1924, %v5589, 0
      %v5654 = vsel %vm1924, %v5591, 0
      %v5656 = vsel %vm1924, %v5593, 0
      %v5658 = vsel %vm1924, %v5595, 0
      %v5660 = vsel %vm1924, %v5597, 0
      %v5662 = vsel %vm1924, %v5599, 0
      %v5664 = vsel %vm1924, %v5601, 0
      %v5666 = vsel %vm1924, %v5603, 0
      %v5668 = vsel %vm1924, %v5605, 0
      %v5670 = vsel %vm1924, %v5607, 0
      %v5672 = vsel %vm1924, %v5609, 0
      %v5674 = vsel %vm1924, %v5611, 0
      %v5676 = vsel %vm1924, %v5613, 0
      %5678 = vmatprep.subr.mxu0 0.0
      %5679 = vmatpush1.xpose.msra.mxu0 %v5646
      %5680 = vmatprep.subr.mxu0 0.0
      %5681 = vmatpush1.xpose.msra.mxu0 %v5648
      %5682 = vmatprep.subr.mxu0 0.0
      %5683 = vmatpush1.xpose.msra.mxu0 %v5650
      %5684 = vmatprep.subr.mxu0 0.0
      %5685 = vmatpush1.xpose.msra.mxu0 %v5652
      %5686 = vmatprep.subr.mxu0 0.0
      %5687 = vmatpush1.xpose.msra.mxu0 %v5654
      %5688 = vmatprep.subr.mxu0 0.0
      %5689 = vmatpush1.xpose.msra.mxu0 %v5656
      %5690 = vmatprep.subr.mxu0 0.0
      %5691 = vmatpush1.xpose.msra.mxu0 %v5658
      %5692 = vmatprep.subr.mxu0 0.0
      %5693 = vmatpush1.xpose.msra.mxu0 %v5660
      %5694 = vmatprep.subr.mxu0 0.0
      %5695 = vmatpush1.xpose.msra.mxu0 %v5662
      %5696 = vmatprep.subr.mxu0 0.0
      %5697 = vmatpush1.xpose.msra.mxu0 %v5664
      %5698 = vmatprep.subr.mxu0 0.0
      %5699 = vmatpush1.xpose.msra.mxu0 %v5666
      %5700 = vmatprep.subr.mxu0 0.0
      %5701 = vmatpush1.xpose.msra.mxu0 %v5668
      %5702 = vmatprep.subr.mxu0 0.0
      %5703 = vmatpush1.xpose.msra.mxu0 %v5670
      %5704 = vmatprep.subr.mxu0 0.0
      %5705 = vmatpush1.xpose.msra.mxu0 %v5672
      %5706 = vmatprep.subr.mxu0 0.0
      %5707 = vmatpush1.xpose.msra.mxu0 %v5674
      %5708 = vmatprep.subr.mxu0 0.0
      %5709 = vmatpush1.xpose.msra.mxu0 %v5676
      %5710 = vmatprep.subr.mxu0 0.0
      %5711 = vmatpush1.xpose.msra.mxu0 0.0
      %5712 = vmatprep.subr.mxu0 0.0
      %5713 = vmatpush1.xpose.msra.mxu0 0.0
      %5714 = vmatprep.subr.mxu0 0.0
      %5715 = vmatpush1.xpose.msra.mxu0 0.0
      %5716 = vmatprep.subr.mxu0 0.0
      %5717 = vmatpush1.xpose.msra.mxu0 0.0
      %5718 = vmatprep.subr.mxu0 0.0
      %5719 = vmatpush1.xpose.msra.mxu0 0.0
      %5720 = vmatprep.subr.mxu0 0.0
      %5721 = vmatpush1.xpose.msra.mxu0 0.0
      %5722 = vmatprep.subr.mxu0 0.0
      %5723 = vmatpush1.xpose.msra.mxu0 0.0
      %5724 = vmatprep.subr.mxu0 0.0
      %5725 = vmatpush1.xpose.msra.mxu0 0.0
      %5726 = vmatprep.subr.mxu0 0.0
      %5727 = vmatpush1.xpose.msra.mxu0 0.0
      %5728 = vmatprep.subr.mxu0 0.0
      %5729 = vmatpush1.xpose.msra.mxu0 0.0
      %5730 = vmatprep.subr.mxu0 0.0
      %5731 = vmatpush1.xpose.msra.mxu0 0.0
      %5732 = vmatprep.subr.mxu0 0.0
      %5733 = vmatpush1.xpose.msra.mxu0 0.0
      %5734 = vmatprep.subr.mxu0 0.0
      %5735 = vmatpush1.xpose.msra.mxu0 0.0
      %5736 = vmatprep.subr.mxu0 0.0
      %5737 = vmatpush1.xpose.msra.mxu0 0.0
      %5738 = vmatprep.subr.mxu0 0.0
      %5739 = vmatpush1.xpose.msra.mxu0 0.0
      %5740 = vmatprep.subr.mxu0 0.0
      %5741 = vmatpush1.xpose.msra.mxu0 0.0
      %5742 = vmatprep.mubr.f32.mxu0 0.0
      %5743 = vmatmul.mubr.f32.gmra.mrb[0].mxu0 %v5614
      %v5744 = vpop.f32.mrb[0].mxu0
      %v5745 = vadd.f32 %v833, %v5744
      %v5746 = vpop.f32.mrb[0].mxu0
      %5747 = vmatprep.mubr.f32.mxu0 0.0
      %5748 = vmatmul.mubr.f32.gmra.mrb[0].mxu0 %v5616
      %v5749 = vpop.f32.mrb[0].mxu0
      %v5750 = vadd.f32 %v834, %v5749
      %v5751 = vpop.f32.mrb[0].mxu0
      %5752 = vmatprep.mubr.f32.mxu0 0.0
      %5753 = vmatmul.mubr.f32.gmra.mrb[0].mxu0 %v5618
      %v5754 = vpop.f32.mrb[0].mxu0
      %v5755 = vadd.f32 %v835, %v5754
      %v5756 = vpop.f32.mrb[0].mxu0
      %5757 = vmatprep.mubr.f32.mxu0 0.0
      %5758 = vmatmul.mubr.f32.gmra.mrb[0].mxu0 %v5620
      %v5759 = vpop.f32.mrb[0].mxu0
      %v5760 = vadd.f32 %v836, %v5759
      %v5761 = vpop.f32.mrb[0].mxu0
      %5762 = vmatprep.mubr.f32.mxu0 0.0
      %5763 = vmatmul.mubr.f32.gmra.mrb[0].mxu0 %v5622
      %v5764 = vpop.f32.mrb[0].mxu0
      %v5765 = vadd.f32 %v837, %v5764
      %v5766 = vpop.f32.mrb[0].mxu0
      %5767 = vmatprep.mubr.f32.mxu0 0.0
      %5768 = vmatmul.mubr.f32.gmra.mrb[0].mxu0 %v5624
      %v5769 = vpop.f32.mrb[0].mxu0
      %v5770 = vadd.f32 %v838, %v5769
      %v5771 = vpop.f32.mrb[0].mxu0
      %5772 = vmatprep.mubr.f32.mxu0 0.0
      %5773 = vmatmul.mubr.f32.gmra.mrb[0].mxu0 %v5626
      %v5774 = vpop.f32.mrb[0].mxu0
      %v5775 = vadd.f32 %v839, %v5774
      %v5776 = vpop.f32.mrb[0].mxu0
      %5777 = vmatprep.mubr.f32.mxu0 0.0
      %5778 = vmatmul.mubr.f32.gmra.mrb[0].mxu0 %v5628
      %v5779 = vpop.f32.mrb[0].mxu0
      %v5780 = vadd.f32 %v840, %v5779
      %v5781 = vpop.f32.mrb[0].mxu0
      %5782 = vmatprep.mubr.f32.mxu0 0.0
      %5783 = vmatmul.mubr.f32.gmra.mrb[0].mxu0 %v5630
      %v5784 = vpop.f32.mrb[0].mxu0
      %v5785 = vadd.f32 %v841, %v5784
      %v5786 = vpop.f32.mrb[0].mxu0
      %5787 = vmatprep.mubr.f32.mxu0 0.0
      %5788 = vmatmul.mubr.f32.gmra.mrb[0].mxu0 %v5632
      %v5789 = vpop.f32.mrb[0].mxu0
      %v5790 = vadd.f32 %v842, %v5789
      %v5791 = vpop.f32.mrb[0].mxu0
      %5792 = vmatprep.mubr.f32.mxu0 0.0
      %5793 = vmatmul.mubr.f32.gmra.mrb[0].mxu0 %v5634
      %v5794 = vpop.f32.mrb[0].mxu0
      %v5795 = vadd.f32 %v843, %v5794
      %v5796 = vpop.f32.mrb[0].mxu0
      %5797 = vmatprep.mubr.f32.mxu0 0.0
      %5798 = vmatmul.mubr.f32.gmra.mrb[0].mxu0 %v5636
      %v5799 = vpop.f32.mrb[0].mxu0
      %v5800 = vadd.f32 %v844, %v5799
      %v5801 = vpop.f32.mrb[0].mxu0
      %5802 = vmatprep.mubr.f32.mxu0 0.0
      %5803 = vmatmul.mubr.f32.gmra.mrb[0].mxu0 %v5638
      %v5804 = vpop.f32.mrb[0].mxu0
      %v5805 = vadd.f32 %v845, %v5804
      %v5806 = vpop.f32.mrb[0].mxu0
      %5807 = vmatprep.mubr.f32.mxu0 0.0
      %5808 = vmatmul.mubr.f32.gmra.mrb[0].mxu0 %v5640
      %v5809 = vpop.f32.mrb[0].mxu0
      %v5810 = vadd.f32 %v846, %v5809
      %v5811 = vpop.f32.mrb[0].mxu0
      %5812 = vmatprep.mubr.f32.mxu0 0.0
      %5813 = vmatmul.mubr.f32.gmra.mrb[0].mxu0 %v5642
      %v5814 = vpop.f32.mrb[0].mxu0
      %v5815 = vadd.f32 %v847, %v5814
      %v5816 = vpop.f32.mrb[0].mxu0
      %5817 = vmatprep.mubr.f32.mxu0 0.0
      %5818 = vmatmul.mubr.f32.gmra.mrb[0].mxu0 %v5644
      %v5819 = vpop.f32.mrb[0].mxu0
      %v5820 = vadd.f32 %v848, %v5819
      %v5821 = vpop.f32.mrb[0].mxu0
      %5822 = vdwg.mxu0
      %5823 = vmax.xlane.f32.xlu0 %v5745
      %v5824 = vpop.xlane.xlu0 %5823
      %5825 = vmax.xlane.f32.xlu0 %v5750
      %v5826 = vpop.xlane.xlu0 %5825
      %5827 = vmax.xlane.f32.xlu0 %v5755
      %v5828 = vpop.xlane.xlu0 %5827
      %5829 = vmax.xlane.f32.xlu0 %v5760
      %v5830 = vpop.xlane.xlu0 %5829
      %5831 = vmax.xlane.f32.xlu0 %v5765
      %v5832 = vpop.xlane.xlu0 %5831
      %5833 = vmax.xlane.f32.xlu0 %v5770
      %v5834 = vpop.xlane.xlu0 %5833
      %5835 = vmax.xlane.f32.xlu0 %v5775
      %v5836 = vpop.xlane.xlu0 %5835
      %5837 = vmax.xlane.f32.xlu0 %v5780
      %v5838 = vpop.xlane.xlu0 %5837
      %5839 = vmax.xlane.f32.xlu0 %v5785
      %v5840 = vpop.xlane.xlu0 %5839
      %5841 = vmax.xlane.f32.xlu0 %v5790
      %v5842 = vpop.xlane.xlu0 %5841
      %5843 = vmax.xlane.f32.xlu0 %v5795
      %v5844 = vpop.xlane.xlu0 %5843
      %5845 = vmax.xlane.f32.xlu0 %v5800
      %v5846 = vpop.xlane.xlu0 %5845
      %5847 = vmax.xlane.f32.xlu0 %v5805
      %v5848 = vpop.xlane.xlu0 %5847
      %5849 = vmax.xlane.f32.xlu0 %v5810
      %v5850 = vpop.xlane.xlu0 %5849
      %5851 = vmax.xlane.f32.xlu0 %v5815
      %v5852 = vpop.xlane.xlu0 %5851
      %5853 = vmax.xlane.f32.xlu0 %v5820
      %v5854 = vpop.xlane.xlu0 %5853
      %v5855 = vsub.f32 %v5745, %v5824
      %v5856 = vsub.f32 %v5750, %v5826
      %v5857 = vsub.f32 %v5755, %v5828
      %v5858 = vsub.f32 %v5760, %v5830
      %v5859 = vsub.f32 %v5765, %v5832
      %v5860 = vsub.f32 %v5770, %v5834
      %v5861 = vsub.f32 %v5775, %v5836
      %v5862 = vsub.f32 %v5780, %v5838
      %v5863 = vsub.f32 %v5785, %v5840
      %v5864 = vsub.f32 %v5790, %v5842
      %v5865 = vsub.f32 %v5795, %v5844
      %v5866 = vsub.f32 %v5800, %v5846
      %v5867 = vsub.f32 %v5805, %v5848
      %v5868 = vsub.f32 %v5810, %v5850
      %v5869 = vsub.f32 %v5815, %v5852
      %v5870 = vsub.f32 %v5820, %v5854
      %v5871 = vmul.f32 %v5855, 1.442695
      %v5872 = vpow.pop %v5871
      %v5873 = vmul.f32 %v5856, 1.442695
      %v5874 = vpow.pop %v5873
      %v5875 = vmul.f32 %v5857, 1.442695
      %v5876 = vpow.pop %v5875
      %v5877 = vmul.f32 %v5858, 1.442695
      %v5878 = vpow.pop %v5877
      %v5879 = vmul.f32 %v5859, 1.442695
      %v5880 = vpow.pop %v5879
      %v5881 = vmul.f32 %v5860, 1.442695
      %v5882 = vpow.pop %v5881
      %v5883 = vmul.f32 %v5861, 1.442695
      %v5884 = vpow.pop %v5883
      %v5885 = vmul.f32 %v5862, 1.442695
      %v5886 = vpow.pop %v5885
      %v5887 = vmul.f32 %v5863, 1.442695
      %v5888 = vpow.pop %v5887
      %v5889 = vmul.f32 %v5864, 1.442695
      %v5890 = vpow.pop %v5889
      %v5891 = vmul.f32 %v5865, 1.442695
      %v5892 = vpow.pop %v5891
      %v5893 = vmul.f32 %v5866, 1.442695
      %v5894 = vpow.pop %v5893
      %v5895 = vmul.f32 %v5867, 1.442695
      %v5896 = vpow.pop %v5895
      %v5897 = vmul.f32 %v5868, 1.442695
      %v5898 = vpow.pop %v5897
      %v5899 = vmul.f32 %v5869, 1.442695
      %v5900 = vpow.pop %v5899
      %v5901 = vmul.f32 %v5870, 1.442695
      %v5902 = vpow.pop %v5901
      %5903 = vadd.xlane.f32.xlu0 %v5872
      %v5904 = vpop.xlane.xlu0 %5903
      %5905 = vadd.xlane.f32.xlu0 %v5874
      %v5906 = vpop.xlane.xlu0 %5905
      %5907 = vadd.xlane.f32.xlu0 %v5876
      %v5908 = vpop.xlane.xlu0 %5907
      %5909 = vadd.xlane.f32.xlu0 %v5878
      %v5910 = vpop.xlane.xlu0 %5909
      %5911 = vadd.xlane.f32.xlu0 %v5880
      %v5912 = vpop.xlane.xlu0 %5911
      %5913 = vadd.xlane.f32.xlu0 %v5882
      %v5914 = vpop.xlane.xlu0 %5913
      %5915 = vadd.xlane.f32.xlu0 %v5884
      %v5916 = vpop.xlane.xlu0 %5915
      %5917 = vadd.xlane.f32.xlu0 %v5886
      %v5918 = vpop.xlane.xlu0 %5917
      %5919 = vadd.xlane.f32.xlu0 %v5888
      %v5920 = vpop.xlane.xlu0 %5919
      %5921 = vadd.xlane.f32.xlu0 %v5890
      %v5922 = vpop.xlane.xlu0 %5921
      %5923 = vadd.xlane.f32.xlu0 %v5892
      %v5924 = vpop.xlane.xlu0 %5923
      %5925 = vadd.xlane.f32.xlu0 %v5894
      %v5926 = vpop.xlane.xlu0 %5925
      %5927 = vadd.xlane.f32.xlu0 %v5896
      %v5928 = vpop.xlane.xlu0 %5927
      %5929 = vadd.xlane.f32.xlu0 %v5898
      %v5930 = vpop.xlane.xlu0 %5929
      %5931 = vadd.xlane.f32.xlu0 %v5900
      %v5932 = vpop.xlane.xlu0 %5931
      %5933 = vadd.xlane.f32.xlu0 %v5902
      %v5934 = vpop.xlane.xlu0 %5933
      %v5935 = vrcp.pop %v5904
      %v5936 = vmul.f32 %v5872, %v5935
      %v5937 = vrcp.pop %v5906
      %v5938 = vmul.f32 %v5874, %v5937
      %v5939 = vrcp.pop %v5908
      %v5940 = vmul.f32 %v5876, %v5939
      %v5941 = vrcp.pop %v5910
      %v5942 = vmul.f32 %v5878, %v5941
      %v5943 = vrcp.pop %v5912
      %v5944 = vmul.f32 %v5880, %v5943
      %v5945 = vrcp.pop %v5914
      %v5946 = vmul.f32 %v5882, %v5945
      %v5947 = vrcp.pop %v5916
      %v5948 = vmul.f32 %v5884, %v5947
      %v5949 = vrcp.pop %v5918
      %v5950 = vmul.f32 %v5886, %v5949
      %v5951 = vrcp.pop %v5920
      %v5952 = vmul.f32 %v5888, %v5951
      %v5953 = vrcp.pop %v5922
      %v5954 = vmul.f32 %v5890, %v5953
      %v5955 = vrcp.pop %v5924
      %v5956 = vmul.f32 %v5892, %v5955
      %v5957 = vrcp.pop %v5926
      %v5958 = vmul.f32 %v5894, %v5957
      %v5959 = vrcp.pop %v5928
      %v5960 = vmul.f32 %v5896, %v5959
      %v5961 = vrcp.pop %v5930
      %v5962 = vmul.f32 %v5898, %v5961
      %v5963 = vrcp.pop %v5932
      %v5964 = vmul.f32 %v5900, %v5963
      %v5965 = vrcp.pop %v5934
      %v5966 = vmul.f32 %v5902, %v5965
      %5967 = vrot.lane.b32.xlu0 %v4878, 48
      %v5968 = vpop.permute.xlu0 %5967
      %5969 = vrot.lane.b32.xlu0 %v4883, 48
      %v5970 = vpop.permute.xlu0 %5969
      %5971 = vrot.lane.b32.xlu0 %v4888, 48
      %v5972 = vpop.permute.xlu0 %5971
      %5973 = vrot.lane.b32.xlu0 %v4893, 48
      %v5974 = vpop.permute.xlu0 %5973
      %5975 = vrot.lane.b32.xlu0 %v4898, 48
      %v5976 = vpop.permute.xlu0 %5975
      %5977 = vrot.lane.b32.xlu0 %v4903, 48
      %v5978 = vpop.permute.xlu0 %5977
      %5979 = vrot.lane.b32.xlu0 %v4908, 48
      %v5980 = vpop.permute.xlu0 %5979
      %5981 = vrot.lane.b32.xlu0 %v4913, 48
      %v5982 = vpop.permute.xlu0 %5981
      %5983 = vrot.lane.b32.xlu0 %v4918, 48
      %v5984 = vpop.permute.xlu0 %5983
      %5985 = vrot.lane.b32.xlu0 %v4923, 48
      %v5986 = vpop.permute.xlu0 %5985
      %5987 = vrot.lane.b32.xlu0 %v4928, 48
      %v5988 = vpop.permute.xlu0 %5987
      %5989 = vrot.lane.b32.xlu0 %v4933, 48
      %v5990 = vpop.permute.xlu0 %5989
      %5991 = vrot.lane.b32.xlu0 %v4938, 48
      %v5992 = vpop.permute.xlu0 %5991
      %5993 = vrot.lane.b32.xlu0 %v4943, 48
      %v5994 = vpop.permute.xlu0 %5993
      %5995 = vrot.lane.b32.xlu0 %v4948, 48
      %v5996 = vpop.permute.xlu0 %5995
      %5997 = vrot.lane.b32.xlu0 %v4953, 48
      %v5998 = vpop.permute.xlu0 %5997
      %6015 = vmatprep.subr.mxu0 0.0
      %6016 = vmatpush1.msra.mxu0 %v5968
      %6017 = vmatprep.subr.mxu0 0.0
      %6018 = vmatpush1.msra.mxu0 %v5970
      %6019 = vmatprep.subr.mxu0 0.0
      %6020 = vmatpush1.msra.mxu0 %v5972
      %6021 = vmatprep.subr.mxu0 0.0
      %6022 = vmatpush1.msra.mxu0 %v5974
      %6023 = vmatprep.subr.mxu0 0.0
      %6024 = vmatpush1.msra.mxu0 %v5976
      %6025 = vmatprep.subr.mxu0 0.0
      %6026 = vmatpush1.msra.mxu0 %v5978
      %6027 = vmatprep.subr.mxu0 0.0
      %6028 = vmatpush1.msra.mxu0 %v5980
      %6029 = vmatprep.subr.mxu0 0.0
      %6030 = vmatpush1.msra.mxu0 %v5982
      %6031 = vmatprep.subr.mxu0 0.0
      %6032 = vmatpush1.msra.mxu0 %v5984
      %6033 = vmatprep.subr.mxu0 0.0
      %6034 = vmatpush1.msra.mxu0 %v5986
      %6035 = vmatprep.subr.mxu0 0.0
      %6036 = vmatpush1.msra.mxu0 %v5988
      %6037 = vmatprep.subr.mxu0 0.0
      %6038 = vmatpush1.msra.mxu0 %v5990
      %6039 = vmatprep.subr.mxu0 0.0
      %6040 = vmatpush1.msra.mxu0 %v5992
      %6041 = vmatprep.subr.mxu0 0.0
      %6042 = vmatpush1.msra.mxu0 %v5994
      %6043 = vmatprep.subr.mxu0 0.0
      %6044 = vmatpush1.msra.mxu0 %v5996
      %6045 = vmatprep.subr.mxu0 0.0
      %6046 = vmatpush1.msra.mxu0 %v5998
      %6047 = vmatprep.subr.mxu0 0.0
      %6048 = vmatpush1.msra.mxu0 0.0
      %6049 = vmatprep.subr.mxu0 0.0
      %6050 = vmatpush1.msra.mxu0 0.0
      %6051 = vmatprep.subr.mxu0 0.0
      %6052 = vmatpush1.msra.mxu0 0.0
      %6053 = vmatprep.subr.mxu0 0.0
      %6054 = vmatpush1.msra.mxu0 0.0
      %6055 = vmatprep.subr.mxu0 0.0
      %6056 = vmatpush1.msra.mxu0 0.0
      %6057 = vmatprep.subr.mxu0 0.0
      %6058 = vmatpush1.msra.mxu0 0.0
      %6059 = vmatprep.subr.mxu0 0.0
      %6060 = vmatpush1.msra.mxu0 0.0
      %6061 = vmatprep.subr.mxu0 0.0
      %6062 = vmatpush1.msra.mxu0 0.0
      %6063 = vmatprep.subr.mxu0 0.0
      %6064 = vmatpush1.msra.mxu0 0.0
      %6065 = vmatprep.subr.mxu0 0.0
      %6066 = vmatpush1.msra.mxu0 0.0
      %6067 = vmatprep.subr.mxu0 0.0
      %6068 = vmatpush1.msra.mxu0 0.0
      %6069 = vmatprep.subr.mxu0 0.0
      %6070 = vmatpush1.msra.mxu0 0.0
      %6071 = vmatprep.subr.mxu0 0.0
      %6072 = vmatpush1.msra.mxu0 0.0
      %6073 = vmatprep.subr.mxu0 0.0
      %6074 = vmatpush1.msra.mxu0 0.0
      %6075 = vmatprep.subr.mxu0 0.0
      %6076 = vmatpush1.msra.mxu0 0.0
      %6077 = vmatprep.subr.mxu0 0.0
      %6078 = vmatpush1.msra.mxu0 0.0
      %6079 = vmatprep.mubr.f32.mxu0 0.0
      %6080 = vmatmul.mubr.f32.gmra.mrb[0].mxu0 %v5936
      %v6081 = vpop.f32.mrb[0].mxu0
      %v6082 = vadd.f32 0.0, %v6081
      %v6083 = vpop.f32.mrb[0].mxu0
      %6084 = vmatprep.mubr.f32.mxu0 0.0
      %6085 = vmatmul.mubr.f32.gmra.mrb[0].mxu0 %v5938
      %v6086 = vpop.f32.mrb[0].mxu0
      %v6087 = vadd.f32 0.0, %v6086
      %v6088 = vpop.f32.mrb[0].mxu0
      %6089 = vmatprep.mubr.f32.mxu0 0.0
      %6090 = vmatmul.mubr.f32.gmra.mrb[0].mxu0 %v5940
      %v6091 = vpop.f32.mrb[0].mxu0
      %v6092 = vadd.f32 0.0, %v6091
      %v6093 = vpop.f32.mrb[0].mxu0
      %6094 = vmatprep.mubr.f32.mxu0 0.0
      %6095 = vmatmul.mubr.f32.gmra.mrb[0].mxu0 %v5942
      %v6096 = vpop.f32.mrb[0].mxu0
      %v6097 = vadd.f32 0.0, %v6096
      %v6098 = vpop.f32.mrb[0].mxu0
      %6099 = vmatprep.mubr.f32.mxu0 0.0
      %6100 = vmatmul.mubr.f32.gmra.mrb[0].mxu0 %v5944
      %v6101 = vpop.f32.mrb[0].mxu0
      %v6102 = vadd.f32 0.0, %v6101
      %v6103 = vpop.f32.mrb[0].mxu0
      %6104 = vmatprep.mubr.f32.mxu0 0.0
      %6105 = vmatmul.mubr.f32.gmra.mrb[0].mxu0 %v5946
      %v6106 = vpop.f32.mrb[0].mxu0
      %v6107 = vadd.f32 0.0, %v6106
      %v6108 = vpop.f32.mrb[0].mxu0
      %6109 = vmatprep.mubr.f32.mxu0 0.0
      %6110 = vmatmul.mubr.f32.gmra.mrb[0].mxu0 %v5948
      %v6111 = vpop.f32.mrb[0].mxu0
      %v6112 = vadd.f32 0.0, %v6111
      %v6113 = vpop.f32.mrb[0].mxu0
      %6114 = vmatprep.mubr.f32.mxu0 0.0
      %6115 = vmatmul.mubr.f32.gmra.mrb[0].mxu0 %v5950
      %v6116 = vpop.f32.mrb[0].mxu0
      %v6117 = vadd.f32 0.0, %v6116
      %v6118 = vpop.f32.mrb[0].mxu0
      %6119 = vmatprep.mubr.f32.mxu0 0.0
      %6120 = vmatmul.mubr.f32.gmra.mrb[0].mxu0 %v5952
      %v6121 = vpop.f32.mrb[0].mxu0
      %v6122 = vadd.f32 0.0, %v6121
      %v6123 = vpop.f32.mrb[0].mxu0
      %6124 = vmatprep.mubr.f32.mxu0 0.0
      %6125 = vmatmul.mubr.f32.gmra.mrb[0].mxu0 %v5954
      %v6126 = vpop.f32.mrb[0].mxu0
      %v6127 = vadd.f32 0.0, %v6126
      %v6128 = vpop.f32.mrb[0].mxu0
      %6129 = vmatprep.mubr.f32.mxu0 0.0
      %6130 = vmatmul.mubr.f32.gmra.mrb[0].mxu0 %v5956
      %v6131 = vpop.f32.mrb[0].mxu0
      %v6132 = vadd.f32 0.0, %v6131
      %v6133 = vpop.f32.mrb[0].mxu0
      %6134 = vmatprep.mubr.f32.mxu0 0.0
      %6135 = vmatmul.mubr.f32.gmra.mrb[0].mxu0 %v5958
      %v6136 = vpop.f32.mrb[0].mxu0
      %v6137 = vadd.f32 0.0, %v6136
      %v6138 = vpop.f32.mrb[0].mxu0
      %6139 = vmatprep.mubr.f32.mxu0 0.0
      %6140 = vmatmul.mubr.f32.gmra.mrb[0].mxu0 %v5960
      %v6141 = vpop.f32.mrb[0].mxu0
      %v6142 = vadd.f32 0.0, %v6141
      %v6143 = vpop.f32.mrb[0].mxu0
      %6144 = vmatprep.mubr.f32.mxu0 0.0
      %6145 = vmatmul.mubr.f32.gmra.mrb[0].mxu0 %v5962
      %v6146 = vpop.f32.mrb[0].mxu0
      %v6147 = vadd.f32 0.0, %v6146
      %v6148 = vpop.f32.mrb[0].mxu0
      %6149 = vmatprep.mubr.f32.mxu0 0.0
      %6150 = vmatmul.mubr.f32.gmra.mrb[0].mxu0 %v5964
      %v6151 = vpop.f32.mrb[0].mxu0
      %v6152 = vadd.f32 0.0, %v6151
      %v6153 = vpop.f32.mrb[0].mxu0
      %6154 = vmatprep.mubr.f32.mxu0 0.0
      %6155 = vmatmul.mubr.f32.gmra.mrb[0].mxu0 %v5966
      %v6156 = vpop.f32.mrb[0].mxu0
      %v6157 = vadd.f32 0.0, %v6156
      %v6158 = vpop.f32.mrb[0].mxu0
      %6159 = vdwg.mxu0
      %6176 = vrot.lane.b32.xlu0 %v6082, 16
      %v6177 = vpop.permute.xlu0 %6176
      %6178 = vrot.lane.b32.xlu0 %v6087, 16
      %v6179 = vpop.permute.xlu0 %6178
      %6180 = vrot.lane.b32.xlu0 %v6092, 16
      %v6181 = vpop.permute.xlu0 %6180
      %6182 = vrot.lane.b32.xlu0 %v6097, 16
      %v6183 = vpop.permute.xlu0 %6182
      %6184 = vrot.lane.b32.xlu0 %v6102, 16
      %v6185 = vpop.permute.xlu0 %6184
      %6186 = vrot.lane.b32.xlu0 %v6107, 16
      %v6187 = vpop.permute.xlu0 %6186
      %6188 = vrot.lane.b32.xlu0 %v6112, 16
      %v6189 = vpop.permute.xlu0 %6188
      %6190 = vrot.lane.b32.xlu0 %v6117, 16
      %v6191 = vpop.permute.xlu0 %6190
      %6192 = vrot.lane.b32.xlu0 %v6122, 16
      %v6193 = vpop.permute.xlu0 %6192
      %6194 = vrot.lane.b32.xlu0 %v6127, 16
      %v6195 = vpop.permute.xlu0 %6194
      %6196 = vrot.lane.b32.xlu0 %v6132, 16
      %v6197 = vpop.permute.xlu0 %6196
      %6198 = vrot.lane.b32.xlu0 %v6137, 16
      %v6199 = vpop.permute.xlu0 %6198
      %6200 = vrot.lane.b32.xlu0 %v6142, 16
      %v6201 = vpop.permute.xlu0 %6200
      %6202 = vrot.lane.b32.xlu0 %v6147, 16
      %v6203 = vpop.permute.xlu0 %6202
      %6204 = vrot.lane.b32.xlu0 %v6152, 16
      %v6205 = vpop.permute.xlu0 %6204
      %6206 = vrot.lane.b32.xlu0 %v6157, 16
      %v6207 = vpop.permute.xlu0 %6206
      %v6224 = vsel %vm1924, %v5472, %v6177
      %v6225 = vsel %vm1924, %v5477, %v6179
      %v6226 = vsel %vm1924, %v5482, %v6181
      %v6227 = vsel %vm1924, %v5487, %v6183
      %v6228 = vsel %vm1924, %v5492, %v6185
      %v6229 = vsel %vm1924, %v5497, %v6187
      %v6230 = vsel %vm1924, %v5502, %v6189
      %v6231 = vsel %vm1924, %v5507, %v6191
      %v6232 = vsel %vm1924, %v5512, %v6193
      %v6233 = vsel %vm1924, %v5517, %v6195
      %v6234 = vsel %vm1924, %v5522, %v6197
      %v6235 = vsel %vm1924, %v5527, %v6199
      %v6236 = vsel %vm1924, %v5532, %v6201
      %v6237 = vsel %vm1924, %v5537, %v6203
      %v6238 = vsel %vm1924, %v5542, %v6205
      %v6239 = vsel %vm1924, %v5547, %v6207
      %s6240 = scalar_lea.vmem %s10, 32
      %v6241 = vld [vmem:[%s6240] sm:$0xff]
      %v6242 = vld [vmem:[%s6240 + $0x8] sm:$0xff]
      %v6243 = vld [vmem:[%s6240 + $0x10] sm:$0xff]
      %v6244 = vld [vmem:[%s6240 + $0x18] sm:$0xff]
      %s6245 = scalar_lea.vmem %s11, 1
      %v6246 = vld [vmem:[%s6245] sm:$0x1]
      %v6248 = vlaneseq
      %v6249 = vshrl.u32 %v6248, 7
      %v6250 = vsub.s32 0, %v6249
      %v6251 = vrot.slane %v6246, %v6250
      %v6254 = vsel %vm1418, %v6224, 0
      %v6257 = vsel %vm1418, %v6225, 0
      %v6260 = vsel %vm1418, %v6226, 0
      %v6263 = vsel %vm1418, %v6227, 0
      %v6266 = vsel %vm1418, %v6228, 0
      %v6269 = vsel %vm1418, %v6229, 0
      %v6272 = vsel %vm1418, %v6230, 0
      %v6275 = vsel %vm1418, %v6231, 0
      %v6278 = vsel %vm1418, %v6232, 0
      %v6281 = vsel %vm1418, %v6233, 0
      %v6284 = vsel %vm1418, %v6234, 0
      %v6287 = vsel %vm1418, %v6235, 0
      %v6290 = vsel %vm1418, %v6236, 0
      %v6293 = vsel %vm1418, %v6237, 0
      %v6296 = vsel %vm1418, %v6238, 0
      %v6299 = vsel %vm1418, %v6239, 0
      %6301 = vmatprep.subr.mxu0 0.0
      %6302 = vmatpush1.msra.mxu0 %v6241
      %6303 = vmatprep.subr.mxu0 0.0
      %6304 = vmatpush1.msra.mxu0 %v6242
      %6305 = vmatprep.subr.mxu0 0.0
      %6306 = vmatpush1.msra.mxu0 %v6243
      %6307 = vmatprep.subr.mxu0 0.0
      %6308 = vmatpush1.msra.mxu0 %v6244
      %6309 = vmatprep.subr.mxu0 0.0
      %6310 = vmatpush1.msra.mxu0 0.0
      %6311 = vmatprep.subr.mxu0 0.0
      %6312 = vmatpush1.msra.mxu0 0.0
      %6313 = vmatprep.subr.mxu0 0.0
      %6314 = vmatpush1.msra.mxu0 0.0
      %6315 = vmatprep.subr.mxu0 0.0
      %6316 = vmatpush1.msra.mxu0 0.0
      %6317 = vmatprep.subr.mxu0 0.0
      %6318 = vmatpush1.msra.mxu0 0.0
      %6319 = vmatprep.subr.mxu0 0.0
      %6320 = vmatpush1.msra.mxu0 0.0
      %6321 = vmatprep.subr.mxu0 0.0
      %6322 = vmatpush1.msra.mxu0 0.0
      %6323 = vmatprep.subr.mxu0 0.0
      %6324 = vmatpush1.msra.mxu0 0.0
      %6325 = vmatprep.subr.mxu0 0.0
      %6326 = vmatpush1.msra.mxu0 0.0
      %6327 = vmatprep.subr.mxu0 0.0
      %6328 = vmatpush1.msra.mxu0 0.0
      %6329 = vmatprep.subr.mxu0 0.0
      %6330 = vmatpush1.msra.mxu0 0.0
      %6331 = vmatprep.subr.mxu0 0.0
      %6332 = vmatpush1.msra.mxu0 0.0
      %6333 = vmatprep.subr.mxu0 0.0
      %6334 = vmatpush1.msra.mxu0 0.0
      %6335 = vmatprep.subr.mxu0 0.0
      %6336 = vmatpush1.msra.mxu0 0.0
      %6337 = vmatprep.subr.mxu0 0.0
      %6338 = vmatpush1.msra.mxu0 0.0
      %6339 = vmatprep.subr.mxu0 0.0
      %6340 = vmatpush1.msra.mxu0 0.0
      %6341 = vmatprep.subr.mxu0 0.0
      %6342 = vmatpush1.msra.mxu0 0.0
      %6343 = vmatprep.subr.mxu0 0.0
      %6344 = vmatpush1.msra.mxu0 0.0
      %6345 = vmatprep.subr.mxu0 0.0
      %6346 = vmatpush1.msra.mxu0 0.0
      %6347 = vmatprep.subr.mxu0 0.0
      %6348 = vmatpush1.msra.mxu0 0.0
      %6349 = vmatprep.subr.mxu0 0.0
      %6350 = vmatpush1.msra.mxu0 0.0
      %6351 = vmatprep.subr.mxu0 0.0
      %6352 = vmatpush1.msra.mxu0 0.0
      %6353 = vmatprep.subr.mxu0 0.0
      %6354 = vmatpush1.msra.mxu0 0.0
      %6355 = vmatprep.subr.mxu0 0.0
      %6356 = vmatpush1.msra.mxu0 0.0
      %6357 = vmatprep.subr.mxu0 0.0
      %6358 = vmatpush1.msra.mxu0 0.0
      %6359 = vmatprep.subr.mxu0 0.0
      %6360 = vmatpush1.msra.mxu0 0.0
      %6361 = vmatprep.subr.mxu0 0.0
      %6362 = vmatpush1.msra.mxu0 0.0
      %6363 = vmatprep.subr.mxu0 0.0
      %6364 = vmatpush1.msra.mxu0 0.0
      %6365 = vmatprep.mubr.f32.mxu0 0.0
      %6366 = vmatmul.mubr.f32.gmra.mrb[0].mxu0 %v6254
      %v6367 = vpop.f32.mrb[0].mxu0
      %v6368 = vadd.f32 %v6251, %v6367
      %v6369 = vpop.f32.mrb[0].mxu0
      %6370 = vmatprep.mubr.f32.mxu0 0.0
      %6371 = vmatmul.mubr.f32.gmra.mrb[0].mxu0 %v6257
      %v6372 = vpop.f32.mrb[0].mxu0
      %v6373 = vadd.f32 %v6251, %v6372
      %v6374 = vpop.f32.mrb[0].mxu0
      %6375 = vmatprep.mubr.f32.mxu0 0.0
      %6376 = vmatmul.mubr.f32.gmra.mrb[0].mxu0 %v6260
      %v6377 = vpop.f32.mrb[0].mxu0
      %v6378 = vadd.f32 %v6251, %v6377
      %v6379 = vpop.f32.mrb[0].mxu0
      %6380 = vmatprep.mubr.f32.mxu0 0.0
      %6381 = vmatmul.mubr.f32.gmra.mrb[0].mxu0 %v6263
      %v6382 = vpop.f32.mrb[0].mxu0
      %v6383 = vadd.f32 %v6251, %v6382
      %v6384 = vpop.f32.mrb[0].mxu0
      %6385 = vmatprep.mubr.f32.mxu0 0.0
      %6386 = vmatmul.mubr.f32.gmra.mrb[0].mxu0 %v6266
      %v6387 = vpop.f32.mrb[0].mxu0
      %v6388 = vadd.f32 %v6251, %v6387
      %v6389 = vpop.f32.mrb[0].mxu0
      %6390 = vmatprep.mubr.f32.mxu0 0.0
      %6391 = vmatmul.mubr.f32.gmra.mrb[0].mxu0 %v6269
      %v6392 = vpop.f32.mrb[0].mxu0
      %v6393 = vadd.f32 %v6251, %v6392
      %v6394 = vpop.f32.mrb[0].mxu0
      %6395 = vmatprep.mubr.f32.mxu0 0.0
      %6396 = vmatmul.mubr.f32.gmra.mrb[0].mxu0 %v6272
      %v6397 = vpop.f32.mrb[0].mxu0
      %v6398 = vadd.f32 %v6251, %v6397
      %v6399 = vpop.f32.mrb[0].mxu0
      %6400 = vmatprep.mubr.f32.mxu0 0.0
      %6401 = vmatmul.mubr.f32.gmra.mrb[0].mxu0 %v6275
      %v6402 = vpop.f32.mrb[0].mxu0
      %v6403 = vadd.f32 %v6251, %v6402
      %v6404 = vpop.f32.mrb[0].mxu0
      %6405 = vmatprep.mubr.f32.mxu0 0.0
      %6406 = vmatmul.mubr.f32.gmra.mrb[0].mxu0 %v6278
      %v6407 = vpop.f32.mrb[0].mxu0
      %v6408 = vadd.f32 %v6251, %v6407
      %v6409 = vpop.f32.mrb[0].mxu0
      %6410 = vmatprep.mubr.f32.mxu0 0.0
      %6411 = vmatmul.mubr.f32.gmra.mrb[0].mxu0 %v6281
      %v6412 = vpop.f32.mrb[0].mxu0
      %v6413 = vadd.f32 %v6251, %v6412
      %v6414 = vpop.f32.mrb[0].mxu0
      %6415 = vmatprep.mubr.f32.mxu0 0.0
      %6416 = vmatmul.mubr.f32.gmra.mrb[0].mxu0 %v6284
      %v6417 = vpop.f32.mrb[0].mxu0
      %v6418 = vadd.f32 %v6251, %v6417
      %v6419 = vpop.f32.mrb[0].mxu0
      %6420 = vmatprep.mubr.f32.mxu0 0.0
      %6421 = vmatmul.mubr.f32.gmra.mrb[0].mxu0 %v6287
      %v6422 = vpop.f32.mrb[0].mxu0
      %v6423 = vadd.f32 %v6251, %v6422
      %v6424 = vpop.f32.mrb[0].mxu0
      %6425 = vmatprep.mubr.f32.mxu0 0.0
      %6426 = vmatmul.mubr.f32.gmra.mrb[0].mxu0 %v6290
      %v6427 = vpop.f32.mrb[0].mxu0
      %v6428 = vadd.f32 %v6251, %v6427
      %v6429 = vpop.f32.mrb[0].mxu0
      %6430 = vmatprep.mubr.f32.mxu0 0.0
      %6431 = vmatmul.mubr.f32.gmra.mrb[0].mxu0 %v6293
      %v6432 = vpop.f32.mrb[0].mxu0
      %v6433 = vadd.f32 %v6251, %v6432
      %v6434 = vpop.f32.mrb[0].mxu0
      %6435 = vmatprep.mubr.f32.mxu0 0.0
      %6436 = vmatmul.mubr.f32.gmra.mrb[0].mxu0 %v6296
      %v6437 = vpop.f32.mrb[0].mxu0
      %v6438 = vadd.f32 %v6251, %v6437
      %v6439 = vpop.f32.mrb[0].mxu0
      %6440 = vmatprep.mubr.f32.mxu0 0.0
      %6441 = vmatmul.mubr.f32.gmra.mrb[0].mxu0 %v6299
      %v6442 = vpop.f32.mrb[0].mxu0
      %v6443 = vadd.f32 %v6251, %v6442
      %v6444 = vpop.f32.mrb[0].mxu0
      %6445 = vdwg.mxu0
      %v6446 = vadd.f32 %v4734, %v6368
      %v6447 = vadd.f32 %v4735, %v6373
      %v6448 = vadd.f32 %v4736, %v6378
      %v6449 = vadd.f32 %v4737, %v6383
      %v6450 = vadd.f32 %v4738, %v6388
      %v6451 = vadd.f32 %v4739, %v6393
      %v6452 = vadd.f32 %v4740, %v6398
      %v6453 = vadd.f32 %v4741, %v6403
      %v6454 = vadd.f32 %v4742, %v6408
      %v6455 = vadd.f32 %v4743, %v6413
      %v6456 = vadd.f32 %v4744, %v6418
      %v6457 = vadd.f32 %v4745, %v6423
      %v6458 = vadd.f32 %v4746, %v6428
      %v6459 = vadd.f32 %v4747, %v6433
      %v6460 = vadd.f32 %v4748, %v6438
      %v6461 = vadd.f32 %v4749, %v6443
      %s6462 = scalar_lea.vmem %s12, 1
      %v6463 = vld [vmem:[%s6462] sm:$0x1]
      %s6464 = scalar_lea.vmem %s13, 1
      %v6465 = vld [vmem:[%s6464] sm:$0x1]
      %v6466 = vsel %vm1418, %v6446, 0.0
      %6467 = vadd.xlane.f32.xlu0 %v6466
      %v6468 = vpop.xlane.xlu0 %6467
      %v6469 = vsel %vm1418, %v6447, 0.0
      %6470 = vadd.xlane.f32.xlu0 %v6469
      %v6471 = vpop.xlane.xlu0 %6470
      %v6472 = vsel %vm1418, %v6448, 0.0
      %6473 = vadd.xlane.f32.xlu0 %v6472
      %v6474 = vpop.xlane.xlu0 %6473
      %v6475 = vsel %vm1418, %v6449, 0.0
      %6476 = vadd.xlane.f32.xlu0 %v6475
      %v6477 = vpop.xlane.xlu0 %6476
      %v6478 = vsel %vm1418, %v6450, 0.0
      %6479 = vadd.xlane.f32.xlu0 %v6478
      %v6480 = vpop.xlane.xlu0 %6479
      %v6481 = vsel %vm1418, %v6451, 0.0
      %6482 = vadd.xlane.f32.xlu0 %v6481
      %v6483 = vpop.xlane.xlu0 %6482
      %v6484 = vsel %vm1418, %v6452, 0.0
      %6485 = vadd.xlane.f32.xlu0 %v6484
      %v6486 = vpop.xlane.xlu0 %6485
      %v6487 = vsel %vm1418, %v6453, 0.0
      %6488 = vadd.xlane.f32.xlu0 %v6487
      %v6489 = vpop.xlane.xlu0 %6488
      %v6490 = vsel %vm1418, %v6454, 0.0
      %6491 = vadd.xlane.f32.xlu0 %v6490
      %v6492 = vpop.xlane.xlu0 %6491
      %v6493 = vsel %vm1418, %v6455, 0.0
      %6494 = vadd.xlane.f32.xlu0 %v6493
      %v6495 = vpop.xlane.xlu0 %6494
      %v6496 = vsel %vm1418, %v6456, 0.0
      %6497 = vadd.xlane.f32.xlu0 %v6496
      %v6498 = vpop.xlane.xlu0 %6497
      %v6499 = vsel %vm1418, %v6457, 0.0
      %6500 = vadd.xlane.f32.xlu0 %v6499
      %v6501 = vpop.xlane.xlu0 %6500
      %v6502 = vsel %vm1418, %v6458, 0.0
      %6503 = vadd.xlane.f32.xlu0 %v6502
      %v6504 = vpop.xlane.xlu0 %6503
      %v6505 = vsel %vm1418, %v6459, 0.0
      %6506 = vadd.xlane.f32.xlu0 %v6505
      %v6507 = vpop.xlane.xlu0 %6506
      %v6508 = vsel %vm1418, %v6460, 0.0
      %6509 = vadd.xlane.f32.xlu0 %v6508
      %v6510 = vpop.xlane.xlu0 %6509
      %v6511 = vsel %vm1418, %v6461, 0.0
      %6512 = vadd.xlane.f32.xlu0 %v6511
      %v6513 = vpop.xlane.xlu0 %6512
      %v6514 = vmul.f32 %v6468, %v1467
      %v6515 = vmul.f32 %v6471, %v1467
      %v6516 = vmul.f32 %v6474, %v1467
      %v6517 = vmul.f32 %v6477, %v1467
      %v6518 = vmul.f32 %v6480, %v1467
      %v6519 = vmul.f32 %v6483, %v1467
      %v6520 = vmul.f32 %v6486, %v1467
      %v6521 = vmul.f32 %v6489, %v1467
      %v6522 = vmul.f32 %v6492, %v1467
      %v6523 = vmul.f32 %v6495, %v1467
      %v6524 = vmul.f32 %v6498, %v1467
      %v6525 = vmul.f32 %v6501, %v1467
      %v6526 = vmul.f32 %v6504, %v1467
      %v6527 = vmul.f32 %v6507, %v1467
      %v6528 = vmul.f32 %v6510, %v1467
      %v6529 = vmul.f32 %v6513, %v1467
      %v6530 = vsub.f32 %v6446, %v6514
      %v6531 = vsub.f32 %v6447, %v6515
      %v6532 = vsub.f32 %v6448, %v6516
      %v6533 = vsub.f32 %v6449, %v6517
      %v6534 = vsub.f32 %v6450, %v6518
      %v6535 = vsub.f32 %v6451, %v6519
      %v6536 = vsub.f32 %v6452, %v6520
      %v6537 = vsub.f32 %v6453, %v6521
      %v6538 = vsub.f32 %v6454, %v6522
      %v6539 = vsub.f32 %v6455, %v6523
      %v6540 = vsub.f32 %v6456, %v6524
      %v6541 = vsub.f32 %v6457, %v6525
      %v6542 = vsub.f32 %v6458, %v6526
      %v6543 = vsub.f32 %v6459, %v6527
      %v6544 = vsub.f32 %v6460, %v6528
      %v6545 = vsub.f32 %v6461, %v6529
      %v6546 = vmul.f32 %v6530, %v6530
      %v6547 = vmul.f32 %v6531, %v6531
      %v6548 = vmul.f32 %v6532, %v6532
      %v6549 = vmul.f32 %v6533, %v6533
      %v6550 = vmul.f32 %v6534, %v6534
      %v6551 = vmul.f32 %v6535, %v6535
      %v6552 = vmul.f32 %v6536, %v6536
      %v6553 = vmul.f32 %v6537, %v6537
      %v6554 = vmul.f32 %v6538, %v6538
      %v6555 = vmul.f32 %v6539, %v6539
      %v6556 = vmul.f32 %v6540, %v6540
      %v6557 = vmul.f32 %v6541, %v6541
      %v6558 = vmul.f32 %v6542, %v6542
      %v6559 = vmul.f32 %v6543, %v6543
      %v6560 = vmul.f32 %v6544, %v6544
      %v6561 = vmul.f32 %v6545, %v6545
      %v6562 = vsel %vm1418, %v6546, 0.0
      %6563 = vadd.xlane.f32.xlu0 %v6562
      %v6564 = vpop.xlane.xlu0 %6563
      %v6565 = vsel %vm1418, %v6547, 0.0
      %6566 = vadd.xlane.f32.xlu0 %v6565
      %v6567 = vpop.xlane.xlu0 %6566
      %v6568 = vsel %vm1418, %v6548, 0.0
      %6569 = vadd.xlane.f32.xlu0 %v6568
      %v6570 = vpop.xlane.xlu0 %6569
      %v6571 = vsel %vm1418, %v6549, 0.0
      %6572 = vadd.xlane.f32.xlu0 %v6571
      %v6573 = vpop.xlane.xlu0 %6572
      %v6574 = vsel %vm1418, %v6550, 0.0
      %6575 = vadd.xlane.f32.xlu0 %v6574
      %v6576 = vpop.xlane.xlu0 %6575
      %v6577 = vsel %vm1418, %v6551, 0.0
      %6578 = vadd.xlane.f32.xlu0 %v6577
      %v6579 = vpop.xlane.xlu0 %6578
      %v6580 = vsel %vm1418, %v6552, 0.0
      %6581 = vadd.xlane.f32.xlu0 %v6580
      %v6582 = vpop.xlane.xlu0 %6581
      %v6583 = vsel %vm1418, %v6553, 0.0
      %6584 = vadd.xlane.f32.xlu0 %v6583
      %v6585 = vpop.xlane.xlu0 %6584
      %v6586 = vsel %vm1418, %v6554, 0.0
      %6587 = vadd.xlane.f32.xlu0 %v6586
      %v6588 = vpop.xlane.xlu0 %6587
      %v6589 = vsel %vm1418, %v6555, 0.0
      %6590 = vadd.xlane.f32.xlu0 %v6589
      %v6591 = vpop.xlane.xlu0 %6590
      %v6592 = vsel %vm1418, %v6556, 0.0
      %6593 = vadd.xlane.f32.xlu0 %v6592
      %v6594 = vpop.xlane.xlu0 %6593
      %v6595 = vsel %vm1418, %v6557, 0.0
      %6596 = vadd.xlane.f32.xlu0 %v6595
      %v6597 = vpop.xlane.xlu0 %6596
      %v6598 = vsel %vm1418, %v6558, 0.0
      %6599 = vadd.xlane.f32.xlu0 %v6598
      %v6600 = vpop.xlane.xlu0 %6599
      %v6601 = vsel %vm1418, %v6559, 0.0
      %6602 = vadd.xlane.f32.xlu0 %v6601
      %v6603 = vpop.xlane.xlu0 %6602
      %v6604 = vsel %vm1418, %v6560, 0.0
      %6605 = vadd.xlane.f32.xlu0 %v6604
      %v6606 = vpop.xlane.xlu0 %6605
      %v6607 = vsel %vm1418, %v6561, 0.0
      %6608 = vadd.xlane.f32.xlu0 %v6607
      %v6609 = vpop.xlane.xlu0 %6608
      %v6610 = vmul.f32 %v6564, %v1467
      %v6611 = vmul.f32 %v6567, %v1467
      %v6612 = vmul.f32 %v6570, %v1467
      %v6613 = vmul.f32 %v6573, %v1467
      %v6614 = vmul.f32 %v6576, %v1467
      %v6615 = vmul.f32 %v6579, %v1467
      %v6616 = vmul.f32 %v6582, %v1467
      %v6617 = vmul.f32 %v6585, %v1467
      %v6618 = vmul.f32 %v6588, %v1467
      %v6619 = vmul.f32 %v6591, %v1467
      %v6620 = vmul.f32 %v6594, %v1467
      %v6621 = vmul.f32 %v6597, %v1467
      %v6622 = vmul.f32 %v6600, %v1467
      %v6623 = vmul.f32 %v6603, %v1467
      %v6624 = vmul.f32 %v6606, %v1467
      %v6625 = vmul.f32 %v6609, %v1467
      %v6626 = vadd.f32 %v6610, 1e-12
      %v6627 = vadd.f32 %v6611, 1e-12
      %v6628 = vadd.f32 %v6612, 1e-12
      %v6629 = vadd.f32 %v6613, 1e-12
      %v6630 = vadd.f32 %v6614, 1e-12
      %v6631 = vadd.f32 %v6615, 1e-12
      %v6632 = vadd.f32 %v6616, 1e-12
      %v6633 = vadd.f32 %v6617, 1e-12
      %v6634 = vadd.f32 %v6618, 1e-12
      %v6635 = vadd.f32 %v6619, 1e-12
      %v6636 = vadd.f32 %v6620, 1e-12
      %v6637 = vadd.f32 %v6621, 1e-12
      %v6638 = vadd.f32 %v6622, 1e-12
      %v6639 = vadd.f32 %v6623, 1e-12
      %v6640 = vadd.f32 %v6624, 1e-12
      %v6641 = vadd.f32 %v6625, 1e-12
      %v6642 = vrsqrt.pop %v6626
      %v6643 = vrsqrt.pop %v6627
      %v6644 = vrsqrt.pop %v6628
      %v6645 = vrsqrt.pop %v6629
      %v6646 = vrsqrt.pop %v6630
      %v6647 = vrsqrt.pop %v6631
      %v6648 = vrsqrt.pop %v6632
      %v6649 = vrsqrt.pop %v6633
      %v6650 = vrsqrt.pop %v6634
      %v6651 = vrsqrt.pop %v6635
      %v6652 = vrsqrt.pop %v6636
      %v6653 = vrsqrt.pop %v6637
      %v6654 = vrsqrt.pop %v6638
      %v6655 = vrsqrt.pop %v6639
      %v6656 = vrsqrt.pop %v6640
      %v6657 = vrsqrt.pop %v6641
      %v6658 = vmul.f32 %v6530, %v6642
      %v6659 = vmul.f32 %v6531, %v6643
      %v6660 = vmul.f32 %v6532, %v6644
      %v6661 = vmul.f32 %v6533, %v6645
      %v6662 = vmul.f32 %v6534, %v6646
      %v6663 = vmul.f32 %v6535, %v6647
      %v6664 = vmul.f32 %v6536, %v6648
      %v6665 = vmul.f32 %v6537, %v6649
      %v6666 = vmul.f32 %v6538, %v6650
      %v6667 = vmul.f32 %v6539, %v6651
      %v6668 = vmul.f32 %v6540, %v6652
      %v6669 = vmul.f32 %v6541, %v6653
      %v6670 = vmul.f32 %v6542, %v6654
      %v6671 = vmul.f32 %v6543, %v6655
      %v6672 = vmul.f32 %v6544, %v6656
      %v6673 = vmul.f32 %v6545, %v6657
      %v6675 = vlaneseq
      %v6676 = vshrl.u32 %v6675, 7
      %v6677 = vsub.s32 0, %v6676
      %v6678 = vrot.slane %v6463, %v6677
      %v6680 = vmul.f32 %v6658, %v6678
      %v6681 = vmul.f32 %v6659, %v6678
      %v6682 = vmul.f32 %v6660, %v6678
      %v6683 = vmul.f32 %v6661, %v6678
      %v6684 = vmul.f32 %v6662, %v6678
      %v6685 = vmul.f32 %v6663, %v6678
      %v6686 = vmul.f32 %v6664, %v6678
      %v6687 = vmul.f32 %v6665, %v6678
      %v6688 = vmul.f32 %v6666, %v6678
      %v6689 = vmul.f32 %v6667, %v6678
      %v6690 = vmul.f32 %v6668, %v6678
      %v6691 = vmul.f32 %v6669, %v6678
      %v6692 = vmul.f32 %v6670, %v6678
      %v6693 = vmul.f32 %v6671, %v6678
      %v6694 = vmul.f32 %v6672, %v6678
      %v6695 = vmul.f32 %v6673, %v6678
      %v6697 = vlaneseq
      %v6698 = vshrl.u32 %v6697, 7
      %v6699 = vsub.s32 0, %v6698
      %v6700 = vrot.slane %v6465, %v6699
      %v6702 = vadd.f32 %v6680, %v6700
      %v6703 = vadd.f32 %v6681, %v6700
      %v6704 = vadd.f32 %v6682, %v6700
      %v6705 = vadd.f32 %v6683, %v6700
      %v6706 = vadd.f32 %v6684, %v6700
      %v6707 = vadd.f32 %v6685, %v6700
      %v6708 = vadd.f32 %v6686, %v6700
      %v6709 = vadd.f32 %v6687, %v6700
      %v6710 = vadd.f32 %v6688, %v6700
      %v6711 = vadd.f32 %v6689, %v6700
      %v6712 = vadd.f32 %v6690, %v6700
      %v6713 = vadd.f32 %v6691, %v6700
      %v6714 = vadd.f32 %v6692, %v6700
      %v6715 = vadd.f32 %v6693, %v6700
      %v6716 = vadd.f32 %v6694, %v6700
      %v6717 = vadd.f32 %v6695, %v6700
      %s6718 = scalar_lea.vmem %s14, 32
      %v6719 = vld [vmem:[%s6718] sm:$0xff]
      %v6720 = vld [vmem:[%s6718 + $0x8] sm:$0xff]
      %v6721 = vld [vmem:[%s6718 + $0x10] sm:$0xff]
      %v6722 = vld [vmem:[%s6718 + $0x18] sm:$0xff]
      %s6723 = scalar_lea.vmem %s15, 1
      %v6724 = vld [vmem:[%s6723] sm:$0x1]
      %v6726 = vlaneseq
      %v6727 = vshrl.u32 %v6726, 7
      %v6728 = vsub.s32 0, %v6727
      %v6729 = vrot.slane %v6724, %v6728
      %v6732 = vsel %vm1418, %v6702, 0
      %v6735 = vsel %vm1418, %v6703, 0
      %v6738 = vsel %vm1418, %v6704, 0
      %v6741 = vsel %vm1418, %v6705, 0
      %v6744 = vsel %vm1418, %v6706, 0
      %v6747 = vsel %vm1418, %v6707, 0
      %v6750 = vsel %vm1418, %v6708, 0
      %v6753 = vsel %vm1418, %v6709, 0
      %v6756 = vsel %vm1418, %v6710, 0
      %v6759 = vsel %vm1418, %v6711, 0
      %v6762 = vsel %vm1418, %v6712, 0
      %v6765 = vsel %vm1418, %v6713, 0
      %v6768 = vsel %vm1418, %v6714, 0
      %v6771 = vsel %vm1418, %v6715, 0
      %v6774 = vsel %vm1418, %v6716, 0
      %v6777 = vsel %vm1418, %v6717, 0
      %6779 = vmatprep.subr.mxu0 0.0
      %6780 = vmatpush1.msra.mxu0 %v6719
      %6781 = vmatprep.subr.mxu0 0.0
      %6782 = vmatpush1.msra.mxu0 %v6720
      %6783 = vmatprep.subr.mxu0 0.0
      %6784 = vmatpush1.msra.mxu0 %v6721
      %6785 = vmatprep.subr.mxu0 0.0
      %6786 = vmatpush1.msra.mxu0 %v6722
      %6787 = vmatprep.subr.mxu0 0.0
      %6788 = vmatpush1.msra.mxu0 0.0
      %6789 = vmatprep.subr.mxu0 0.0
      %6790 = vmatpush1.msra.mxu0 0.0
      %6791 = vmatprep.subr.mxu0 0.0
      %6792 = vmatpush1.msra.mxu0 0.0
      %6793 = vmatprep.subr.mxu0 0.0
      %6794 = vmatpush1.msra.mxu0 0.0
      %6795 = vmatprep.subr.mxu0 0.0
      %6796 = vmatpush1.msra.mxu0 0.0
      %6797 = vmatprep.subr.mxu0 0.0
      %6798 = vmatpush1.msra.mxu0 0.0
      %6799 = vmatprep.subr.mxu0 0.0
      %6800 = vmatpush1.msra.mxu0 0.0
      %6801 = vmatprep.subr.mxu0 0.0
      %6802 = vmatpush1.msra.mxu0 0.0
      %6803 = vmatprep.subr.mxu0 0.0
      %6804 = vmatpush1.msra.mxu0 0.0
      %6805 = vmatprep.subr.mxu0 0.0
      %6806 = vmatpush1.msra.mxu0 0.0
      %6807 = vmatprep.subr.mxu0 0.0
      %6808 = vmatpush1.msra.mxu0 0.0
      %6809 = vmatprep.subr.mxu0 0.0
      %6810 = vmatpush1.msra.mxu0 0.0
      %6811 = vmatprep.subr.mxu0 0.0
      %6812 = vmatpush1.msra.mxu0 0.0
      %6813 = vmatprep.subr.mxu0 0.0
      %6814 = vmatpush1.msra.mxu0 0.0
      %6815 = vmatprep.subr.mxu0 0.0
      %6816 = vmatpush1.msra.mxu0 0.0
      %6817 = vmatprep.subr.mxu0 0.0
      %6818 = vmatpush1.msra.mxu0 0.0
      %6819 = vmatprep.subr.mxu0 0.0
      %6820 = vmatpush1.msra.mxu0 0.0
      %6821 = vmatprep.subr.mxu0 0.0
      %6822 = vmatpush1.msra.mxu0 0.0
      %6823 = vmatprep.subr.mxu0 0.0
      %6824 = vmatpush1.msra.mxu0 0.0
      %6825 = vmatprep.subr.mxu0 0.0
      %6826 = vmatpush1.msra.mxu0 0.0
      %6827 = vmatprep.subr.mxu0 0.0
      %6828 = vmatpush1.msra.mxu0 0.0
      %6829 = vmatprep.subr.mxu0 0.0
      %6830 = vmatpush1.msra.mxu0 0.0
      %6831 = vmatprep.subr.mxu0 0.0
      %6832 = vmatpush1.msra.mxu0 0.0
      %6833 = vmatprep.subr.mxu0 0.0
      %6834 = vmatpush1.msra.mxu0 0.0
      %6835 = vmatprep.subr.mxu0 0.0
      %6836 = vmatpush1.msra.mxu0 0.0
      %6837 = vmatprep.subr.mxu0 0.0
      %6838 = vmatpush1.msra.mxu0 0.0
      %6839 = vmatprep.subr.mxu0 0.0
      %6840 = vmatpush1.msra.mxu0 0.0
      %6841 = vmatprep.subr.mxu0 0.0
      %6842 = vmatpush1.msra.mxu0 0.0
      %6843 = vmatprep.mubr.f32.mxu0 0.0
      %6844 = vmatmul.mubr.f32.gmra.mrb[0].mxu0 %v6732
      %v6845 = vpop.f32.mrb[0].mxu0
      %v6846 = vadd.f32 %v6729, %v6845
      %v6847 = vpop.f32.mrb[0].mxu0
      %6848 = vmatprep.mubr.f32.mxu0 0.0
      %6849 = vmatmul.mubr.f32.gmra.mrb[0].mxu0 %v6735
      %v6850 = vpop.f32.mrb[0].mxu0
      %v6851 = vadd.f32 %v6729, %v6850
      %v6852 = vpop.f32.mrb[0].mxu0
      %6853 = vmatprep.mubr.f32.mxu0 0.0
      %6854 = vmatmul.mubr.f32.gmra.mrb[0].mxu0 %v6738
      %v6855 = vpop.f32.mrb[0].mxu0
      %v6856 = vadd.f32 %v6729, %v6855
      %v6857 = vpop.f32.mrb[0].mxu0
      %6858 = vmatprep.mubr.f32.mxu0 0.0
      %6859 = vmatmul.mubr.f32.gmra.mrb[0].mxu0 %v6741
      %v6860 = vpop.f32.mrb[0].mxu0
      %v6861 = vadd.f32 %v6729, %v6860
      %v6862 = vpop.f32.mrb[0].mxu0
      %6863 = vmatprep.mubr.f32.mxu0 0.0
      %6864 = vmatmul.mubr.f32.gmra.mrb[0].mxu0 %v6744
      %v6865 = vpop.f32.mrb[0].mxu0
      %v6866 = vadd.f32 %v6729, %v6865
      %v6867 = vpop.f32.mrb[0].mxu0
      %6868 = vmatprep.mubr.f32.mxu0 0.0
      %6869 = vmatmul.mubr.f32.gmra.mrb[0].mxu0 %v6747
      %v6870 = vpop.f32.mrb[0].mxu0
      %v6871 = vadd.f32 %v6729, %v6870
      %v6872 = vpop.f32.mrb[0].mxu0
      %6873 = vmatprep.mubr.f32.mxu0 0.0
      %6874 = vmatmul.mubr.f32.gmra.mrb[0].mxu0 %v6750
      %v6875 = vpop.f32.mrb[0].mxu0
      %v6876 = vadd.f32 %v6729, %v6875
      %v6877 = vpop.f32.mrb[0].mxu0
      %6878 = vmatprep.mubr.f32.mxu0 0.0
      %6879 = vmatmul.mubr.f32.gmra.mrb[0].mxu0 %v6753
      %v6880 = vpop.f32.mrb[0].mxu0
      %v6881 = vadd.f32 %v6729, %v6880
      %v6882 = vpop.f32.mrb[0].mxu0
      %6883 = vmatprep.mubr.f32.mxu0 0.0
      %6884 = vmatmul.mubr.f32.gmra.mrb[0].mxu0 %v6756
      %v6885 = vpop.f32.mrb[0].mxu0
      %v6886 = vadd.f32 %v6729, %v6885
      %v6887 = vpop.f32.mrb[0].mxu0
      %6888 = vmatprep.mubr.f32.mxu0 0.0
      %6889 = vmatmul.mubr.f32.gmra.mrb[0].mxu0 %v6759
      %v6890 = vpop.f32.mrb[0].mxu0
      %v6891 = vadd.f32 %v6729, %v6890
      %v6892 = vpop.f32.mrb[0].mxu0
      %6893 = vmatprep.mubr.f32.mxu0 0.0
      %6894 = vmatmul.mubr.f32.gmra.mrb[0].mxu0 %v6762
      %v6895 = vpop.f32.mrb[0].mxu0
      %v6896 = vadd.f32 %v6729, %v6895
      %v6897 = vpop.f32.mrb[0].mxu0
      %6898 = vmatprep.mubr.f32.mxu0 0.0
      %6899 = vmatmul.mubr.f32.gmra.mrb[0].mxu0 %v6765
      %v6900 = vpop.f32.mrb[0].mxu0
      %v6901 = vadd.f32 %v6729, %v6900
      %v6902 = vpop.f32.mrb[0].mxu0
      %6903 = vmatprep.mubr.f32.mxu0 0.0
      %6904 = vmatmul.mubr.f32.gmra.mrb[0].mxu0 %v6768
      %v6905 = vpop.f32.mrb[0].mxu0
      %v6906 = vadd.f32 %v6729, %v6905
      %v6907 = vpop.f32.mrb[0].mxu0
      %6908 = vmatprep.mubr.f32.mxu0 0.0
      %6909 = vmatmul.mubr.f32.gmra.mrb[0].mxu0 %v6771
      %v6910 = vpop.f32.mrb[0].mxu0
      %v6911 = vadd.f32 %v6729, %v6910
      %v6912 = vpop.f32.mrb[0].mxu0
      %6913 = vmatprep.mubr.f32.mxu0 0.0
      %6914 = vmatmul.mubr.f32.gmra.mrb[0].mxu0 %v6774
      %v6915 = vpop.f32.mrb[0].mxu0
      %v6916 = vadd.f32 %v6729, %v6915
      %v6917 = vpop.f32.mrb[0].mxu0
      %6918 = vmatprep.mubr.f32.mxu0 0.0
      %6919 = vmatmul.mubr.f32.gmra.mrb[0].mxu0 %v6777
      %v6920 = vpop.f32.mrb[0].mxu0
      %v6921 = vadd.f32 %v6729, %v6920
      %v6922 = vpop.f32.mrb[0].mxu0
      %6923 = vdwg.mxu0
      %v6924 = vmul.f32 %v6846, 0.5
      %v6925 = vmul.f32 %v6851, 0.5
      %v6926 = vmul.f32 %v6856, 0.5
      %v6927 = vmul.f32 %v6861, 0.5
      %v6928 = vmul.f32 %v6866, 0.5
      %v6929 = vmul.f32 %v6871, 0.5
      %v6930 = vmul.f32 %v6876, 0.5
      %v6931 = vmul.f32 %v6881, 0.5
      %v6932 = vmul.f32 %v6886, 0.5
      %v6933 = vmul.f32 %v6891, 0.5
      %v6934 = vmul.f32 %v6896, 0.5
      %v6935 = vmul.f32 %v6901, 0.5
      %v6936 = vmul.f32 %v6906, 0.5
      %v6937 = vmul.f32 %v6911, 0.5
      %v6938 = vmul.f32 %v6916, 0.5
      %v6939 = vmul.f32 %v6921, 0.5
      %v6940 = vmul.f32 %v6846, 0.70710677
      %v6941 = vmul.f32 %v6851, 0.70710677
      %v6942 = vmul.f32 %v6856, 0.70710677
      %v6943 = vmul.f32 %v6861, 0.70710677
      %v6944 = vmul.f32 %v6866, 0.70710677
      %v6945 = vmul.f32 %v6871, 0.70710677
      %v6946 = vmul.f32 %v6876, 0.70710677
      %v6947 = vmul.f32 %v6881, 0.70710677
      %v6948 = vmul.f32 %v6886, 0.70710677
      %v6949 = vmul.f32 %v6891, 0.70710677
      %v6950 = vmul.f32 %v6896, 0.70710677
      %v6951 = vmul.f32 %v6901, 0.70710677
      %v6952 = vmul.f32 %v6906, 0.70710677
      %v6953 = vmul.f32 %v6911, 0.70710677
      %v6954 = vmul.f32 %v6916, 0.70710677
      %v6955 = vmul.f32 %v6921, 0.70710677
      %vm6956 = vcmp.ge.f32.partialorder %v6940, 0.0
      %vm6957 = vcmp.ge.f32.partialorder %v6941, 0.0
      %vm6958 = vcmp.ge.f32.partialorder %v6942, 0.0
      %vm6959 = vcmp.ge.f32.partialorder %v6943, 0.0
      %vm6960 = vcmp.ge.f32.partialorder %v6944, 0.0
      %vm6961 = vcmp.ge.f32.partialorder %v6945, 0.0
      %vm6962 = vcmp.ge.f32.partialorder %v6946, 0.0
      %vm6963 = vcmp.ge.f32.partialorder %v6947, 0.0
      %vm6964 = vcmp.ge.f32.partialorder %v6948, 0.0
      %vm6965 = vcmp.ge.f32.partialorder %v6949, 0.0
      %vm6966 = vcmp.ge.f32.partialorder %v6950, 0.0
      %vm6967 = vcmp.ge.f32.partialorder %v6951, 0.0
      %vm6968 = vcmp.ge.f32.partialorder %v6952, 0.0
      %vm6969 = vcmp.ge.f32.partialorder %v6953, 0.0
      %vm6970 = vcmp.ge.f32.partialorder %v6954, 0.0
      %vm6971 = vcmp.ge.f32.partialorder %v6955, 0.0
      %v6972 = vsel %vm6956, 1.0, -1.0
      %v6973 = vsel %vm6957, 1.0, -1.0
      %v6974 = vsel %vm6958, 1.0, -1.0
      %v6975 = vsel %vm6959, 1.0, -1.0
      %v6976 = vsel %vm6960, 1.0, -1.0
      %v6977 = vsel %vm6961, 1.0, -1.0
      %v6978 = vsel %vm6962, 1.0, -1.0
      %v6979 = vsel %vm6963, 1.0, -1.0
      %v6980 = vsel %vm6964, 1.0, -1.0
      %v6981 = vsel %vm6965, 1.0, -1.0
      %v6982 = vsel %vm6966, 1.0, -1.0
      %v6983 = vsel %vm6967, 1.0, -1.0
      %v6984 = vsel %vm6968, 1.0, -1.0
      %v6985 = vsel %vm6969, 1.0, -1.0
      %v6986 = vsel %vm6970, 1.0, -1.0
      %v6987 = vsel %vm6971, 1.0, -1.0
      %v6988 = vand.u32 2147483647, %v6940
      %v6989 = vand.u32 2147483647, %v6941
      %v6990 = vand.u32 2147483647, %v6942
      %v6991 = vand.u32 2147483647, %v6943
      %v6992 = vand.u32 2147483647, %v6944
      %v6993 = vand.u32 2147483647, %v6945
      %v6994 = vand.u32 2147483647, %v6946
      %v6995 = vand.u32 2147483647, %v6947
      %v6996 = vand.u32 2147483647, %v6948
      %v6997 = vand.u32 2147483647, %v6949
      %v6998 = vand.u32 2147483647, %v6950
      %v6999 = vand.u32 2147483647, %v6951
      %v7000 = vand.u32 2147483647, %v6952
      %v7001 = vand.u32 2147483647, %v6953
      %v7002 = vand.u32 2147483647, %v6954
      %v7003 = vand.u32 2147483647, %v6955
      %v7004 = vmul.f32 %v6988, 0.3275911
      %v7005 = vmul.f32 %v6989, 0.3275911
      %v7006 = vmul.f32 %v6990, 0.3275911
      %v7007 = vmul.f32 %v6991, 0.3275911
      %v7008 = vmul.f32 %v6992, 0.3275911
      %v7009 = vmul.f32 %v6993, 0.3275911
      %v7010 = vmul.f32 %v6994, 0.3275911
      %v7011 = vmul.f32 %v6995, 0.3275911
      %v7012 = vmul.f32 %v6996, 0.3275911
      %v7013 = vmul.f32 %v6997, 0.3275911
      %v7014 = vmul.f32 %v6998, 0.3275911
      %v7015 = vmul.f32 %v6999, 0.3275911
      %v7016 = vmul.f32 %v7000, 0.3275911
      %v7017 = vmul.f32 %v7001, 0.3275911
      %v7018 = vmul.f32 %v7002, 0.3275911
      %v7019 = vmul.f32 %v7003, 0.3275911
      %v7020 = vadd.f32 %v7004, 1.0
      %v7021 = vadd.f32 %v7005, 1.0
      %v7022 = vadd.f32 %v7006, 1.0
      %v7023 = vadd.f32 %v7007, 1.0
      %v7024 = vadd.f32 %v7008, 1.0
      %v7025 = vadd.f32 %v7009, 1.0
      %v7026 = vadd.f32 %v7010, 1.0
      %v7027 = vadd.f32 %v7011, 1.0
      %v7028 = vadd.f32 %v7012, 1.0
      %v7029 = vadd.f32 %v7013, 1.0
      %v7030 = vadd.f32 %v7014, 1.0
      %v7031 = vadd.f32 %v7015, 1.0
      %v7032 = vadd.f32 %v7016, 1.0
      %v7033 = vadd.f32 %v7017, 1.0
      %v7034 = vadd.f32 %v7018, 1.0
      %v7035 = vadd.f32 %v7019, 1.0
      %v7036 = vrcp.pop %v7020
      %v7037 = vmul.f32 1.0, %v7036
      %v7038 = vrcp.pop %v7021
      %v7039 = vmul.f32 1.0, %v7038
      %v7040 = vrcp.pop %v7022
      %v7041 = vmul.f32 1.0, %v7040
      %v7042 = vrcp.pop %v7023
      %v7043 = vmul.f32 1.0, %v7042
      %v7044 = vrcp.pop %v7024
      %v7045 = vmul.f32 1.0, %v7044
      %v7046 = vrcp.pop %v7025
      %v7047 = vmul.f32 1.0, %v7046
      %v7048 = vrcp.pop %v7026
      %v7049 = vmul.f32 1.0, %v7048
      %v7050 = vrcp.pop %v7027
      %v7051 = vmul.f32 1.0, %v7050
      %v7052 = vrcp.pop %v7028
      %v7053 = vmul.f32 1.0, %v7052
      %v7054 = vrcp.pop %v7029
      %v7055 = vmul.f32 1.0, %v7054
      %v7056 = vrcp.pop %v7030
      %v7057 = vmul.f32 1.0, %v7056
      %v7058 = vrcp.pop %v7031
      %v7059 = vmul.f32 1.0, %v7058
      %v7060 = vrcp.pop %v7032
      %v7061 = vmul.f32 1.0, %v7060
      %v7062 = vrcp.pop %v7033
      %v7063 = vmul.f32 1.0, %v7062
      %v7064 = vrcp.pop %v7034
      %v7065 = vmul.f32 1.0, %v7064
      %v7066 = vrcp.pop %v7035
      %v7067 = vmul.f32 1.0, %v7066
      %v7068 = vmul.f32 %v7037, 1.0614054
      %v7069 = vmul.f32 %v7039, 1.0614054
      %v7070 = vmul.f32 %v7041, 1.0614054
      %v7071 = vmul.f32 %v7043, 1.0614054
      %v7072 = vmul.f32 %v7045, 1.0614054
      %v7073 = vmul.f32 %v7047, 1.0614054
      %v7074 = vmul.f32 %v7049, 1.0614054
      %v7075 = vmul.f32 %v7051, 1.0614054
      %v7076 = vmul.f32 %v7053, 1.0614054
      %v7077 = vmul.f32 %v7055, 1.0614054
      %v7078 = vmul.f32 %v7057, 1.0614054
      %v7079 = vmul.f32 %v7059, 1.0614054
      %v7080 = vmul.f32 %v7061, 1.0614054
      %v7081 = vmul.f32 %v7063, 1.0614054
      %v7082 = vmul.f32 %v7065, 1.0614054
      %v7083 = vmul.f32 %v7067, 1.0614054
      %v7084 = vadd.f32 %v7068, -1.4531521
      %v7085 = vadd.f32 %v7069, -1.4531521
      %v7086 = vadd.f32 %v7070, -1.4531521
      %v7087 = vadd.f32 %v7071, -1.4531521
      %v7088 = vadd.f32 %v7072, -1.4531521
      %v7089 = vadd.f32 %v7073, -1.4531521
      %v7090 = vadd.f32 %v7074, -1.4531521
      %v7091 = vadd.f32 %v7075, -1.4531521
      %v7092 = vadd.f32 %v7076, -1.4531521
      %v7093 = vadd.f32 %v7077, -1.4531521
      %v7094 = vadd.f32 %v7078, -1.4531521
      %v7095 = vadd.f32 %v7079, -1.4531521
      %v7096 = vadd.f32 %v7080, -1.4531521
      %v7097 = vadd.f32 %v7081, -1.4531521
      %v7098 = vadd.f32 %v7082, -1.4531521
      %v7099 = vadd.f32 %v7083, -1.4531521
      %v7100 = vmul.f32 %v7084, %v7037
      %v7101 = vmul.f32 %v7085, %v7039
      %v7102 = vmul.f32 %v7086, %v7041
      %v7103 = vmul.f32 %v7087, %v7043
      %v7104 = vmul.f32 %v7088, %v7045
      %v7105 = vmul.f32 %v7089, %v7047
      %v7106 = vmul.f32 %v7090, %v7049
      %v7107 = vmul.f32 %v7091, %v7051
      %v7108 = vmul.f32 %v7092, %v7053
      %v7109 = vmul.f32 %v7093, %v7055
      %v7110 = vmul.f32 %v7094, %v7057
      %v7111 = vmul.f32 %v7095, %v7059
      %v7112 = vmul.f32 %v7096, %v7061
      %v7113 = vmul.f32 %v7097, %v7063
      %v7114 = vmul.f32 %v7098, %v7065
      %v7115 = vmul.f32 %v7099, %v7067
      %v7116 = vadd.f32 %v7100, 1.4214138
      %v7117 = vadd.f32 %v7101, 1.4214138
      %v7118 = vadd.f32 %v7102, 1.4214138
      %v7119 = vadd.f32 %v7103, 1.4214138
      %v7120 = vadd.f32 %v7104, 1.4214138
      %v7121 = vadd.f32 %v7105, 1.4214138
      %v7122 = vadd.f32 %v7106, 1.4214138
      %v7123 = vadd.f32 %v7107, 1.4214138
      %v7124 = vadd.f32 %v7108, 1.4214138
      %v7125 = vadd.f32 %v7109, 1.4214138
      %v7126 = vadd.f32 %v7110, 1.4214138
      %v7127 = vadd.f32 %v7111, 1.4214138
      %v7128 = vadd.f32 %v7112, 1.4214138
      %v7129 = vadd.f32 %v7113, 1.4214138
      %v7130 = vadd.f32 %v7114, 1.4214138
      %v7131 = vadd.f32 %v7115, 1.4214138
      %v7132 = vmul.f32 %v7116, %v7037
      %v7133 = vmul.f32 %v7117, %v7039
      %v7134 = vmul.f32 %v7118, %v7041
      %v7135 = vmul.f32 %v7119, %v7043
      %v7136 = vmul.f32 %v7120, %v7045
      %v7137 = vmul.f32 %v7121, %v7047
      %v7138 = vmul.f32 %v7122, %v7049
      %v7139 = vmul.f32 %v7123, %v7051
      %v7140 = vmul.f32 %v7124, %v7053
      %v7141 = vmul.f32 %v7125, %v7055
      %v7142 = vmul.f32 %v7126, %v7057
      %v7143 = vmul.f32 %v7127, %v7059
      %v7144 = vmul.f32 %v7128, %v7061
      %v7145 = vmul.f32 %v7129, %v7063
      %v7146 = vmul.f32 %v7130, %v7065
      %v7147 = vmul.f32 %v7131, %v7067
      %v7148 = vadd.f32 %v7132, -0.28449672
      %v7149 = vadd.f32 %v7133, -0.28449672
      %v7150 = vadd.f32 %v7134, -0.28449672
      %v7151 = vadd.f32 %v7135, -0.28449672
      %v7152 = vadd.f32 %v7136, -0.28449672
      %v7153 = vadd.f32 %v7137, -0.28449672
      %v7154 = vadd.f32 %v7138, -0.28449672
      %v7155 = vadd.f32 %v7139, -0.28449672
      %v7156 = vadd.f32 %v7140, -0.28449672
      %v7157 = vadd.f32 %v7141, -0.28449672
      %v7158 = vadd.f32 %v7142, -0.28449672
      %v7159 = vadd.f32 %v7143, -0.28449672
      %v7160 = vadd.f32 %v7144, -0.28449672
      %v7161 = vadd.f32 %v7145, -0.28449672
      %v7162 = vadd.f32 %v7146, -0.28449672
      %v7163 = vadd.f32 %v7147, -0.28449672
      %v7164 = vmul.f32 %v7148, %v7037
      %v7165 = vmul.f32 %v7149, %v7039
      %v7166 = vmul.f32 %v7150, %v7041
      %v7167 = vmul.f32 %v7151, %v7043
      %v7168 = vmul.f32 %v7152, %v7045
      %v7169 = vmul.f32 %v7153, %v7047
      %v7170 = vmul.f32 %v7154, %v7049
      %v7171 = vmul.f32 %v7155, %v7051
      %v7172 = vmul.f32 %v7156, %v7053
      %v7173 = vmul.f32 %v7157, %v7055
      %v7174 = vmul.f32 %v7158, %v7057
      %v7175 = vmul.f32 %v7159, %v7059
      %v7176 = vmul.f32 %v7160, %v7061
      %v7177 = vmul.f32 %v7161, %v7063
      %v7178 = vmul.f32 %v7162, %v7065
      %v7179 = vmul.f32 %v7163, %v7067
      %v7180 = vadd.f32 %v7164, 0.2548296
      %v7181 = vadd.f32 %v7165, 0.2548296
      %v7182 = vadd.f32 %v7166, 0.2548296
      %v7183 = vadd.f32 %v7167, 0.2548296
      %v7184 = vadd.f32 %v7168, 0.2548296
      %v7185 = vadd.f32 %v7169, 0.2548296
      %v7186 = vadd.f32 %v7170, 0.2548296
      %v7187 = vadd.f32 %v7171, 0.2548296
      %v7188 = vadd.f32 %v7172, 0.2548296
      %v7189 = vadd.f32 %v7173, 0.2548296
      %v7190 = vadd.f32 %v7174, 0.2548296
      %v7191 = vadd.f32 %v7175, 0.2548296
      %v7192 = vadd.f32 %v7176, 0.2548296
      %v7193 = vadd.f32 %v7177, 0.2548296
      %v7194 = vadd.f32 %v7178, 0.2548296
      %v7195 = vadd.f32 %v7179, 0.2548296
      %v7196 = vmul.f32 %v7180, %v7037
      %v7197 = vmul.f32 %v7181, %v7039
      %v7198 = vmul.f32 %v7182, %v7041
      %v7199 = vmul.f32 %v7183, %v7043
      %v7200 = vmul.f32 %v7184, %v7045
      %v7201 = vmul.f32 %v7185, %v7047
      %v7202 = vmul.f32 %v7186, %v7049
      %v7203 = vmul.f32 %v7187, %v7051
      %v7204 = vmul.f32 %v7188, %v7053
      %v7205 = vmul.f32 %v7189, %v7055
      %v7206 = vmul.f32 %v7190, %v7057
      %v7207 = vmul.f32 %v7191, %v7059
      %v7208 = vmul.f32 %v7192, %v7061
      %v7209 = vmul.f32 %v7193, %v7063
      %v7210 = vmul.f32 %v7194, %v7065
      %v7211 = vmul.f32 %v7195, %v7067
      %v7212 = vsub.f32 0.0, %v6988
      %v7213 = vsub.f32 0.0, %v6989
      %v7214 = vsub.f32 0.0, %v6990
      %v7215 = vsub.f32 0.0, %v6991
      %v7216 = vsub.f32 0.0, %v6992
      %v7217 = vsub.f32 0.0, %v6993
      %v7218 = vsub.f32 0.0, %v6994
      %v7219 = vsub.f32 0.0, %v6995
      %v7220 = vsub.f32 0.0, %v6996
      %v7221 = vsub.f32 0.0, %v6997
      %v7222 = vsub.f32 0.0, %v6998
      %v7223 = vsub.f32 0.0, %v6999
      %v7224 = vsub.f32 0.0, %v7000
      %v7225 = vsub.f32 0.0, %v7001
      %v7226 = vsub.f32 0.0, %v7002
      %v7227 = vsub.f32 0.0, %v7003
      %v7228 = vmul.f32 %v7212, %v6988
      %v7229 = vmul.f32 %v7213, %v6989
      %v7230 = vmul.f32 %v7214, %v6990
      %v7231 = vmul.f32 %v7215, %v6991
      %v7232 = vmul.f32 %v7216, %v6992
      %v7233 = vmul.f32 %v7217, %v6993
      %v7234 = vmul.f32 %v7218, %v6994
      %v7235 = vmul.f32 %v7219, %v6995
      %v7236 = vmul.f32 %v7220, %v6996
      %v7237 = vmul.f32 %v7221, %v6997
      %v7238 = vmul.f32 %v7222, %v6998
      %v7239 = vmul.f32 %v7223, %v6999
      %v7240 = vmul.f32 %v7224, %v7000
      %v7241 = vmul.f32 %v7225, %v7001
      %v7242 = vmul.f32 %v7226, %v7002
      %v7243 = vmul.f32 %v7227, %v7003
      %v7244 = vmul.f32 %v7228, 1.442695
      %v7245 = vpow.pop %v7244
      %v7246 = vmul.f32 %v7229, 1.442695
      %v7247 = vpow.pop %v7246
      %v7248 = vmul.f32 %v7230, 1.442695
      %v7249 = vpow.pop %v7248
      %v7250 = vmul.f32 %v7231, 1.442695
      %v7251 = vpow.pop %v7250
      %v7252 = vmul.f32 %v7232, 1.442695
      %v7253 = vpow.pop %v7252
      %v7254 = vmul.f32 %v7233, 1.442695
      %v7255 = vpow.pop %v7254
      %v7256 = vmul.f32 %v7234, 1.442695
      %v7257 = vpow.pop %v7256
      %v7258 = vmul.f32 %v7235, 1.442695
      %v7259 = vpow.pop %v7258
      %v7260 = vmul.f32 %v7236, 1.442695
      %v7261 = vpow.pop %v7260
      %v7262 = vmul.f32 %v7237, 1.442695
      %v7263 = vpow.pop %v7262
      %v7264 = vmul.f32 %v7238, 1.442695
      %v7265 = vpow.pop %v7264
      %v7266 = vmul.f32 %v7239, 1.442695
      %v7267 = vpow.pop %v7266
      %v7268 = vmul.f32 %v7240, 1.442695
      %v7269 = vpow.pop %v7268
      %v7270 = vmul.f32 %v7241, 1.442695
      %v7271 = vpow.pop %v7270
      %v7272 = vmul.f32 %v7242, 1.442695
      %v7273 = vpow.pop %v7272
      %v7274 = vmul.f32 %v7243, 1.442695
      %v7275 = vpow.pop %v7274
      %v7276 = vmul.f32 %v7196, %v7245
      %v7277 = vmul.f32 %v7197, %v7247
      %v7278 = vmul.f32 %v7198, %v7249
      %v7279 = vmul.f32 %v7199, %v7251
      %v7280 = vmul.f32 %v7200, %v7253
      %v7281 = vmul.f32 %v7201, %v7255
      %v7282 = vmul.f32 %v7202, %v7257
      %v7283 = vmul.f32 %v7203, %v7259
      %v7284 = vmul.f32 %v7204, %v7261
      %v7285 = vmul.f32 %v7205, %v7263
      %v7286 = vmul.f32 %v7206, %v7265
      %v7287 = vmul.f32 %v7207, %v7267
      %v7288 = vmul.f32 %v7208, %v7269
      %v7289 = vmul.f32 %v7209, %v7271
      %v7290 = vmul.f32 %v7210, %v7273
      %v7291 = vmul.f32 %v7211, %v7275
      %v7292 = vsub.f32 1.0, %v7276
      %v7293 = vsub.f32 1.0, %v7277
      %v7294 = vsub.f32 1.0, %v7278
      %v7295 = vsub.f32 1.0, %v7279
      %v7296 = vsub.f32 1.0, %v7280
      %v7297 = vsub.f32 1.0, %v7281
      %v7298 = vsub.f32 1.0, %v7282
      %v7299 = vsub.f32 1.0, %v7283
      %v7300 = vsub.f32 1.0, %v7284
      %v7301 = vsub.f32 1.0, %v7285
      %v7302 = vsub.f32 1.0, %v7286
      %v7303 = vsub.f32 1.0, %v7287
      %v7304 = vsub.f32 1.0, %v7288
      %v7305 = vsub.f32 1.0, %v7289
      %v7306 = vsub.f32 1.0, %v7290
      %v7307 = vsub.f32 1.0, %v7291
      %v7308 = vmul.f32 %v6972, %v7292
      %v7309 = vmul.f32 %v6973, %v7293
      %v7310 = vmul.f32 %v6974, %v7294
      %v7311 = vmul.f32 %v6975, %v7295
      %v7312 = vmul.f32 %v6976, %v7296
      %v7313 = vmul.f32 %v6977, %v7297
      %v7314 = vmul.f32 %v6978, %v7298
      %v7315 = vmul.f32 %v6979, %v7299
      %v7316 = vmul.f32 %v6980, %v7300
      %v7317 = vmul.f32 %v6981, %v7301
      %v7318 = vmul.f32 %v6982, %v7302
      %v7319 = vmul.f32 %v6983, %v7303
      %v7320 = vmul.f32 %v6984, %v7304
      %v7321 = vmul.f32 %v6985, %v7305
      %v7322 = vmul.f32 %v6986, %v7306
      %v7323 = vmul.f32 %v6987, %v7307
      %v7324 = vadd.f32 %v7308, 1.0
      %v7325 = vadd.f32 %v7309, 1.0
      %v7326 = vadd.f32 %v7310, 1.0
      %v7327 = vadd.f32 %v7311, 1.0
      %v7328 = vadd.f32 %v7312, 1.0
      %v7329 = vadd.f32 %v7313, 1.0
      %v7330 = vadd.f32 %v7314, 1.0
      %v7331 = vadd.f32 %v7315, 1.0
      %v7332 = vadd.f32 %v7316, 1.0
      %v7333 = vadd.f32 %v7317, 1.0
      %v7334 = vadd.f32 %v7318, 1.0
      %v7335 = vadd.f32 %v7319, 1.0
      %v7336 = vadd.f32 %v7320, 1.0
      %v7337 = vadd.f32 %v7321, 1.0
      %v7338 = vadd.f32 %v7322, 1.0
      %v7339 = vadd.f32 %v7323, 1.0
      %v7340 = vmul.f32 %v6924, %v7324
      %v7341 = vmul.f32 %v6925, %v7325
      %v7342 = vmul.f32 %v6926, %v7326
      %v7343 = vmul.f32 %v6927, %v7327
      %v7344 = vmul.f32 %v6928, %v7328
      %v7345 = vmul.f32 %v6929, %v7329
      %v7346 = vmul.f32 %v6930, %v7330
      %v7347 = vmul.f32 %v6931, %v7331
      %v7348 = vmul.f32 %v6932, %v7332
      %v7349 = vmul.f32 %v6933, %v7333
      %v7350 = vmul.f32 %v6934, %v7334
      %v7351 = vmul.f32 %v6935, %v7335
      %v7352 = vmul.f32 %v6936, %v7336
      %v7353 = vmul.f32 %v6937, %v7337
      %v7354 = vmul.f32 %v6938, %v7338
      %v7355 = vmul.f32 %v6939, %v7339
      %s7356 = scalar_lea.vmem %s16, 64
      %v7357 = vld [vmem:[%s7356] sm:$0xff]
      %v7358 = vld [vmem:[%s7356 + $0x8] sm:$0xff]
      %v7359 = vld [vmem:[%s7356 + $0x10] sm:$0xff]
      %v7360 = vld [vmem:[%s7356 + $0x18] sm:$0xff]
      %v7361 = vld [vmem:[%s7356 + $0x20] sm:$0xff]
      %v7362 = vld [vmem:[%s7356 + $0x28] sm:$0xff]
      %v7363 = vld [vmem:[%s7356 + $0x30] sm:$0xff]
      %v7364 = vld [vmem:[%s7356 + $0x38] sm:$0xff]
      %s7365 = scalar_lea.vmem %s17, 1
      %v7366 = vld [vmem:[%s7365] sm:$0x1]
      %v7368 = vlaneseq
      %v7369 = vshrl.u32 %v7368, 7
      %v7370 = vsub.s32 0, %v7369
      %v7371 = vrot.slane %v7366, %v7370
      %v7374 = vsel %vm4286, %v7340, 0
      %v7377 = vsel %vm4286, %v7341, 0
      %v7380 = vsel %vm4286, %v7342, 0
      %v7383 = vsel %vm4286, %v7343, 0
      %v7386 = vsel %vm4286, %v7344, 0
      %v7389 = vsel %vm4286, %v7345, 0
      %v7392 = vsel %vm4286, %v7346, 0
      %v7395 = vsel %vm4286, %v7347, 0
      %v7398 = vsel %vm4286, %v7348, 0
      %v7401 = vsel %vm4286, %v7349, 0
      %v7404 = vsel %vm4286, %v7350, 0
      %v7407 = vsel %vm4286, %v7351, 0
      %v7410 = vsel %vm4286, %v7352, 0
      %v7413 = vsel %vm4286, %v7353, 0
      %v7416 = vsel %vm4286, %v7354, 0
      %v7419 = vsel %vm4286, %v7355, 0
      %7421 = vmatprep.subr.mxu0 0.0
      %7422 = vmatpush1.msra.mxu0 %v7357
      %7423 = vmatprep.subr.mxu0 0.0
      %7424 = vmatpush1.msra.mxu0 %v7358
      %7425 = vmatprep.subr.mxu0 0.0
      %7426 = vmatpush1.msra.mxu0 %v7359
      %7427 = vmatprep.subr.mxu0 0.0
      %7428 = vmatpush1.msra.mxu0 %v7360
      %7429 = vmatprep.subr.mxu0 0.0
      %7430 = vmatpush1.msra.mxu0 %v7361
      %7431 = vmatprep.subr.mxu0 0.0
      %7432 = vmatpush1.msra.mxu0 %v7362
      %7433 = vmatprep.subr.mxu0 0.0
      %7434 = vmatpush1.msra.mxu0 %v7363
      %7435 = vmatprep.subr.mxu0 0.0
      %7436 = vmatpush1.msra.mxu0 %v7364
      %7437 = vmatprep.subr.mxu0 0.0
      %7438 = vmatpush1.msra.mxu0 0.0
      %7439 = vmatprep.subr.mxu0 0.0
      %7440 = vmatpush1.msra.mxu0 0.0
      %7441 = vmatprep.subr.mxu0 0.0
      %7442 = vmatpush1.msra.mxu0 0.0
      %7443 = vmatprep.subr.mxu0 0.0
      %7444 = vmatpush1.msra.mxu0 0.0
      %7445 = vmatprep.subr.mxu0 0.0
      %7446 = vmatpush1.msra.mxu0 0.0
      %7447 = vmatprep.subr.mxu0 0.0
      %7448 = vmatpush1.msra.mxu0 0.0
      %7449 = vmatprep.subr.mxu0 0.0
      %7450 = vmatpush1.msra.mxu0 0.0
      %7451 = vmatprep.subr.mxu0 0.0
      %7452 = vmatpush1.msra.mxu0 0.0
      %7453 = vmatprep.subr.mxu0 0.0
      %7454 = vmatpush1.msra.mxu0 0.0
      %7455 = vmatprep.subr.mxu0 0.0
      %7456 = vmatpush1.msra.mxu0 0.0
      %7457 = vmatprep.subr.mxu0 0.0
      %7458 = vmatpush1.msra.mxu0 0.0
      %7459 = vmatprep.subr.mxu0 0.0
      %7460 = vmatpush1.msra.mxu0 0.0
      %7461 = vmatprep.subr.mxu0 0.0
      %7462 = vmatpush1.msra.mxu0 0.0
      %7463 = vmatprep.subr.mxu0 0.0
      %7464 = vmatpush1.msra.mxu0 0.0
      %7465 = vmatprep.subr.mxu0 0.0
      %7466 = vmatpush1.msra.mxu0 0.0
      %7467 = vmatprep.subr.mxu0 0.0
      %7468 = vmatpush1.msra.mxu0 0.0
      %7469 = vmatprep.subr.mxu0 0.0
      %7470 = vmatpush1.msra.mxu0 0.0
      %7471 = vmatprep.subr.mxu0 0.0
      %7472 = vmatpush1.msra.mxu0 0.0
      %7473 = vmatprep.subr.mxu0 0.0
      %7474 = vmatpush1.msra.mxu0 0.0
      %7475 = vmatprep.subr.mxu0 0.0
      %7476 = vmatpush1.msra.mxu0 0.0
      %7477 = vmatprep.subr.mxu0 0.0
      %7478 = vmatpush1.msra.mxu0 0.0
      %7479 = vmatprep.subr.mxu0 0.0
      %7480 = vmatpush1.msra.mxu0 0.0
      %7481 = vmatprep.subr.mxu0 0.0
      %7482 = vmatpush1.msra.mxu0 0.0
      %7483 = vmatprep.subr.mxu0 0.0
      %7484 = vmatpush1.msra.mxu0 0.0
      %7485 = vmatprep.mubr.f32.mxu0 0.0
      %7486 = vmatmul.mubr.f32.gmra.mrb[0].mxu0 %v7374
      %v7487 = vpop.f32.mrb[0].mxu0
      %v7488 = vadd.f32 %v7371, %v7487
      %v7489 = vpop.f32.mrb[0].mxu0
      %7490 = vmatprep.mubr.f32.mxu0 0.0
      %7491 = vmatmul.mubr.f32.gmra.mrb[0].mxu0 %v7377
      %v7492 = vpop.f32.mrb[0].mxu0
      %v7493 = vadd.f32 %v7371, %v7492
      %v7494 = vpop.f32.mrb[0].mxu0
      %7495 = vmatprep.mubr.f32.mxu0 0.0
      %7496 = vmatmul.mubr.f32.gmra.mrb[0].mxu0 %v7380
      %v7497 = vpop.f32.mrb[0].mxu0
      %v7498 = vadd.f32 %v7371, %v7497
      %v7499 = vpop.f32.mrb[0].mxu0
      %7500 = vmatprep.mubr.f32.mxu0 0.0
      %7501 = vmatmul.mubr.f32.gmra.mrb[0].mxu0 %v7383
      %v7502 = vpop.f32.mrb[0].mxu0
      %v7503 = vadd.f32 %v7371, %v7502
      %v7504 = vpop.f32.mrb[0].mxu0
      %7505 = vmatprep.mubr.f32.mxu0 0.0
      %7506 = vmatmul.mubr.f32.gmra.mrb[0].mxu0 %v7386
      %v7507 = vpop.f32.mrb[0].mxu0
      %v7508 = vadd.f32 %v7371, %v7507
      %v7509 = vpop.f32.mrb[0].mxu0
      %7510 = vmatprep.mubr.f32.mxu0 0.0
      %7511 = vmatmul.mubr.f32.gmra.mrb[0].mxu0 %v7389
      %v7512 = vpop.f32.mrb[0].mxu0
      %v7513 = vadd.f32 %v7371, %v7512
      %v7514 = vpop.f32.mrb[0].mxu0
      %7515 = vmatprep.mubr.f32.mxu0 0.0
      %7516 = vmatmul.mubr.f32.gmra.mrb[0].mxu0 %v7392
      %v7517 = vpop.f32.mrb[0].mxu0
      %v7518 = vadd.f32 %v7371, %v7517
      %v7519 = vpop.f32.mrb[0].mxu0
      %7520 = vmatprep.mubr.f32.mxu0 0.0
      %7521 = vmatmul.mubr.f32.gmra.mrb[0].mxu0 %v7395
      %v7522 = vpop.f32.mrb[0].mxu0
      %v7523 = vadd.f32 %v7371, %v7522
      %v7524 = vpop.f32.mrb[0].mxu0
      %7525 = vmatprep.mubr.f32.mxu0 0.0
      %7526 = vmatmul.mubr.f32.gmra.mrb[0].mxu0 %v7398
      %v7527 = vpop.f32.mrb[0].mxu0
      %v7528 = vadd.f32 %v7371, %v7527
      %v7529 = vpop.f32.mrb[0].mxu0
      %7530 = vmatprep.mubr.f32.mxu0 0.0
      %7531 = vmatmul.mubr.f32.gmra.mrb[0].mxu0 %v7401
      %v7532 = vpop.f32.mrb[0].mxu0
      %v7533 = vadd.f32 %v7371, %v7532
      %v7534 = vpop.f32.mrb[0].mxu0
      %7535 = vmatprep.mubr.f32.mxu0 0.0
      %7536 = vmatmul.mubr.f32.gmra.mrb[0].mxu0 %v7404
      %v7537 = vpop.f32.mrb[0].mxu0
      %v7538 = vadd.f32 %v7371, %v7537
      %v7539 = vpop.f32.mrb[0].mxu0
      %7540 = vmatprep.mubr.f32.mxu0 0.0
      %7541 = vmatmul.mubr.f32.gmra.mrb[0].mxu0 %v7407
      %v7542 = vpop.f32.mrb[0].mxu0
      %v7543 = vadd.f32 %v7371, %v7542
      %v7544 = vpop.f32.mrb[0].mxu0
      %7545 = vmatprep.mubr.f32.mxu0 0.0
      %7546 = vmatmul.mubr.f32.gmra.mrb[0].mxu0 %v7410
      %v7547 = vpop.f32.mrb[0].mxu0
      %v7548 = vadd.f32 %v7371, %v7547
      %v7549 = vpop.f32.mrb[0].mxu0
      %7550 = vmatprep.mubr.f32.mxu0 0.0
      %7551 = vmatmul.mubr.f32.gmra.mrb[0].mxu0 %v7413
      %v7552 = vpop.f32.mrb[0].mxu0
      %v7553 = vadd.f32 %v7371, %v7552
      %v7554 = vpop.f32.mrb[0].mxu0
      %7555 = vmatprep.mubr.f32.mxu0 0.0
      %7556 = vmatmul.mubr.f32.gmra.mrb[0].mxu0 %v7416
      %v7557 = vpop.f32.mrb[0].mxu0
      %v7558 = vadd.f32 %v7371, %v7557
      %v7559 = vpop.f32.mrb[0].mxu0
      %7560 = vmatprep.mubr.f32.mxu0 0.0
      %7561 = vmatmul.mubr.f32.gmra.mrb[0].mxu0 %v7419
      %v7562 = vpop.f32.mrb[0].mxu0
      %v7563 = vadd.f32 %v7371, %v7562
      %v7564 = vpop.f32.mrb[0].mxu0
      %7565 = vdwg.mxu0
      %v7566 = vadd.f32 %v6702, %v7488
      %v7567 = vadd.f32 %v6703, %v7493
      %v7568 = vadd.f32 %v6704, %v7498
      %v7569 = vadd.f32 %v6705, %v7503
      %v7570 = vadd.f32 %v6706, %v7508
      %v7571 = vadd.f32 %v6707, %v7513
      %v7572 = vadd.f32 %v6708, %v7518
      %v7573 = vadd.f32 %v6709, %v7523
      %v7574 = vadd.f32 %v6710, %v7528
      %v7575 = vadd.f32 %v6711, %v7533
      %v7576 = vadd.f32 %v6712, %v7538
      %v7577 = vadd.f32 %v6713, %v7543
      %v7578 = vadd.f32 %v6714, %v7548
      %v7579 = vadd.f32 %v6715, %v7553
      %v7580 = vadd.f32 %v6716, %v7558
      %v7581 = vadd.f32 %v6717, %v7563
      %s7582 = scalar_lea.vmem %s18, 1
      %v7583 = vld [vmem:[%s7582] sm:$0x1]
      %s7584 = scalar_lea.vmem %s19, 1
      %v7585 = vld [vmem:[%s7584] sm:$0x1]
      %v7586 = vsel %vm1418, %v7566, 0.0
      %7587 = vadd.xlane.f32.xlu0 %v7586
      %v7588 = vpop.xlane.xlu0 %7587
      %v7589 = vsel %vm1418, %v7567, 0.0
      %7590 = vadd.xlane.f32.xlu0 %v7589
      %v7591 = vpop.xlane.xlu0 %7590
      %v7592 = vsel %vm1418, %v7568, 0.0
      %7593 = vadd.xlane.f32.xlu0 %v7592
      %v7594 = vpop.xlane.xlu0 %7593
      %v7595 = vsel %vm1418, %v7569, 0.0
      %7596 = vadd.xlane.f32.xlu0 %v7595
      %v7597 = vpop.xlane.xlu0 %7596
      %v7598 = vsel %vm1418, %v7570, 0.0
      %7599 = vadd.xlane.f32.xlu0 %v7598
      %v7600 = vpop.xlane.xlu0 %7599
      %v7601 = vsel %vm1418, %v7571, 0.0
      %7602 = vadd.xlane.f32.xlu0 %v7601
      %v7603 = vpop.xlane.xlu0 %7602
      %v7604 = vsel %vm1418, %v7572, 0.0
      %7605 = vadd.xlane.f32.xlu0 %v7604
      %v7606 = vpop.xlane.xlu0 %7605
      %v7607 = vsel %vm1418, %v7573, 0.0
      %7608 = vadd.xlane.f32.xlu0 %v7607
      %v7609 = vpop.xlane.xlu0 %7608
      %v7610 = vsel %vm1418, %v7574, 0.0
      %7611 = vadd.xlane.f32.xlu0 %v7610
      %v7612 = vpop.xlane.xlu0 %7611
      %v7613 = vsel %vm1418, %v7575, 0.0
      %7614 = vadd.xlane.f32.xlu0 %v7613
      %v7615 = vpop.xlane.xlu0 %7614
      %v7616 = vsel %vm1418, %v7576, 0.0
      %7617 = vadd.xlane.f32.xlu0 %v7616
      %v7618 = vpop.xlane.xlu0 %7617
      %v7619 = vsel %vm1418, %v7577, 0.0
      %7620 = vadd.xlane.f32.xlu0 %v7619
      %v7621 = vpop.xlane.xlu0 %7620
      %v7622 = vsel %vm1418, %v7578, 0.0
      %7623 = vadd.xlane.f32.xlu0 %v7622
      %v7624 = vpop.xlane.xlu0 %7623
      %v7625 = vsel %vm1418, %v7579, 0.0
      %7626 = vadd.xlane.f32.xlu0 %v7625
      %v7627 = vpop.xlane.xlu0 %7626
      %v7628 = vsel %vm1418, %v7580, 0.0
      %7629 = vadd.xlane.f32.xlu0 %v7628
      %v7630 = vpop.xlane.xlu0 %7629
      %v7631 = vsel %vm1418, %v7581, 0.0
      %7632 = vadd.xlane.f32.xlu0 %v7631
      %v7633 = vpop.xlane.xlu0 %7632
      %v7634 = vmul.f32 %v7588, %v1467
      %v7635 = vmul.f32 %v7591, %v1467
      %v7636 = vmul.f32 %v7594, %v1467
      %v7637 = vmul.f32 %v7597, %v1467
      %v7638 = vmul.f32 %v7600, %v1467
      %v7639 = vmul.f32 %v7603, %v1467
      %v7640 = vmul.f32 %v7606, %v1467
      %v7641 = vmul.f32 %v7609, %v1467
      %v7642 = vmul.f32 %v7612, %v1467
      %v7643 = vmul.f32 %v7615, %v1467
      %v7644 = vmul.f32 %v7618, %v1467
      %v7645 = vmul.f32 %v7621, %v1467
      %v7646 = vmul.f32 %v7624, %v1467
      %v7647 = vmul.f32 %v7627, %v1467
      %v7648 = vmul.f32 %v7630, %v1467
      %v7649 = vmul.f32 %v7633, %v1467
      %v7650 = vsub.f32 %v7566, %v7634
      %v7651 = vsub.f32 %v7567, %v7635
      %v7652 = vsub.f32 %v7568, %v7636
      %v7653 = vsub.f32 %v7569, %v7637
      %v7654 = vsub.f32 %v7570, %v7638
      %v7655 = vsub.f32 %v7571, %v7639
      %v7656 = vsub.f32 %v7572, %v7640
      %v7657 = vsub.f32 %v7573, %v7641
      %v7658 = vsub.f32 %v7574, %v7642
      %v7659 = vsub.f32 %v7575, %v7643
      %v7660 = vsub.f32 %v7576, %v7644
      %v7661 = vsub.f32 %v7577, %v7645
      %v7662 = vsub.f32 %v7578, %v7646
      %v7663 = vsub.f32 %v7579, %v7647
      %v7664 = vsub.f32 %v7580, %v7648
      %v7665 = vsub.f32 %v7581, %v7649
      %v7666 = vmul.f32 %v7650, %v7650
      %v7667 = vmul.f32 %v7651, %v7651
      %v7668 = vmul.f32 %v7652, %v7652
      %v7669 = vmul.f32 %v7653, %v7653
      %v7670 = vmul.f32 %v7654, %v7654
      %v7671 = vmul.f32 %v7655, %v7655
      %v7672 = vmul.f32 %v7656, %v7656
      %v7673 = vmul.f32 %v7657, %v7657
      %v7674 = vmul.f32 %v7658, %v7658
      %v7675 = vmul.f32 %v7659, %v7659
      %v7676 = vmul.f32 %v7660, %v7660
      %v7677 = vmul.f32 %v7661, %v7661
      %v7678 = vmul.f32 %v7662, %v7662
      %v7679 = vmul.f32 %v7663, %v7663
      %v7680 = vmul.f32 %v7664, %v7664
      %v7681 = vmul.f32 %v7665, %v7665
      %v7682 = vsel %vm1418, %v7666, 0.0
      %7683 = vadd.xlane.f32.xlu0 %v7682
      %v7684 = vpop.xlane.xlu0 %7683
      %v7685 = vsel %vm1418, %v7667, 0.0
      %7686 = vadd.xlane.f32.xlu0 %v7685
      %v7687 = vpop.xlane.xlu0 %7686
      %v7688 = vsel %vm1418, %v7668, 0.0
      %7689 = vadd.xlane.f32.xlu0 %v7688
      %v7690 = vpop.xlane.xlu0 %7689
      %v7691 = vsel %vm1418, %v7669, 0.0
      %7692 = vadd.xlane.f32.xlu0 %v7691
      %v7693 = vpop.xlane.xlu0 %7692
      %v7694 = vsel %vm1418, %v7670, 0.0
      %7695 = vadd.xlane.f32.xlu0 %v7694
      %v7696 = vpop.xlane.xlu0 %7695
      %v7697 = vsel %vm1418, %v7671, 0.0
      %7698 = vadd.xlane.f32.xlu0 %v7697
      %v7699 = vpop.xlane.xlu0 %7698
      %v7700 = vsel %vm1418, %v7672, 0.0
      %7701 = vadd.xlane.f32.xlu0 %v7700
      %v7702 = vpop.xlane.xlu0 %7701
      %v7703 = vsel %vm1418, %v7673, 0.0
      %7704 = vadd.xlane.f32.xlu0 %v7703
      %v7705 = vpop.xlane.xlu0 %7704
      %v7706 = vsel %vm1418, %v7674, 0.0
      %7707 = vadd.xlane.f32.xlu0 %v7706
      %v7708 = vpop.xlane.xlu0 %7707
      %v7709 = vsel %vm1418, %v7675, 0.0
      %7710 = vadd.xlane.f32.xlu0 %v7709
      %v7711 = vpop.xlane.xlu0 %7710
      %v7712 = vsel %vm1418, %v7676, 0.0
      %7713 = vadd.xlane.f32.xlu0 %v7712
      %v7714 = vpop.xlane.xlu0 %7713
      %v7715 = vsel %vm1418, %v7677, 0.0
      %7716 = vadd.xlane.f32.xlu0 %v7715
      %v7717 = vpop.xlane.xlu0 %7716
      %v7718 = vsel %vm1418, %v7678, 0.0
      %7719 = vadd.xlane.f32.xlu0 %v7718
      %v7720 = vpop.xlane.xlu0 %7719
      %v7721 = vsel %vm1418, %v7679, 0.0
      %7722 = vadd.xlane.f32.xlu0 %v7721
      %v7723 = vpop.xlane.xlu0 %7722
      %v7724 = vsel %vm1418, %v7680, 0.0
      %7725 = vadd.xlane.f32.xlu0 %v7724
      %v7726 = vpop.xlane.xlu0 %7725
      %v7727 = vsel %vm1418, %v7681, 0.0
      %7728 = vadd.xlane.f32.xlu0 %v7727
      %v7729 = vpop.xlane.xlu0 %7728
      %v7730 = vmul.f32 %v7684, %v1467
      %v7731 = vmul.f32 %v7687, %v1467
      %v7732 = vmul.f32 %v7690, %v1467
      %v7733 = vmul.f32 %v7693, %v1467
      %v7734 = vmul.f32 %v7696, %v1467
      %v7735 = vmul.f32 %v7699, %v1467
      %v7736 = vmul.f32 %v7702, %v1467
      %v7737 = vmul.f32 %v7705, %v1467
      %v7738 = vmul.f32 %v7708, %v1467
      %v7739 = vmul.f32 %v7711, %v1467
      %v7740 = vmul.f32 %v7714, %v1467
      %v7741 = vmul.f32 %v7717, %v1467
      %v7742 = vmul.f32 %v7720, %v1467
      %v7743 = vmul.f32 %v7723, %v1467
      %v7744 = vmul.f32 %v7726, %v1467
      %v7745 = vmul.f32 %v7729, %v1467
      %v7746 = vadd.f32 %v7730, 1e-12
      %v7747 = vadd.f32 %v7731, 1e-12
      %v7748 = vadd.f32 %v7732, 1e-12
      %v7749 = vadd.f32 %v7733, 1e-12
      %v7750 = vadd.f32 %v7734, 1e-12
      %v7751 = vadd.f32 %v7735, 1e-12
      %v7752 = vadd.f32 %v7736, 1e-12
      %v7753 = vadd.f32 %v7737, 1e-12
      %v7754 = vadd.f32 %v7738, 1e-12
      %v7755 = vadd.f32 %v7739, 1e-12
      %v7756 = vadd.f32 %v7740, 1e-12
      %v7757 = vadd.f32 %v7741, 1e-12
      %v7758 = vadd.f32 %v7742, 1e-12
      %v7759 = vadd.f32 %v7743, 1e-12
      %v7760 = vadd.f32 %v7744, 1e-12
      %v7761 = vadd.f32 %v7745, 1e-12
      %v7762 = vrsqrt.pop %v7746
      %v7763 = vrsqrt.pop %v7747
      %v7764 = vrsqrt.pop %v7748
      %v7765 = vrsqrt.pop %v7749
      %v7766 = vrsqrt.pop %v7750
      %v7767 = vrsqrt.pop %v7751
      %v7768 = vrsqrt.pop %v7752
      %v7769 = vrsqrt.pop %v7753
      %v7770 = vrsqrt.pop %v7754
      %v7771 = vrsqrt.pop %v7755
      %v7772 = vrsqrt.pop %v7756
      %v7773 = vrsqrt.pop %v7757
      %v7774 = vrsqrt.pop %v7758
      %v7775 = vrsqrt.pop %v7759
      %v7776 = vrsqrt.pop %v7760
      %v7777 = vrsqrt.pop %v7761
      %v7778 = vmul.f32 %v7650, %v7762
      %v7779 = vmul.f32 %v7651, %v7763
      %v7780 = vmul.f32 %v7652, %v7764
      %v7781 = vmul.f32 %v7653, %v7765
      %v7782 = vmul.f32 %v7654, %v7766
      %v7783 = vmul.f32 %v7655, %v7767
      %v7784 = vmul.f32 %v7656, %v7768
      %v7785 = vmul.f32 %v7657, %v7769
      %v7786 = vmul.f32 %v7658, %v7770
      %v7787 = vmul.f32 %v7659, %v7771
      %v7788 = vmul.f32 %v7660, %v7772
      %v7789 = vmul.f32 %v7661, %v7773
      %v7790 = vmul.f32 %v7662, %v7774
      %v7791 = vmul.f32 %v7663, %v7775
      %v7792 = vmul.f32 %v7664, %v7776
      %v7793 = vmul.f32 %v7665, %v7777
      %v7795 = vlaneseq
      %v7796 = vshrl.u32 %v7795, 7
      %v7797 = vsub.s32 0, %v7796
      %v7798 = vrot.slane %v7583, %v7797
      %v7800 = vmul.f32 %v7778, %v7798
      %v7801 = vmul.f32 %v7779, %v7798
      %v7802 = vmul.f32 %v7780, %v7798
      %v7803 = vmul.f32 %v7781, %v7798
      %v7804 = vmul.f32 %v7782, %v7798
      %v7805 = vmul.f32 %v7783, %v7798
      %v7806 = vmul.f32 %v7784, %v7798
      %v7807 = vmul.f32 %v7785, %v7798
      %v7808 = vmul.f32 %v7786, %v7798
      %v7809 = vmul.f32 %v7787, %v7798
      %v7810 = vmul.f32 %v7788, %v7798
      %v7811 = vmul.f32 %v7789, %v7798
      %v7812 = vmul.f32 %v7790, %v7798
      %v7813 = vmul.f32 %v7791, %v7798
      %v7814 = vmul.f32 %v7792, %v7798
      %v7815 = vmul.f32 %v7793, %v7798
      %v7817 = vlaneseq
      %v7818 = vshrl.u32 %v7817, 7
      %v7819 = vsub.s32 0, %v7818
      %v7820 = vrot.slane %v7585, %v7819
      %v7822 = vadd.f32 %v7800, %v7820
      %v7823 = vadd.f32 %v7801, %v7820
      %v7824 = vadd.f32 %v7802, %v7820
      %v7825 = vadd.f32 %v7803, %v7820
      %v7826 = vadd.f32 %v7804, %v7820
      %v7827 = vadd.f32 %v7805, %v7820
      %v7828 = vadd.f32 %v7806, %v7820
      %v7829 = vadd.f32 %v7807, %v7820
      %v7830 = vadd.f32 %v7808, %v7820
      %v7831 = vadd.f32 %v7809, %v7820
      %v7832 = vadd.f32 %v7810, %v7820
      %v7833 = vadd.f32 %v7811, %v7820
      %v7834 = vadd.f32 %v7812, %v7820
      %v7835 = vadd.f32 %v7813, %v7820
      %v7836 = vadd.f32 %v7814, %v7820
      %v7837 = vadd.f32 %v7815, %v7820
      %7838 = vst.msk [vmem:[%s731] sm:$0xff] %vm1418, %v7822
      %7839 = vst.msk [vmem:[%s731 + $0x8] sm:$0xff] %vm1418, %v7823
      %7840 = vst.msk [vmem:[%s731 + $0x10] sm:$0xff] %vm1418, %v7824
      %7841 = vst.msk [vmem:[%s731 + $0x18] sm:$0xff] %vm1418, %v7825
      %7842 = vst.msk [vmem:[%s731 + $0x20] sm:$0xff] %vm1418, %v7826
      %7843 = vst.msk [vmem:[%s731 + $0x28] sm:$0xff] %vm1418, %v7827
      %7844 = vst.msk [vmem:[%s731 + $0x30] sm:$0xff] %vm1418, %v7828
      %7845 = vst.msk [vmem:[%s731 + $0x38] sm:$0xff] %vm1418, %v7829
      %7846 = vst.msk [vmem:[%s731 + $0x40] sm:$0xff] %vm1418, %v7830
      %7847 = vst.msk [vmem:[%s731 + $0x48] sm:$0xff] %vm1418, %v7831
      %7848 = vst.msk [vmem:[%s731 + $0x50] sm:$0xff] %vm1418, %v7832
      %7849 = vst.msk [vmem:[%s731 + $0x58] sm:$0xff] %vm1418, %v7833
      %7850 = vst.msk [vmem:[%s731 + $0x60] sm:$0xff] %vm1418, %v7834
      %7851 = vst.msk [vmem:[%s731 + $0x68] sm:$0xff] %vm1418, %v7835
      %7852 = vst.msk [vmem:[%s731 + $0x70] sm:$0xff] %vm1418, %v7836
      %7853 = vst.msk [vmem:[%s731 + $0x78] sm:$0xff] %vm1418, %v7837
      %s7854 = smul.u32 16, %s31
      %p7855 = scmp.lt.s32.totalorder %s7854, 31
      %s7856 = scalar_select %p7855, %s7854, 31
      %s7857 = smul.addr %s7856, 8
      %s7858 = scalar_lea.vmem %s20, %s7857
      // Predicated region
      $region101: #{tpu_custom_call.1} parent=99 // pred_check
        %p7859 = pneg %p499
      $region102: #{tpu_custom_call.1} parent=99 // pred_check_branch
        %7861 = sbr.rel (%p7859) target = $region104
      $region103: #{tpu_custom_call.1} parent=99 // pred_region
        %s7862 = smul.u32 16, %s31
      $region104: #{tpu_custom_call.1} parent=99 // pred_fallthru
        _
    $region100: #{tpu_custom_call.1} parent=5 // pred_fallthru
      _
    %p7863 = scmp.le.s32.totalorder 2, %s26
    // Predicated region
    $region105: #{tpu_custom_call.1} parent=5 // pred_check
      %p7864 = pneg %p7863
    $region106: #{tpu_custom_call.1} parent=5 // pred_check_branch
      %7866 = sbr.rel (%p7864) target = $region108
    $region107: #{tpu_custom_call.1} parent=5 // pred_region
      %s7867 = ssub.s32 %s26, 2
      // Predicated region
      $region109: #{tpu_custom_call.1} parent=107 // pred_check
        %p7868 = pneg %p505
      $region110: #{tpu_custom_call.1} parent=107 // pred_check_branch
        %7870 = sbr.rel (%p7868) target = $region112
      $region111: #{tpu_custom_call.1} parent=107 // pred_region
        %s7871 = smul.u32 16, %s32
        %p7872 = scmp.lt.s32.totalorder %s7871, 31
        %s7873 = scalar_select %p7872, %s7871, 31
        %s7874 = smul.addr %s7873, 8
        %s7875 = scalar_lea.vmem %s20, %s7874
      $region112: #{tpu_custom_call.1} parent=107 // pred_fallthru
        _
    $region108: #{tpu_custom_call.1} parent=5 // pred_fallthru
      _
  $region6: #{tpu_custom_call.1} parent=0 // loop_footer
    %s30 = sadd.s32 1, %s26
  $region7: #{tpu_custom_call.1} parent=0 // loop_footer_branch
    %25 = sbr.rel target = $region3
  $region8: #{tpu_custom_call.1} parent=0 // loop_exit
    _

</llo_original>
